<compile_context>
chip_gen: v7x
topology: tpu7x:2x2x1
jax: 0.10.0
libtpu: 0.0.40
codegen_flags: <defaults>
</compile_context>

<pallas_src>
import functools

import jax
import jax.numpy as jnp
from jax.experimental import pallas as pl
from jax.experimental.pallas import tpu as pltpu


# --------------------------------------------------------------------------
# Generic tiled matmul kernel with fused BN-scale/shift + residual + ReLU
# --------------------------------------------------------------------------

_TM_MAX = 256   # tile caps chosen so 2x-buffered VMEM footprint stays ~2 MiB:
_TN_MAX = 256   # safe under v7x's 64 MiB and the v5e/v6e scoped defaults.
_TK_MAX = 256


def _round_up(x, m):
    return (x + m - 1) // m * m


def _pad2(x, rows, cols):
    return jnp.pad(x, ((0, rows - x.shape[0]), (0, cols - x.shape[1])))


def _make_matmul_kernel(has_scale, has_residual, relu):
    def kernel(*refs):
        a_ref, b_ref = refs[0], refs[1]
        idx = 2
        if has_scale:
            scale_ref, shift_ref = refs[idx], refs[idx + 1]
            idx += 2
        if has_residual:
            res_ref = refs[idx]
            idx += 1
        o_ref, acc_ref = refs[idx], refs[idx + 1]

        k = pl.program_id(2)

        @pl.when(k == 0)
        def _():
            acc_ref[...] = jnp.zeros_like(acc_ref)

        acc_ref[...] += jnp.dot(a_ref[...], b_ref[...],
                                preferred_element_type=jnp.float32)

        @pl.when(k == pl.num_programs(2) - 1)
        def _():
            acc = acc_ref[...]
            if has_scale:                      # per-row (per out-channel) BN
                acc = acc * scale_ref[...] + shift_ref[...]
            if has_residual:                   # fused residual merge
                acc = acc + res_ref[...]
            if relu:
                acc = jnp.maximum(acc, 0.0)
            o_ref[...] = acc.astype(o_ref.dtype)

    return kernel


def fused_matmul(a, b, *, scale=None, shift=None, residual=None, relu=False):
    """out = relu?( (a @ b) * scale + shift + residual ).

    a: (M, K), b: (K, N); scale/shift broadcast per row (shape (M,) or (M,1));
    residual: (M, N).  MXU inputs are cast to bf16; accumulation/epilogue f32.
    Inputs are zero-padded to tile multiples (zero K-padding is exact)."""
    M, K = a.shape
    K2, N = b.shape
    assert K == K2

    tm = min(_TM_MAX, _round_up(M, 8))
    tn = min(_TN_MAX, _round_up(N, 128))
    tk = min(_TK_MAX, _round_up(K, 128))
    Mp, Np, Kp = _round_up(M, tm), _round_up(N, tn), _round_up(K, tk)

    inputs = [_pad2(a, Mp, Kp).astype(jnp.bfloat16),
              _pad2(b, Kp, Np).astype(jnp.bfloat16)]
    in_specs = [pl.BlockSpec((tm, tk), lambda i, j, k: (i, k)),
                pl.BlockSpec((tk, tn), lambda i, j, k: (k, j))]
    bytes_accessed = 2 * Mp * Kp + 2 * Kp * Np + 4 * Mp * Np

    has_scale = scale is not None
    if has_scale:
        inputs += [_pad2(scale.reshape(M, 1).astype(jnp.float32), Mp, 1),
                   _pad2(shift.reshape(M, 1).astype(jnp.float32), Mp, 1)]
        in_specs += [pl.BlockSpec((tm, 1), lambda i, j, k: (i, 0)),
                     pl.BlockSpec((tm, 1), lambda i, j, k: (i, 0))]
        bytes_accessed += 8 * Mp

    has_residual = residual is not None
    if has_residual:
        inputs.append(_pad2(residual.astype(jnp.float32), Mp, Np))
        in_specs.append(pl.BlockSpec((tm, tn), lambda i, j, k: (i, j)))
        bytes_accessed += 4 * Mp * Np

    out = pl.pallas_call(
        _make_matmul_kernel(has_scale, has_residual, relu),
        grid=(Mp // tm, Np // tn, Kp // tk),
        out_shape=jax.ShapeDtypeStruct((Mp, Np), jnp.float32),
        in_specs=in_specs,
        out_specs=pl.BlockSpec((tm, tn), lambda i, j, k: (i, j)),
        scratch_shapes=[pltpu.VMEM((tm, tn), jnp.float32)],
        compiler_params=pltpu.CompilerParams(
            dimension_semantics=("parallel", "parallel", "arbitrary")),
        cost_estimate=pl.CostEstimate(flops=2 * Mp * Np * Kp,
                                      transcendentals=0,
                                      bytes_accessed=int(bytes_accessed)),
    )(*inputs)
    return out[:M, :N]


# --------------------------------------------------------------------------
# LSTM recurrence kernel (time-chunked, h/c carried in VMEM scratch)
# --------------------------------------------------------------------------

def _lstm_chunk_kernel(*refs, hidden, chunk, fuse_fc):
    if fuse_fc:
        (gx_ref, whh_ref, fcw_ref,
         out_ref, h_out_ref, c_out_ref, h_sc, c_sc) = refs
    else:
        gx_ref, whh_ref, out_ref, h_out_ref, c_out_ref, h_sc, c_sc = refs

    @pl.when(pl.program_id(0) == 0)
    def _():
        h_sc[...] = jnp.zeros_like(h_sc)
        c_sc[...] = jnp.zeros_like(c_sc)

    H = hidden
    whh = whh_ref[...]
    # Statically unrolled chunk of timesteps: only h @ W_hh^T and the gate
    # nonlinearities sit in the serial chain (x @ W_ih^T was hoisted outside).
    for tt in range(chunk):
        gates = gx_ref[tt] + jnp.dot(h_sc[...], whh,
                                     preferred_element_type=jnp.float32)
        # torch.nn.LSTM gate order: [i, f, g, o]
        i_g = jax.nn.sigmoid(gates[:, 0 * H:1 * H])
        f_g = jax.nn.sigmoid(gates[:, 1 * H:2 * H])
        g_g = jnp.tanh(gates[:, 2 * H:3 * H])
        o_g = jax.nn.sigmoid(gates[:, 3 * H:4 * H])
        c_new = f_g * c_sc[...] + i_g * g_g
        h_new = o_g * jnp.tanh(c_new)
        c_sc[...] = c_new
        h_sc[...] = h_new
        if fuse_fc:
            # fused Linear(lstm_dim -> 1, bias=False) + Sigmoid head
            out_ref[tt] = jax.nn.sigmoid(
                jnp.dot(h_new, fcw_ref[...], preferred_element_type=jnp.float32))
        else:
            out_ref[tt] = h_new

    h_out_ref[...] = h_sc[...]
    c_out_ref[...] = c_sc[...]


def _pick_chunk(S, max_chunk=8):
    for cand in range(min(max_chunk, S), 0, -1):
        if S % cand == 0:
            return cand
    return 1


def lstm_layer(x_sbi, w_ih, w_hh, hidden, fc_w=None):
    """One torch.nn.LSTM layer (bias=False).  x_sbi: (S, B, I) time-major.
    w_ih: (4H, I), w_hh: (4H, H) in torch layout.

    If fc_w (H, 1) is given (last layer), the Linear+Sigmoid head is fused and
    the sequence output is the (S, B, 1) fc result instead of the hidden seq."""
    S, B, I = x_sbi.shape
    H4 = 4 * hidden

    # Hoisted input projection: no time dependence -> one big tiled matmul.
    gates_x = fused_matmul(x_sbi.reshape(S * B, I), jnp.transpose(w_ih))
    gates_x = gates_x.reshape(S, B, H4)
    w_hh_t = jnp.transpose(w_hh).astype(jnp.float32)        # (H, 4H)

    chunk = _pick_chunk(S)
    fuse_fc = fc_w is not None

    inputs = [gates_x, w_hh_t]
    in_specs = [pl.BlockSpec((chunk, B, H4), lambda c: (c, 0, 0)),
                pl.BlockSpec((hidden, H4), lambda c: (0, 0))]
    if fuse_fc:
        inputs.append(fc_w.astype(jnp.float32))
        in_specs.append(pl.BlockSpec((hidden, 1), lambda c: (0, 0)))

    seq_dim = 1 if fuse_fc else hidden
    out_shape = (jax.ShapeDtypeStruct((S, B, seq_dim), jnp.float32),
                 jax.ShapeDtypeStruct((B, hidden), jnp.float32),
                 jax.ShapeDtypeStruct((B, hidden), jnp.float32))
    out_specs = (pl.BlockSpec((chunk, B, seq_dim), lambda c: (c, 0, 0)),
                 pl.BlockSpec((B, hidden), lambda c: (0, 0)),
                 pl.BlockSpec((B, hidden), lambda c: (0, 0)))

    seq_out, h_n, c_n = pl.pallas_call(
        functools.partial(_lstm_chunk_kernel, hidden=hidden, chunk=chunk,
                          fuse_fc=fuse_fc),
        grid=(S // chunk,),
        out_shape=out_shape,
        in_specs=in_specs,
        out_specs=out_specs,
        scratch_shapes=[pltpu.VMEM((B, hidden), jnp.float32),   # h carry
                        pltpu.VMEM((B, hidden), jnp.float32)],  # c carry
        compiler_params=pltpu.CompilerParams(
            dimension_semantics=("arbitrary",)),                # sequential time
    )(*inputs)
    return seq_out, h_n, c_n


# --------------------------------------------------------------------------
# Glue: channel-major im2col, conv+BN wrapper, ResBlock, params, forward
# --------------------------------------------------------------------------

def im2col_cm(x_cnhw, kh, kw, stride, pad):
    """x: (C, N, H, W) -> patches (C*kh*kw, N*Ho*Wo).

    K-major order (C, kh, kw) matches the torch conv-weight flatten; the big
    N*Ho*Wo axis ends up as the matmul's lane-dense output dimension."""
    C, N, H, W = x_cnhw.shape
    Ho = (H + 2 * pad - kh) // stride + 1
    Wo = (W + 2 * pad - kw) // stride + 1
    xp = jnp.pad(x_cnhw, ((0, 0), (0, 0), (pad, pad), (pad, pad)))
    cols = []
    for i in range(kh):
        for j in range(kw):
            cols.append(xp[:, :,
                           i:i + stride * (Ho - 1) + 1:stride,
                           j:j + stride * (Wo - 1) + 1:stride])
    patches = jnp.stack(cols, axis=1)                  # (C, kh*kw, N, Ho, Wo)
    return patches.reshape(C * kh * kw, N * Ho * Wo), Ho, Wo


def conv_bn(x_cnhw, w, bn_scale, bn_shift, stride, pad, relu, residual=None):
    """Conv2d(bias=False) + folded BN (+ residual) (+ ReLU), channel-major.

    x: (C, N, H, W);  w: (O, C, kh, kw);  residual: (O, N, Ho, Wo) or None."""
    C, N, H, W = x_cnhw.shape
    O, _, kh, kw = w.shape
    patches, Ho, Wo = im2col_cm(x_cnhw, kh, kw, stride, pad)
    res = residual.reshape(O, N * Ho * Wo) if residual is not None else None
    out = fused_matmul(w.reshape(O, C * kh * kw), patches,
                       scale=bn_scale, shift=bn_shift,
                       residual=res, relu=relu)
    return out.reshape(O, N, Ho, Wo)


def res_block(x_cnhw, p):
    # shortcut: conv1x1(s=2) -> BN
    sc = conv_bn(x_cnhw, p["ws"], p["bns_scale"], p["bns_shift"],
                 stride=2, pad=0, relu=False)
    # main: conv3x3(s=2) -> BN -> ReLU  (dropout: identity in eval mode)
    y = conv_bn(x_cnhw, p["w1"], p["bn1_scale"], p["bn1_shift"],
                stride=2, pad=1, relu=True)
    # second conv's epilogue fuses BN + residual add + final ReLU (no add_relu
    # kernel / extra HBM round trip).
    return conv_bn(y, p["w2"], p["bn2_scale"], p["bn2_shift"],
                   stride=1, pad=1, relu=True, residual=sc)


def init_params(key, in_channel, in_size, res_num, lstm_n, lstm_dim):
    eps = 1e-5

    # BatchNorm eval with default stats: gamma=1, beta=0, mean=0, var=1
    # (real trained BN stats would be folded into scale/shift the same way).
    def bn_fold(out_ch):
        scale = jnp.full((out_ch,), 1.0 / jnp.sqrt(1.0 + eps), jnp.float32)
        shift = jnp.zeros((out_ch,), jnp.float32)
        return scale, shift

    params = {"res": [], "lstm": []}
    ch, num = in_channel, in_size
    for _ in range(res_num):
        out_ch = ch * 2
        key, k1, k2, k3 = jax.random.split(key, 4)
        s1, b1 = bn_fold(out_ch)
        s2, b2 = bn_fold(out_ch)
        ss, bs = bn_fold(out_ch)
        params["res"].append({
            "w1": 0.1 * jax.random.normal(k1, (out_ch, ch, 3, 3), jnp.float32),
            "w2": 0.1 * jax.random.normal(k2, (out_ch, out_ch, 3, 3), jnp.float32),
            "ws": 0.1 * jax.random.normal(k3, (out_ch, ch, 1, 1), jnp.float32),
            "bn1_scale": s1, "bn1_shift": b1,
            "bn2_scale": s2, "bn2_shift": b2,
            "bns_scale": ss, "bns_shift": bs,
        })
        ch = out_ch
        num = (num + 1) // 2

    in_sz = ch * num * num
    for _ in range(lstm_n):
        key, k1, k2 = jax.random.split(key, 3)
        params["lstm"].append({
            "w_ih": 0.05 * jax.random.normal(k1, (4 * lstm_dim, in_sz), jnp.float32),
            "w_hh": 0.05 * jax.random.normal(k2, (4 * lstm_dim, lstm_dim), jnp.float32),
        })
        in_sz = lstm_dim

    key, kf = jax.random.split(key)
    params["fc_w"] = 0.1 * jax.random.normal(kf, (lstm_dim, 1), jnp.float32)
    return params


def wl_forward(params, x, lstm_dim):
    """x: (b, s, c, w, h) -> (out, (h_n, c_n))   [matches _WL.forward, eval]."""
    b, s, c, w, h = x.shape
    # channel-major conv layout: (C, b*s, H, W) so conv matmuls are lane-dense.
    out = jnp.transpose(x.reshape(b * s, c, w, h), (1, 0, 2, 3))
    for blk in params["res"]:
        out = res_block(out, blk)

    C, N, Ho, Wo = out.shape
    # back to torch's (N, C, H, W) flatten order, then time-major for the LSTM
    feat = jnp.transpose(out, (1, 0, 2, 3)).reshape(b, s, C * Ho * Wo)
    cur = jnp.transpose(feat, (1, 0, 2))                        # (S, B, I)

    n_layers = len(params["lstm"])
    h_ns, c_ns = [], []
    fc_sbo = None
    for li, layer in enumerate(params["lstm"]):
        last = li == n_layers - 1
        seq, h_n, c_n = lstm_layer(cur, layer["w_ih"], layer["w_hh"], lstm_dim,
                                   fc_w=params["fc_w"] if last else None)
        h_ns.append(h_n)
        c_ns.append(c_n)
        if last:
            fc_sbo = seq                  # (S, B, 1): fused Linear+Sigmoid head
        else:
            cur = seq                     # inter-layer dropout: identity (eval)

    out_bso = jnp.transpose(fc_sbo, (1, 0, 2))                  # (b, s, 1)
    # torch's .squeeze() removes all unit dims; same semantics here.
    out_final = jnp.squeeze(out_bso)
    return out_final, (jnp.stack(h_ns), jnp.stack(c_ns))


# --------------------------------------------------------------------------

if __name__ == "__main__":
    # Small shapes consistent with the module: (b, s, c, w, h)
    B, S = 2, 16
    IN_CH, IN_SIZE = 2, 16
    RES_NUM, LSTM_N, LSTM_DIM = 2, 2, 32

    key = jax.random.PRNGKey(0)
    kp, kx = jax.random.split(key)
    params = init_params(kp, IN_CH, IN_SIZE, RES_NUM, LSTM_N, LSTM_DIM)
    x = jax.random.normal(kx, (B, S, IN_CH, IN_SIZE, IN_SIZE), jnp.float32)

    fwd = jax.jit(functools.partial(wl_forward, lstm_dim=LSTM_DIM))
    out, (h_n, c_n) = fwd(params, x)
    jax.block_until_ready((out, h_n, c_n))

    assert out.shape == (B, S), out.shape
    assert h_n.shape == (LSTM_N, B, LSTM_DIM), h_n.shape
    assert c_n.shape == (LSTM_N, B, LSTM_DIM), c_n.shape
    assert bool(jnp.all(jnp.isfinite(out)))
    print("KERNEL_OK")
</pallas_src>

<mosaic_0001>
module attributes {stable_mosaic.version = 11 : i64} {
  func.func @kernel(%arg0: i32, %arg1: i32, %arg2: i32, %arg3: memref<8x128xbf16, #tpu.memory_space<vmem>>, %arg4: memref<128x256xbf16, #tpu.memory_space<vmem>>, %arg5: memref<8x1xf32, #tpu.memory_space<vmem>>, %arg6: memref<8x1xf32, #tpu.memory_space<vmem>>, %arg7: memref<8x256xf32, #tpu.memory_space<vmem>>, %arg8: memref<8x256xf32, #tpu.memory_space<vmem>>) attributes {dimension_semantics = [#tpu.dimension_semantics<parallel>, #tpu.dimension_semantics<parallel>, #tpu.dimension_semantics<arbitrary>], iteration_bounds = array<i64: 1, 8, 1>, scalar_prefetch = 0 : i64, scratch_operands = 1 : i64, tpu.core_type = #tpu.core_type<tc>, window_params = [{transform_indices = @transform_0, window_bounds = array<i64: 8, 128>}, {transform_indices = @transform_1, window_bounds = array<i64: 128, 256>}, {transform_indices = @transform_2, window_bounds = array<i64: 8, 1>}, {transform_indices = @transform_3, window_bounds = array<i64: 8, 1>}, {transform_indices = @transform_4, window_bounds = array<i64: 8, 256>}]} {
    %c0_i32 = arith.constant 0 : i32
    %0 = arith.cmpi eq, %arg2, %c0_i32 : i32
    %1 = arith.extui %0 : i1 to i32
    %c0_i32_0 = arith.constant 0 : i32
    %2 = arith.cmpi ne, %1, %c0_i32_0 : i32
    scf.if %2 {
      %cst_10 = arith.constant 0.000000e+00 : f32
      %12 = vector.broadcast %cst_10 : f32 to vector<8x256xf32>
      %c0_11 = arith.constant 0 : index
      %c0_12 = arith.constant 0 : index
      %13 = vector.load %arg8[%c0_11, %c0_12] : memref<8x256xf32, #tpu.memory_space<vmem>>, vector<8x256xf32>
      tpu.vector_store %arg8[%c0_11, %c0_12], %12 {strides = array<i32>} : memref<8x256xf32, #tpu.memory_space<vmem>>, vector<8x256xf32>,
    } else {
    }
    %c0 = arith.constant 0 : index
    %c0_1 = arith.constant 0 : index
    %3 = vector.load %arg8[%c0, %c0_1] : memref<8x256xf32, #tpu.memory_space<vmem>>, vector<8x256xf32>
    %c0_2 = arith.constant 0 : index
    %c0_3 = arith.constant 0 : index
    %4 = vector.load %arg3[%c0_2, %c0_3] : memref<8x128xbf16, #tpu.memory_space<vmem>>, vector<8x128xbf16>
    %c0_4 = arith.constant 0 : index
    %c0_5 = arith.constant 0 : index
    %5 = vector.load %arg4[%c0_4, %c0_5] : memref<128x256xbf16, #tpu.memory_space<vmem>>, vector<128x256xbf16>
    %cst = arith.constant dense<0.000000e+00> : vector<8x256xf32>
    %6 = tpu.matmul %4, %5, %cst {dimension_numbers = #tpu.dot_dimension_numbers<[1], [0], [0], [1], [0, 0, 1, 1], [], []>} : vector<8x128xbf16>, vector<128x256xbf16>, vector<8x256xf32> -> vector<8x256xf32>
    %7 = arith.addf %3, %6 : vector<8x256xf32>
    %c0_6 = arith.constant 0 : index
    %c0_7 = arith.constant 0 : index
    %8 = vector.load %arg8[%c0_6, %c0_7] : memref<8x256xf32, #tpu.memory_space<vmem>>, vector<8x256xf32>
    tpu.vector_store %arg8[%c0_6, %c0_7], %7 {strides = array<i32>} : memref<8x256xf32, #tpu.memory_space<vmem>>, vector<8x256xf32>,
    %c0_i32_8 = arith.constant 0 : i32
    %9 = arith.cmpi eq, %arg2, %c0_i32_8 : i32
    %10 = arith.extui %9 : i1 to i32
    %c0_i32_9 = arith.constant 0 : i32
    %11 = arith.cmpi ne, %10, %c0_i32_9 : i32
    scf.if %11 {
      %c0_10 = arith.constant 0 : index
      %c0_11 = arith.constant 0 : index
      %12 = vector.load %arg8[%c0_10, %c0_11] : memref<8x256xf32, #tpu.memory_space<vmem>>, vector<8x256xf32>
      %c0_12 = arith.constant 0 : index
      %c0_13 = arith.constant 0 : index
      %13 = vector.load %arg5[%c0_12, %c0_13] : memref<8x1xf32, #tpu.memory_space<vmem>>, vector<8x1xf32>
      %14 = vector.broadcast %13 : vector<8x1xf32> to vector<8x256xf32>
      %15 = arith.mulf %12, %14 : vector<8x256xf32>
      %c0_14 = arith.constant 0 : index
      %c0_15 = arith.constant 0 : index
      %16 = vector.load %arg6[%c0_14, %c0_15] : memref<8x1xf32, #tpu.memory_space<vmem>>, vector<8x1xf32>
      %17 = vector.broadcast %16 : vector<8x1xf32> to vector<8x256xf32>
      %18 = arith.addf %15, %17 : vector<8x256xf32>
      %c0_16 = arith.constant 0 : index
      %c0_17 = arith.constant 0 : index
      %19 = vector.load %arg7[%c0_16, %c0_17] : memref<8x256xf32, #tpu.memory_space<vmem>>, vector<8x256xf32>
      tpu.vector_store %arg7[%c0_16, %c0_17], %18 {strides = array<i32>} : memref<8x256xf32, #tpu.memory_space<vmem>>, vector<8x256xf32>,
    } else {
    }
    return
  }
  func.func @transform_0(%arg0: i32, %arg1: i32, %arg2: i32) -> (i32, i32) {
    %c0_i32 = arith.constant 0 : i32
    return %arg0, %arg2 : i32, i32
  }
  func.func @transform_1(%arg0: i32, %arg1: i32, %arg2: i32) -> (i32, i32) {
    %c0_i32 = arith.constant 0 : i32
    return %arg2, %arg1 : i32, i32
  }
  func.func @transform_2(%arg0: i32, %arg1: i32, %arg2: i32) -> (i32, i32) {
    %c0_i32 = arith.constant 0 : i32
    %c0_i32_0 = arith.constant 0 : i32
    return %arg0, %c0_i32 : i32, i32
  }
  func.func @transform_3(%arg0: i32, %arg1: i32, %arg2: i32) -> (i32, i32) {
    %c0_i32 = arith.constant 0 : i32
    %c0_i32_0 = arith.constant 0 : i32
    return %arg0, %c0_i32 : i32, i32
  }
  func.func @transform_4(%arg0: i32, %arg1: i32, %arg2: i32) -> (i32, i32) {
    %c0_i32 = arith.constant 0 : i32
    return %arg0, %arg1 : i32, i32
  }
}

module attributes {stable_mosaic.version = 11 : i64} {
  func.func @kernel(%arg0: i32, %arg1: i32, %arg2: i32, %arg3: memref<8x128xbf16, #tpu.memory_space<vmem>>, %arg4: memref<128x256xbf16, #tpu.memory_space<vmem>>, %arg5: memref<8x1xf32, #tpu.memory_space<vmem>>, %arg6: memref<8x1xf32, #tpu.memory_space<vmem>>, %arg7: memref<8x256xf32, #tpu.memory_space<vmem>>, %arg8: memref<8x256xf32, #tpu.memory_space<vmem>>) attributes {dimension_semantics = [#tpu.dimension_semantics<parallel>, #tpu.dimension_semantics<parallel>, #tpu.dimension_semantics<arbitrary>], iteration_bounds = array<i64: 1, 8, 1>, scalar_prefetch = 0 : i64, scratch_operands = 1 : i64, tpu.core_type = #tpu.core_type<tc>, window_params = [{transform_indices = @transform_0, window_bounds = array<i64: 8, 128>}, {transform_indices = @transform_1, window_bounds = array<i64: 128, 256>}, {transform_indices = @transform_2, window_bounds = array<i64: 8, 1>}, {transform_indices = @transform_3, window_bounds = array<i64: 8, 1>}, {transform_indices = @transform_4, window_bounds = array<i64: 8, 256>}]} {
    %c0_i32 = arith.constant 0 : i32
    %0 = arith.cmpi eq, %arg2, %c0_i32 : i32
    %1 = arith.extui %0 : i1 to i32
    %c0_i32_0 = arith.constant 0 : i32
    %2 = arith.cmpi ne, %1, %c0_i32_0 : i32
    scf.if %2 {
      %cst_10 = arith.constant 0.000000e+00 : f32
      %12 = vector.broadcast %cst_10 : f32 to vector<8x256xf32>
      %c0_11 = arith.constant 0 : index
      %c0_12 = arith.constant 0 : index
      %13 = vector.load %arg8[%c0_11, %c0_12] : memref<8x256xf32, #tpu.memory_space<vmem>>, vector<8x256xf32>
      tpu.vector_store %arg8[%c0_11, %c0_12], %12 {strides = array<i32>} : memref<8x256xf32, #tpu.memory_space<vmem>>, vector<8x256xf32>,
    } else {
    }
    %c0 = arith.constant 0 : index
    %c0_1 = arith.constant 0 : index
    %3 = vector.load %arg8[%c0, %c0_1] : memref<8x256xf32, #tpu.memory_space<vmem>>, vector<8x256xf32>
    %c0_2 = arith.constant 0 : index
    %c0_3 = arith.constant 0 : index
    %4 = vector.load %arg3[%c0_2, %c0_3] : memref<8x128xbf16, #tpu.memory_space<vmem>>, vector<8x128xbf16>
    %c0_4 = arith.constant 0 : index
    %c0_5 = arith.constant 0 : index
    %5 = vector.load %arg4[%c0_4, %c0_5] : memref<128x256xbf16, #tpu.memory_space<vmem>>, vector<128x256xbf16>
    %cst = arith.constant dense<0.000000e+00> : vector<8x256xf32>
    %6 = tpu.matmul %4, %5, %cst {dimension_numbers = #tpu.dot_dimension_numbers<[1], [0], [0], [1], [0, 0, 1, 1], [], []>} : vector<8x128xbf16>, vector<128x256xbf16>, vector<8x256xf32> -> vector<8x256xf32>
    %7 = arith.addf %3, %6 : vector<8x256xf32>
    %c0_6 = arith.constant 0 : index
    %c0_7 = arith.constant 0 : index
    %8 = vector.load %arg8[%c0_6, %c0_7] : memref<8x256xf32, #tpu.memory_space<vmem>>, vector<8x256xf32>
    tpu.vector_store %arg8[%c0_6, %c0_7], %7 {strides = array<i32>} : memref<8x256xf32, #tpu.memory_space<vmem>>, vector<8x256xf32>,
    %c0_i32_8 = arith.constant 0 : i32
    %9 = arith.cmpi eq, %arg2, %c0_i32_8 : i32
    %10 = arith.extui %9 : i1 to i32
    %c0_i32_9 = arith.constant 0 : i32
    %11 = arith.cmpi ne, %10, %c0_i32_9 : i32
    scf.if %11 {
      %c0_10 = arith.constant 0 : index
      %c0_11 = arith.constant 0 : index
      %12 = vector.load %arg8[%c0_10, %c0_11] : memref<8x256xf32, #tpu.memory_space<vmem>>, vector<8x256xf32>
      %c0_12 = arith.constant 0 : index
      %c0_13 = arith.constant 0 : index
      %13 = vector.load %arg5[%c0_12, %c0_13] : memref<8x1xf32, #tpu.memory_space<vmem>>, vector<8x1xf32>
      %14 = vector.broadcast %13 : vector<8x1xf32> to vector<8x256xf32>
      %15 = arith.mulf %12, %14 : vector<8x256xf32>
      %c0_14 = arith.constant 0 : index
      %c0_15 = arith.constant 0 : index
      %16 = vector.load %arg6[%c0_14, %c0_15] : memref<8x1xf32, #tpu.memory_space<vmem>>, vector<8x1xf32>
      %17 = vector.broadcast %16 : vector<8x1xf32> to vector<8x256xf32>
      %18 = arith.addf %15, %17 : vector<8x256xf32>
      %cst_16 = arith.constant 0.000000e+00 : f32
      %19 = vector.broadcast %cst_16 : f32 to vector<8x256xf32>
      %20 = arith.maximumf %18, %19 : vector<8x256xf32>
      %c0_17 = arith.constant 0 : index
      %c0_18 = arith.constant 0 : index
      %21 = vector.load %arg7[%c0_17, %c0_18] : memref<8x256xf32, #tpu.memory_space<vmem>>, vector<8x256xf32>
      tpu.vector_store %arg7[%c0_17, %c0_18], %20 {strides = array<i32>} : memref<8x256xf32, #tpu.memory_space<vmem>>, vector<8x256xf32>,
    } else {
    }
    return
  }
  func.func @transform_0(%arg0: i32, %arg1: i32, %arg2: i32) -> (i32, i32) {
    %c0_i32 = arith.constant 0 : i32
    return %arg0, %arg2 : i32, i32
  }
  func.func @transform_1(%arg0: i32, %arg1: i32, %arg2: i32) -> (i32, i32) {
    %c0_i32 = arith.constant 0 : i32
    return %arg2, %arg1 : i32, i32
  }
  func.func @transform_2(%arg0: i32, %arg1: i32, %arg2: i32) -> (i32, i32) {
    %c0_i32 = arith.constant 0 : i32
    %c0_i32_0 = arith.constant 0 : i32
    return %arg0, %c0_i32 : i32, i32
  }
  func.func @transform_3(%arg0: i32, %arg1: i32, %arg2: i32) -> (i32, i32) {
    %c0_i32 = arith.constant 0 : i32
    %c0_i32_0 = arith.constant 0 : i32
    return %arg0, %c0_i32 : i32, i32
  }
  func.func @transform_4(%arg0: i32, %arg1: i32, %arg2: i32) -> (i32, i32) {
    %c0_i32 = arith.constant 0 : i32
    return %arg0, %arg1 : i32, i32
  }
}

module attributes {stable_mosaic.version = 11 : i64} {
  func.func @kernel(%arg0: i32, %arg1: i32, %arg2: i32, %arg3: memref<8x128xbf16, #tpu.memory_space<vmem>>, %arg4: memref<128x256xbf16, #tpu.memory_space<vmem>>, %arg5: memref<8x1xf32, #tpu.memory_space<vmem>>, %arg6: memref<8x1xf32, #tpu.memory_space<vmem>>, %arg7: memref<8x256xf32, #tpu.memory_space<vmem>>, %arg8: memref<8x256xf32, #tpu.memory_space<vmem>>, %arg9: memref<8x256xf32, #tpu.memory_space<vmem>>) attributes {dimension_semantics = [#tpu.dimension_semantics<parallel>, #tpu.dimension_semantics<parallel>, #tpu.dimension_semantics<arbitrary>], iteration_bounds = array<i64: 1, 8, 1>, scalar_prefetch = 0 : i64, scratch_operands = 1 : i64, tpu.core_type = #tpu.core_type<tc>, window_params = [{transform_indices = @transform_0, window_bounds = array<i64: 8, 128>}, {transform_indices = @transform_1, window_bounds = array<i64: 128, 256>}, {transform_indices = @transform_2, window_bounds = array<i64: 8, 1>}, {transform_indices = @transform_3, window_bounds = array<i64: 8, 1>}, {transform_indices = @transform_4, window_bounds = array<i64: 8, 256>}, {transform_indices = @transform_5, window_bounds = array<i64: 8, 256>}]} {
    %c0_i32 = arith.constant 0 : i32
    %0 = arith.cmpi eq, %arg2, %c0_i32 : i32
    %1 = arith.extui %0 : i1 to i32
    %c0_i32_0 = arith.constant 0 : i32
    %2 = arith.cmpi ne, %1, %c0_i32_0 : i32
    scf.if %2 {
      %cst_10 = arith.constant 0.000000e+00 : f32
      %12 = vector.broadcast %cst_10 : f32 to vector<8x256xf32>
      %c0_11 = arith.constant 0 : index
      %c0_12 = arith.constant 0 : index
      %13 = vector.load %arg9[%c0_11, %c0_12] : memref<8x256xf32, #tpu.memory_space<vmem>>, vector<8x256xf32>
      tpu.vector_store %arg9[%c0_11, %c0_12], %12 {strides = array<i32>} : memref<8x256xf32, #tpu.memory_space<vmem>>, vector<8x256xf32>,
    } else {
    }
    %c0 = arith.constant 0 : index
    %c0_1 = arith.constant 0 : index
    %3 = vector.load %arg9[%c0, %c0_1] : memref<8x256xf32, #tpu.memory_space<vmem>>, vector<8x256xf32>
    %c0_2 = arith.constant 0 : index
    %c0_3 = arith.constant 0 : index
    %4 = vector.load %arg3[%c0_2, %c0_3] : memref<8x128xbf16, #tpu.memory_space<vmem>>, vector<8x128xbf16>
    %c0_4 = arith.constant 0 : index
    %c0_5 = arith.constant 0 : index
    %5 = vector.load %arg4[%c0_4, %c0_5] : memref<128x256xbf16, #tpu.memory_space<vmem>>, vector<128x256xbf16>
    %cst = arith.constant dense<0.000000e+00> : vector<8x256xf32>
    %6 = tpu.matmul %4, %5, %cst {dimension_numbers = #tpu.dot_dimension_numbers<[1], [0], [0], [1], [0, 0, 1, 1], [], []>} : vector<8x128xbf16>, vector<128x256xbf16>, vector<8x256xf32> -> vector<8x256xf32>
    %7 = arith.addf %3, %6 : vector<8x256xf32>
    %c0_6 = arith.constant 0 : index
    %c0_7 = arith.constant 0 : index
    %8 = vector.load %arg9[%c0_6, %c0_7] : memref<8x256xf32, #tpu.memory_space<vmem>>, vector<8x256xf32>
    tpu.vector_store %arg9[%c0_6, %c0_7], %7 {strides = array<i32>} : memref<8x256xf32, #tpu.memory_space<vmem>>, vector<8x256xf32>,
    %c0_i32_8 = arith.constant 0 : i32
    %9 = arith.cmpi eq, %arg2, %c0_i32_8 : i32
    %10 = arith.extui %9 : i1 to i32
    %c0_i32_9 = arith.constant 0 : i32
    %11 = arith.cmpi ne, %10, %c0_i32_9 : i32
    scf.if %11 {
      %c0_10 = arith.constant 0 : index
      %c0_11 = arith.constant 0 : index
      %12 = vector.load %arg9[%c0_10, %c0_11] : memref<8x256xf32, #tpu.memory_space<vmem>>, vector<8x256xf32>
      %c0_12 = arith.constant 0 : index
      %c0_13 = arith.constant 0 : index
      %13 = vector.load %arg5[%c0_12, %c0_13] : memref<8x1xf32, #tpu.memory_space<vmem>>, vector<8x1xf32>
      %14 = vector.broadcast %13 : vector<8x1xf32> to vector<8x256xf32>
      %15 = arith.mulf %12, %14 : vector<8x256xf32>
      %c0_14 = arith.constant 0 : index
      %c0_15 = arith.constant 0 : index
      %16 = vector.load %arg6[%c0_14, %c0_15] : memref<8x1xf32, #tpu.memory_space<vmem>>, vector<8x1xf32>
      %17 = vector.broadcast %16 : vector<8x1xf32> to vector<8x256xf32>
      %18 = arith.addf %15, %17 : vector<8x256xf32>
      %c0_16 = arith.constant 0 : index
      %c0_17 = arith.constant 0 : index
      %19 = vector.load %arg7[%c0_16, %c0_17] : memref<8x256xf32, #tpu.memory_space<vmem>>, vector<8x256xf32>
      %20 = arith.addf %18, %19 : vector<8x256xf32>
      %cst_18 = arith.constant 0.000000e+00 : f32
      %21 = vector.broadcast %cst_18 : f32 to vector<8x256xf32>
      %22 = arith.maximumf %20, %21 : vector<8x256xf32>
      %c0_19 = arith.constant 0 : index
      %c0_20 = arith.constant 0 : index
      %23 = vector.load %arg8[%c0_19, %c0_20] : memref<8x256xf32, #tpu.memory_space<vmem>>, vector<8x256xf32>
      tpu.vector_store %arg8[%c0_19, %c0_20], %22 {strides = array<i32>} : memref<8x256xf32, #tpu.memory_space<vmem>>, vector<8x256xf32>,
    } else {
    }
    return
  }
  func.func @transform_0(%arg0: i32, %arg1: i32, %arg2: i32) -> (i32, i32) {
    %c0_i32 = arith.constant 0 : i32
    return %arg0, %arg2 : i32, i32
  }
  func.func @transform_1(%arg0: i32, %arg1: i32, %arg2: i32) -> (i32, i32) {
    %c0_i32 = arith.constant 0 : i32
    return %arg2, %arg1 : i32, i32
  }
  func.func @transform_2(%arg0: i32, %arg1: i32, %arg2: i32) -> (i32, i32) {
    %c0_i32 = arith.constant 0 : i32
    %c0_i32_0 = arith.constant 0 : i32
    return %arg0, %c0_i32 : i32, i32
  }
  func.func @transform_3(%arg0: i32, %arg1: i32, %arg2: i32) -> (i32, i32) {
    %c0_i32 = arith.constant 0 : i32
    %c0_i32_0 = arith.constant 0 : i32
    return %arg0, %c0_i32 : i32, i32
  }
  func.func @transform_4(%arg0: i32, %arg1: i32, %arg2: i32) -> (i32, i32) {
    %c0_i32 = arith.constant 0 : i32
    return %arg0, %arg1 : i32, i32
  }
  func.func @transform_5(%arg0: i32, %arg1: i32, %arg2: i32) -> (i32, i32) {
    %c0_i32 = arith.constant 0 : i32
    return %arg0, %arg1 : i32, i32
  }
}

module attributes {stable_mosaic.version = 11 : i64} {
  func.func @kernel(%arg0: i32, %arg1: i32, %arg2: i32, %arg3: memref<8x128xbf16, #tpu.memory_space<vmem>>, %arg4: memref<128x256xbf16, #tpu.memory_space<vmem>>, %arg5: memref<8x1xf32, #tpu.memory_space<vmem>>, %arg6: memref<8x1xf32, #tpu.memory_space<vmem>>, %arg7: memref<8x256xf32, #tpu.memory_space<vmem>>, %arg8: memref<8x256xf32, #tpu.memory_space<vmem>>) attributes {dimension_semantics = [#tpu.dimension_semantics<parallel>, #tpu.dimension_semantics<parallel>, #tpu.dimension_semantics<arbitrary>], iteration_bounds = array<i64: 1, 2, 1>, scalar_prefetch = 0 : i64, scratch_operands = 1 : i64, tpu.core_type = #tpu.core_type<tc>, window_params = [{transform_indices = @transform_0, window_bounds = array<i64: 8, 128>}, {transform_indices = @transform_1, window_bounds = array<i64: 128, 256>}, {transform_indices = @transform_2, window_bounds = array<i64: 8, 1>}, {transform_indices = @transform_3, window_bounds = array<i64: 8, 1>}, {transform_indices = @transform_4, window_bounds = array<i64: 8, 256>}]} {
    %c0_i32 = arith.constant 0 : i32
    %0 = arith.cmpi eq, %arg2, %c0_i32 : i32
    %1 = arith.extui %0 : i1 to i32
    %c0_i32_0 = arith.constant 0 : i32
    %2 = arith.cmpi ne, %1, %c0_i32_0 : i32
    scf.if %2 {
      %cst_10 = arith.constant 0.000000e+00 : f32
      %12 = vector.broadcast %cst_10 : f32 to vector<8x256xf32>
      %c0_11 = arith.constant 0 : index
      %c0_12 = arith.constant 0 : index
      %13 = vector.load %arg8[%c0_11, %c0_12] : memref<8x256xf32, #tpu.memory_space<vmem>>, vector<8x256xf32>
      tpu.vector_store %arg8[%c0_11, %c0_12], %12 {strides = array<i32>} : memref<8x256xf32, #tpu.memory_space<vmem>>, vector<8x256xf32>,
    } else {
    }
    %c0 = arith.constant 0 : index
    %c0_1 = arith.constant 0 : index
    %3 = vector.load %arg8[%c0, %c0_1] : memref<8x256xf32, #tpu.memory_space<vmem>>, vector<8x256xf32>
    %c0_2 = arith.constant 0 : index
    %c0_3 = arith.constant 0 : index
    %4 = vector.load %arg3[%c0_2, %c0_3] : memref<8x128xbf16, #tpu.memory_space<vmem>>, vector<8x128xbf16>
    %c0_4 = arith.constant 0 : index
    %c0_5 = arith.constant 0 : index
    %5 = vector.load %arg4[%c0_4, %c0_5] : memref<128x256xbf16, #tpu.memory_space<vmem>>, vector<128x256xbf16>
    %cst = arith.constant dense<0.000000e+00> : vector<8x256xf32>
    %6 = tpu.matmul %4, %5, %cst {dimension_numbers = #tpu.dot_dimension_numbers<[1], [0], [0], [1], [0, 0, 1, 1], [], []>} : vector<8x128xbf16>, vector<128x256xbf16>, vector<8x256xf32> -> vector<8x256xf32>
    %7 = arith.addf %3, %6 : vector<8x256xf32>
    %c0_6 = arith.constant 0 : index
    %c0_7 = arith.constant 0 : index
    %8 = vector.load %arg8[%c0_6, %c0_7] : memref<8x256xf32, #tpu.memory_space<vmem>>, vector<8x256xf32>
    tpu.vector_store %arg8[%c0_6, %c0_7], %7 {strides = array<i32>} : memref<8x256xf32, #tpu.memory_space<vmem>>, vector<8x256xf32>,
    %c0_i32_8 = arith.constant 0 : i32
    %9 = arith.cmpi eq, %arg2, %c0_i32_8 : i32
    %10 = arith.extui %9 : i1 to i32
    %c0_i32_9 = arith.constant 0 : i32
    %11 = arith.cmpi ne, %10, %c0_i32_9 : i32
    scf.if %11 {
      %c0_10 = arith.constant 0 : index
      %c0_11 = arith.constant 0 : index
      %12 = vector.load %arg8[%c0_10, %c0_11] : memref<8x256xf32, #tpu.memory_space<vmem>>, vector<8x256xf32>
      %c0_12 = arith.constant 0 : index
      %c0_13 = arith.constant 0 : index
      %13 = vector.load %arg5[%c0_12, %c0_13] : memref<8x1xf32, #tpu.memory_space<vmem>>, vector<8x1xf32>
      %14 = vector.broadcast %13 : vector<8x1xf32> to vector<8x256xf32>
      %15 = arith.mulf %12, %14 : vector<8x256xf32>
      %c0_14 = arith.constant 0 : index
      %c0_15 = arith.constant 0 : index
      %16 = vector.load %arg6[%c0_14, %c0_15] : memref<8x1xf32, #tpu.memory_space<vmem>>, vector<8x1xf32>
      %17 = vector.broadcast %16 : vector<8x1xf32> to vector<8x256xf32>
      %18 = arith.addf %15, %17 : vector<8x256xf32>
      %c0_16 = arith.constant 0 : index
      %c0_17 = arith.constant 0 : index
      %19 = vector.load %arg7[%c0_16, %c0_17] : memref<8x256xf32, #tpu.memory_space<vmem>>, vector<8x256xf32>
      tpu.vector_store %arg7[%c0_16, %c0_17], %18 {strides = array<i32>} : memref<8x256xf32, #tpu.memory_space<vmem>>, vector<8x256xf32>,
    } else {
    }
    return
  }
  func.func @transform_0(%arg0: i32, %arg1: i32, %arg2: i32) -> (i32, i32) {
    %c0_i32 = arith.constant 0 : i32
    return %arg0, %arg2 : i32, i32
  }
  func.func @transform_1(%arg0: i32, %arg1: i32, %arg2: i32) -> (i32, i32) {
    %c0_i32 = arith.constant 0 : i32
    return %arg2, %arg1 : i32, i32
  }
  func.func @transform_2(%arg0: i32, %arg1: i32, %arg2: i32) -> (i32, i32) {
    %c0_i32 = arith.constant 0 : i32
    %c0_i32_0 = arith.constant 0 : i32
    return %arg0, %c0_i32 : i32, i32
  }
  func.func @transform_3(%arg0: i32, %arg1: i32, %arg2: i32) -> (i32, i32) {
    %c0_i32 = arith.constant 0 : i32
    %c0_i32_0 = arith.constant 0 : i32
    return %arg0, %c0_i32 : i32, i32
  }
  func.func @transform_4(%arg0: i32, %arg1: i32, %arg2: i32) -> (i32, i32) {
    %c0_i32 = arith.constant 0 : i32
    return %arg0, %arg1 : i32, i32
  }
}

module attributes {stable_mosaic.version = 11 : i64} {
  func.func @kernel(%arg0: i32, %arg1: i32, %arg2: i32, %arg3: memref<8x128xbf16, #tpu.memory_space<vmem>>, %arg4: memref<128x256xbf16, #tpu.memory_space<vmem>>, %arg5: memref<8x1xf32, #tpu.memory_space<vmem>>, %arg6: memref<8x1xf32, #tpu.memory_space<vmem>>, %arg7: memref<8x256xf32, #tpu.memory_space<vmem>>, %arg8: memref<8x256xf32, #tpu.memory_space<vmem>>) attributes {dimension_semantics = [#tpu.dimension_semantics<parallel>, #tpu.dimension_semantics<parallel>, #tpu.dimension_semantics<arbitrary>], iteration_bounds = array<i64: 1, 2, 1>, scalar_prefetch = 0 : i64, scratch_operands = 1 : i64, tpu.core_type = #tpu.core_type<tc>, window_params = [{transform_indices = @transform_0, window_bounds = array<i64: 8, 128>}, {transform_indices = @transform_1, window_bounds = array<i64: 128, 256>}, {transform_indices = @transform_2, window_bounds = array<i64: 8, 1>}, {transform_indices = @transform_3, window_bounds = array<i64: 8, 1>}, {transform_indices = @transform_4, window_bounds = array<i64: 8, 256>}]} {
    %c0_i32 = arith.constant 0 : i32
    %0 = arith.cmpi eq, %arg2, %c0_i32 : i32
    %1 = arith.extui %0 : i1 to i32
    %c0_i32_0 = arith.constant 0 : i32
    %2 = arith.cmpi ne, %1, %c0_i32_0 : i32
    scf.if %2 {
      %cst_10 = arith.constant 0.000000e+00 : f32
      %12 = vector.broadcast %cst_10 : f32 to vector<8x256xf32>
      %c0_11 = arith.constant 0 : index
      %c0_12 = arith.constant 0 : index
      %13 = vector.load %arg8[%c0_11, %c0_12] : memref<8x256xf32, #tpu.memory_space<vmem>>, vector<8x256xf32>
      tpu.vector_store %arg8[%c0_11, %c0_12], %12 {strides = array<i32>} : memref<8x256xf32, #tpu.memory_space<vmem>>, vector<8x256xf32>,
    } else {
    }
    %c0 = arith.constant 0 : index
    %c0_1 = arith.constant 0 : index
    %3 = vector.load %arg8[%c0, %c0_1] : memref<8x256xf32, #tpu.memory_space<vmem>>, vector<8x256xf32>
    %c0_2 = arith.constant 0 : index
    %c0_3 = arith.constant 0 : index
    %4 = vector.load %arg3[%c0_2, %c0_3] : memref<8x128xbf16, #tpu.memory_space<vmem>>, vector<8x128xbf16>
    %c0_4 = arith.constant 0 : index
    %c0_5 = arith.constant 0 : index
    %5 = vector.load %arg4[%c0_4, %c0_5] : memref<128x256xbf16, #tpu.memory_space<vmem>>, vector<128x256xbf16>
    %cst = arith.constant dense<0.000000e+00> : vector<8x256xf32>
    %6 = tpu.matmul %4, %5, %cst {dimension_numbers = #tpu.dot_dimension_numbers<[1], [0], [0], [1], [0, 0, 1, 1], [], []>} : vector<8x128xbf16>, vector<128x256xbf16>, vector<8x256xf32> -> vector<8x256xf32>
    %7 = arith.addf %3, %6 : vector<8x256xf32>
    %c0_6 = arith.constant 0 : index
    %c0_7 = arith.constant 0 : index
    %8 = vector.load %arg8[%c0_6, %c0_7] : memref<8x256xf32, #tpu.memory_space<vmem>>, vector<8x256xf32>
    tpu.vector_store %arg8[%c0_6, %c0_7], %7 {strides = array<i32>} : memref<8x256xf32, #tpu.memory_space<vmem>>, vector<8x256xf32>,
    %c0_i32_8 = arith.constant 0 : i32
    %9 = arith.cmpi eq, %arg2, %c0_i32_8 : i32
    %10 = arith.extui %9 : i1 to i32
    %c0_i32_9 = arith.constant 0 : i32
    %11 = arith.cmpi ne, %10, %c0_i32_9 : i32
    scf.if %11 {
      %c0_10 = arith.constant 0 : index
      %c0_11 = arith.constant 0 : index
      %12 = vector.load %arg8[%c0_10, %c0_11] : memref<8x256xf32, #tpu.memory_space<vmem>>, vector<8x256xf32>
      %c0_12 = arith.constant 0 : index
      %c0_13 = arith.constant 0 : index
      %13 = vector.load %arg5[%c0_12, %c0_13] : memref<8x1xf32, #tpu.memory_space<vmem>>, vector<8x1xf32>
      %14 = vector.broadcast %13 : vector<8x1xf32> to vector<8x256xf32>
      %15 = arith.mulf %12, %14 : vector<8x256xf32>
      %c0_14 = arith.constant 0 : index
      %c0_15 = arith.constant 0 : index
      %16 = vector.load %arg6[%c0_14, %c0_15] : memref<8x1xf32, #tpu.memory_space<vmem>>, vector<8x1xf32>
      %17 = vector.broadcast %16 : vector<8x1xf32> to vector<8x256xf32>
      %18 = arith.addf %15, %17 : vector<8x256xf32>
      %cst_16 = arith.constant 0.000000e+00 : f32
      %19 = vector.broadcast %cst_16 : f32 to vector<8x256xf32>
      %20 = arith.maximumf %18, %19 : vector<8x256xf32>
      %c0_17 = arith.constant 0 : index
      %c0_18 = arith.constant 0 : index
      %21 = vector.load %arg7[%c0_17, %c0_18] : memref<8x256xf32, #tpu.memory_space<vmem>>, vector<8x256xf32>
      tpu.vector_store %arg7[%c0_17, %c0_18], %20 {strides = array<i32>} : memref<8x256xf32, #tpu.memory_space<vmem>>, vector<8x256xf32>,
    } else {
    }
    return
  }
  func.func @transform_0(%arg0: i32, %arg1: i32, %arg2: i32) -> (i32, i32) {
    %c0_i32 = arith.constant 0 : i32
    return %arg0, %arg2 : i32, i32
  }
  func.func @transform_1(%arg0: i32, %arg1: i32, %arg2: i32) -> (i32, i32) {
    %c0_i32 = arith.constant 0 : i32
    return %arg2, %arg1 : i32, i32
  }
  func.func @transform_2(%arg0: i32, %arg1: i32, %arg2: i32) -> (i32, i32) {
    %c0_i32 = arith.constant 0 : i32
    %c0_i32_0 = arith.constant 0 : i32
    return %arg0, %c0_i32 : i32, i32
  }
  func.func @transform_3(%arg0: i32, %arg1: i32, %arg2: i32) -> (i32, i32) {
    %c0_i32 = arith.constant 0 : i32
    %c0_i32_0 = arith.constant 0 : i32
    return %arg0, %c0_i32 : i32, i32
  }
  func.func @transform_4(%arg0: i32, %arg1: i32, %arg2: i32) -> (i32, i32) {
    %c0_i32 = arith.constant 0 : i32
    return %arg0, %arg1 : i32, i32
  }
}

module attributes {stable_mosaic.version = 11 : i64} {
  func.func @kernel(%arg0: i32, %arg1: i32, %arg2: i32, %arg3: memref<8x128xbf16, #tpu.memory_space<vmem>>, %arg4: memref<128x256xbf16, #tpu.memory_space<vmem>>, %arg5: memref<8x1xf32, #tpu.memory_space<vmem>>, %arg6: memref<8x1xf32, #tpu.memory_space<vmem>>, %arg7: memref<8x256xf32, #tpu.memory_space<vmem>>, %arg8: memref<8x256xf32, #tpu.memory_space<vmem>>, %arg9: memref<8x256xf32, #tpu.memory_space<vmem>>) attributes {dimension_semantics = [#tpu.dimension_semantics<parallel>, #tpu.dimension_semantics<parallel>, #tpu.dimension_semantics<arbitrary>], iteration_bounds = array<i64: 1, 2, 1>, scalar_prefetch = 0 : i64, scratch_operands = 1 : i64, tpu.core_type = #tpu.core_type<tc>, window_params = [{transform_indices = @transform_0, window_bounds = array<i64: 8, 128>}, {transform_indices = @transform_1, window_bounds = array<i64: 128, 256>}, {transform_indices = @transform_2, window_bounds = array<i64: 8, 1>}, {transform_indices = @transform_3, window_bounds = array<i64: 8, 1>}, {transform_indices = @transform_4, window_bounds = array<i64: 8, 256>}, {transform_indices = @transform_5, window_bounds = array<i64: 8, 256>}]} {
    %c0_i32 = arith.constant 0 : i32
    %0 = arith.cmpi eq, %arg2, %c0_i32 : i32
    %1 = arith.extui %0 : i1 to i32
    %c0_i32_0 = arith.constant 0 : i32
    %2 = arith.cmpi ne, %1, %c0_i32_0 : i32
    scf.if %2 {
      %cst_10 = arith.constant 0.000000e+00 : f32
      %12 = vector.broadcast %cst_10 : f32 to vector<8x256xf32>
      %c0_11 = arith.constant 0 : index
      %c0_12 = arith.constant 0 : index
      %13 = vector.load %arg9[%c0_11, %c0_12] : memref<8x256xf32, #tpu.memory_space<vmem>>, vector<8x256xf32>
      tpu.vector_store %arg9[%c0_11, %c0_12], %12 {strides = array<i32>} : memref<8x256xf32, #tpu.memory_space<vmem>>, vector<8x256xf32>,
    } else {
    }
    %c0 = arith.constant 0 : index
    %c0_1 = arith.constant 0 : index
    %3 = vector.load %arg9[%c0, %c0_1] : memref<8x256xf32, #tpu.memory_space<vmem>>, vector<8x256xf32>
    %c0_2 = arith.constant 0 : index
    %c0_3 = arith.constant 0 : index
    %4 = vector.load %arg3[%c0_2, %c0_3] : memref<8x128xbf16, #tpu.memory_space<vmem>>, vector<8x128xbf16>
    %c0_4 = arith.constant 0 : index
    %c0_5 = arith.constant 0 : index
    %5 = vector.load %arg4[%c0_4, %c0_5] : memref<128x256xbf16, #tpu.memory_space<vmem>>, vector<128x256xbf16>
    %cst = arith.constant dense<0.000000e+00> : vector<8x256xf32>
    %6 = tpu.matmul %4, %5, %cst {dimension_numbers = #tpu.dot_dimension_numbers<[1], [0], [0], [1], [0, 0, 1, 1], [], []>} : vector<8x128xbf16>, vector<128x256xbf16>, vector<8x256xf32> -> vector<8x256xf32>
    %7 = arith.addf %3, %6 : vector<8x256xf32>
    %c0_6 = arith.constant 0 : index
    %c0_7 = arith.constant 0 : index
    %8 = vector.load %arg9[%c0_6, %c0_7] : memref<8x256xf32, #tpu.memory_space<vmem>>, vector<8x256xf32>
    tpu.vector_store %arg9[%c0_6, %c0_7], %7 {strides = array<i32>} : memref<8x256xf32, #tpu.memory_space<vmem>>, vector<8x256xf32>,
    %c0_i32_8 = arith.constant 0 : i32
    %9 = arith.cmpi eq, %arg2, %c0_i32_8 : i32
    %10 = arith.extui %9 : i1 to i32
    %c0_i32_9 = arith.constant 0 : i32
    %11 = arith.cmpi ne, %10, %c0_i32_9 : i32
    scf.if %11 {
      %c0_10 = arith.constant 0 : index
      %c0_11 = arith.constant 0 : index
      %12 = vector.load %arg9[%c0_10, %c0_11] : memref<8x256xf32, #tpu.memory_space<vmem>>, vector<8x256xf32>
      %c0_12 = arith.constant 0 : index
      %c0_13 = arith.constant 0 : index
      %13 = vector.load %arg5[%c0_12, %c0_13] : memref<8x1xf32, #tpu.memory_space<vmem>>, vector<8x1xf32>
      %14 = vector.broadcast %13 : vector<8x1xf32> to vector<8x256xf32>
      %15 = arith.mulf %12, %14 : vector<8x256xf32>
      %c0_14 = arith.constant 0 : index
      %c0_15 = arith.constant 0 : index
      %16 = vector.load %arg6[%c0_14, %c0_15] : memref<8x1xf32, #tpu.memory_space<vmem>>, vector<8x1xf32>
      %17 = vector.broadcast %16 : vector<8x1xf32> to vector<8x256xf32>
      %18 = arith.addf %15, %17 : vector<8x256xf32>
      %c0_16 = arith.constant 0 : index
      %c0_17 = arith.constant 0 : index
      %19 = vector.load %arg7[%c0_16, %c0_17] : memref<8x256xf32, #tpu.memory_space<vmem>>, vector<8x256xf32>
      %20 = arith.addf %18, %19 : vector<8x256xf32>
      %cst_18 = arith.constant 0.000000e+00 : f32
      %21 = vector.broadcast %cst_18 : f32 to vector<8x256xf32>
      %22 = arith.maximumf %20, %21 : vector<8x256xf32>
      %c0_19 = arith.constant 0 : index
      %c0_20 = arith.constant 0 : index
      %23 = vector.load %arg8[%c0_19, %c0_20] : memref<8x256xf32, #tpu.memory_space<vmem>>, vector<8x256xf32>
      tpu.vector_store %arg8[%c0_19, %c0_20], %22 {strides = array<i32>} : memref<8x256xf32, #tpu.memory_space<vmem>>, vector<8x256xf32>,
    } else {
    }
    return
  }
  func.func @transform_0(%arg0: i32, %arg1: i32, %arg2: i32) -> (i32, i32) {
    %c0_i32 = arith.constant 0 : i32
    return %arg0, %arg2 : i32, i32
  }
  func.func @transform_1(%arg0: i32, %arg1: i32, %arg2: i32) -> (i32, i32) {
    %c0_i32 = arith.constant 0 : i32
    return %arg2, %arg1 : i32, i32
  }
  func.func @transform_2(%arg0: i32, %arg1: i32, %arg2: i32) -> (i32, i32) {
    %c0_i32 = arith.constant 0 : i32
    %c0_i32_0 = arith.constant 0 : i32
    return %arg0, %c0_i32 : i32, i32
  }
  func.func @transform_3(%arg0: i32, %arg1: i32, %arg2: i32) -> (i32, i32) {
    %c0_i32 = arith.constant 0 : i32
    %c0_i32_0 = arith.constant 0 : i32
    return %arg0, %c0_i32 : i32, i32
  }
  func.func @transform_4(%arg0: i32, %arg1: i32, %arg2: i32) -> (i32, i32) {
    %c0_i32 = arith.constant 0 : i32
    return %arg0, %arg1 : i32, i32
  }
  func.func @transform_5(%arg0: i32, %arg1: i32, %arg2: i32) -> (i32, i32) {
    %c0_i32 = arith.constant 0 : i32
    return %arg0, %arg1 : i32, i32
  }
}

module attributes {stable_mosaic.version = 11 : i64} {
  func.func @kernel(%arg0: i32, %arg1: i32, %arg2: i32, %arg3: memref<32x128xbf16, #tpu.memory_space<vmem>>, %arg4: memref<128x128xbf16, #tpu.memory_space<vmem>>, %arg5: memref<32x128xf32, #tpu.memory_space<vmem>>, %arg6: memref<32x128xf32, #tpu.memory_space<vmem>>) attributes {dimension_semantics = [#tpu.dimension_semantics<parallel>, #tpu.dimension_semantics<parallel>, #tpu.dimension_semantics<arbitrary>], iteration_bounds = array<i64: 1, 1, 1>, scalar_prefetch = 0 : i64, scratch_operands = 1 : i64, tpu.core_type = #tpu.core_type<tc>, window_params = [{transform_indices = @transform_0, window_bounds = array<i64: 32, 128>}, {transform_indices = @transform_1, window_bounds = array<i64: 128, 128>}, {transform_indices = @transform_2, window_bounds = array<i64: 32, 128>}]} {
    %c0_i32 = arith.constant 0 : i32
    %0 = arith.cmpi eq, %arg2, %c0_i32 : i32
    %1 = arith.extui %0 : i1 to i32
    %c0_i32_0 = arith.constant 0 : i32
    %2 = arith.cmpi ne, %1, %c0_i32_0 : i32
    scf.if %2 {
      %cst_10 = arith.constant 0.000000e+00 : f32
      %12 = vector.broadcast %cst_10 : f32 to vector<32x128xf32>
      %c0_11 = arith.constant 0 : index
      %c0_12 = arith.constant 0 : index
      %13 = vector.load %arg6[%c0_11, %c0_12] : memref<32x128xf32, #tpu.memory_space<vmem>>, vector<32x128xf32>
      tpu.vector_store %arg6[%c0_11, %c0_12], %12 {strides = array<i32>} : memref<32x128xf32, #tpu.memory_space<vmem>>, vector<32x128xf32>,
    } else {
    }
    %c0 = arith.constant 0 : index
    %c0_1 = arith.constant 0 : index
    %3 = vector.load %arg6[%c0, %c0_1] : memref<32x128xf32, #tpu.memory_space<vmem>>, vector<32x128xf32>
    %c0_2 = arith.constant 0 : index
    %c0_3 = arith.constant 0 : index
    %4 = vector.load %arg3[%c0_2, %c0_3] : memref<32x128xbf16, #tpu.memory_space<vmem>>, vector<32x128xbf16>
    %c0_4 = arith.constant 0 : index
    %c0_5 = arith.constant 0 : index
    %5 = vector.load %arg4[%c0_4, %c0_5] : memref<128x128xbf16, #tpu.memory_space<vmem>>, vector<128x128xbf16>
    %cst = arith.constant dense<0.000000e+00> : vector<32x128xf32>
    %6 = tpu.matmul %4, %5, %cst {dimension_numbers = #tpu.dot_dimension_numbers<[1], [0], [0], [1], [0, 0, 1, 1], [], []>} : vector<32x128xbf16>, vector<128x128xbf16>, vector<32x128xf32> -> vector<32x128xf32>
    %7 = arith.addf %3, %6 : vector<32x128xf32>
    %c0_6 = arith.constant 0 : index
    %c0_7 = arith.constant 0 : index
    %8 = vector.load %arg6[%c0_6, %c0_7] : memref<32x128xf32, #tpu.memory_space<vmem>>, vector<32x128xf32>
    tpu.vector_store %arg6[%c0_6, %c0_7], %7 {strides = array<i32>} : memref<32x128xf32, #tpu.memory_space<vmem>>, vector<32x128xf32>,
    %c0_i32_8 = arith.constant 0 : i32
    %9 = arith.cmpi eq, %arg2, %c0_i32_8 : i32
    %10 = arith.extui %9 : i1 to i32
    %c0_i32_9 = arith.constant 0 : i32
    %11 = arith.cmpi ne, %10, %c0_i32_9 : i32
    scf.if %11 {
      %c0_10 = arith.constant 0 : index
      %c0_11 = arith.constant 0 : index
      %12 = vector.load %arg6[%c0_10, %c0_11] : memref<32x128xf32, #tpu.memory_space<vmem>>, vector<32x128xf32>
      %c0_12 = arith.constant 0 : index
      %c0_13 = arith.constant 0 : index
      %13 = vector.load %arg5[%c0_12, %c0_13] : memref<32x128xf32, #tpu.memory_space<vmem>>, vector<32x128xf32>
      tpu.vector_store %arg5[%c0_12, %c0_13], %12 {strides = array<i32>} : memref<32x128xf32, #tpu.memory_space<vmem>>, vector<32x128xf32>,
    } else {
    }
    return
  }
  func.func @transform_0(%arg0: i32, %arg1: i32, %arg2: i32) -> (i32, i32) {
    %c0_i32 = arith.constant 0 : i32
    return %arg0, %arg2 : i32, i32
  }
  func.func @transform_1(%arg0: i32, %arg1: i32, %arg2: i32) -> (i32, i32) {
    %c0_i32 = arith.constant 0 : i32
    return %arg2, %arg1 : i32, i32
  }
  func.func @transform_2(%arg0: i32, %arg1: i32, %arg2: i32) -> (i32, i32) {
    %c0_i32 = arith.constant 0 : i32
    return %arg0, %arg1 : i32, i32
  }
}

module attributes {stable_mosaic.version = 11 : i64} {
  func.func @_lstm_chunk_kernel(%arg0: i32, %arg1: memref<8x2x128xf32, #tpu.memory_space<vmem>>, %arg2: memref<32x128xf32, #tpu.memory_space<vmem>>, %arg3: memref<8x2x32xf32, #tpu.memory_space<vmem>>, %arg4: memref<2x32xf32, #tpu.memory_space<vmem>>, %arg5: memref<2x32xf32, #tpu.memory_space<vmem>>, %arg6: memref<2x32xf32, #tpu.memory_space<vmem>>, %arg7: memref<2x32xf32, #tpu.memory_space<vmem>>) attributes {dimension_semantics = [#tpu.dimension_semantics<arbitrary>], iteration_bounds = array<i64: 2>, scalar_prefetch = 0 : i64, scratch_operands = 2 : i64, tpu.core_type = #tpu.core_type<tc>, window_params = [{transform_indices = @transform_0, window_bounds = array<i64: 8, 2, 128>}, {pipeline_mode = #tpu.pipeline_mode<synchronous>, transform_indices = @transform_1, window_bounds = array<i64: 32, 128>}, {transform_indices = @transform_2, window_bounds = array<i64: 8, 2, 32>}, {pipeline_mode = #tpu.pipeline_mode<synchronous>, transform_indices = @transform_3, window_bounds = array<i64: 2, 32>}, {pipeline_mode = #tpu.pipeline_mode<synchronous>, transform_indices = @transform_4, window_bounds = array<i64: 2, 32>}]} {
    %c0_i32 = arith.constant 0 : i32
    %0 = arith.cmpi eq, %arg0, %c0_i32 : i32
    %1 = arith.extui %0 : i1 to i32
    %c0_i32_0 = arith.constant 0 : i32
    %2 = arith.cmpi ne, %1, %c0_i32_0 : i32
    scf.if %2 {
      %cst_146 = arith.constant 0.000000e+00 : f32
      %296 = vector.broadcast %cst_146 : f32 to vector<2x32xf32>
      %c0_147 = arith.constant 0 : index
      %c0_148 = arith.constant 0 : index
      %297 = vector.load %arg6[%c0_147, %c0_148] : memref<2x32xf32, #tpu.memory_space<vmem>>, vector<2x32xf32>
      tpu.vector_store %arg6[%c0_147, %c0_148], %296 {strides = array<i32>} : memref<2x32xf32, #tpu.memory_space<vmem>>, vector<2x32xf32>,
      %cst_149 = arith.constant 0.000000e+00 : f32
      %298 = vector.broadcast %cst_149 : f32 to vector<2x32xf32>
      %c0_150 = arith.constant 0 : index
      %c0_151 = arith.constant 0 : index
      %299 = vector.load %arg7[%c0_150, %c0_151] : memref<2x32xf32, #tpu.memory_space<vmem>>, vector<2x32xf32>
      tpu.vector_store %arg7[%c0_150, %c0_151], %298 {strides = array<i32>} : memref<2x32xf32, #tpu.memory_space<vmem>>, vector<2x32xf32>,
    } else {
    }
    %c0 = arith.constant 0 : index
    %c0_1 = arith.constant 0 : index
    %3 = vector.load %arg2[%c0, %c0_1] : memref<32x128xf32, #tpu.memory_space<vmem>>, vector<32x128xf32>
    %c0_2 = arith.constant 0 : index
    %c0_3 = arith.constant 0 : index
    %c0_4 = arith.constant 0 : index
    %4 = vector.load %arg1[%c0_2, %c0_3, %c0_4] : memref<8x2x128xf32, #tpu.memory_space<vmem>>, vector<1x2x128xf32>
    %5 = vector.shape_cast %4 : vector<1x2x128xf32> to vector<2x128xf32>
    %c0_5 = arith.constant 0 : index
    %c0_6 = arith.constant 0 : index
    %6 = vector.load %arg6[%c0_5, %c0_6] : memref<2x32xf32, #tpu.memory_space<vmem>>, vector<2x32xf32>
    %cst = arith.constant dense<0.000000e+00> : vector<2x128xf32>
    %7 = tpu.matmul %6, %3, %cst {dimension_numbers = #tpu.dot_dimension_numbers<[1], [0], [0], [1], [0, 0, 1, 1], [], []>} : vector<2x32xf32>, vector<32x128xf32>, vector<2x128xf32> -> vector<2x128xf32>
    %8 = arith.addf %5, %7 : vector<2x128xf32>
    %9 = vector.extract_strided_slice %8 {offsets = [0, 0], sizes = [2, 32], strides = [1, 1]} : vector<2x128xf32> to vector<2x32xf32>
    %10 = arith.negf %9 : vector<2x32xf32>
    %11 = math.exp %10 : vector<2x32xf32>
    %cst_7 = arith.constant 1.000000e+00 : f32
    %12 = vector.broadcast %cst_7 : f32 to vector<2x32xf32>
    %13 = arith.addf %12, %11 : vector<2x32xf32>
    %14 = arith.divf %12, %13 : vector<2x32xf32>
    %15 = vector.extract_strided_slice %8 {offsets = [0, 32], sizes = [2, 32], strides = [1, 1]} : vector<2x128xf32> to vector<2x32xf32>
    %16 = arith.negf %15 : vector<2x32xf32>
    %17 = math.exp %16 : vector<2x32xf32>
    %cst_8 = arith.constant 1.000000e+00 : f32
    %18 = vector.broadcast %cst_8 : f32 to vector<2x32xf32>
    %19 = arith.addf %18, %17 : vector<2x32xf32>
    %20 = arith.divf %18, %19 : vector<2x32xf32>
    %21 = vector.extract_strided_slice %8 {offsets = [0, 64], sizes = [2, 32], strides = [1, 1]} : vector<2x128xf32> to vector<2x32xf32>
    %22 = math.tanh %21 : vector<2x32xf32>
    %23 = vector.extract_strided_slice %8 {offsets = [0, 96], sizes = [2, 32], strides = [1, 1]} : vector<2x128xf32> to vector<2x32xf32>
    %24 = arith.negf %23 : vector<2x32xf32>
    %25 = math.exp %24 : vector<2x32xf32>
    %cst_9 = arith.constant 1.000000e+00 : f32
    %26 = vector.broadcast %cst_9 : f32 to vector<2x32xf32>
    %27 = arith.addf %26, %25 : vector<2x32xf32>
    %28 = arith.divf %26, %27 : vector<2x32xf32>
    %c0_10 = arith.constant 0 : index
    %c0_11 = arith.constant 0 : index
    %29 = vector.load %arg7[%c0_10, %c0_11] : memref<2x32xf32, #tpu.memory_space<vmem>>, vector<2x32xf32>
    %30 = arith.mulf %20, %29 : vector<2x32xf32>
    %31 = arith.mulf %14, %22 : vector<2x32xf32>
    %32 = arith.addf %30, %31 : vector<2x32xf32>
    %33 = math.tanh %32 : vector<2x32xf32>
    %34 = arith.mulf %28, %33 : vector<2x32xf32>
    %c0_12 = arith.constant 0 : index
    %c0_13 = arith.constant 0 : index
    %35 = vector.load %arg7[%c0_12, %c0_13] : memref<2x32xf32, #tpu.memory_space<vmem>>, vector<2x32xf32>
    tpu.vector_store %arg7[%c0_12, %c0_13], %32 {strides = array<i32>} : memref<2x32xf32, #tpu.memory_space<vmem>>, vector<2x32xf32>,
    %c0_14 = arith.constant 0 : index
    %c0_15 = arith.constant 0 : index
    %36 = vector.load %arg6[%c0_14, %c0_15] : memref<2x32xf32, #tpu.memory_space<vmem>>, vector<2x32xf32>
    tpu.vector_store %arg6[%c0_14, %c0_15], %34 {strides = array<i32>} : memref<2x32xf32, #tpu.memory_space<vmem>>, vector<2x32xf32>,
    %c0_16 = arith.constant 0 : index
    %c0_17 = arith.constant 0 : index
    %c0_18 = arith.constant 0 : index
    %37 = vector.load %arg3[%c0_16, %c0_17, %c0_18] : memref<8x2x32xf32, #tpu.memory_space<vmem>>, vector<1x2x32xf32>
    %38 = vector.shape_cast %37 : vector<1x2x32xf32> to vector<2x32xf32>
    %39 = vector.shape_cast %34 : vector<2x32xf32> to vector<1x2x32xf32>
    tpu.vector_store %arg3[%c0_16, %c0_17, %c0_18], %39 {strides = array<i32>} : memref<8x2x32xf32, #tpu.memory_space<vmem>>, vector<1x2x32xf32>,
    %c1 = arith.constant 1 : index
    %c0_19 = arith.constant 0 : index
    %c0_20 = arith.constant 0 : index
    %40 = vector.load %arg1[%c1, %c0_19, %c0_20] : memref<8x2x128xf32, #tpu.memory_space<vmem>>, vector<1x2x128xf32>
    %41 = vector.shape_cast %40 : vector<1x2x128xf32> to vector<2x128xf32>
    %c0_21 = arith.constant 0 : index
    %c0_22 = arith.constant 0 : index
    %42 = vector.load %arg6[%c0_21, %c0_22] : memref<2x32xf32, #tpu.memory_space<vmem>>, vector<2x32xf32>
    %cst_23 = arith.constant dense<0.000000e+00> : vector<2x128xf32>
    %43 = tpu.matmul %42, %3, %cst_23 {dimension_numbers = #tpu.dot_dimension_numbers<[1], [0], [0], [1], [0, 0, 1, 1], [], []>} : vector<2x32xf32>, vector<32x128xf32>, vector<2x128xf32> -> vector<2x128xf32>
    %44 = arith.addf %41, %43 : vector<2x128xf32>
    %45 = vector.extract_strided_slice %44 {offsets = [0, 0], sizes = [2, 32], strides = [1, 1]} : vector<2x128xf32> to vector<2x32xf32>
    %46 = arith.negf %45 : vector<2x32xf32>
    %47 = math.exp %46 : vector<2x32xf32>
    %cst_24 = arith.constant 1.000000e+00 : f32
    %48 = vector.broadcast %cst_24 : f32 to vector<2x32xf32>
    %49 = arith.addf %48, %47 : vector<2x32xf32>
    %50 = arith.divf %48, %49 : vector<2x32xf32>
    %51 = vector.extract_strided_slice %44 {offsets = [0, 32], sizes = [2, 32], strides = [1, 1]} : vector<2x128xf32> to vector<2x32xf32>
    %52 = arith.negf %51 : vector<2x32xf32>
    %53 = math.exp %52 : vector<2x32xf32>
    %cst_25 = arith.constant 1.000000e+00 : f32
    %54 = vector.broadcast %cst_25 : f32 to vector<2x32xf32>
    %55 = arith.addf %54, %53 : vector<2x32xf32>
    %56 = arith.divf %54, %55 : vector<2x32xf32>
    %57 = vector.extract_strided_slice %44 {offsets = [0, 64], sizes = [2, 32], strides = [1, 1]} : vector<2x128xf32> to vector<2x32xf32>
    %58 = math.tanh %57 : vector<2x32xf32>
    %59 = vector.extract_strided_slice %44 {offsets = [0, 96], sizes = [2, 32], strides = [1, 1]} : vector<2x128xf32> to vector<2x32xf32>
    %60 = arith.negf %59 : vector<2x32xf32>
    %61 = math.exp %60 : vector<2x32xf32>
    %cst_26 = arith.constant 1.000000e+00 : f32
    %62 = vector.broadcast %cst_26 : f32 to vector<2x32xf32>
    %63 = arith.addf %62, %61 : vector<2x32xf32>
    %64 = arith.divf %62, %63 : vector<2x32xf32>
    %c0_27 = arith.constant 0 : index
    %c0_28 = arith.constant 0 : index
    %65 = vector.load %arg7[%c0_27, %c0_28] : memref<2x32xf32, #tpu.memory_space<vmem>>, vector<2x32xf32>
    %66 = arith.mulf %56, %65 : vector<2x32xf32>
    %67 = arith.mulf %50, %58 : vector<2x32xf32>
    %68 = arith.addf %66, %67 : vector<2x32xf32>
    %69 = math.tanh %68 : vector<2x32xf32>
    %70 = arith.mulf %64, %69 : vector<2x32xf32>
    %c0_29 = arith.constant 0 : index
    %c0_30 = arith.constant 0 : index
    %71 = vector.load %arg7[%c0_29, %c0_30] : memref<2x32xf32, #tpu.memory_space<vmem>>, vector<2x32xf32>
    tpu.vector_store %arg7[%c0_29, %c0_30], %68 {strides = array<i32>} : memref<2x32xf32, #tpu.memory_space<vmem>>, vector<2x32xf32>,
    %c0_31 = arith.constant 0 : index
    %c0_32 = arith.constant 0 : index
    %72 = vector.load %arg6[%c0_31, %c0_32] : memref<2x32xf32, #tpu.memory_space<vmem>>, vector<2x32xf32>
    tpu.vector_store %arg6[%c0_31, %c0_32], %70 {strides = array<i32>} : memref<2x32xf32, #tpu.memory_space<vmem>>, vector<2x32xf32>,
    %c1_33 = arith.constant 1 : index
    %c0_34 = arith.constant 0 : index
    %c0_35 = arith.constant 0 : index
    %73 = vector.load %arg3[%c1_33, %c0_34, %c0_35] : memref<8x2x32xf32, #tpu.memory_space<vmem>>, vector<1x2x32xf32>
    %74 = vector.shape_cast %73 : vector<1x2x32xf32> to vector<2x32xf32>
    %75 = vector.shape_cast %70 : vector<2x32xf32> to vector<1x2x32xf32>
    tpu.vector_store %arg3[%c1_33, %c0_34, %c0_35], %75 {strides = array<i32>} : memref<8x2x32xf32, #tpu.memory_space<vmem>>, vector<1x2x32xf32>,
    %c2 = arith.constant 2 : index
    %c0_36 = arith.constant 0 : index
    %c0_37 = arith.constant 0 : index
    %76 = vector.load %arg1[%c2, %c0_36, %c0_37] : memref<8x2x128xf32, #tpu.memory_space<vmem>>, vector<1x2x128xf32>
    %77 = vector.shape_cast %76 : vector<1x2x128xf32> to vector<2x128xf32>
    %c0_38 = arith.constant 0 : index
    %c0_39 = arith.constant 0 : index
    %78 = vector.load %arg6[%c0_38, %c0_39] : memref<2x32xf32, #tpu.memory_space<vmem>>, vector<2x32xf32>
    %cst_40 = arith.constant dense<0.000000e+00> : vector<2x128xf32>
    %79 = tpu.matmul %78, %3, %cst_40 {dimension_numbers = #tpu.dot_dimension_numbers<[1], [0], [0], [1], [0, 0, 1, 1], [], []>} : vector<2x32xf32>, vector<32x128xf32>, vector<2x128xf32> -> vector<2x128xf32>
    %80 = arith.addf %77, %79 : vector<2x128xf32>
    %81 = vector.extract_strided_slice %80 {offsets = [0, 0], sizes = [2, 32], strides = [1, 1]} : vector<2x128xf32> to vector<2x32xf32>
    %82 = arith.negf %81 : vector<2x32xf32>
    %83 = math.exp %82 : vector<2x32xf32>
    %cst_41 = arith.constant 1.000000e+00 : f32
    %84 = vector.broadcast %cst_41 : f32 to vector<2x32xf32>
    %85 = arith.addf %84, %83 : vector<2x32xf32>
    %86 = arith.divf %84, %85 : vector<2x32xf32>
    %87 = vector.extract_strided_slice %80 {offsets = [0, 32], sizes = [2, 32], strides = [1, 1]} : vector<2x128xf32> to vector<2x32xf32>
    %88 = arith.negf %87 : vector<2x32xf32>
    %89 = math.exp %88 : vector<2x32xf32>
    %cst_42 = arith.constant 1.000000e+00 : f32
    %90 = vector.broadcast %cst_42 : f32 to vector<2x32xf32>
    %91 = arith.addf %90, %89 : vector<2x32xf32>
    %92 = arith.divf %90, %91 : vector<2x32xf32>
    %93 = vector.extract_strided_slice %80 {offsets = [0, 64], sizes = [2, 32], strides = [1, 1]} : vector<2x128xf32> to vector<2x32xf32>
    %94 = math.tanh %93 : vector<2x32xf32>
    %95 = vector.extract_strided_slice %80 {offsets = [0, 96], sizes = [2, 32], strides = [1, 1]} : vector<2x128xf32> to vector<2x32xf32>
    %96 = arith.negf %95 : vector<2x32xf32>
    %97 = math.exp %96 : vector<2x32xf32>
    %cst_43 = arith.constant 1.000000e+00 : f32
    %98 = vector.broadcast %cst_43 : f32 to vector<2x32xf32>
    %99 = arith.addf %98, %97 : vector<2x32xf32>
    %100 = arith.divf %98, %99 : vector<2x32xf32>
    %c0_44 = arith.constant 0 : index
    %c0_45 = arith.constant 0 : index
    %101 = vector.load %arg7[%c0_44, %c0_45] : memref<2x32xf32, #tpu.memory_space<vmem>>, vector<2x32xf32>
    %102 = arith.mulf %92, %101 : vector<2x32xf32>
    %103 = arith.mulf %86, %94 : vector<2x32xf32>
    %104 = arith.addf %102, %103 : vector<2x32xf32>
    %105 = math.tanh %104 : vector<2x32xf32>
    %106 = arith.mulf %100, %105 : vector<2x32xf32>
    %c0_46 = arith.constant 0 : index
    %c0_47 = arith.constant 0 : index
    %107 = vector.load %arg7[%c0_46, %c0_47] : memref<2x32xf32, #tpu.memory_space<vmem>>, vector<2x32xf32>
    tpu.vector_store %arg7[%c0_46, %c0_47], %104 {strides = array<i32>} : memref<2x32xf32, #tpu.memory_space<vmem>>, vector<2x32xf32>,
    %c0_48 = arith.constant 0 : index
    %c0_49 = arith.constant 0 : index
    %108 = vector.load %arg6[%c0_48, %c0_49] : memref<2x32xf32, #tpu.memory_space<vmem>>, vector<2x32xf32>
    tpu.vector_store %arg6[%c0_48, %c0_49], %106 {strides = array<i32>} : memref<2x32xf32, #tpu.memory_space<vmem>>, vector<2x32xf32>,
    %c2_50 = arith.constant 2 : index
    %c0_51 = arith.constant 0 : index
    %c0_52 = arith.constant 0 : index
    %109 = vector.load %arg3[%c2_50, %c0_51, %c0_52] : memref<8x2x32xf32, #tpu.memory_space<vmem>>, vector<1x2x32xf32>
    %110 = vector.shape_cast %109 : vector<1x2x32xf32> to vector<2x32xf32>
    %111 = vector.shape_cast %106 : vector<2x32xf32> to vector<1x2x32xf32>
    tpu.vector_store %arg3[%c2_50, %c0_51, %c0_52], %111 {strides = array<i32>} : memref<8x2x32xf32, #tpu.memory_space<vmem>>, vector<1x2x32xf32>,
    %c3 = arith.constant 3 : index
    %c0_53 = arith.constant 0 : index
    %c0_54 = arith.constant 0 : index
    %112 = vector.load %arg1[%c3, %c0_53, %c0_54] : memref<8x2x128xf32, #tpu.memory_space<vmem>>, vector<1x2x128xf32>
    %113 = vector.shape_cast %112 : vector<1x2x128xf32> to vector<2x128xf32>
    %c0_55 = arith.constant 0 : index
    %c0_56 = arith.constant 0 : index
    %114 = vector.load %arg6[%c0_55, %c0_56] : memref<2x32xf32, #tpu.memory_space<vmem>>, vector<2x32xf32>
    %cst_57 = arith.constant dense<0.000000e+00> : vector<2x128xf32>
    %115 = tpu.matmul %114, %3, %cst_57 {dimension_numbers = #tpu.dot_dimension_numbers<[1], [0], [0], [1], [0, 0, 1, 1], [], []>} : vector<2x32xf32>, vector<32x128xf32>, vector<2x128xf32> -> vector<2x128xf32>
    %116 = arith.addf %113, %115 : vector<2x128xf32>
    %117 = vector.extract_strided_slice %116 {offsets = [0, 0], sizes = [2, 32], strides = [1, 1]} : vector<2x128xf32> to vector<2x32xf32>
    %118 = arith.negf %117 : vector<2x32xf32>
    %119 = math.exp %118 : vector<2x32xf32>
    %cst_58 = arith.constant 1.000000e+00 : f32
    %120 = vector.broadcast %cst_58 : f32 to vector<2x32xf32>
    %121 = arith.addf %120, %119 : vector<2x32xf32>
    %122 = arith.divf %120, %121 : vector<2x32xf32>
    %123 = vector.extract_strided_slice %116 {offsets = [0, 32], sizes = [2, 32], strides = [1, 1]} : vector<2x128xf32> to vector<2x32xf32>
    %124 = arith.negf %123 : vector<2x32xf32>
    %125 = math.exp %124 : vector<2x32xf32>
    %cst_59 = arith.constant 1.000000e+00 : f32
    %126 = vector.broadcast %cst_59 : f32 to vector<2x32xf32>
    %127 = arith.addf %126, %125 : vector<2x32xf32>
    %128 = arith.divf %126, %127 : vector<2x32xf32>
    %129 = vector.extract_strided_slice %116 {offsets = [0, 64], sizes = [2, 32], strides = [1, 1]} : vector<2x128xf32> to vector<2x32xf32>
    %130 = math.tanh %129 : vector<2x32xf32>
    %131 = vector.extract_strided_slice %116 {offsets = [0, 96], sizes = [2, 32], strides = [1, 1]} : vector<2x128xf32> to vector<2x32xf32>
    %132 = arith.negf %131 : vector<2x32xf32>
    %133 = math.exp %132 : vector<2x32xf32>
    %cst_60 = arith.constant 1.000000e+00 : f32
    %134 = vector.broadcast %cst_60 : f32 to vector<2x32xf32>
    %135 = arith.addf %134, %133 : vector<2x32xf32>
    %136 = arith.divf %134, %135 : vector<2x32xf32>
    %c0_61 = arith.constant 0 : index
    %c0_62 = arith.constant 0 : index
    %137 = vector.load %arg7[%c0_61, %c0_62] : memref<2x32xf32, #tpu.memory_space<vmem>>, vector<2x32xf32>
    %138 = arith.mulf %128, %137 : vector<2x32xf32>
    %139 = arith.mulf %122, %130 : vector<2x32xf32>
    %140 = arith.addf %138, %139 : vector<2x32xf32>
    %141 = math.tanh %140 : vector<2x32xf32>
    %142 = arith.mulf %136, %141 : vector<2x32xf32>
    %c0_63 = arith.constant 0 : index
    %c0_64 = arith.constant 0 : index
    %143 = vector.load %arg7[%c0_63, %c0_64] : memref<2x32xf32, #tpu.memory_space<vmem>>, vector<2x32xf32>
    tpu.vector_store %arg7[%c0_63, %c0_64], %140 {strides = array<i32>} : memref<2x32xf32, #tpu.memory_space<vmem>>, vector<2x32xf32>,
    %c0_65 = arith.constant 0 : index
    %c0_66 = arith.constant 0 : index
    %144 = vector.load %arg6[%c0_65, %c0_66] : memref<2x32xf32, #tpu.memory_space<vmem>>, vector<2x32xf32>
    tpu.vector_store %arg6[%c0_65, %c0_66], %142 {strides = array<i32>} : memref<2x32xf32, #tpu.memory_space<vmem>>, vector<2x32xf32>,
    %c3_67 = arith.constant 3 : index
    %c0_68 = arith.constant 0 : index
    %c0_69 = arith.constant 0 : index
    %145 = vector.load %arg3[%c3_67, %c0_68, %c0_69] : memref<8x2x32xf32, #tpu.memory_space<vmem>>, vector<1x2x32xf32>
    %146 = vector.shape_cast %145 : vector<1x2x32xf32> to vector<2x32xf32>
    %147 = vector.shape_cast %142 : vector<2x32xf32> to vector<1x2x32xf32>
    tpu.vector_store %arg3[%c3_67, %c0_68, %c0_69], %147 {strides = array<i32>} : memref<8x2x32xf32, #tpu.memory_space<vmem>>, vector<1x2x32xf32>,
    %c4 = arith.constant 4 : index
    %c0_70 = arith.constant 0 : index
    %c0_71 = arith.constant 0 : index
    %148 = vector.load %arg1[%c4, %c0_70, %c0_71] : memref<8x2x128xf32, #tpu.memory_space<vmem>>, vector<1x2x128xf32>
    %149 = vector.shape_cast %148 : vector<1x2x128xf32> to vector<2x128xf32>
    %c0_72 = arith.constant 0 : index
    %c0_73 = arith.constant 0 : index
    %150 = vector.load %arg6[%c0_72, %c0_73] : memref<2x32xf32, #tpu.memory_space<vmem>>, vector<2x32xf32>
    %cst_74 = arith.constant dense<0.000000e+00> : vector<2x128xf32>
    %151 = tpu.matmul %150, %3, %cst_74 {dimension_numbers = #tpu.dot_dimension_numbers<[1], [0], [0], [1], [0, 0, 1, 1], [], []>} : vector<2x32xf32>, vector<32x128xf32>, vector<2x128xf32> -> vector<2x128xf32>
    %152 = arith.addf %149, %151 : vector<2x128xf32>
    %153 = vector.extract_strided_slice %152 {offsets = [0, 0], sizes = [2, 32], strides = [1, 1]} : vector<2x128xf32> to vector<2x32xf32>
    %154 = arith.negf %153 : vector<2x32xf32>
    %155 = math.exp %154 : vector<2x32xf32>
    %cst_75 = arith.constant 1.000000e+00 : f32
    %156 = vector.broadcast %cst_75 : f32 to vector<2x32xf32>
    %157 = arith.addf %156, %155 : vector<2x32xf32>
    %158 = arith.divf %156, %157 : vector<2x32xf32>
    %159 = vector.extract_strided_slice %152 {offsets = [0, 32], sizes = [2, 32], strides = [1, 1]} : vector<2x128xf32> to vector<2x32xf32>
    %160 = arith.negf %159 : vector<2x32xf32>
    %161 = math.exp %160 : vector<2x32xf32>
    %cst_76 = arith.constant 1.000000e+00 : f32
    %162 = vector.broadcast %cst_76 : f32 to vector<2x32xf32>
    %163 = arith.addf %162, %161 : vector<2x32xf32>
    %164 = arith.divf %162, %163 : vector<2x32xf32>
    %165 = vector.extract_strided_slice %152 {offsets = [0, 64], sizes = [2, 32], strides = [1, 1]} : vector<2x128xf32> to vector<2x32xf32>
    %166 = math.tanh %165 : vector<2x32xf32>
    %167 = vector.extract_strided_slice %152 {offsets = [0, 96], sizes = [2, 32], strides = [1, 1]} : vector<2x128xf32> to vector<2x32xf32>
    %168 = arith.negf %167 : vector<2x32xf32>
    %169 = math.exp %168 : vector<2x32xf32>
    %cst_77 = arith.constant 1.000000e+00 : f32
    %170 = vector.broadcast %cst_77 : f32 to vector<2x32xf32>
    %171 = arith.addf %170, %169 : vector<2x32xf32>
    %172 = arith.divf %170, %171 : vector<2x32xf32>
    %c0_78 = arith.constant 0 : index
    %c0_79 = arith.constant 0 : index
    %173 = vector.load %arg7[%c0_78, %c0_79] : memref<2x32xf32, #tpu.memory_space<vmem>>, vector<2x32xf32>
    %174 = arith.mulf %164, %173 : vector<2x32xf32>
    %175 = arith.mulf %158, %166 : vector<2x32xf32>
    %176 = arith.addf %174, %175 : vector<2x32xf32>
    %177 = math.tanh %176 : vector<2x32xf32>
    %178 = arith.mulf %172, %177 : vector<2x32xf32>
    %c0_80 = arith.constant 0 : index
    %c0_81 = arith.constant 0 : index
    %179 = vector.load %arg7[%c0_80, %c0_81] : memref<2x32xf32, #tpu.memory_space<vmem>>, vector<2x32xf32>
    tpu.vector_store %arg7[%c0_80, %c0_81], %176 {strides = array<i32>} : memref<2x32xf32, #tpu.memory_space<vmem>>, vector<2x32xf32>,
    %c0_82 = arith.constant 0 : index
    %c0_83 = arith.constant 0 : index
    %180 = vector.load %arg6[%c0_82, %c0_83] : memref<2x32xf32, #tpu.memory_space<vmem>>, vector<2x32xf32>
    tpu.vector_store %arg6[%c0_82, %c0_83], %178 {strides = array<i32>} : memref<2x32xf32, #tpu.memory_space<vmem>>, vector<2x32xf32>,
    %c4_84 = arith.constant 4 : index
    %c0_85 = arith.constant 0 : index
    %c0_86 = arith.constant 0 : index
    %181 = vector.load %arg3[%c4_84, %c0_85, %c0_86] : memref<8x2x32xf32, #tpu.memory_space<vmem>>, vector<1x2x32xf32>
    %182 = vector.shape_cast %181 : vector<1x2x32xf32> to vector<2x32xf32>
    %183 = vector.shape_cast %178 : vector<2x32xf32> to vector<1x2x32xf32>
    tpu.vector_store %arg3[%c4_84, %c0_85, %c0_86], %183 {strides = array<i32>} : memref<8x2x32xf32, #tpu.memory_space<vmem>>, vector<1x2x32xf32>,
    %c5 = arith.constant 5 : index
    %c0_87 = arith.constant 0 : index
    %c0_88 = arith.constant 0 : index
    %184 = vector.load %arg1[%c5, %c0_87, %c0_88] : memref<8x2x128xf32, #tpu.memory_space<vmem>>, vector<1x2x128xf32>
    %185 = vector.shape_cast %184 : vector<1x2x128xf32> to vector<2x128xf32>
    %c0_89 = arith.constant 0 : index
    %c0_90 = arith.constant 0 : index
    %186 = vector.load %arg6[%c0_89, %c0_90] : memref<2x32xf32, #tpu.memory_space<vmem>>, vector<2x32xf32>
    %cst_91 = arith.constant dense<0.000000e+00> : vector<2x128xf32>
    %187 = tpu.matmul %186, %3, %cst_91 {dimension_numbers = #tpu.dot_dimension_numbers<[1], [0], [0], [1], [0, 0, 1, 1], [], []>} : vector<2x32xf32>, vector<32x128xf32>, vector<2x128xf32> -> vector<2x128xf32>
    %188 = arith.addf %185, %187 : vector<2x128xf32>
    %189 = vector.extract_strided_slice %188 {offsets = [0, 0], sizes = [2, 32], strides = [1, 1]} : vector<2x128xf32> to vector<2x32xf32>
    %190 = arith.negf %189 : vector<2x32xf32>
    %191 = math.exp %190 : vector<2x32xf32>
    %cst_92 = arith.constant 1.000000e+00 : f32
    %192 = vector.broadcast %cst_92 : f32 to vector<2x32xf32>
    %193 = arith.addf %192, %191 : vector<2x32xf32>
    %194 = arith.divf %192, %193 : vector<2x32xf32>
    %195 = vector.extract_strided_slice %188 {offsets = [0, 32], sizes = [2, 32], strides = [1, 1]} : vector<2x128xf32> to vector<2x32xf32>
    %196 = arith.negf %195 : vector<2x32xf32>
    %197 = math.exp %196 : vector<2x32xf32>
    %cst_93 = arith.constant 1.000000e+00 : f32
    %198 = vector.broadcast %cst_93 : f32 to vector<2x32xf32>
    %199 = arith.addf %198, %197 : vector<2x32xf32>
    %200 = arith.divf %198, %199 : vector<2x32xf32>
    %201 = vector.extract_strided_slice %188 {offsets = [0, 64], sizes = [2, 32], strides = [1, 1]} : vector<2x128xf32> to vector<2x32xf32>
    %202 = math.tanh %201 : vector<2x32xf32>
    %203 = vector.extract_strided_slice %188 {offsets = [0, 96], sizes = [2, 32], strides = [1, 1]} : vector<2x128xf32> to vector<2x32xf32>
    %204 = arith.negf %203 : vector<2x32xf32>
    %205 = math.exp %204 : vector<2x32xf32>
    %cst_94 = arith.constant 1.000000e+00 : f32
    %206 = vector.broadcast %cst_94 : f32 to vector<2x32xf32>
    %207 = arith.addf %206, %205 : vector<2x32xf32>
    %208 = arith.divf %206, %207 : vector<2x32xf32>
    %c0_95 = arith.constant 0 : index
    %c0_96 = arith.constant 0 : index
    %209 = vector.load %arg7[%c0_95, %c0_96] : memref<2x32xf32, #tpu.memory_space<vmem>>, vector<2x32xf32>
    %210 = arith.mulf %200, %209 : vector<2x32xf32>
    %211 = arith.mulf %194, %202 : vector<2x32xf32>
    %212 = arith.addf %210, %211 : vector<2x32xf32>
    %213 = math.tanh %212 : vector<2x32xf32>
    %214 = arith.mulf %208, %213 : vector<2x32xf32>
    %c0_97 = arith.constant 0 : index
    %c0_98 = arith.constant 0 : index
    %215 = vector.load %arg7[%c0_97, %c0_98] : memref<2x32xf32, #tpu.memory_space<vmem>>, vector<2x32xf32>
    tpu.vector_store %arg7[%c0_97, %c0_98], %212 {strides = array<i32>} : memref<2x32xf32, #tpu.memory_space<vmem>>, vector<2x32xf32>,
    %c0_99 = arith.constant 0 : index
    %c0_100 = arith.constant 0 : index
    %216 = vector.load %arg6[%c0_99, %c0_100] : memref<2x32xf32, #tpu.memory_space<vmem>>, vector<2x32xf32>
    tpu.vector_store %arg6[%c0_99, %c0_100], %214 {strides = array<i32>} : memref<2x32xf32, #tpu.memory_space<vmem>>, vector<2x32xf32>,
    %c5_101 = arith.constant 5 : index
    %c0_102 = arith.constant 0 : index
    %c0_103 = arith.constant 0 : index
    %217 = vector.load %arg3[%c5_101, %c0_102, %c0_103] : memref<8x2x32xf32, #tpu.memory_space<vmem>>, vector<1x2x32xf32>
    %218 = vector.shape_cast %217 : vector<1x2x32xf32> to vector<2x32xf32>
    %219 = vector.shape_cast %214 : vector<2x32xf32> to vector<1x2x32xf32>
    tpu.vector_store %arg3[%c5_101, %c0_102, %c0_103], %219 {strides = array<i32>} : memref<8x2x32xf32, #tpu.memory_space<vmem>>, vector<1x2x32xf32>,
    %c6 = arith.constant 6 : index
    %c0_104 = arith.constant 0 : index
    %c0_105 = arith.constant 0 : index
    %220 = vector.load %arg1[%c6, %c0_104, %c0_105] : memref<8x2x128xf32, #tpu.memory_space<vmem>>, vector<1x2x128xf32>
    %221 = vector.shape_cast %220 : vector<1x2x128xf32> to vector<2x128xf32>
    %c0_106 = arith.constant 0 : index
    %c0_107 = arith.constant 0 : index
    %222 = vector.load %arg6[%c0_106, %c0_107] : memref<2x32xf32, #tpu.memory_space<vmem>>, vector<2x32xf32>
    %cst_108 = arith.constant dense<0.000000e+00> : vector<2x128xf32>
    %223 = tpu.matmul %222, %3, %cst_108 {dimension_numbers = #tpu.dot_dimension_numbers<[1], [0], [0], [1], [0, 0, 1, 1], [], []>} : vector<2x32xf32>, vector<32x128xf32>, vector<2x128xf32> -> vector<2x128xf32>
    %224 = arith.addf %221, %223 : vector<2x128xf32>
    %225 = vector.extract_strided_slice %224 {offsets = [0, 0], sizes = [2, 32], strides = [1, 1]} : vector<2x128xf32> to vector<2x32xf32>
    %226 = arith.negf %225 : vector<2x32xf32>
    %227 = math.exp %226 : vector<2x32xf32>
    %cst_109 = arith.constant 1.000000e+00 : f32
    %228 = vector.broadcast %cst_109 : f32 to vector<2x32xf32>
    %229 = arith.addf %228, %227 : vector<2x32xf32>
    %230 = arith.divf %228, %229 : vector<2x32xf32>
    %231 = vector.extract_strided_slice %224 {offsets = [0, 32], sizes = [2, 32], strides = [1, 1]} : vector<2x128xf32> to vector<2x32xf32>
    %232 = arith.negf %231 : vector<2x32xf32>
    %233 = math.exp %232 : vector<2x32xf32>
    %cst_110 = arith.constant 1.000000e+00 : f32
    %234 = vector.broadcast %cst_110 : f32 to vector<2x32xf32>
    %235 = arith.addf %234, %233 : vector<2x32xf32>
    %236 = arith.divf %234, %235 : vector<2x32xf32>
    %237 = vector.extract_strided_slice %224 {offsets = [0, 64], sizes = [2, 32], strides = [1, 1]} : vector<2x128xf32> to vector<2x32xf32>
    %238 = math.tanh %237 : vector<2x32xf32>
    %239 = vector.extract_strided_slice %224 {offsets = [0, 96], sizes = [2, 32], strides = [1, 1]} : vector<2x128xf32> to vector<2x32xf32>
    %240 = arith.negf %239 : vector<2x32xf32>
    %241 = math.exp %240 : vector<2x32xf32>
    %cst_111 = arith.constant 1.000000e+00 : f32
    %242 = vector.broadcast %cst_111 : f32 to vector<2x32xf32>
    %243 = arith.addf %242, %241 : vector<2x32xf32>
    %244 = arith.divf %242, %243 : vector<2x32xf32>
    %c0_112 = arith.constant 0 : index
    %c0_113 = arith.constant 0 : index
    %245 = vector.load %arg7[%c0_112, %c0_113] : memref<2x32xf32, #tpu.memory_space<vmem>>, vector<2x32xf32>
    %246 = arith.mulf %236, %245 : vector<2x32xf32>
    %247 = arith.mulf %230, %238 : vector<2x32xf32>
    %248 = arith.addf %246, %247 : vector<2x32xf32>
    %249 = math.tanh %248 : vector<2x32xf32>
    %250 = arith.mulf %244, %249 : vector<2x32xf32>
    %c0_114 = arith.constant 0 : index
    %c0_115 = arith.constant 0 : index
    %251 = vector.load %arg7[%c0_114, %c0_115] : memref<2x32xf32, #tpu.memory_space<vmem>>, vector<2x32xf32>
    tpu.vector_store %arg7[%c0_114, %c0_115], %248 {strides = array<i32>} : memref<2x32xf32, #tpu.memory_space<vmem>>, vector<2x32xf32>,
    %c0_116 = arith.constant 0 : index
    %c0_117 = arith.constant 0 : index
    %252 = vector.load %arg6[%c0_116, %c0_117] : memref<2x32xf32, #tpu.memory_space<vmem>>, vector<2x32xf32>
    tpu.vector_store %arg6[%c0_116, %c0_117], %250 {strides = array<i32>} : memref<2x32xf32, #tpu.memory_space<vmem>>, vector<2x32xf32>,
    %c6_118 = arith.constant 6 : index
    %c0_119 = arith.constant 0 : index
    %c0_120 = arith.constant 0 : index
    %253 = vector.load %arg3[%c6_118, %c0_119, %c0_120] : memref<8x2x32xf32, #tpu.memory_space<vmem>>, vector<1x2x32xf32>
    %254 = vector.shape_cast %253 : vector<1x2x32xf32> to vector<2x32xf32>
    %255 = vector.shape_cast %250 : vector<2x32xf32> to vector<1x2x32xf32>
    tpu.vector_store %arg3[%c6_118, %c0_119, %c0_120], %255 {strides = array<i32>} : memref<8x2x32xf32, #tpu.memory_space<vmem>>, vector<1x2x32xf32>,
    %c7 = arith.constant 7 : index
    %c0_121 = arith.constant 0 : index
    %c0_122 = arith.constant 0 : index
    %256 = vector.load %arg1[%c7, %c0_121, %c0_122] : memref<8x2x128xf32, #tpu.memory_space<vmem>>, vector<1x2x128xf32>
    %257 = vector.shape_cast %256 : vector<1x2x128xf32> to vector<2x128xf32>
    %c0_123 = arith.constant 0 : index
    %c0_124 = arith.constant 0 : index
    %258 = vector.load %arg6[%c0_123, %c0_124] : memref<2x32xf32, #tpu.memory_space<vmem>>, vector<2x32xf32>
    %cst_125 = arith.constant dense<0.000000e+00> : vector<2x128xf32>
    %259 = tpu.matmul %258, %3, %cst_125 {dimension_numbers = #tpu.dot_dimension_numbers<[1], [0], [0], [1], [0, 0, 1, 1], [], []>} : vector<2x32xf32>, vector<32x128xf32>, vector<2x128xf32> -> vector<2x128xf32>
    %260 = arith.addf %257, %259 : vector<2x128xf32>
    %261 = vector.extract_strided_slice %260 {offsets = [0, 0], sizes = [2, 32], strides = [1, 1]} : vector<2x128xf32> to vector<2x32xf32>
    %262 = arith.negf %261 : vector<2x32xf32>
    %263 = math.exp %262 : vector<2x32xf32>
    %cst_126 = arith.constant 1.000000e+00 : f32
    %264 = vector.broadcast %cst_126 : f32 to vector<2x32xf32>
    %265 = arith.addf %264, %263 : vector<2x32xf32>
    %266 = arith.divf %264, %265 : vector<2x32xf32>
    %267 = vector.extract_strided_slice %260 {offsets = [0, 32], sizes = [2, 32], strides = [1, 1]} : vector<2x128xf32> to vector<2x32xf32>
    %268 = arith.negf %267 : vector<2x32xf32>
    %269 = math.exp %268 : vector<2x32xf32>
    %cst_127 = arith.constant 1.000000e+00 : f32
    %270 = vector.broadcast %cst_127 : f32 to vector<2x32xf32>
    %271 = arith.addf %270, %269 : vector<2x32xf32>
    %272 = arith.divf %270, %271 : vector<2x32xf32>
    %273 = vector.extract_strided_slice %260 {offsets = [0, 64], sizes = [2, 32], strides = [1, 1]} : vector<2x128xf32> to vector<2x32xf32>
    %274 = math.tanh %273 : vector<2x32xf32>
    %275 = vector.extract_strided_slice %260 {offsets = [0, 96], sizes = [2, 32], strides = [1, 1]} : vector<2x128xf32> to vector<2x32xf32>
    %276 = arith.negf %275 : vector<2x32xf32>
    %277 = math.exp %276 : vector<2x32xf32>
    %cst_128 = arith.constant 1.000000e+00 : f32
    %278 = vector.broadcast %cst_128 : f32 to vector<2x32xf32>
    %279 = arith.addf %278, %277 : vector<2x32xf32>
    %280 = arith.divf %278, %279 : vector<2x32xf32>
    %c0_129 = arith.constant 0 : index
    %c0_130 = arith.constant 0 : index
    %281 = vector.load %arg7[%c0_129, %c0_130] : memref<2x32xf32, #tpu.memory_space<vmem>>, vector<2x32xf32>
    %282 = arith.mulf %272, %281 : vector<2x32xf32>
    %283 = arith.mulf %266, %274 : vector<2x32xf32>
    %284 = arith.addf %282, %283 : vector<2x32xf32>
    %285 = math.tanh %284 : vector<2x32xf32>
    %286 = arith.mulf %280, %285 : vector<2x32xf32>
    %c0_131 = arith.constant 0 : index
    %c0_132 = arith.constant 0 : index
    %287 = vector.load %arg7[%c0_131, %c0_132] : memref<2x32xf32, #tpu.memory_space<vmem>>, vector<2x32xf32>
    tpu.vector_store %arg7[%c0_131, %c0_132], %284 {strides = array<i32>} : memref<2x32xf32, #tpu.memory_space<vmem>>, vector<2x32xf32>,
    %c0_133 = arith.constant 0 : index
    %c0_134 = arith.constant 0 : index
    %288 = vector.load %arg6[%c0_133, %c0_134] : memref<2x32xf32, #tpu.memory_space<vmem>>, vector<2x32xf32>
    tpu.vector_store %arg6[%c0_133, %c0_134], %286 {strides = array<i32>} : memref<2x32xf32, #tpu.memory_space<vmem>>, vector<2x32xf32>,
    %c7_135 = arith.constant 7 : index
    %c0_136 = arith.constant 0 : index
    %c0_137 = arith.constant 0 : index
    %289 = vector.load %arg3[%c7_135, %c0_136, %c0_137] : memref<8x2x32xf32, #tpu.memory_space<vmem>>, vector<1x2x32xf32>
    %290 = vector.shape_cast %289 : vector<1x2x32xf32> to vector<2x32xf32>
    %291 = vector.shape_cast %286 : vector<2x32xf32> to vector<1x2x32xf32>
    tpu.vector_store %arg3[%c7_135, %c0_136, %c0_137], %291 {strides = array<i32>} : memref<8x2x32xf32, #tpu.memory_space<vmem>>, vector<1x2x32xf32>,
    %c0_138 = arith.constant 0 : index
    %c0_139 = arith.constant 0 : index
    %292 = vector.load %arg6[%c0_138, %c0_139] : memref<2x32xf32, #tpu.memory_space<vmem>>, vector<2x32xf32>
    %c0_140 = arith.constant 0 : index
    %c0_141 = arith.constant 0 : index
    %293 = vector.load %arg4[%c0_140, %c0_141] : memref<2x32xf32, #tpu.memory_space<vmem>>, vector<2x32xf32>
    tpu.vector_store %arg4[%c0_140, %c0_141], %292 {strides = array<i32>} : memref<2x32xf32, #tpu.memory_space<vmem>>, vector<2x32xf32>,
    %c0_142 = arith.constant 0 : index
    %c0_143 = arith.constant 0 : index
    %294 = vector.load %arg7[%c0_142, %c0_143] : memref<2x32xf32, #tpu.memory_space<vmem>>, vector<2x32xf32>
    %c0_144 = arith.constant 0 : index
    %c0_145 = arith.constant 0 : index
    %295 = vector.load %arg5[%c0_144, %c0_145] : memref<2x32xf32, #tpu.memory_space<vmem>>, vector<2x32xf32>
    tpu.vector_store %arg5[%c0_144, %c0_145], %294 {strides = array<i32>} : memref<2x32xf32, #tpu.memory_space<vmem>>, vector<2x32xf32>,
    return
  }
  func.func @transform_0(%arg0: i32) -> (i32, i32, i32) {
    %c0_i32 = arith.constant 0 : i32
    %c0_i32_0 = arith.constant 0 : i32
    %c0_i32_1 = arith.constant 0 : i32
    return %arg0, %c0_i32, %c0_i32_0 : i32, i32, i32
  }
  func.func @transform_1(%arg0: i32) -> (i32, i32) {
    %c0_i32 = arith.constant 0 : i32
    %c0_i32_0 = arith.constant 0 : i32
    %c0_i32_1 = arith.constant 0 : i32
    return %c0_i32, %c0_i32_0 : i32, i32
  }
  func.func @transform_2(%arg0: i32) -> (i32, i32, i32) {
    %c0_i32 = arith.constant 0 : i32
    %c0_i32_0 = arith.constant 0 : i32
    %c0_i32_1 = arith.constant 0 : i32
    return %arg0, %c0_i32, %c0_i32_0 : i32, i32, i32
  }
  func.func @transform_3(%arg0: i32) -> (i32, i32) {
    %c0_i32 = arith.constant 0 : i32
    %c0_i32_0 = arith.constant 0 : i32
    %c0_i32_1 = arith.constant 0 : i32
    return %c0_i32, %c0_i32_0 : i32, i32
  }
  func.func @transform_4(%arg0: i32) -> (i32, i32) {
    %c0_i32 = arith.constant 0 : i32
    %c0_i32_0 = arith.constant 0 : i32
    %c0_i32_1 = arith.constant 0 : i32
    return %c0_i32, %c0_i32_0 : i32, i32
  }
}

module attributes {stable_mosaic.version = 11 : i64} {
  func.func @_lstm_chunk_kernel(%arg0: i32, %arg1: memref<8x2x128xf32, #tpu.memory_space<vmem>>, %arg2: memref<32x128xf32, #tpu.memory_space<vmem>>, %arg3: memref<32x1xf32, #tpu.memory_space<vmem>>, %arg4: memref<8x2x1xf32, #tpu.memory_space<vmem>>, %arg5: memref<2x32xf32, #tpu.memory_space<vmem>>, %arg6: memref<2x32xf32, #tpu.memory_space<vmem>>, %arg7: memref<2x32xf32, #tpu.memory_space<vmem>>, %arg8: memref<2x32xf32, #tpu.memory_space<vmem>>) attributes {dimension_semantics = [#tpu.dimension_semantics<arbitrary>], iteration_bounds = array<i64: 2>, scalar_prefetch = 0 : i64, scratch_operands = 2 : i64, tpu.core_type = #tpu.core_type<tc>, window_params = [{transform_indices = @transform_0, window_bounds = array<i64: 8, 2, 128>}, {pipeline_mode = #tpu.pipeline_mode<synchronous>, transform_indices = @transform_1, window_bounds = array<i64: 32, 128>}, {pipeline_mode = #tpu.pipeline_mode<synchronous>, transform_indices = @transform_2, window_bounds = array<i64: 32, 1>}, {transform_indices = @transform_3, window_bounds = array<i64: 8, 2, 1>}, {pipeline_mode = #tpu.pipeline_mode<synchronous>, transform_indices = @transform_4, window_bounds = array<i64: 2, 32>}, {pipeline_mode = #tpu.pipeline_mode<synchronous>, transform_indices = @transform_5, window_bounds = array<i64: 2, 32>}]} {
    %c0_i32 = arith.constant 0 : i32
    %0 = arith.cmpi eq, %arg0, %c0_i32 : i32
    %1 = arith.extui %0 : i1 to i32
    %c0_i32_0 = arith.constant 0 : i32
    %2 = arith.cmpi ne, %1, %c0_i32_0 : i32
    scf.if %2 {
      %cst_178 = arith.constant 0.000000e+00 : f32
      %352 = vector.broadcast %cst_178 : f32 to vector<2x32xf32>
      %c0_179 = arith.constant 0 : index
      %c0_180 = arith.constant 0 : index
      %353 = vector.load %arg7[%c0_179, %c0_180] : memref<2x32xf32, #tpu.memory_space<vmem>>, vector<2x32xf32>
      tpu.vector_store %arg7[%c0_179, %c0_180], %352 {strides = array<i32>} : memref<2x32xf32, #tpu.memory_space<vmem>>, vector<2x32xf32>,
      %cst_181 = arith.constant 0.000000e+00 : f32
      %354 = vector.broadcast %cst_181 : f32 to vector<2x32xf32>
      %c0_182 = arith.constant 0 : index
      %c0_183 = arith.constant 0 : index
      %355 = vector.load %arg8[%c0_182, %c0_183] : memref<2x32xf32, #tpu.memory_space<vmem>>, vector<2x32xf32>
      tpu.vector_store %arg8[%c0_182, %c0_183], %354 {strides = array<i32>} : memref<2x32xf32, #tpu.memory_space<vmem>>, vector<2x32xf32>,
    } else {
    }
    %c0 = arith.constant 0 : index
    %c0_1 = arith.constant 0 : index
    %3 = vector.load %arg2[%c0, %c0_1] : memref<32x128xf32, #tpu.memory_space<vmem>>, vector<32x128xf32>
    %c0_2 = arith.constant 0 : index
    %c0_3 = arith.constant 0 : index
    %c0_4 = arith.constant 0 : index
    %4 = vector.load %arg1[%c0_2, %c0_3, %c0_4] : memref<8x2x128xf32, #tpu.memory_space<vmem>>, vector<1x2x128xf32>
    %5 = vector.shape_cast %4 : vector<1x2x128xf32> to vector<2x128xf32>
    %c0_5 = arith.constant 0 : index
    %c0_6 = arith.constant 0 : index
    %6 = vector.load %arg7[%c0_5, %c0_6] : memref<2x32xf32, #tpu.memory_space<vmem>>, vector<2x32xf32>
    %cst = arith.constant dense<0.000000e+00> : vector<2x128xf32>
    %7 = tpu.matmul %6, %3, %cst {dimension_numbers = #tpu.dot_dimension_numbers<[1], [0], [0], [1], [0, 0, 1, 1], [], []>} : vector<2x32xf32>, vector<32x128xf32>, vector<2x128xf32> -> vector<2x128xf32>
    %8 = arith.addf %5, %7 : vector<2x128xf32>
    %9 = vector.extract_strided_slice %8 {offsets = [0, 0], sizes = [2, 32], strides = [1, 1]} : vector<2x128xf32> to vector<2x32xf32>
    %10 = arith.negf %9 : vector<2x32xf32>
    %11 = math.exp %10 : vector<2x32xf32>
    %cst_7 = arith.constant 1.000000e+00 : f32
    %12 = vector.broadcast %cst_7 : f32 to vector<2x32xf32>
    %13 = arith.addf %12, %11 : vector<2x32xf32>
    %14 = arith.divf %12, %13 : vector<2x32xf32>
    %15 = vector.extract_strided_slice %8 {offsets = [0, 32], sizes = [2, 32], strides = [1, 1]} : vector<2x128xf32> to vector<2x32xf32>
    %16 = arith.negf %15 : vector<2x32xf32>
    %17 = math.exp %16 : vector<2x32xf32>
    %cst_8 = arith.constant 1.000000e+00 : f32
    %18 = vector.broadcast %cst_8 : f32 to vector<2x32xf32>
    %19 = arith.addf %18, %17 : vector<2x32xf32>
    %20 = arith.divf %18, %19 : vector<2x32xf32>
    %21 = vector.extract_strided_slice %8 {offsets = [0, 64], sizes = [2, 32], strides = [1, 1]} : vector<2x128xf32> to vector<2x32xf32>
    %22 = math.tanh %21 : vector<2x32xf32>
    %23 = vector.extract_strided_slice %8 {offsets = [0, 96], sizes = [2, 32], strides = [1, 1]} : vector<2x128xf32> to vector<2x32xf32>
    %24 = arith.negf %23 : vector<2x32xf32>
    %25 = math.exp %24 : vector<2x32xf32>
    %cst_9 = arith.constant 1.000000e+00 : f32
    %26 = vector.broadcast %cst_9 : f32 to vector<2x32xf32>
    %27 = arith.addf %26, %25 : vector<2x32xf32>
    %28 = arith.divf %26, %27 : vector<2x32xf32>
    %c0_10 = arith.constant 0 : index
    %c0_11 = arith.constant 0 : index
    %29 = vector.load %arg8[%c0_10, %c0_11] : memref<2x32xf32, #tpu.memory_space<vmem>>, vector<2x32xf32>
    %30 = arith.mulf %20, %29 : vector<2x32xf32>
    %31 = arith.mulf %14, %22 : vector<2x32xf32>
    %32 = arith.addf %30, %31 : vector<2x32xf32>
    %33 = math.tanh %32 : vector<2x32xf32>
    %34 = arith.mulf %28, %33 : vector<2x32xf32>
    %c0_12 = arith.constant 0 : index
    %c0_13 = arith.constant 0 : index
    %35 = vector.load %arg8[%c0_12, %c0_13] : memref<2x32xf32, #tpu.memory_space<vmem>>, vector<2x32xf32>
    tpu.vector_store %arg8[%c0_12, %c0_13], %32 {strides = array<i32>} : memref<2x32xf32, #tpu.memory_space<vmem>>, vector<2x32xf32>,
    %c0_14 = arith.constant 0 : index
    %c0_15 = arith.constant 0 : index
    %36 = vector.load %arg7[%c0_14, %c0_15] : memref<2x32xf32, #tpu.memory_space<vmem>>, vector<2x32xf32>
    tpu.vector_store %arg7[%c0_14, %c0_15], %34 {strides = array<i32>} : memref<2x32xf32, #tpu.memory_space<vmem>>, vector<2x32xf32>,
    %c0_16 = arith.constant 0 : index
    %c0_17 = arith.constant 0 : index
    %37 = vector.load %arg3[%c0_16, %c0_17] : memref<32x1xf32, #tpu.memory_space<vmem>>, vector<32x1xf32>
    %cst_18 = arith.constant dense<0.000000e+00> : vector<2x1xf32>
    %38 = tpu.matmul %34, %37, %cst_18 {dimension_numbers = #tpu.dot_dimension_numbers<[1], [0], [0], [1], [0, 0, 1, 1], [], []>} : vector<2x32xf32>, vector<32x1xf32>, vector<2x1xf32> -> vector<2x1xf32>
    %39 = arith.negf %38 : vector<2x1xf32>
    %40 = math.exp %39 : vector<2x1xf32>
    %cst_19 = arith.constant 1.000000e+00 : f32
    %41 = vector.broadcast %cst_19 : f32 to vector<2x1xf32>
    %42 = arith.addf %41, %40 : vector<2x1xf32>
    %43 = arith.divf %41, %42 : vector<2x1xf32>
    %c0_20 = arith.constant 0 : index
    %c0_21 = arith.constant 0 : index
    %c0_22 = arith.constant 0 : index
    %44 = vector.load %arg4[%c0_20, %c0_21, %c0_22] : memref<8x2x1xf32, #tpu.memory_space<vmem>>, vector<1x2x1xf32>
    %45 = vector.shape_cast %44 : vector<1x2x1xf32> to vector<2x1xf32>
    %46 = vector.shape_cast %43 : vector<2x1xf32> to vector<1x2x1xf32>
    tpu.vector_store %arg4[%c0_20, %c0_21, %c0_22], %46 {strides = array<i32>} : memref<8x2x1xf32, #tpu.memory_space<vmem>>, vector<1x2x1xf32>,
    %c1 = arith.constant 1 : index
    %c0_23 = arith.constant 0 : index
    %c0_24 = arith.constant 0 : index
    %47 = vector.load %arg1[%c1, %c0_23, %c0_24] : memref<8x2x128xf32, #tpu.memory_space<vmem>>, vector<1x2x128xf32>
    %48 = vector.shape_cast %47 : vector<1x2x128xf32> to vector<2x128xf32>
    %c0_25 = arith.constant 0 : index
    %c0_26 = arith.constant 0 : index
    %49 = vector.load %arg7[%c0_25, %c0_26] : memref<2x32xf32, #tpu.memory_space<vmem>>, vector<2x32xf32>
    %cst_27 = arith.constant dense<0.000000e+00> : vector<2x128xf32>
    %50 = tpu.matmul %49, %3, %cst_27 {dimension_numbers = #tpu.dot_dimension_numbers<[1], [0], [0], [1], [0, 0, 1, 1], [], []>} : vector<2x32xf32>, vector<32x128xf32>, vector<2x128xf32> -> vector<2x128xf32>
    %51 = arith.addf %48, %50 : vector<2x128xf32>
    %52 = vector.extract_strided_slice %51 {offsets = [0, 0], sizes = [2, 32], strides = [1, 1]} : vector<2x128xf32> to vector<2x32xf32>
    %53 = arith.negf %52 : vector<2x32xf32>
    %54 = math.exp %53 : vector<2x32xf32>
    %cst_28 = arith.constant 1.000000e+00 : f32
    %55 = vector.broadcast %cst_28 : f32 to vector<2x32xf32>
    %56 = arith.addf %55, %54 : vector<2x32xf32>
    %57 = arith.divf %55, %56 : vector<2x32xf32>
    %58 = vector.extract_strided_slice %51 {offsets = [0, 32], sizes = [2, 32], strides = [1, 1]} : vector<2x128xf32> to vector<2x32xf32>
    %59 = arith.negf %58 : vector<2x32xf32>
    %60 = math.exp %59 : vector<2x32xf32>
    %cst_29 = arith.constant 1.000000e+00 : f32
    %61 = vector.broadcast %cst_29 : f32 to vector<2x32xf32>
    %62 = arith.addf %61, %60 : vector<2x32xf32>
    %63 = arith.divf %61, %62 : vector<2x32xf32>
    %64 = vector.extract_strided_slice %51 {offsets = [0, 64], sizes = [2, 32], strides = [1, 1]} : vector<2x128xf32> to vector<2x32xf32>
    %65 = math.tanh %64 : vector<2x32xf32>
    %66 = vector.extract_strided_slice %51 {offsets = [0, 96], sizes = [2, 32], strides = [1, 1]} : vector<2x128xf32> to vector<2x32xf32>
    %67 = arith.negf %66 : vector<2x32xf32>
    %68 = math.exp %67 : vector<2x32xf32>
    %cst_30 = arith.constant 1.000000e+00 : f32
    %69 = vector.broadcast %cst_30 : f32 to vector<2x32xf32>
    %70 = arith.addf %69, %68 : vector<2x32xf32>
    %71 = arith.divf %69, %70 : vector<2x32xf32>
    %c0_31 = arith.constant 0 : index
    %c0_32 = arith.constant 0 : index
    %72 = vector.load %arg8[%c0_31, %c0_32] : memref<2x32xf32, #tpu.memory_space<vmem>>, vector<2x32xf32>
    %73 = arith.mulf %63, %72 : vector<2x32xf32>
    %74 = arith.mulf %57, %65 : vector<2x32xf32>
    %75 = arith.addf %73, %74 : vector<2x32xf32>
    %76 = math.tanh %75 : vector<2x32xf32>
    %77 = arith.mulf %71, %76 : vector<2x32xf32>
    %c0_33 = arith.constant 0 : index
    %c0_34 = arith.constant 0 : index
    %78 = vector.load %arg8[%c0_33, %c0_34] : memref<2x32xf32, #tpu.memory_space<vmem>>, vector<2x32xf32>
    tpu.vector_store %arg8[%c0_33, %c0_34], %75 {strides = array<i32>} : memref<2x32xf32, #tpu.memory_space<vmem>>, vector<2x32xf32>,
    %c0_35 = arith.constant 0 : index
    %c0_36 = arith.constant 0 : index
    %79 = vector.load %arg7[%c0_35, %c0_36] : memref<2x32xf32, #tpu.memory_space<vmem>>, vector<2x32xf32>
    tpu.vector_store %arg7[%c0_35, %c0_36], %77 {strides = array<i32>} : memref<2x32xf32, #tpu.memory_space<vmem>>, vector<2x32xf32>,
    %c0_37 = arith.constant 0 : index
    %c0_38 = arith.constant 0 : index
    %80 = vector.load %arg3[%c0_37, %c0_38] : memref<32x1xf32, #tpu.memory_space<vmem>>, vector<32x1xf32>
    %cst_39 = arith.constant dense<0.000000e+00> : vector<2x1xf32>
    %81 = tpu.matmul %77, %80, %cst_39 {dimension_numbers = #tpu.dot_dimension_numbers<[1], [0], [0], [1], [0, 0, 1, 1], [], []>} : vector<2x32xf32>, vector<32x1xf32>, vector<2x1xf32> -> vector<2x1xf32>
    %82 = arith.negf %81 : vector<2x1xf32>
    %83 = math.exp %82 : vector<2x1xf32>
    %cst_40 = arith.constant 1.000000e+00 : f32
    %84 = vector.broadcast %cst_40 : f32 to vector<2x1xf32>
    %85 = arith.addf %84, %83 : vector<2x1xf32>
    %86 = arith.divf %84, %85 : vector<2x1xf32>
    %c1_41 = arith.constant 1 : index
    %c0_42 = arith.constant 0 : index
    %c0_43 = arith.constant 0 : index
    %87 = vector.load %arg4[%c1_41, %c0_42, %c0_43] : memref<8x2x1xf32, #tpu.memory_space<vmem>>, vector<1x2x1xf32>
    %88 = vector.shape_cast %87 : vector<1x2x1xf32> to vector<2x1xf32>
    %89 = vector.shape_cast %86 : vector<2x1xf32> to vector<1x2x1xf32>
    tpu.vector_store %arg4[%c1_41, %c0_42, %c0_43], %89 {strides = array<i32>} : memref<8x2x1xf32, #tpu.memory_space<vmem>>, vector<1x2x1xf32>,
    %c2 = arith.constant 2 : index
    %c0_44 = arith.constant 0 : index
    %c0_45 = arith.constant 0 : index
    %90 = vector.load %arg1[%c2, %c0_44, %c0_45] : memref<8x2x128xf32, #tpu.memory_space<vmem>>, vector<1x2x128xf32>
    %91 = vector.shape_cast %90 : vector<1x2x128xf32> to vector<2x128xf32>
    %c0_46 = arith.constant 0 : index
    %c0_47 = arith.constant 0 : index
    %92 = vector.load %arg7[%c0_46, %c0_47] : memref<2x32xf32, #tpu.memory_space<vmem>>, vector<2x32xf32>
    %cst_48 = arith.constant dense<0.000000e+00> : vector<2x128xf32>
    %93 = tpu.matmul %92, %3, %cst_48 {dimension_numbers = #tpu.dot_dimension_numbers<[1], [0], [0], [1], [0, 0, 1, 1], [], []>} : vector<2x32xf32>, vector<32x128xf32>, vector<2x128xf32> -> vector<2x128xf32>
    %94 = arith.addf %91, %93 : vector<2x128xf32>
    %95 = vector.extract_strided_slice %94 {offsets = [0, 0], sizes = [2, 32], strides = [1, 1]} : vector<2x128xf32> to vector<2x32xf32>
    %96 = arith.negf %95 : vector<2x32xf32>
    %97 = math.exp %96 : vector<2x32xf32>
    %cst_49 = arith.constant 1.000000e+00 : f32
    %98 = vector.broadcast %cst_49 : f32 to vector<2x32xf32>
    %99 = arith.addf %98, %97 : vector<2x32xf32>
    %100 = arith.divf %98, %99 : vector<2x32xf32>
    %101 = vector.extract_strided_slice %94 {offsets = [0, 32], sizes = [2, 32], strides = [1, 1]} : vector<2x128xf32> to vector<2x32xf32>
    %102 = arith.negf %101 : vector<2x32xf32>
    %103 = math.exp %102 : vector<2x32xf32>
    %cst_50 = arith.constant 1.000000e+00 : f32
    %104 = vector.broadcast %cst_50 : f32 to vector<2x32xf32>
    %105 = arith.addf %104, %103 : vector<2x32xf32>
    %106 = arith.divf %104, %105 : vector<2x32xf32>
    %107 = vector.extract_strided_slice %94 {offsets = [0, 64], sizes = [2, 32], strides = [1, 1]} : vector<2x128xf32> to vector<2x32xf32>
    %108 = math.tanh %107 : vector<2x32xf32>
    %109 = vector.extract_strided_slice %94 {offsets = [0, 96], sizes = [2, 32], strides = [1, 1]} : vector<2x128xf32> to vector<2x32xf32>
    %110 = arith.negf %109 : vector<2x32xf32>
    %111 = math.exp %110 : vector<2x32xf32>
    %cst_51 = arith.constant 1.000000e+00 : f32
    %112 = vector.broadcast %cst_51 : f32 to vector<2x32xf32>
    %113 = arith.addf %112, %111 : vector<2x32xf32>
    %114 = arith.divf %112, %113 : vector<2x32xf32>
    %c0_52 = arith.constant 0 : index
    %c0_53 = arith.constant 0 : index
    %115 = vector.load %arg8[%c0_52, %c0_53] : memref<2x32xf32, #tpu.memory_space<vmem>>, vector<2x32xf32>
    %116 = arith.mulf %106, %115 : vector<2x32xf32>
    %117 = arith.mulf %100, %108 : vector<2x32xf32>
    %118 = arith.addf %116, %117 : vector<2x32xf32>
    %119 = math.tanh %118 : vector<2x32xf32>
    %120 = arith.mulf %114, %119 : vector<2x32xf32>
    %c0_54 = arith.constant 0 : index
    %c0_55 = arith.constant 0 : index
    %121 = vector.load %arg8[%c0_54, %c0_55] : memref<2x32xf32, #tpu.memory_space<vmem>>, vector<2x32xf32>
    tpu.vector_store %arg8[%c0_54, %c0_55], %118 {strides = array<i32>} : memref<2x32xf32, #tpu.memory_space<vmem>>, vector<2x32xf32>,
    %c0_56 = arith.constant 0 : index
    %c0_57 = arith.constant 0 : index
    %122 = vector.load %arg7[%c0_56, %c0_57] : memref<2x32xf32, #tpu.memory_space<vmem>>, vector<2x32xf32>
    tpu.vector_store %arg7[%c0_56, %c0_57], %120 {strides = array<i32>} : memref<2x32xf32, #tpu.memory_space<vmem>>, vector<2x32xf32>,
    %c0_58 = arith.constant 0 : index
    %c0_59 = arith.constant 0 : index
    %123 = vector.load %arg3[%c0_58, %c0_59] : memref<32x1xf32, #tpu.memory_space<vmem>>, vector<32x1xf32>
    %cst_60 = arith.constant dense<0.000000e+00> : vector<2x1xf32>
    %124 = tpu.matmul %120, %123, %cst_60 {dimension_numbers = #tpu.dot_dimension_numbers<[1], [0], [0], [1], [0, 0, 1, 1], [], []>} : vector<2x32xf32>, vector<32x1xf32>, vector<2x1xf32> -> vector<2x1xf32>
    %125 = arith.negf %124 : vector<2x1xf32>
    %126 = math.exp %125 : vector<2x1xf32>
    %cst_61 = arith.constant 1.000000e+00 : f32
    %127 = vector.broadcast %cst_61 : f32 to vector<2x1xf32>
    %128 = arith.addf %127, %126 : vector<2x1xf32>
    %129 = arith.divf %127, %128 : vector<2x1xf32>
    %c2_62 = arith.constant 2 : index
    %c0_63 = arith.constant 0 : index
    %c0_64 = arith.constant 0 : index
    %130 = vector.load %arg4[%c2_62, %c0_63, %c0_64] : memref<8x2x1xf32, #tpu.memory_space<vmem>>, vector<1x2x1xf32>
    %131 = vector.shape_cast %130 : vector<1x2x1xf32> to vector<2x1xf32>
    %132 = vector.shape_cast %129 : vector<2x1xf32> to vector<1x2x1xf32>
    tpu.vector_store %arg4[%c2_62, %c0_63, %c0_64], %132 {strides = array<i32>} : memref<8x2x1xf32, #tpu.memory_space<vmem>>, vector<1x2x1xf32>,
    %c3 = arith.constant 3 : index
    %c0_65 = arith.constant 0 : index
    %c0_66 = arith.constant 0 : index
    %133 = vector.load %arg1[%c3, %c0_65, %c0_66] : memref<8x2x128xf32, #tpu.memory_space<vmem>>, vector<1x2x128xf32>
    %134 = vector.shape_cast %133 : vector<1x2x128xf32> to vector<2x128xf32>
    %c0_67 = arith.constant 0 : index
    %c0_68 = arith.constant 0 : index
    %135 = vector.load %arg7[%c0_67, %c0_68] : memref<2x32xf32, #tpu.memory_space<vmem>>, vector<2x32xf32>
    %cst_69 = arith.constant dense<0.000000e+00> : vector<2x128xf32>
    %136 = tpu.matmul %135, %3, %cst_69 {dimension_numbers = #tpu.dot_dimension_numbers<[1], [0], [0], [1], [0, 0, 1, 1], [], []>} : vector<2x32xf32>, vector<32x128xf32>, vector<2x128xf32> -> vector<2x128xf32>
    %137 = arith.addf %134, %136 : vector<2x128xf32>
    %138 = vector.extract_strided_slice %137 {offsets = [0, 0], sizes = [2, 32], strides = [1, 1]} : vector<2x128xf32> to vector<2x32xf32>
    %139 = arith.negf %138 : vector<2x32xf32>
    %140 = math.exp %139 : vector<2x32xf32>
    %cst_70 = arith.constant 1.000000e+00 : f32
    %141 = vector.broadcast %cst_70 : f32 to vector<2x32xf32>
    %142 = arith.addf %141, %140 : vector<2x32xf32>
    %143 = arith.divf %141, %142 : vector<2x32xf32>
    %144 = vector.extract_strided_slice %137 {offsets = [0, 32], sizes = [2, 32], strides = [1, 1]} : vector<2x128xf32> to vector<2x32xf32>
    %145 = arith.negf %144 : vector<2x32xf32>
    %146 = math.exp %145 : vector<2x32xf32>
    %cst_71 = arith.constant 1.000000e+00 : f32
    %147 = vector.broadcast %cst_71 : f32 to vector<2x32xf32>
    %148 = arith.addf %147, %146 : vector<2x32xf32>
    %149 = arith.divf %147, %148 : vector<2x32xf32>
    %150 = vector.extract_strided_slice %137 {offsets = [0, 64], sizes = [2, 32], strides = [1, 1]} : vector<2x128xf32> to vector<2x32xf32>
    %151 = math.tanh %150 : vector<2x32xf32>
    %152 = vector.extract_strided_slice %137 {offsets = [0, 96], sizes = [2, 32], strides = [1, 1]} : vector<2x128xf32> to vector<2x32xf32>
    %153 = arith.negf %152 : vector<2x32xf32>
    %154 = math.exp %153 : vector<2x32xf32>
    %cst_72 = arith.constant 1.000000e+00 : f32
    %155 = vector.broadcast %cst_72 : f32 to vector<2x32xf32>
    %156 = arith.addf %155, %154 : vector<2x32xf32>
    %157 = arith.divf %155, %156 : vector<2x32xf32>
    %c0_73 = arith.constant 0 : index
    %c0_74 = arith.constant 0 : index
    %158 = vector.load %arg8[%c0_73, %c0_74] : memref<2x32xf32, #tpu.memory_space<vmem>>, vector<2x32xf32>
    %159 = arith.mulf %149, %158 : vector<2x32xf32>
    %160 = arith.mulf %143, %151 : vector<2x32xf32>
    %161 = arith.addf %159, %160 : vector<2x32xf32>
    %162 = math.tanh %161 : vector<2x32xf32>
    %163 = arith.mulf %157, %162 : vector<2x32xf32>
    %c0_75 = arith.constant 0 : index
    %c0_76 = arith.constant 0 : index
    %164 = vector.load %arg8[%c0_75, %c0_76] : memref<2x32xf32, #tpu.memory_space<vmem>>, vector<2x32xf32>
    tpu.vector_store %arg8[%c0_75, %c0_76], %161 {strides = array<i32>} : memref<2x32xf32, #tpu.memory_space<vmem>>, vector<2x32xf32>,
    %c0_77 = arith.constant 0 : index
    %c0_78 = arith.constant 0 : index
    %165 = vector.load %arg7[%c0_77, %c0_78] : memref<2x32xf32, #tpu.memory_space<vmem>>, vector<2x32xf32>
    tpu.vector_store %arg7[%c0_77, %c0_78], %163 {strides = array<i32>} : memref<2x32xf32, #tpu.memory_space<vmem>>, vector<2x32xf32>,
    %c0_79 = arith.constant 0 : index
    %c0_80 = arith.constant 0 : index
    %166 = vector.load %arg3[%c0_79, %c0_80] : memref<32x1xf32, #tpu.memory_space<vmem>>, vector<32x1xf32>
    %cst_81 = arith.constant dense<0.000000e+00> : vector<2x1xf32>
    %167 = tpu.matmul %163, %166, %cst_81 {dimension_numbers = #tpu.dot_dimension_numbers<[1], [0], [0], [1], [0, 0, 1, 1], [], []>} : vector<2x32xf32>, vector<32x1xf32>, vector<2x1xf32> -> vector<2x1xf32>
    %168 = arith.negf %167 : vector<2x1xf32>
    %169 = math.exp %168 : vector<2x1xf32>
    %cst_82 = arith.constant 1.000000e+00 : f32
    %170 = vector.broadcast %cst_82 : f32 to vector<2x1xf32>
    %171 = arith.addf %170, %169 : vector<2x1xf32>
    %172 = arith.divf %170, %171 : vector<2x1xf32>
    %c3_83 = arith.constant 3 : index
    %c0_84 = arith.constant 0 : index
    %c0_85 = arith.constant 0 : index
    %173 = vector.load %arg4[%c3_83, %c0_84, %c0_85] : memref<8x2x1xf32, #tpu.memory_space<vmem>>, vector<1x2x1xf32>
    %174 = vector.shape_cast %173 : vector<1x2x1xf32> to vector<2x1xf32>
    %175 = vector.shape_cast %172 : vector<2x1xf32> to vector<1x2x1xf32>
    tpu.vector_store %arg4[%c3_83, %c0_84, %c0_85], %175 {strides = array<i32>} : memref<8x2x1xf32, #tpu.memory_space<vmem>>, vector<1x2x1xf32>,
    %c4 = arith.constant 4 : index
    %c0_86 = arith.constant 0 : index
    %c0_87 = arith.constant 0 : index
    %176 = vector.load %arg1[%c4, %c0_86, %c0_87] : memref<8x2x128xf32, #tpu.memory_space<vmem>>, vector<1x2x128xf32>
    %177 = vector.shape_cast %176 : vector<1x2x128xf32> to vector<2x128xf32>
    %c0_88 = arith.constant 0 : index
    %c0_89 = arith.constant 0 : index
    %178 = vector.load %arg7[%c0_88, %c0_89] : memref<2x32xf32, #tpu.memory_space<vmem>>, vector<2x32xf32>
    %cst_90 = arith.constant dense<0.000000e+00> : vector<2x128xf32>
    %179 = tpu.matmul %178, %3, %cst_90 {dimension_numbers = #tpu.dot_dimension_numbers<[1], [0], [0], [1], [0, 0, 1, 1], [], []>} : vector<2x32xf32>, vector<32x128xf32>, vector<2x128xf32> -> vector<2x128xf32>
    %180 = arith.addf %177, %179 : vector<2x128xf32>
    %181 = vector.extract_strided_slice %180 {offsets = [0, 0], sizes = [2, 32], strides = [1, 1]} : vector<2x128xf32> to vector<2x32xf32>
    %182 = arith.negf %181 : vector<2x32xf32>
    %183 = math.exp %182 : vector<2x32xf32>
    %cst_91 = arith.constant 1.000000e+00 : f32
    %184 = vector.broadcast %cst_91 : f32 to vector<2x32xf32>
    %185 = arith.addf %184, %183 : vector<2x32xf32>
    %186 = arith.divf %184, %185 : vector<2x32xf32>
    %187 = vector.extract_strided_slice %180 {offsets = [0, 32], sizes = [2, 32], strides = [1, 1]} : vector<2x128xf32> to vector<2x32xf32>
    %188 = arith.negf %187 : vector<2x32xf32>
    %189 = math.exp %188 : vector<2x32xf32>
    %cst_92 = arith.constant 1.000000e+00 : f32
    %190 = vector.broadcast %cst_92 : f32 to vector<2x32xf32>
    %191 = arith.addf %190, %189 : vector<2x32xf32>
    %192 = arith.divf %190, %191 : vector<2x32xf32>
    %193 = vector.extract_strided_slice %180 {offsets = [0, 64], sizes = [2, 32], strides = [1, 1]} : vector<2x128xf32> to vector<2x32xf32>
    %194 = math.tanh %193 : vector<2x32xf32>
    %195 = vector.extract_strided_slice %180 {offsets = [0, 96], sizes = [2, 32], strides = [1, 1]} : vector<2x128xf32> to vector<2x32xf32>
    %196 = arith.negf %195 : vector<2x32xf32>
    %197 = math.exp %196 : vector<2x32xf32>
    %cst_93 = arith.constant 1.000000e+00 : f32
    %198 = vector.broadcast %cst_93 : f32 to vector<2x32xf32>
    %199 = arith.addf %198, %197 : vector<2x32xf32>
    %200 = arith.divf %198, %199 : vector<2x32xf32>
    %c0_94 = arith.constant 0 : index
    %c0_95 = arith.constant 0 : index
    %201 = vector.load %arg8[%c0_94, %c0_95] : memref<2x32xf32, #tpu.memory_space<vmem>>, vector<2x32xf32>
    %202 = arith.mulf %192, %201 : vector<2x32xf32>
    %203 = arith.mulf %186, %194 : vector<2x32xf32>
    %204 = arith.addf %202, %203 : vector<2x32xf32>
    %205 = math.tanh %204 : vector<2x32xf32>
    %206 = arith.mulf %200, %205 : vector<2x32xf32>
    %c0_96 = arith.constant 0 : index
    %c0_97 = arith.constant 0 : index
    %207 = vector.load %arg8[%c0_96, %c0_97] : memref<2x32xf32, #tpu.memory_space<vmem>>, vector<2x32xf32>
    tpu.vector_store %arg8[%c0_96, %c0_97], %204 {strides = array<i32>} : memref<2x32xf32, #tpu.memory_space<vmem>>, vector<2x32xf32>,
    %c0_98 = arith.constant 0 : index
    %c0_99 = arith.constant 0 : index
    %208 = vector.load %arg7[%c0_98, %c0_99] : memref<2x32xf32, #tpu.memory_space<vmem>>, vector<2x32xf32>
    tpu.vector_store %arg7[%c0_98, %c0_99], %206 {strides = array<i32>} : memref<2x32xf32, #tpu.memory_space<vmem>>, vector<2x32xf32>,
    %c0_100 = arith.constant 0 : index
    %c0_101 = arith.constant 0 : index
    %209 = vector.load %arg3[%c0_100, %c0_101] : memref<32x1xf32, #tpu.memory_space<vmem>>, vector<32x1xf32>
    %cst_102 = arith.constant dense<0.000000e+00> : vector<2x1xf32>
    %210 = tpu.matmul %206, %209, %cst_102 {dimension_numbers = #tpu.dot_dimension_numbers<[1], [0], [0], [1], [0, 0, 1, 1], [], []>} : vector<2x32xf32>, vector<32x1xf32>, vector<2x1xf32> -> vector<2x1xf32>
    %211 = arith.negf %210 : vector<2x1xf32>
    %212 = math.exp %211 : vector<2x1xf32>
    %cst_103 = arith.constant 1.000000e+00 : f32
    %213 = vector.broadcast %cst_103 : f32 to vector<2x1xf32>
    %214 = arith.addf %213, %212 : vector<2x1xf32>
    %215 = arith.divf %213, %214 : vector<2x1xf32>
    %c4_104 = arith.constant 4 : index
    %c0_105 = arith.constant 0 : index
    %c0_106 = arith.constant 0 : index
    %216 = vector.load %arg4[%c4_104, %c0_105, %c0_106] : memref<8x2x1xf32, #tpu.memory_space<vmem>>, vector<1x2x1xf32>
    %217 = vector.shape_cast %216 : vector<1x2x1xf32> to vector<2x1xf32>
    %218 = vector.shape_cast %215 : vector<2x1xf32> to vector<1x2x1xf32>
    tpu.vector_store %arg4[%c4_104, %c0_105, %c0_106], %218 {strides = array<i32>} : memref<8x2x1xf32, #tpu.memory_space<vmem>>, vector<1x2x1xf32>,
    %c5 = arith.constant 5 : index
    %c0_107 = arith.constant 0 : index
    %c0_108 = arith.constant 0 : index
    %219 = vector.load %arg1[%c5, %c0_107, %c0_108] : memref<8x2x128xf32, #tpu.memory_space<vmem>>, vector<1x2x128xf32>
    %220 = vector.shape_cast %219 : vector<1x2x128xf32> to vector<2x128xf32>
    %c0_109 = arith.constant 0 : index
    %c0_110 = arith.constant 0 : index
    %221 = vector.load %arg7[%c0_109, %c0_110] : memref<2x32xf32, #tpu.memory_space<vmem>>, vector<2x32xf32>
    %cst_111 = arith.constant dense<0.000000e+00> : vector<2x128xf32>
    %222 = tpu.matmul %221, %3, %cst_111 {dimension_numbers = #tpu.dot_dimension_numbers<[1], [0], [0], [1], [0, 0, 1, 1], [], []>} : vector<2x32xf32>, vector<32x128xf32>, vector<2x128xf32> -> vector<2x128xf32>
    %223 = arith.addf %220, %222 : vector<2x128xf32>
    %224 = vector.extract_strided_slice %223 {offsets = [0, 0], sizes = [2, 32], strides = [1, 1]} : vector<2x128xf32> to vector<2x32xf32>
    %225 = arith.negf %224 : vector<2x32xf32>
    %226 = math.exp %225 : vector<2x32xf32>
    %cst_112 = arith.constant 1.000000e+00 : f32
    %227 = vector.broadcast %cst_112 : f32 to vector<2x32xf32>
    %228 = arith.addf %227, %226 : vector<2x32xf32>
    %229 = arith.divf %227, %228 : vector<2x32xf32>
    %230 = vector.extract_strided_slice %223 {offsets = [0, 32], sizes = [2, 32], strides = [1, 1]} : vector<2x128xf32> to vector<2x32xf32>
    %231 = arith.negf %230 : vector<2x32xf32>
    %232 = math.exp %231 : vector<2x32xf32>
    %cst_113 = arith.constant 1.000000e+00 : f32
    %233 = vector.broadcast %cst_113 : f32 to vector<2x32xf32>
    %234 = arith.addf %233, %232 : vector<2x32xf32>
    %235 = arith.divf %233, %234 : vector<2x32xf32>
    %236 = vector.extract_strided_slice %223 {offsets = [0, 64], sizes = [2, 32], strides = [1, 1]} : vector<2x128xf32> to vector<2x32xf32>
    %237 = math.tanh %236 : vector<2x32xf32>
    %238 = vector.extract_strided_slice %223 {offsets = [0, 96], sizes = [2, 32], strides = [1, 1]} : vector<2x128xf32> to vector<2x32xf32>
    %239 = arith.negf %238 : vector<2x32xf32>
    %240 = math.exp %239 : vector<2x32xf32>
    %cst_114 = arith.constant 1.000000e+00 : f32
    %241 = vector.broadcast %cst_114 : f32 to vector<2x32xf32>
    %242 = arith.addf %241, %240 : vector<2x32xf32>
    %243 = arith.divf %241, %242 : vector<2x32xf32>
    %c0_115 = arith.constant 0 : index
    %c0_116 = arith.constant 0 : index
    %244 = vector.load %arg8[%c0_115, %c0_116] : memref<2x32xf32, #tpu.memory_space<vmem>>, vector<2x32xf32>
    %245 = arith.mulf %235, %244 : vector<2x32xf32>
    %246 = arith.mulf %229, %237 : vector<2x32xf32>
    %247 = arith.addf %245, %246 : vector<2x32xf32>
    %248 = math.tanh %247 : vector<2x32xf32>
    %249 = arith.mulf %243, %248 : vector<2x32xf32>
    %c0_117 = arith.constant 0 : index
    %c0_118 = arith.constant 0 : index
    %250 = vector.load %arg8[%c0_117, %c0_118] : memref<2x32xf32, #tpu.memory_space<vmem>>, vector<2x32xf32>
    tpu.vector_store %arg8[%c0_117, %c0_118], %247 {strides = array<i32>} : memref<2x32xf32, #tpu.memory_space<vmem>>, vector<2x32xf32>,
    %c0_119 = arith.constant 0 : index
    %c0_120 = arith.constant 0 : index
    %251 = vector.load %arg7[%c0_119, %c0_120] : memref<2x32xf32, #tpu.memory_space<vmem>>, vector<2x32xf32>
    tpu.vector_store %arg7[%c0_119, %c0_120], %249 {strides = array<i32>} : memref<2x32xf32, #tpu.memory_space<vmem>>, vector<2x32xf32>,
    %c0_121 = arith.constant 0 : index
    %c0_122 = arith.constant 0 : index
    %252 = vector.load %arg3[%c0_121, %c0_122] : memref<32x1xf32, #tpu.memory_space<vmem>>, vector<32x1xf32>
    %cst_123 = arith.constant dense<0.000000e+00> : vector<2x1xf32>
    %253 = tpu.matmul %249, %252, %cst_123 {dimension_numbers = #tpu.dot_dimension_numbers<[1], [0], [0], [1], [0, 0, 1, 1], [], []>} : vector<2x32xf32>, vector<32x1xf32>, vector<2x1xf32> -> vector<2x1xf32>
    %254 = arith.negf %253 : vector<2x1xf32>
    %255 = math.exp %254 : vector<2x1xf32>
    %cst_124 = arith.constant 1.000000e+00 : f32
    %256 = vector.broadcast %cst_124 : f32 to vector<2x1xf32>
    %257 = arith.addf %256, %255 : vector<2x1xf32>
    %258 = arith.divf %256, %257 : vector<2x1xf32>
    %c5_125 = arith.constant 5 : index
    %c0_126 = arith.constant 0 : index
    %c0_127 = arith.constant 0 : index
    %259 = vector.load %arg4[%c5_125, %c0_126, %c0_127] : memref<8x2x1xf32, #tpu.memory_space<vmem>>, vector<1x2x1xf32>
    %260 = vector.shape_cast %259 : vector<1x2x1xf32> to vector<2x1xf32>
    %261 = vector.shape_cast %258 : vector<2x1xf32> to vector<1x2x1xf32>
    tpu.vector_store %arg4[%c5_125, %c0_126, %c0_127], %261 {strides = array<i32>} : memref<8x2x1xf32, #tpu.memory_space<vmem>>, vector<1x2x1xf32>,
    %c6 = arith.constant 6 : index
    %c0_128 = arith.constant 0 : index
    %c0_129 = arith.constant 0 : index
    %262 = vector.load %arg1[%c6, %c0_128, %c0_129] : memref<8x2x128xf32, #tpu.memory_space<vmem>>, vector<1x2x128xf32>
    %263 = vector.shape_cast %262 : vector<1x2x128xf32> to vector<2x128xf32>
    %c0_130 = arith.constant 0 : index
    %c0_131 = arith.constant 0 : index
    %264 = vector.load %arg7[%c0_130, %c0_131] : memref<2x32xf32, #tpu.memory_space<vmem>>, vector<2x32xf32>
    %cst_132 = arith.constant dense<0.000000e+00> : vector<2x128xf32>
    %265 = tpu.matmul %264, %3, %cst_132 {dimension_numbers = #tpu.dot_dimension_numbers<[1], [0], [0], [1], [0, 0, 1, 1], [], []>} : vector<2x32xf32>, vector<32x128xf32>, vector<2x128xf32> -> vector<2x128xf32>
    %266 = arith.addf %263, %265 : vector<2x128xf32>
    %267 = vector.extract_strided_slice %266 {offsets = [0, 0], sizes = [2, 32], strides = [1, 1]} : vector<2x128xf32> to vector<2x32xf32>
    %268 = arith.negf %267 : vector<2x32xf32>
    %269 = math.exp %268 : vector<2x32xf32>
    %cst_133 = arith.constant 1.000000e+00 : f32
    %270 = vector.broadcast %cst_133 : f32 to vector<2x32xf32>
    %271 = arith.addf %270, %269 : vector<2x32xf32>
    %272 = arith.divf %270, %271 : vector<2x32xf32>
    %273 = vector.extract_strided_slice %266 {offsets = [0, 32], sizes = [2, 32], strides = [1, 1]} : vector<2x128xf32> to vector<2x32xf32>
    %274 = arith.negf %273 : vector<2x32xf32>
    %275 = math.exp %274 : vector<2x32xf32>
    %cst_134 = arith.constant 1.000000e+00 : f32
    %276 = vector.broadcast %cst_134 : f32 to vector<2x32xf32>
    %277 = arith.addf %276, %275 : vector<2x32xf32>
    %278 = arith.divf %276, %277 : vector<2x32xf32>
    %279 = vector.extract_strided_slice %266 {offsets = [0, 64], sizes = [2, 32], strides = [1, 1]} : vector<2x128xf32> to vector<2x32xf32>
    %280 = math.tanh %279 : vector<2x32xf32>
    %281 = vector.extract_strided_slice %266 {offsets = [0, 96], sizes = [2, 32], strides = [1, 1]} : vector<2x128xf32> to vector<2x32xf32>
    %282 = arith.negf %281 : vector<2x32xf32>
    %283 = math.exp %282 : vector<2x32xf32>
    %cst_135 = arith.constant 1.000000e+00 : f32
    %284 = vector.broadcast %cst_135 : f32 to vector<2x32xf32>
    %285 = arith.addf %284, %283 : vector<2x32xf32>
    %286 = arith.divf %284, %285 : vector<2x32xf32>
    %c0_136 = arith.constant 0 : index
    %c0_137 = arith.constant 0 : index
    %287 = vector.load %arg8[%c0_136, %c0_137] : memref<2x32xf32, #tpu.memory_space<vmem>>, vector<2x32xf32>
    %288 = arith.mulf %278, %287 : vector<2x32xf32>
    %289 = arith.mulf %272, %280 : vector<2x32xf32>
    %290 = arith.addf %288, %289 : vector<2x32xf32>
    %291 = math.tanh %290 : vector<2x32xf32>
    %292 = arith.mulf %286, %291 : vector<2x32xf32>
    %c0_138 = arith.constant 0 : index
    %c0_139 = arith.constant 0 : index
    %293 = vector.load %arg8[%c0_138, %c0_139] : memref<2x32xf32, #tpu.memory_space<vmem>>, vector<2x32xf32>
    tpu.vector_store %arg8[%c0_138, %c0_139], %290 {strides = array<i32>} : memref<2x32xf32, #tpu.memory_space<vmem>>, vector<2x32xf32>,
    %c0_140 = arith.constant 0 : index
    %c0_141 = arith.constant 0 : index
    %294 = vector.load %arg7[%c0_140, %c0_141] : memref<2x32xf32, #tpu.memory_space<vmem>>, vector<2x32xf32>
    tpu.vector_store %arg7[%c0_140, %c0_141], %292 {strides = array<i32>} : memref<2x32xf32, #tpu.memory_space<vmem>>, vector<2x32xf32>,
    %c0_142 = arith.constant 0 : index
    %c0_143 = arith.constant 0 : index
    %295 = vector.load %arg3[%c0_142, %c0_143] : memref<32x1xf32, #tpu.memory_space<vmem>>, vector<32x1xf32>
    %cst_144 = arith.constant dense<0.000000e+00> : vector<2x1xf32>
    %296 = tpu.matmul %292, %295, %cst_144 {dimension_numbers = #tpu.dot_dimension_numbers<[1], [0], [0], [1], [0, 0, 1, 1], [], []>} : vector<2x32xf32>, vector<32x1xf32>, vector<2x1xf32> -> vector<2x1xf32>
    %297 = arith.negf %296 : vector<2x1xf32>
    %298 = math.exp %297 : vector<2x1xf32>
    %cst_145 = arith.constant 1.000000e+00 : f32
    %299 = vector.broadcast %cst_145 : f32 to vector<2x1xf32>
    %300 = arith.addf %299, %298 : vector<2x1xf32>
    %301 = arith.divf %299, %300 : vector<2x1xf32>
    %c6_146 = arith.constant 6 : index
    %c0_147 = arith.constant 0 : index
    %c0_148 = arith.constant 0 : index
    %302 = vector.load %arg4[%c6_146, %c0_147, %c0_148] : memref<8x2x1xf32, #tpu.memory_space<vmem>>, vector<1x2x1xf32>
    %303 = vector.shape_cast %302 : vector<1x2x1xf32> to vector<2x1xf32>
    %304 = vector.shape_cast %301 : vector<2x1xf32> to vector<1x2x1xf32>
    tpu.vector_store %arg4[%c6_146, %c0_147, %c0_148], %304 {strides = array<i32>} : memref<8x2x1xf32, #tpu.memory_space<vmem>>, vector<1x2x1xf32>,
    %c7 = arith.constant 7 : index
    %c0_149 = arith.constant 0 : index
    %c0_150 = arith.constant 0 : index
    %305 = vector.load %arg1[%c7, %c0_149, %c0_150] : memref<8x2x128xf32, #tpu.memory_space<vmem>>, vector<1x2x128xf32>
    %306 = vector.shape_cast %305 : vector<1x2x128xf32> to vector<2x128xf32>
    %c0_151 = arith.constant 0 : index
    %c0_152 = arith.constant 0 : index
    %307 = vector.load %arg7[%c0_151, %c0_152] : memref<2x32xf32, #tpu.memory_space<vmem>>, vector<2x32xf32>
    %cst_153 = arith.constant dense<0.000000e+00> : vector<2x128xf32>
    %308 = tpu.matmul %307, %3, %cst_153 {dimension_numbers = #tpu.dot_dimension_numbers<[1], [0], [0], [1], [0, 0, 1, 1], [], []>} : vector<2x32xf32>, vector<32x128xf32>, vector<2x128xf32> -> vector<2x128xf32>
    %309 = arith.addf %306, %308 : vector<2x128xf32>
    %310 = vector.extract_strided_slice %309 {offsets = [0, 0], sizes = [2, 32], strides = [1, 1]} : vector<2x128xf32> to vector<2x32xf32>
    %311 = arith.negf %310 : vector<2x32xf32>
    %312 = math.exp %311 : vector<2x32xf32>
    %cst_154 = arith.constant 1.000000e+00 : f32
    %313 = vector.broadcast %cst_154 : f32 to vector<2x32xf32>
    %314 = arith.addf %313, %312 : vector<2x32xf32>
    %315 = arith.divf %313, %314 : vector<2x32xf32>
    %316 = vector.extract_strided_slice %309 {offsets = [0, 32], sizes = [2, 32], strides = [1, 1]} : vector<2x128xf32> to vector<2x32xf32>
    %317 = arith.negf %316 : vector<2x32xf32>
    %318 = math.exp %317 : vector<2x32xf32>
    %cst_155 = arith.constant 1.000000e+00 : f32
    %319 = vector.broadcast %cst_155 : f32 to vector<2x32xf32>
    %320 = arith.addf %319, %318 : vector<2x32xf32>
    %321 = arith.divf %319, %320 : vector<2x32xf32>
    %322 = vector.extract_strided_slice %309 {offsets = [0, 64], sizes = [2, 32], strides = [1, 1]} : vector<2x128xf32> to vector<2x32xf32>
    %323 = math.tanh %322 : vector<2x32xf32>
    %324 = vector.extract_strided_slice %309 {offsets = [0, 96], sizes = [2, 32], strides = [1, 1]} : vector<2x128xf32> to vector<2x32xf32>
    %325 = arith.negf %324 : vector<2x32xf32>
    %326 = math.exp %325 : vector<2x32xf32>
    %cst_156 = arith.constant 1.000000e+00 : f32
    %327 = vector.broadcast %cst_156 : f32 to vector<2x32xf32>
    %328 = arith.addf %327, %326 : vector<2x32xf32>
    %329 = arith.divf %327, %328 : vector<2x32xf32>
    %c0_157 = arith.constant 0 : index
    %c0_158 = arith.constant 0 : index
    %330 = vector.load %arg8[%c0_157, %c0_158] : memref<2x32xf32, #tpu.memory_space<vmem>>, vector<2x32xf32>
    %331 = arith.mulf %321, %330 : vector<2x32xf32>
    %332 = arith.mulf %315, %323 : vector<2x32xf32>
    %333 = arith.addf %331, %332 : vector<2x32xf32>
    %334 = math.tanh %333 : vector<2x32xf32>
    %335 = arith.mulf %329, %334 : vector<2x32xf32>
    %c0_159 = arith.constant 0 : index
    %c0_160 = arith.constant 0 : index
    %336 = vector.load %arg8[%c0_159, %c0_160] : memref<2x32xf32, #tpu.memory_space<vmem>>, vector<2x32xf32>
    tpu.vector_store %arg8[%c0_159, %c0_160], %333 {strides = array<i32>} : memref<2x32xf32, #tpu.memory_space<vmem>>, vector<2x32xf32>,
    %c0_161 = arith.constant 0 : index
    %c0_162 = arith.constant 0 : index
    %337 = vector.load %arg7[%c0_161, %c0_162] : memref<2x32xf32, #tpu.memory_space<vmem>>, vector<2x32xf32>
    tpu.vector_store %arg7[%c0_161, %c0_162], %335 {strides = array<i32>} : memref<2x32xf32, #tpu.memory_space<vmem>>, vector<2x32xf32>,
    %c0_163 = arith.constant 0 : index
    %c0_164 = arith.constant 0 : index
    %338 = vector.load %arg3[%c0_163, %c0_164] : memref<32x1xf32, #tpu.memory_space<vmem>>, vector<32x1xf32>
    %cst_165 = arith.constant dense<0.000000e+00> : vector<2x1xf32>
    %339 = tpu.matmul %335, %338, %cst_165 {dimension_numbers = #tpu.dot_dimension_numbers<[1], [0], [0], [1], [0, 0, 1, 1], [], []>} : vector<2x32xf32>, vector<32x1xf32>, vector<2x1xf32> -> vector<2x1xf32>
    %340 = arith.negf %339 : vector<2x1xf32>
    %341 = math.exp %340 : vector<2x1xf32>
    %cst_166 = arith.constant 1.000000e+00 : f32
    %342 = vector.broadcast %cst_166 : f32 to vector<2x1xf32>
    %343 = arith.addf %342, %341 : vector<2x1xf32>
    %344 = arith.divf %342, %343 : vector<2x1xf32>
    %c7_167 = arith.constant 7 : index
    %c0_168 = arith.constant 0 : index
    %c0_169 = arith.constant 0 : index
    %345 = vector.load %arg4[%c7_167, %c0_168, %c0_169] : memref<8x2x1xf32, #tpu.memory_space<vmem>>, vector<1x2x1xf32>
    %346 = vector.shape_cast %345 : vector<1x2x1xf32> to vector<2x1xf32>
    %347 = vector.shape_cast %344 : vector<2x1xf32> to vector<1x2x1xf32>
    tpu.vector_store %arg4[%c7_167, %c0_168, %c0_169], %347 {strides = array<i32>} : memref<8x2x1xf32, #tpu.memory_space<vmem>>, vector<1x2x1xf32>,
    %c0_170 = arith.constant 0 : index
    %c0_171 = arith.constant 0 : index
    %348 = vector.load %arg7[%c0_170, %c0_171] : memref<2x32xf32, #tpu.memory_space<vmem>>, vector<2x32xf32>
    %c0_172 = arith.constant 0 : index
    %c0_173 = arith.constant 0 : index
    %349 = vector.load %arg5[%c0_172, %c0_173] : memref<2x32xf32, #tpu.memory_space<vmem>>, vector<2x32xf32>
    tpu.vector_store %arg5[%c0_172, %c0_173], %348 {strides = array<i32>} : memref<2x32xf32, #tpu.memory_space<vmem>>, vector<2x32xf32>,
    %c0_174 = arith.constant 0 : index
    %c0_175 = arith.constant 0 : index
    %350 = vector.load %arg8[%c0_174, %c0_175] : memref<2x32xf32, #tpu.memory_space<vmem>>, vector<2x32xf32>
    %c0_176 = arith.constant 0 : index
    %c0_177 = arith.constant 0 : index
    %351 = vector.load %arg6[%c0_176, %c0_177] : memref<2x32xf32, #tpu.memory_space<vmem>>, vector<2x32xf32>
    tpu.vector_store %arg6[%c0_176, %c0_177], %350 {strides = array<i32>} : memref<2x32xf32, #tpu.memory_space<vmem>>, vector<2x32xf32>,
    return
  }
  func.func @transform_0(%arg0: i32) -> (i32, i32, i32) {
    %c0_i32 = arith.constant 0 : i32
    %c0_i32_0 = arith.constant 0 : i32
    %c0_i32_1 = arith.constant 0 : i32
    return %arg0, %c0_i32, %c0_i32_0 : i32, i32, i32
  }
  func.func @transform_1(%arg0: i32) -> (i32, i32) {
    %c0_i32 = arith.constant 0 : i32
    %c0_i32_0 = arith.constant 0 : i32
    %c0_i32_1 = arith.constant 0 : i32
    return %c0_i32, %c0_i32_0 : i32, i32
  }
  func.func @transform_2(%arg0: i32) -> (i32, i32) {
    %c0_i32 = arith.constant 0 : i32
    %c0_i32_0 = arith.constant 0 : i32
    %c0_i32_1 = arith.constant 0 : i32
    return %c0_i32, %c0_i32_0 : i32, i32
  }
  func.func @transform_3(%arg0: i32) -> (i32, i32, i32) {
    %c0_i32 = arith.constant 0 : i32
    %c0_i32_0 = arith.constant 0 : i32
    %c0_i32_1 = arith.constant 0 : i32
    return %arg0, %c0_i32, %c0_i32_0 : i32, i32, i32
  }
  func.func @transform_4(%arg0: i32) -> (i32, i32) {
    %c0_i32 = arith.constant 0 : i32
    %c0_i32_0 = arith.constant 0 : i32
    %c0_i32_1 = arith.constant 0 : i32
    return %c0_i32, %c0_i32_0 : i32, i32
  }
  func.func @transform_5(%arg0: i32) -> (i32, i32) {
    %c0_i32 = arith.constant 0 : i32
    %c0_i32_0 = arith.constant 0 : i32
    %c0_i32_1 = arith.constant 0 : i32
    return %c0_i32, %c0_i32_0 : i32, i32
  }
}

</mosaic_0001>

<llo_original>
// kernel: wl_forward.10
$region0: #{wl_forward.10}
  #allocation0 [shape = 'u32[]', space=smem, size = 0x4, offset = 0x4, fixed_abs, tag = 'smem constant byte address 0x4 - core index']
  #allocation1 [shape = 'u32[144,128]{1,0:T(1,128)}', space=vmem, size = 0x12000, scoped, tag = 'internal scratch']
  #allocation2 [shape = 'f32[8,256]{1,0:T(8,128)}', space=vmem, size = 0x2000, scoped, tag = 'scratch operand']
  %s0 = inlined_call_operand.vmem [shape: bf16[8,128], index: 0, kind: input, shape index: {}]
  %s1 = inlined_call_operand.vmem [shape: bf16[128,2048], index: 1, kind: input, shape index: {}]
  %s2 = inlined_call_operand.vmem [shape: f32[8,1], index: 2, kind: input, shape index: {}]
  %s3 = inlined_call_operand.vmem [shape: f32[8,1], index: 3, kind: input, shape index: {}]
  %s4 = inlined_call_operand.vmem [shape: f32[8,2048], index: 4, kind: output, shape index: {}]
  %s5 = sld [smem:[#allocation0]]
  $region95: #{wl_forward.10} parent=0
    _
  %s7 = ssub.s32 1, %s5
  %s8 = scalar_select 0, %s7, %s5
  $region1: #{wl_forward.10} parent=0
    #allocation3 [shape = 'u8[131072]{0}', space=vmem, size = 0x20000, scoped, tag = 'input window, operand 1']
    loop: start=0, step=1, limit=10
    $region2: #{wl_forward.10} parent=1 // loop_pre_header
      _
    $region3: #{wl_forward.10} parent=1 // loop_header
      %s10 = sphi 0, %s14
      %p11 = scmp.ge.s32.totalorder %s10, 10
      %s17 = sphi 0, %s36
      %s18 = sphi 0, %s32
      %s19 = sphi 0, %s28
      %s20 = sphi 0, %s17
      %s21 = sphi 0, %s18
      %s22 = sphi 0, %s19
      %s23 = sphi 0, %s20
      %s24 = sphi 0, %s21
      %s25 = sphi 0, %s22
      %s41 = sphi 0, %s43
      %s44 = sphi 0, %s41
      %s45 = sphi 0, %s44
      %s61 = sphi 0, %s45
      %s69 = sphi 0, %s71
      %s72 = sphi 0, %s69
      %s73 = sphi 0, %s72
      %s89 = sphi 0, %s73
      %s95 = sphi 0, %s97
      %s98 = sphi 0, %s95
      %s99 = sphi 0, %s98
      %s115 = sphi 0, %s99
      %s121 = sphi 0, %s123
      %s124 = sphi 0, %s121
      %s125 = sphi 0, %s124
      %s141 = sphi 0, %s125
      %s149 = sphi 0, %s151
      %s152 = sphi 0, %s149
      %s153 = sphi 0, %s152
      %s169 = sphi 0, %s153
    $region4: #{wl_forward.10} parent=1 // loop_header_branch
      %13 = sbr.rel (%p11) target = $region8
    $region5: #{wl_forward.10} parent=1 // loop_body
      %s15 = ssub.s32 %s10, 1
      %s16 = ssub.s32 %s10, 2
      %s26 = sadd.s32 1, %s19
      %p27 = scmp.ge.s32.totalorder %s26, 1
      %s28 = scalar_select %p27, 0, %s26
      %s29 = sadd.s32 1, %s18
      %s30 = scalar_select %p27, %s29, %s18
      %p31 = scmp.ge.s32.totalorder %s30, 8
      %s32 = scalar_select %p31, 0, %s30
      %s33 = sadd.s32 1, %s17
      %s34 = scalar_select %p31, %s33, %s17
      %p35 = scmp.ge.s32.totalorder %s34, 1
      %s36 = scalar_select %p35, 0, %s34
      %s37 = ssub.s32 %s17, %s36
      %s38 = ssub.s32 %s19, %s28
      %s39 = sor.u32 %s37, %s38
      %p40 = scmp.eq.s32.totalorder %s39, 0
      %s42 = sadd.s32 %s41, 1
      %s43 = scalar_select %p40, %s41, %s42
      %p46 = pneg %p40
      %p47 = scmp.eq.s32.totalorder %s10, 7
      %p48 = por %p46, %p47
      %p49 = scmp.ne.s32.totalorder %s41, %s44
      %p50 = scmp.eq.s32.totalorder %s10, 0
      %p51 = por %p49, %p50
      %p52 = scmp.ne.s32.totalorder %s41, %s44
      %p53 = scmp.eq.s32.totalorder %s15, 7
      %p54 = por %p52, %p53
      %p55 = scmp.ne.s32.totalorder %s44, %s45
      %p56 = scmp.eq.s32.totalorder %s15, 0
      %p57 = por %p55, %p56
      %p58 = scmp.ne.s32.totalorder %s44, %s45
      %p59 = scmp.eq.s32.totalorder %s16, 7
      %p60 = por %p58, %p59
      %p62 = scmp.ne.s32.totalorder %s45, %s61
      %p63 = scmp.eq.s32.totalorder %s16, 0
      %p64 = por %p62, %p63
      %s65 = ssub.s32 %s19, %s28
      %s66 = ssub.s32 %s18, %s32
      %s67 = sor.u32 %s65, %s66
      %p68 = scmp.eq.s32.totalorder %s67, 0
      %s70 = sadd.s32 %s69, 1
      %s71 = scalar_select %p68, %s69, %s70
      %p74 = pneg %p68
      %p75 = scmp.eq.s32.totalorder %s10, 7
      %p76 = por %p74, %p75
      %p77 = scmp.ne.s32.totalorder %s69, %s72
      %p78 = scmp.eq.s32.totalorder %s10, 0
      %p79 = por %p77, %p78
      %p80 = scmp.ne.s32.totalorder %s69, %s72
      %p81 = scmp.eq.s32.totalorder %s15, 7
      %p82 = por %p80, %p81
      %p83 = scmp.ne.s32.totalorder %s72, %s73
      %p84 = scmp.eq.s32.totalorder %s15, 0
      %p85 = por %p83, %p84
      %p86 = scmp.ne.s32.totalorder %s72, %s73
      %p87 = scmp.eq.s32.totalorder %s16, 7
      %p88 = por %p86, %p87
      %p90 = scmp.ne.s32.totalorder %s73, %s89
      %p91 = scmp.eq.s32.totalorder %s16, 0
      %p92 = por %p90, %p91
      %s93 = ssub.s32 %s17, %s36
      %p94 = scmp.eq.s32.totalorder %s93, 0
      %s96 = sadd.s32 %s95, 1
      %s97 = scalar_select %p94, %s95, %s96
      %p100 = pneg %p94
      %p101 = scmp.eq.s32.totalorder %s10, 7
      %p102 = por %p100, %p101
      %p103 = scmp.ne.s32.totalorder %s95, %s98
      %p104 = scmp.eq.s32.totalorder %s10, 0
      %p105 = por %p103, %p104
      %p106 = scmp.ne.s32.totalorder %s95, %s98
      %p107 = scmp.eq.s32.totalorder %s15, 7
      %p108 = por %p106, %p107
      %p109 = scmp.ne.s32.totalorder %s98, %s99
      %p110 = scmp.eq.s32.totalorder %s15, 0
      %p111 = por %p109, %p110
      %p112 = scmp.ne.s32.totalorder %s98, %s99
      %p113 = scmp.eq.s32.totalorder %s16, 7
      %p114 = por %p112, %p113
      %p116 = scmp.ne.s32.totalorder %s99, %s115
      %p117 = scmp.eq.s32.totalorder %s16, 0
      %p118 = por %p116, %p117
      %s119 = ssub.s32 %s17, %s36
      %p120 = scmp.eq.s32.totalorder %s119, 0
      %s122 = sadd.s32 %s121, 1
      %s123 = scalar_select %p120, %s121, %s122
      %p126 = pneg %p120
      %p127 = scmp.eq.s32.totalorder %s10, 7
      %p128 = por %p126, %p127
      %p129 = scmp.ne.s32.totalorder %s121, %s124
      %p130 = scmp.eq.s32.totalorder %s10, 0
      %p131 = por %p129, %p130
      %p132 = scmp.ne.s32.totalorder %s121, %s124
      %p133 = scmp.eq.s32.totalorder %s15, 7
      %p134 = por %p132, %p133
      %p135 = scmp.ne.s32.totalorder %s124, %s125
      %p136 = scmp.eq.s32.totalorder %s15, 0
      %p137 = por %p135, %p136
      %p138 = scmp.ne.s32.totalorder %s124, %s125
      %p139 = scmp.eq.s32.totalorder %s16, 7
      %p140 = por %p138, %p139
      %p142 = scmp.ne.s32.totalorder %s125, %s141
      %p143 = scmp.eq.s32.totalorder %s16, 0
      %p144 = por %p142, %p143
      %s145 = ssub.s32 %s17, %s36
      %s146 = ssub.s32 %s18, %s32
      %s147 = sor.u32 %s145, %s146
      %p148 = scmp.eq.s32.totalorder %s147, 0
      %s150 = sadd.s32 %s149, 1
      %s151 = scalar_select %p148, %s149, %s150
      %p154 = pneg %p148
      %p155 = scmp.eq.s32.totalorder %s10, 7
      %p156 = por %p154, %p155
      %p157 = scmp.ne.s32.totalorder %s149, %s152
      %p158 = scmp.eq.s32.totalorder %s10, 0
      %p159 = por %p157, %p158
      %p160 = scmp.ne.s32.totalorder %s149, %s152
      %p161 = scmp.eq.s32.totalorder %s15, 7
      %p162 = por %p160, %p161
      %p163 = scmp.ne.s32.totalorder %s152, %s153
      %p164 = scmp.eq.s32.totalorder %s15, 0
      %p165 = por %p163, %p164
      %p166 = scmp.ne.s32.totalorder %s152, %s153
      %p167 = scmp.eq.s32.totalorder %s16, 7
      %p168 = por %p166, %p167
      %p170 = scmp.ne.s32.totalorder %s153, %s169
      %p171 = scmp.eq.s32.totalorder %s16, 0
      %p172 = por %p170, %p171
      %p173 = scmp.le.s32.totalorder 1, %s10
      %p174 = scmp.lt.s32.totalorder %s10, 9
      %p175 = pnand %p173, %p174
      %p176 = pneg %p175
      // Predicated region
      $region9: #{wl_forward.10} parent=5 // pred_check
        _
      $region10: #{wl_forward.10} parent=5 // pred_check_branch
        %178 = sbr.rel (%p175) target = $region12
      $region11: #{wl_forward.10} parent=5 // pred_region
        %s179 = ssub.s32 %s10, 1
        // Predicated region
        $region13: #{wl_forward.10} parent=11 // pred_check
          %p180 = pneg %p57
        $region14: #{wl_forward.10} parent=11 // pred_check_branch
          %182 = sbr.rel (%p180) target = $region16
        $region15: #{wl_forward.10} parent=11 // pred_region
          %p183 = scmp.lt.s32.totalorder %s20, 0
          %s184 = scalar_select %p183, %s20, 0
          %p185 = scmp.lt.s32.totalorder %s22, 0
          %s186 = scalar_select %p185, %s22, 0
          %s187 = sadd.s32 %s186, %s184
          %s188 = smul.addr %s187, 4
          %s189 = scalar_lea.vmem %s0, %s188
        $region16: #{wl_forward.10} parent=11 // pred_fallthru
          _
        // Predicated region
        $region17: #{wl_forward.10} parent=11 // pred_check
          %p190 = pneg %p111
        $region18: #{wl_forward.10} parent=11 // pred_check_branch
          %192 = sbr.rel (%p190) target = $region20
        $region19: #{wl_forward.10} parent=11 // pred_region
          %p193 = scmp.lt.s32.totalorder %s20, 0
          %s194 = scalar_select %p193, %s20, 0
          %s195 = smul.addr %s194, 8
          %s196 = scalar_lea.vmem %s2, %s195
        $region20: #{wl_forward.10} parent=11 // pred_fallthru
          _
        // Predicated region
        $region21: #{wl_forward.10} parent=11 // pred_check
          %p197 = pneg %p137
        $region22: #{wl_forward.10} parent=11 // pred_check_branch
          %199 = sbr.rel (%p197) target = $region24
        $region23: #{wl_forward.10} parent=11 // pred_region
          %p200 = scmp.lt.s32.totalorder %s20, 0
          %s201 = scalar_select %p200, %s20, 0
          %s202 = smul.addr %s201, 8
          %s203 = scalar_lea.vmem %s3, %s202
        $region24: #{wl_forward.10} parent=11 // pred_fallthru
          _
      $region12: #{wl_forward.10} parent=5 // pred_fallthru
        _
      %p204 = scmp.lt.s32.totalorder %s10, 8
      // Predicated region
      $region25: #{wl_forward.10} parent=5 // pred_check
        %p205 = pneg %p204
      $region26: #{wl_forward.10} parent=5 // pred_check_branch
        %207 = sbr.rel (%p205) target = $region28
      $region27: #{wl_forward.10} parent=5 // pred_region
        // Predicated region
        $region29: #{wl_forward.10} parent=27 // pred_check
          %p208 = pneg %p79
        $region30: #{wl_forward.10} parent=27 // pred_check_branch
          %210 = sbr.rel (%p208) target = $region32
        $region31: #{wl_forward.10} parent=27 // pred_region
          %s211 = sand.u32 %s69, 1
          %s212 = sand.u32 %s69, 1
          %s213 = smul.addr %s212, 128
          %s214 = scalar_lea.vmem [#allocation3], %s213
          %s215 = smul.u32 16, %s19
          %s216 = smul.u32 2, %s18
          %s217 = smul.addr %s215, 16
          %s218 = sadd.s32 %s216, %s217
          %s219 = smul.addr %s218, 4
          %s220 = scalar_lea.vmem %s1, %s219
          // Predicated region
          $region33: #{wl_forward.10} parent=31 // pred_check
            _
          $region34: #{wl_forward.10} parent=31 // pred_check_branch
            %222 = sbr.rel (0) target = $region36
          $region35: #{wl_forward.10} parent=31 // pred_region
            // Predicated region
            $region37: #{wl_forward.10} parent=35 // pred_check
              _
            $region38: #{wl_forward.10} parent=35 // pred_check_branch
              %224 = sbr.rel (0) target = $region40
            $region39: #{wl_forward.10} parent=35 // pred_region
              // Predicated region
              $region52: #{wl_forward.10} parent=39 // pred_check
                _
              $region53: #{wl_forward.10} parent=39 // pred_check_branch
                %269 = sbr.rel (0) target = $region55
              $region54: #{wl_forward.10} parent=39 // pred_region
                loop: start=0, step=1, limit=1
                $region56: #{wl_forward.10} parent=54 // loop_pre_header
                  _
                $region57: #{wl_forward.10} parent=54 // loop_header
                  %s271 = sphi 0, %s275
                  %p272 = scmp.ge.s32.totalorder %s271, 1
                  %s276 = sphi %s220, %s220
                  %s277 = sphi %s214, %s214
                $region58: #{wl_forward.10} parent=54 // loop_header_branch
                  %274 = sbr.rel (%p272) target = $region62
                $region59: #{wl_forward.10} parent=54 // loop_body
                  %v278 = vld [vmem:[%s276] sm:$0xff]
                  %279 = vst [vmem:[%s277] sm:$0xff] %v278
                  %v280 = vld [vmem:[%s276 + $0x40] sm:$0xff]
                  %281 = vst [vmem:[%s277 + $0x8] sm:$0xff] %v280
                  %v282 = vld [vmem:[%s276 + $0x80] sm:$0xff]
                  %283 = vst [vmem:[%s277 + $0x10] sm:$0xff] %v282
                  %v284 = vld [vmem:[%s276 + $0xc0] sm:$0xff]
                  %285 = vst [vmem:[%s277 + $0x18] sm:$0xff] %v284
                  %v286 = vld [vmem:[%s276 + $0x100] sm:$0xff]
                  %287 = vst [vmem:[%s277 + $0x20] sm:$0xff] %v286
                  %v288 = vld [vmem:[%s276 + $0x140] sm:$0xff]
                  %289 = vst [vmem:[%s277 + $0x28] sm:$0xff] %v288
                  %v290 = vld [vmem:[%s276 + $0x180] sm:$0xff]
                  %291 = vst [vmem:[%s277 + $0x30] sm:$0xff] %v290
                  %v292 = vld [vmem:[%s276 + $0x1c0] sm:$0xff]
                  %293 = vst [vmem:[%s277 + $0x38] sm:$0xff] %v292
                  %v294 = vld [vmem:[%s276 + $0x200] sm:$0xff]
                  %295 = vst [vmem:[%s277 + $0x40] sm:$0xff] %v294
                  %v296 = vld [vmem:[%s276 + $0x240] sm:$0xff]
                  %297 = vst [vmem:[%s277 + $0x48] sm:$0xff] %v296
                  %v298 = vld [vmem:[%s276 + $0x280] sm:$0xff]
                  %299 = vst [vmem:[%s277 + $0x50] sm:$0xff] %v298
                  %v300 = vld [vmem:[%s276 + $0x2c0] sm:$0xff]
                  %301 = vst [vmem:[%s277 + $0x58] sm:$0xff] %v300
                  %v302 = vld [vmem:[%s276 + $0x300] sm:$0xff]
                  %303 = vst [vmem:[%s277 + $0x60] sm:$0xff] %v302
                  %v304 = vld [vmem:[%s276 + $0x340] sm:$0xff]
                  %305 = vst [vmem:[%s277 + $0x68] sm:$0xff] %v304
                  %v306 = vld [vmem:[%s276 + $0x380] sm:$0xff]
                  %307 = vst [vmem:[%s277 + $0x70] sm:$0xff] %v306
                  %v308 = vld [vmem:[%s276 + $0x3c0] sm:$0xff]
                  %309 = vst [vmem:[%s277 + $0x78] sm:$0xff] %v308
                $region60: #{wl_forward.10} parent=54 // loop_footer
                  %s275 = sadd.s32 1, %s271
                $region61: #{wl_forward.10} parent=54 // loop_footer_branch
                  %270 = sbr.rel target = $region57
                $region62: #{wl_forward.10} parent=54 // loop_exit
                  _
              $region55: #{wl_forward.10} parent=39 // pred_fallthru
                _
              // Predicated region
              $region63: #{wl_forward.10} parent=39 // pred_check
                _
              $region64: #{wl_forward.10} parent=39 // pred_check_branch
                %311 = sbr.rel target = $region66
              $region65: #{wl_forward.10} parent=39 // pred_region
                _
              $region66: #{wl_forward.10} parent=39 // pred_fallthru
                _
            $region40: #{wl_forward.10} parent=35 // pred_fallthru
              _
            // Predicated region
            $region41: #{wl_forward.10} parent=35 // pred_check
              _
            $region42: #{wl_forward.10} parent=35 // pred_check_branch
              %226 = sbr.rel target = $region44
            $region43: #{wl_forward.10} parent=35 // pred_region
              loop: start=0, step=1, limit=1
              $region45: #{wl_forward.10} parent=43 // loop_pre_header
                _
              $region46: #{wl_forward.10} parent=43 // loop_header
                %s229 = sphi 0, %s233
                %p230 = scmp.ge.s32.totalorder %s229, 1
                %s234 = sphi %s220, %s220
                %s235 = sphi %s214, %s214
              $region47: #{wl_forward.10} parent=43 // loop_header_branch
                %232 = sbr.rel (%p230) target = $region51
              $region48: #{wl_forward.10} parent=43 // loop_body
                %v236 = vld [vmem:[%s234] sm:$0xff]
                %237 = vst [vmem:[%s235] sm:$0xff] %v236
                %v238 = vld [vmem:[%s234 + $0x40] sm:$0xff]
                %239 = vst [vmem:[%s235 + $0x8] sm:$0xff] %v238
                %v240 = vld [vmem:[%s234 + $0x80] sm:$0xff]
                %241 = vst [vmem:[%s235 + $0x10] sm:$0xff] %v240
                %v242 = vld [vmem:[%s234 + $0xc0] sm:$0xff]
                %243 = vst [vmem:[%s235 + $0x18] sm:$0xff] %v242
                %v244 = vld [vmem:[%s234 + $0x100] sm:$0xff]
                %245 = vst [vmem:[%s235 + $0x20] sm:$0xff] %v244
                %v246 = vld [vmem:[%s234 + $0x140] sm:$0xff]
                %247 = vst [vmem:[%s235 + $0x28] sm:$0xff] %v246
                %v248 = vld [vmem:[%s234 + $0x180] sm:$0xff]
                %249 = vst [vmem:[%s235 + $0x30] sm:$0xff] %v248
                %v250 = vld [vmem:[%s234 + $0x1c0] sm:$0xff]
                %251 = vst [vmem:[%s235 + $0x38] sm:$0xff] %v250
                %v252 = vld [vmem:[%s234 + $0x200] sm:$0xff]
                %253 = vst [vmem:[%s235 + $0x40] sm:$0xff] %v252
                %v254 = vld [vmem:[%s234 + $0x240] sm:$0xff]
                %255 = vst [vmem:[%s235 + $0x48] sm:$0xff] %v254
                %v256 = vld [vmem:[%s234 + $0x280] sm:$0xff]
                %257 = vst [vmem:[%s235 + $0x50] sm:$0xff] %v256
                %v258 = vld [vmem:[%s234 + $0x2c0] sm:$0xff]
                %259 = vst [vmem:[%s235 + $0x58] sm:$0xff] %v258
                %v260 = vld [vmem:[%s234 + $0x300] sm:$0xff]
                %261 = vst [vmem:[%s235 + $0x60] sm:$0xff] %v260
                %v262 = vld [vmem:[%s234 + $0x340] sm:$0xff]
                %263 = vst [vmem:[%s235 + $0x68] sm:$0xff] %v262
                %v264 = vld [vmem:[%s234 + $0x380] sm:$0xff]
                %265 = vst [vmem:[%s235 + $0x70] sm:$0xff] %v264
                %v266 = vld [vmem:[%s234 + $0x3c0] sm:$0xff]
                %267 = vst [vmem:[%s235 + $0x78] sm:$0xff] %v266
              $region49: #{wl_forward.10} parent=43 // loop_footer
                %s233 = sadd.s32 1, %s229
              $region50: #{wl_forward.10} parent=43 // loop_footer_branch
                %228 = sbr.rel target = $region46
              $region51: #{wl_forward.10} parent=43 // loop_exit
                _
            $region44: #{wl_forward.10} parent=35 // pred_fallthru
              _
          $region36: #{wl_forward.10} parent=31 // pred_fallthru
            _
          %312 = vnop
        $region32: #{wl_forward.10} parent=27 // pred_fallthru
          _
      $region28: #{wl_forward.10} parent=5 // pred_fallthru
        _
      %p313 = scmp.le.s32.totalorder 1, %s10
      %p314 = scmp.lt.s32.totalorder %s10, 9
      %p315 = pnand %p313, %p314
      %p316 = pneg %p315
      // Predicated region
      $region67: #{wl_forward.10} parent=5 // pred_check
        _
      $region68: #{wl_forward.10} parent=5 // pred_check_branch
        %318 = sbr.rel (%p315) target = $region70
      $region69: #{wl_forward.10} parent=5 // pred_region
        %s319 = ssub.s32 %s10, 1
        %s320 = sand.u32 %s72, 1
        %s321 = sand.u32 %s72, 1
        %s322 = smul.addr %s321, 128
        %s323 = scalar_lea.vmem [#allocation3], %s322
        // Predicated region
        $region71: #{wl_forward.10} parent=69 // pred_check
          %p324 = pneg %p85
        $region72: #{wl_forward.10} parent=69 // pred_check_branch
          %326 = sbr.rel (%p324) target = $region74
        $region73: #{wl_forward.10} parent=69 // pred_region
          _
        $region74: #{wl_forward.10} parent=69 // pred_fallthru
          _
        %p327 = scmp.lt.s32.totalorder %s20, 0
        %s328 = scalar_select %p327, %s20, 0
        %p329 = scmp.lt.s32.totalorder %s22, 0
        %s330 = scalar_select %p329, %s22, 0
        %s331 = sadd.s32 %s330, %s328
        %s332 = smul.addr %s331, 4
        %s333 = scalar_lea.vmem %s0, %s332
        %p334 = pneg %p57
        %p335 = pneg %p54
        %s336 = sand.u32 %s72, 1
        %s337 = sand.u32 %s72, 1
        %s338 = smul.addr %s337, 128
        %s339 = scalar_lea.vmem [#allocation3], %s338
        %p340 = pneg %p85
        %p341 = pneg %p82
        %p342 = scmp.lt.s32.totalorder %s20, 0
        %s343 = scalar_select %p342, %s20, 0
        %s344 = smul.addr %s343, 8
        %s345 = scalar_lea.vmem %s2, %s344
        %p346 = pneg %p111
        %p347 = pneg %p108
        %p348 = scmp.lt.s32.totalorder %s20, 0
        %s349 = scalar_select %p348, %s20, 0
        %s350 = smul.addr %s349, 8
        %s351 = scalar_lea.vmem %s3, %s350
        %p352 = pneg %p137
        %p353 = pneg %p134
        %p354 = pneg %p165
        %p355 = pneg %p162
        %s356 = smul.u32 2, %s21
        %p357 = scmp.lt.s32.totalorder %s20, 0
        %s358 = scalar_select %p357, %s20, 0
        %p359 = scmp.lt.s32.totalorder %s356, 15
        %s360 = scalar_select %p359, %s356, 15
        %s361 = smul.addr %s358, 16
        %s362 = sadd.s32 %s360, %s361
        %s363 = smul.addr %s362, 8
        %s364 = scalar_lea.vmem %s4, %s363
        %p365 = scmp.lt.s32.totalorder %s20, 0
        %s366 = scalar_select %p365, %s20, 0
        %p367 = scmp.lt.s32.totalorder %s22, 0
        %s368 = scalar_select %p367, %s22, 0
        %s369 = sadd.s32 %s368, %s366
        %s370 = smul.addr %s369, 4
        %s371 = scalar_lea.vmem %s0, %s370
        %s372 = smul.u32 16, %s22
        %s373 = smul.u32 2, %s21
        %p374 = scmp.lt.s32.totalorder %s20, 0
        %s375 = scalar_select %p374, %s20, 0
        %s376 = smul.addr %s375, 8
        %s377 = scalar_lea.vmem %s2, %s376
        %p378 = scmp.lt.s32.totalorder %s20, 0
        %s379 = scalar_select %p378, %s20, 0
        %s380 = smul.addr %s379, 8
        %s381 = scalar_lea.vmem %s3, %s380
        %s382 = smul.u32 2, %s21
        %p383 = scmp.lt.s32.totalorder %s20, 0
        %s384 = scalar_select %p383, %s20, 0
        %p385 = scmp.lt.s32.totalorder %s382, 15
        %s386 = scalar_select %p385, %s382, 15
        %s387 = smul.addr %s384, 16
        %s388 = sadd.s32 %s386, %s387
        %s389 = smul.addr %s388, 8
        %s390 = scalar_lea.vmem %s4, %s389
        %s391 = smul.u32 2, %s21
        %p393 = scmp.eq.s32.totalorder %s22, 0
        // Predicated region
        $region75: #{wl_forward.10} parent=69 // pred_check
          %p394 = pneg %p393
        $region76: #{wl_forward.10} parent=69 // pred_check_branch
          %396 = sbr.rel (%p394) target = $region78
        $region77: #{wl_forward.10} parent=69 // pred_region
          %397 = vst [vmem:[#allocation2] sm:$0xff] 0.0
          %398 = vst [vmem:[#allocation2 + $0x8] sm:$0xff] 0.0
        $region78: #{wl_forward.10} parent=69 // pred_fallthru
          _
        %v399 = vld [vmem:[#allocation2] sm:$0xff]
        %v400 = vld [vmem:[#allocation2 + $0x8] sm:$0xff]
        %v401 = vld [vmem:[%s371] sm:$0xf]
        %v402 = vld [vmem:[%s323] sm:$0xff]
        %v403 = vld [vmem:[%s323 + $0x8] sm:$0xff]
        %v404 = vld [vmem:[%s323 + $0x10] sm:$0xff]
        %v405 = vld [vmem:[%s323 + $0x18] sm:$0xff]
        %v406 = vld [vmem:[%s323 + $0x20] sm:$0xff]
        %v407 = vld [vmem:[%s323 + $0x28] sm:$0xff]
        %v408 = vld [vmem:[%s323 + $0x30] sm:$0xff]
        %v409 = vld [vmem:[%s323 + $0x38] sm:$0xff]
        %v410 = vld [vmem:[%s323 + $0x40] sm:$0xff]
        %v411 = vld [vmem:[%s323 + $0x48] sm:$0xff]
        %v412 = vld [vmem:[%s323 + $0x50] sm:$0xff]
        %v413 = vld [vmem:[%s323 + $0x58] sm:$0xff]
        %v414 = vld [vmem:[%s323 + $0x60] sm:$0xff]
        %v415 = vld [vmem:[%s323 + $0x68] sm:$0xff]
        %v416 = vld [vmem:[%s323 + $0x70] sm:$0xff]
        %v417 = vld [vmem:[%s323 + $0x78] sm:$0xff]
        %v434 = vunpack.c.l.b16 %v402
        %v435 = vunpack.c.h.b16 %v402
        %v436 = vunpack.c.l.b16 %v403
        %v437 = vunpack.c.h.b16 %v403
        %v438 = vunpack.c.l.b16 %v404
        %v439 = vunpack.c.h.b16 %v404
        %v440 = vunpack.c.l.b16 %v405
        %v441 = vunpack.c.h.b16 %v405
        %v442 = vunpack.c.l.b16 %v406
        %v443 = vunpack.c.h.b16 %v406
        %v444 = vunpack.c.l.b16 %v407
        %v445 = vunpack.c.h.b16 %v407
        %v446 = vunpack.c.l.b16 %v408
        %v447 = vunpack.c.h.b16 %v408
        %v448 = vunpack.c.l.b16 %v409
        %v449 = vunpack.c.h.b16 %v409
        %v450 = vunpack.c.l.b16 %v410
        %v451 = vunpack.c.h.b16 %v410
        %v452 = vunpack.c.l.b16 %v411
        %v453 = vunpack.c.h.b16 %v411
        %v454 = vunpack.c.l.b16 %v412
        %v455 = vunpack.c.h.b16 %v412
        %v456 = vunpack.c.l.b16 %v413
        %v457 = vunpack.c.h.b16 %v413
        %v458 = vunpack.c.l.b16 %v414
        %v459 = vunpack.c.h.b16 %v414
        %v460 = vunpack.c.l.b16 %v415
        %v461 = vunpack.c.h.b16 %v415
        %v462 = vunpack.c.l.b16 %v416
        %v463 = vunpack.c.h.b16 %v416
        %v464 = vunpack.c.l.b16 %v417
        %v465 = vunpack.c.h.b16 %v417
        %v466 = vpack.c.b16 %v436, %v434
        %v467 = vpack.c.b16 %v437, %v435
        %v468 = vpack.c.b16 %v440, %v438
        %v469 = vpack.c.b16 %v441, %v439
        %v470 = vpack.c.b16 %v444, %v442
        %v471 = vpack.c.b16 %v445, %v443
        %v472 = vpack.c.b16 %v448, %v446
        %v473 = vpack.c.b16 %v449, %v447
        %v474 = vpack.c.b16 %v452, %v450
        %v475 = vpack.c.b16 %v453, %v451
        %v476 = vpack.c.b16 %v456, %v454
        %v477 = vpack.c.b16 %v457, %v455
        %v478 = vpack.c.b16 %v460, %v458
        %v479 = vpack.c.b16 %v461, %v459
        %v480 = vpack.c.b16 %v464, %v462
        %v481 = vpack.c.b16 %v465, %v463
        %498 = vmatprep.subr.bf16.mxu0 %v467
        %499 = vmatpush1.bf16.msra.mxu0 %v466
        %500 = vmatprep.subr.bf16.mxu0 %v469
        %501 = vmatpush1.bf16.msra.mxu0 %v468
        %502 = vmatprep.subr.bf16.mxu0 %v471
        %503 = vmatpush1.bf16.msra.mxu0 %v470
        %504 = vmatprep.subr.bf16.mxu0 %v473
        %505 = vmatpush1.bf16.msra.mxu0 %v472
        %506 = vmatprep.subr.bf16.mxu0 %v475
        %507 = vmatpush1.bf16.msra.mxu0 %v474
        %508 = vmatprep.subr.bf16.mxu0 %v477
        %509 = vmatpush1.bf16.msra.mxu0 %v476
        %510 = vmatprep.subr.bf16.mxu0 %v479
        %511 = vmatpush1.bf16.msra.mxu0 %v478
        %512 = vmatprep.subr.bf16.mxu0 %v481
        %513 = vmatpush1.bf16.msra.mxu0 %v480
        %514 = vmatprep.subr.bf16.mxu0 0
        %515 = vmatpush1.bf16.msra.mxu0 0
        %516 = vmatprep.subr.bf16.mxu0 0
        %517 = vmatpush1.bf16.msra.mxu0 0
        %518 = vmatprep.subr.bf16.mxu0 0
        %519 = vmatpush1.bf16.msra.mxu0 0
        %520 = vmatprep.subr.bf16.mxu0 0
        %521 = vmatpush1.bf16.msra.mxu0 0
        %522 = vmatprep.subr.bf16.mxu0 0
        %523 = vmatpush1.bf16.msra.mxu0 0
        %524 = vmatprep.subr.bf16.mxu0 0
        %525 = vmatpush1.bf16.msra.mxu0 0
        %526 = vmatprep.subr.bf16.mxu0 0
        %527 = vmatpush1.bf16.msra.mxu0 0
        %528 = vmatprep.subr.bf16.mxu0 0
        %529 = vmatpush1.bf16.msra.mxu0 0
        %530 = vmatprep.mubr.bf16.mxu0 0
        %531 = vmatmul.mubr.bf16.gmra.mrb[0].mxu0 %v401
        %v532 = vpop.f32.mrb[0].mxu0
        %v533 = vadd.f32 0.0, %v532
        %v534 = vpop.f32.mrb[0].mxu0
        %v535 = vadd.f32 0.0, %v534
        %v536 = vpop.f32.mrb[0].mxu0
        %v537 = vpop.f32.mrb[0].mxu0
        %538 = vdwg.mxu0
        %v539 = vadd.f32 %v399, %v533
        %v540 = vadd.f32 %v400, %v535
        %541 = vst [vmem:[#allocation2] sm:$0xff] %v539
        %542 = vst [vmem:[#allocation2 + $0x8] sm:$0xff] %v540
        // Predicated region
        $region79: #{wl_forward.10} parent=69 // pred_check
          %p543 = pneg %p393
        $region80: #{wl_forward.10} parent=69 // pred_check_branch
          %545 = sbr.rel (%p543) target = $region82
        $region81: #{wl_forward.10} parent=69 // pred_region
          %v546 = vld [vmem:[#allocation2] sm:$0xff]
          %v547 = vld [vmem:[#allocation2 + $0x8] sm:$0xff]
          %v548 = vld [vmem:[%s377] sm:$0xff]
          %550 = vset.pattern.permute.xlu0 0
          %551 = vperm.xlu0 %550, %v548
          %v552 = vpop.permute.xlu0 %551
          %v554 = vmul.f32 %v546, %v552
          %v555 = vmul.f32 %v547, %v552
          %v556 = vld [vmem:[%s381] sm:$0xff]
          %558 = vset.pattern.permute.xlu0 0
          %559 = vperm.xlu0 %558, %v556
          %v560 = vpop.permute.xlu0 %559
          %v562 = vadd.f32 %v554, %v560
          %v563 = vadd.f32 %v555, %v560
          %564 = vst [vmem:[%s390] sm:$0xff] %v562
          %565 = vst [vmem:[%s390 + $0x8] sm:$0xff] %v563
        $region82: #{wl_forward.10} parent=69 // pred_fallthru
          _
        %s566 = smul.u32 2, %s21
        %p567 = scmp.lt.s32.totalorder %s20, 0
        %s568 = scalar_select %p567, %s20, 0
        %p569 = scmp.lt.s32.totalorder %s566, 15
        %s570 = scalar_select %p569, %s566, 15
        %s571 = smul.addr %s568, 16
        %s572 = sadd.s32 %s570, %s571
        %s573 = smul.addr %s572, 8
        %s574 = scalar_lea.vmem %s4, %s573
        // Predicated region
        $region83: #{wl_forward.10} parent=69 // pred_check
          %p575 = pneg %p162
        $region84: #{wl_forward.10} parent=69 // pred_check_branch
          %577 = sbr.rel (%p575) target = $region86
        $region85: #{wl_forward.10} parent=69 // pred_region
          %s578 = smul.u32 2, %s21
        $region86: #{wl_forward.10} parent=69 // pred_fallthru
          _
      $region70: #{wl_forward.10} parent=5 // pred_fallthru
        _
      %p579 = scmp.le.s32.totalorder 2, %s10
      // Predicated region
      $region87: #{wl_forward.10} parent=5 // pred_check
        %p580 = pneg %p579
      $region88: #{wl_forward.10} parent=5 // pred_check_branch
        %582 = sbr.rel (%p580) target = $region90
      $region89: #{wl_forward.10} parent=5 // pred_region
        %s583 = ssub.s32 %s10, 2
        // Predicated region
        $region91: #{wl_forward.10} parent=89 // pred_check
          %p584 = pneg %p168
        $region92: #{wl_forward.10} parent=89 // pred_check_branch
          %586 = sbr.rel (%p584) target = $region94
        $region93: #{wl_forward.10} parent=89 // pred_region
          %s587 = smul.u32 2, %s24
          %p588 = scmp.lt.s32.totalorder %s23, 0
          %s589 = scalar_select %p588, %s23, 0
          %p590 = scmp.lt.s32.totalorder %s587, 15
          %s591 = scalar_select %p590, %s587, 15
          %s592 = smul.addr %s589, 16
          %s593 = sadd.s32 %s591, %s592
          %s594 = smul.addr %s593, 8
          %s595 = scalar_lea.vmem %s4, %s594
        $region94: #{wl_forward.10} parent=89 // pred_fallthru
          _
      $region90: #{wl_forward.10} parent=5 // pred_fallthru
        _
    $region6: #{wl_forward.10} parent=1 // loop_footer
      %s14 = sadd.s32 1, %s10
    $region7: #{wl_forward.10} parent=1 // loop_footer_branch
      %9 = sbr.rel target = $region3
    $region8: #{wl_forward.10} parent=1 // loop_exit
      _

// kernel: wl_forward.11
$region0: #{wl_forward.11}
  #allocation0 [shape = 'u32[]', space=smem, size = 0x4, offset = 0x4, fixed_abs, tag = 'smem constant byte address 0x4 - core index']
  #allocation1 [shape = 'u32[144,128]{1,0:T(1,128)}', space=vmem, size = 0x12000, scoped, tag = 'internal scratch']
  #allocation2 [shape = 'f32[8,256]{1,0:T(8,128)}', space=vmem, size = 0x2000, scoped, tag = 'scratch operand']
  %s0 = inlined_call_operand.vmem [shape: bf16[8,128], index: 0, kind: input, shape index: {}]
  %s1 = inlined_call_operand.vmem [shape: bf16[128,2048], index: 1, kind: input, shape index: {}]
  %s2 = inlined_call_operand.vmem [shape: f32[8,1], index: 2, kind: input, shape index: {}]
  %s3 = inlined_call_operand.vmem [shape: f32[8,1], index: 3, kind: input, shape index: {}]
  %s4 = inlined_call_operand.vmem [shape: f32[8,2048], index: 4, kind: output, shape index: {}]
  %s5 = sld [smem:[#allocation0]]
  $region95: #{wl_forward.11} parent=0
    _
  %s7 = ssub.s32 1, %s5
  %s8 = scalar_select 0, %s7, %s5
  $region1: #{wl_forward.11} parent=0
    #allocation3 [shape = 'u8[131072]{0}', space=vmem, size = 0x20000, scoped, tag = 'input window, operand 1']
    loop: start=0, step=1, limit=10
    $region2: #{wl_forward.11} parent=1 // loop_pre_header
      _
    $region3: #{wl_forward.11} parent=1 // loop_header
      %s10 = sphi 0, %s14
      %p11 = scmp.ge.s32.totalorder %s10, 10
      %s17 = sphi 0, %s36
      %s18 = sphi 0, %s32
      %s19 = sphi 0, %s28
      %s20 = sphi 0, %s17
      %s21 = sphi 0, %s18
      %s22 = sphi 0, %s19
      %s23 = sphi 0, %s20
      %s24 = sphi 0, %s21
      %s25 = sphi 0, %s22
      %s41 = sphi 0, %s43
      %s44 = sphi 0, %s41
      %s45 = sphi 0, %s44
      %s61 = sphi 0, %s45
      %s69 = sphi 0, %s71
      %s72 = sphi 0, %s69
      %s73 = sphi 0, %s72
      %s89 = sphi 0, %s73
      %s95 = sphi 0, %s97
      %s98 = sphi 0, %s95
      %s99 = sphi 0, %s98
      %s115 = sphi 0, %s99
      %s121 = sphi 0, %s123
      %s124 = sphi 0, %s121
      %s125 = sphi 0, %s124
      %s141 = sphi 0, %s125
      %s149 = sphi 0, %s151
      %s152 = sphi 0, %s149
      %s153 = sphi 0, %s152
      %s169 = sphi 0, %s153
    $region4: #{wl_forward.11} parent=1 // loop_header_branch
      %13 = sbr.rel (%p11) target = $region8
    $region5: #{wl_forward.11} parent=1 // loop_body
      %s15 = ssub.s32 %s10, 1
      %s16 = ssub.s32 %s10, 2
      %s26 = sadd.s32 1, %s19
      %p27 = scmp.ge.s32.totalorder %s26, 1
      %s28 = scalar_select %p27, 0, %s26
      %s29 = sadd.s32 1, %s18
      %s30 = scalar_select %p27, %s29, %s18
      %p31 = scmp.ge.s32.totalorder %s30, 8
      %s32 = scalar_select %p31, 0, %s30
      %s33 = sadd.s32 1, %s17
      %s34 = scalar_select %p31, %s33, %s17
      %p35 = scmp.ge.s32.totalorder %s34, 1
      %s36 = scalar_select %p35, 0, %s34
      %s37 = ssub.s32 %s17, %s36
      %s38 = ssub.s32 %s19, %s28
      %s39 = sor.u32 %s37, %s38
      %p40 = scmp.eq.s32.totalorder %s39, 0
      %s42 = sadd.s32 %s41, 1
      %s43 = scalar_select %p40, %s41, %s42
      %p46 = pneg %p40
      %p47 = scmp.eq.s32.totalorder %s10, 7
      %p48 = por %p46, %p47
      %p49 = scmp.ne.s32.totalorder %s41, %s44
      %p50 = scmp.eq.s32.totalorder %s10, 0
      %p51 = por %p49, %p50
      %p52 = scmp.ne.s32.totalorder %s41, %s44
      %p53 = scmp.eq.s32.totalorder %s15, 7
      %p54 = por %p52, %p53
      %p55 = scmp.ne.s32.totalorder %s44, %s45
      %p56 = scmp.eq.s32.totalorder %s15, 0
      %p57 = por %p55, %p56
      %p58 = scmp.ne.s32.totalorder %s44, %s45
      %p59 = scmp.eq.s32.totalorder %s16, 7
      %p60 = por %p58, %p59
      %p62 = scmp.ne.s32.totalorder %s45, %s61
      %p63 = scmp.eq.s32.totalorder %s16, 0
      %p64 = por %p62, %p63
      %s65 = ssub.s32 %s19, %s28
      %s66 = ssub.s32 %s18, %s32
      %s67 = sor.u32 %s65, %s66
      %p68 = scmp.eq.s32.totalorder %s67, 0
      %s70 = sadd.s32 %s69, 1
      %s71 = scalar_select %p68, %s69, %s70
      %p74 = pneg %p68
      %p75 = scmp.eq.s32.totalorder %s10, 7
      %p76 = por %p74, %p75
      %p77 = scmp.ne.s32.totalorder %s69, %s72
      %p78 = scmp.eq.s32.totalorder %s10, 0
      %p79 = por %p77, %p78
      %p80 = scmp.ne.s32.totalorder %s69, %s72
      %p81 = scmp.eq.s32.totalorder %s15, 7
      %p82 = por %p80, %p81
      %p83 = scmp.ne.s32.totalorder %s72, %s73
      %p84 = scmp.eq.s32.totalorder %s15, 0
      %p85 = por %p83, %p84
      %p86 = scmp.ne.s32.totalorder %s72, %s73
      %p87 = scmp.eq.s32.totalorder %s16, 7
      %p88 = por %p86, %p87
      %p90 = scmp.ne.s32.totalorder %s73, %s89
      %p91 = scmp.eq.s32.totalorder %s16, 0
      %p92 = por %p90, %p91
      %s93 = ssub.s32 %s17, %s36
      %p94 = scmp.eq.s32.totalorder %s93, 0
      %s96 = sadd.s32 %s95, 1
      %s97 = scalar_select %p94, %s95, %s96
      %p100 = pneg %p94
      %p101 = scmp.eq.s32.totalorder %s10, 7
      %p102 = por %p100, %p101
      %p103 = scmp.ne.s32.totalorder %s95, %s98
      %p104 = scmp.eq.s32.totalorder %s10, 0
      %p105 = por %p103, %p104
      %p106 = scmp.ne.s32.totalorder %s95, %s98
      %p107 = scmp.eq.s32.totalorder %s15, 7
      %p108 = por %p106, %p107
      %p109 = scmp.ne.s32.totalorder %s98, %s99
      %p110 = scmp.eq.s32.totalorder %s15, 0
      %p111 = por %p109, %p110
      %p112 = scmp.ne.s32.totalorder %s98, %s99
      %p113 = scmp.eq.s32.totalorder %s16, 7
      %p114 = por %p112, %p113
      %p116 = scmp.ne.s32.totalorder %s99, %s115
      %p117 = scmp.eq.s32.totalorder %s16, 0
      %p118 = por %p116, %p117
      %s119 = ssub.s32 %s17, %s36
      %p120 = scmp.eq.s32.totalorder %s119, 0
      %s122 = sadd.s32 %s121, 1
      %s123 = scalar_select %p120, %s121, %s122
      %p126 = pneg %p120
      %p127 = scmp.eq.s32.totalorder %s10, 7
      %p128 = por %p126, %p127
      %p129 = scmp.ne.s32.totalorder %s121, %s124
      %p130 = scmp.eq.s32.totalorder %s10, 0
      %p131 = por %p129, %p130
      %p132 = scmp.ne.s32.totalorder %s121, %s124
      %p133 = scmp.eq.s32.totalorder %s15, 7
      %p134 = por %p132, %p133
      %p135 = scmp.ne.s32.totalorder %s124, %s125
      %p136 = scmp.eq.s32.totalorder %s15, 0
      %p137 = por %p135, %p136
      %p138 = scmp.ne.s32.totalorder %s124, %s125
      %p139 = scmp.eq.s32.totalorder %s16, 7
      %p140 = por %p138, %p139
      %p142 = scmp.ne.s32.totalorder %s125, %s141
      %p143 = scmp.eq.s32.totalorder %s16, 0
      %p144 = por %p142, %p143
      %s145 = ssub.s32 %s17, %s36
      %s146 = ssub.s32 %s18, %s32
      %s147 = sor.u32 %s145, %s146
      %p148 = scmp.eq.s32.totalorder %s147, 0
      %s150 = sadd.s32 %s149, 1
      %s151 = scalar_select %p148, %s149, %s150
      %p154 = pneg %p148
      %p155 = scmp.eq.s32.totalorder %s10, 7
      %p156 = por %p154, %p155
      %p157 = scmp.ne.s32.totalorder %s149, %s152
      %p158 = scmp.eq.s32.totalorder %s10, 0
      %p159 = por %p157, %p158
      %p160 = scmp.ne.s32.totalorder %s149, %s152
      %p161 = scmp.eq.s32.totalorder %s15, 7
      %p162 = por %p160, %p161
      %p163 = scmp.ne.s32.totalorder %s152, %s153
      %p164 = scmp.eq.s32.totalorder %s15, 0
      %p165 = por %p163, %p164
      %p166 = scmp.ne.s32.totalorder %s152, %s153
      %p167 = scmp.eq.s32.totalorder %s16, 7
      %p168 = por %p166, %p167
      %p170 = scmp.ne.s32.totalorder %s153, %s169
      %p171 = scmp.eq.s32.totalorder %s16, 0
      %p172 = por %p170, %p171
      %p173 = scmp.le.s32.totalorder 1, %s10
      %p174 = scmp.lt.s32.totalorder %s10, 9
      %p175 = pnand %p173, %p174
      %p176 = pneg %p175
      // Predicated region
      $region9: #{wl_forward.11} parent=5 // pred_check
        _
      $region10: #{wl_forward.11} parent=5 // pred_check_branch
        %178 = sbr.rel (%p175) target = $region12
      $region11: #{wl_forward.11} parent=5 // pred_region
        %s179 = ssub.s32 %s10, 1
        // Predicated region
        $region13: #{wl_forward.11} parent=11 // pred_check
          %p180 = pneg %p57
        $region14: #{wl_forward.11} parent=11 // pred_check_branch
          %182 = sbr.rel (%p180) target = $region16
        $region15: #{wl_forward.11} parent=11 // pred_region
          %p183 = scmp.lt.s32.totalorder %s20, 0
          %s184 = scalar_select %p183, %s20, 0
          %p185 = scmp.lt.s32.totalorder %s22, 0
          %s186 = scalar_select %p185, %s22, 0
          %s187 = sadd.s32 %s186, %s184
          %s188 = smul.addr %s187, 4
          %s189 = scalar_lea.vmem %s0, %s188
        $region16: #{wl_forward.11} parent=11 // pred_fallthru
          _
        // Predicated region
        $region17: #{wl_forward.11} parent=11 // pred_check
          %p190 = pneg %p111
        $region18: #{wl_forward.11} parent=11 // pred_check_branch
          %192 = sbr.rel (%p190) target = $region20
        $region19: #{wl_forward.11} parent=11 // pred_region
          %p193 = scmp.lt.s32.totalorder %s20, 0
          %s194 = scalar_select %p193, %s20, 0
          %s195 = smul.addr %s194, 8
          %s196 = scalar_lea.vmem %s2, %s195
        $region20: #{wl_forward.11} parent=11 // pred_fallthru
          _
        // Predicated region
        $region21: #{wl_forward.11} parent=11 // pred_check
          %p197 = pneg %p137
        $region22: #{wl_forward.11} parent=11 // pred_check_branch
          %199 = sbr.rel (%p197) target = $region24
        $region23: #{wl_forward.11} parent=11 // pred_region
          %p200 = scmp.lt.s32.totalorder %s20, 0
          %s201 = scalar_select %p200, %s20, 0
          %s202 = smul.addr %s201, 8
          %s203 = scalar_lea.vmem %s3, %s202
        $region24: #{wl_forward.11} parent=11 // pred_fallthru
          _
      $region12: #{wl_forward.11} parent=5 // pred_fallthru
        _
      %p204 = scmp.lt.s32.totalorder %s10, 8
      // Predicated region
      $region25: #{wl_forward.11} parent=5 // pred_check
        %p205 = pneg %p204
      $region26: #{wl_forward.11} parent=5 // pred_check_branch
        %207 = sbr.rel (%p205) target = $region28
      $region27: #{wl_forward.11} parent=5 // pred_region
        // Predicated region
        $region29: #{wl_forward.11} parent=27 // pred_check
          %p208 = pneg %p79
        $region30: #{wl_forward.11} parent=27 // pred_check_branch
          %210 = sbr.rel (%p208) target = $region32
        $region31: #{wl_forward.11} parent=27 // pred_region
          %s211 = sand.u32 %s69, 1
          %s212 = sand.u32 %s69, 1
          %s213 = smul.addr %s212, 128
          %s214 = scalar_lea.vmem [#allocation3], %s213
          %s215 = smul.u32 16, %s19
          %s216 = smul.u32 2, %s18
          %s217 = smul.addr %s215, 16
          %s218 = sadd.s32 %s216, %s217
          %s219 = smul.addr %s218, 4
          %s220 = scalar_lea.vmem %s1, %s219
          // Predicated region
          $region33: #{wl_forward.11} parent=31 // pred_check
            _
          $region34: #{wl_forward.11} parent=31 // pred_check_branch
            %222 = sbr.rel (0) target = $region36
          $region35: #{wl_forward.11} parent=31 // pred_region
            // Predicated region
            $region37: #{wl_forward.11} parent=35 // pred_check
              _
            $region38: #{wl_forward.11} parent=35 // pred_check_branch
              %224 = sbr.rel (0) target = $region40
            $region39: #{wl_forward.11} parent=35 // pred_region
              // Predicated region
              $region52: #{wl_forward.11} parent=39 // pred_check
                _
              $region53: #{wl_forward.11} parent=39 // pred_check_branch
                %269 = sbr.rel (0) target = $region55
              $region54: #{wl_forward.11} parent=39 // pred_region
                loop: start=0, step=1, limit=1
                $region56: #{wl_forward.11} parent=54 // loop_pre_header
                  _
                $region57: #{wl_forward.11} parent=54 // loop_header
                  %s271 = sphi 0, %s275
                  %p272 = scmp.ge.s32.totalorder %s271, 1
                  %s276 = sphi %s220, %s220
                  %s277 = sphi %s214, %s214
                $region58: #{wl_forward.11} parent=54 // loop_header_branch
                  %274 = sbr.rel (%p272) target = $region62
                $region59: #{wl_forward.11} parent=54 // loop_body
                  %v278 = vld [vmem:[%s276] sm:$0xff]
                  %279 = vst [vmem:[%s277] sm:$0xff] %v278
                  %v280 = vld [vmem:[%s276 + $0x40] sm:$0xff]
                  %281 = vst [vmem:[%s277 + $0x8] sm:$0xff] %v280
                  %v282 = vld [vmem:[%s276 + $0x80] sm:$0xff]
                  %283 = vst [vmem:[%s277 + $0x10] sm:$0xff] %v282
                  %v284 = vld [vmem:[%s276 + $0xc0] sm:$0xff]
                  %285 = vst [vmem:[%s277 + $0x18] sm:$0xff] %v284
                  %v286 = vld [vmem:[%s276 + $0x100] sm:$0xff]
                  %287 = vst [vmem:[%s277 + $0x20] sm:$0xff] %v286
                  %v288 = vld [vmem:[%s276 + $0x140] sm:$0xff]
                  %289 = vst [vmem:[%s277 + $0x28] sm:$0xff] %v288
                  %v290 = vld [vmem:[%s276 + $0x180] sm:$0xff]
                  %291 = vst [vmem:[%s277 + $0x30] sm:$0xff] %v290
                  %v292 = vld [vmem:[%s276 + $0x1c0] sm:$0xff]
                  %293 = vst [vmem:[%s277 + $0x38] sm:$0xff] %v292
                  %v294 = vld [vmem:[%s276 + $0x200] sm:$0xff]
                  %295 = vst [vmem:[%s277 + $0x40] sm:$0xff] %v294
                  %v296 = vld [vmem:[%s276 + $0x240] sm:$0xff]
                  %297 = vst [vmem:[%s277 + $0x48] sm:$0xff] %v296
                  %v298 = vld [vmem:[%s276 + $0x280] sm:$0xff]
                  %299 = vst [vmem:[%s277 + $0x50] sm:$0xff] %v298
                  %v300 = vld [vmem:[%s276 + $0x2c0] sm:$0xff]
                  %301 = vst [vmem:[%s277 + $0x58] sm:$0xff] %v300
                  %v302 = vld [vmem:[%s276 + $0x300] sm:$0xff]
                  %303 = vst [vmem:[%s277 + $0x60] sm:$0xff] %v302
                  %v304 = vld [vmem:[%s276 + $0x340] sm:$0xff]
                  %305 = vst [vmem:[%s277 + $0x68] sm:$0xff] %v304
                  %v306 = vld [vmem:[%s276 + $0x380] sm:$0xff]
                  %307 = vst [vmem:[%s277 + $0x70] sm:$0xff] %v306
                  %v308 = vld [vmem:[%s276 + $0x3c0] sm:$0xff]
                  %309 = vst [vmem:[%s277 + $0x78] sm:$0xff] %v308
                $region60: #{wl_forward.11} parent=54 // loop_footer
                  %s275 = sadd.s32 1, %s271
                $region61: #{wl_forward.11} parent=54 // loop_footer_branch
                  %270 = sbr.rel target = $region57
                $region62: #{wl_forward.11} parent=54 // loop_exit
                  _
              $region55: #{wl_forward.11} parent=39 // pred_fallthru
                _
              // Predicated region
              $region63: #{wl_forward.11} parent=39 // pred_check
                _
              $region64: #{wl_forward.11} parent=39 // pred_check_branch
                %311 = sbr.rel target = $region66
              $region65: #{wl_forward.11} parent=39 // pred_region
                _
              $region66: #{wl_forward.11} parent=39 // pred_fallthru
                _
            $region40: #{wl_forward.11} parent=35 // pred_fallthru
              _
            // Predicated region
            $region41: #{wl_forward.11} parent=35 // pred_check
              _
            $region42: #{wl_forward.11} parent=35 // pred_check_branch
              %226 = sbr.rel target = $region44
            $region43: #{wl_forward.11} parent=35 // pred_region
              loop: start=0, step=1, limit=1
              $region45: #{wl_forward.11} parent=43 // loop_pre_header
                _
              $region46: #{wl_forward.11} parent=43 // loop_header
                %s229 = sphi 0, %s233
                %p230 = scmp.ge.s32.totalorder %s229, 1
                %s234 = sphi %s220, %s220
                %s235 = sphi %s214, %s214
              $region47: #{wl_forward.11} parent=43 // loop_header_branch
                %232 = sbr.rel (%p230) target = $region51
              $region48: #{wl_forward.11} parent=43 // loop_body
                %v236 = vld [vmem:[%s234] sm:$0xff]
                %237 = vst [vmem:[%s235] sm:$0xff] %v236
                %v238 = vld [vmem:[%s234 + $0x40] sm:$0xff]
                %239 = vst [vmem:[%s235 + $0x8] sm:$0xff] %v238
                %v240 = vld [vmem:[%s234 + $0x80] sm:$0xff]
                %241 = vst [vmem:[%s235 + $0x10] sm:$0xff] %v240
                %v242 = vld [vmem:[%s234 + $0xc0] sm:$0xff]
                %243 = vst [vmem:[%s235 + $0x18] sm:$0xff] %v242
                %v244 = vld [vmem:[%s234 + $0x100] sm:$0xff]
                %245 = vst [vmem:[%s235 + $0x20] sm:$0xff] %v244
                %v246 = vld [vmem:[%s234 + $0x140] sm:$0xff]
                %247 = vst [vmem:[%s235 + $0x28] sm:$0xff] %v246
                %v248 = vld [vmem:[%s234 + $0x180] sm:$0xff]
                %249 = vst [vmem:[%s235 + $0x30] sm:$0xff] %v248
                %v250 = vld [vmem:[%s234 + $0x1c0] sm:$0xff]
                %251 = vst [vmem:[%s235 + $0x38] sm:$0xff] %v250
                %v252 = vld [vmem:[%s234 + $0x200] sm:$0xff]
                %253 = vst [vmem:[%s235 + $0x40] sm:$0xff] %v252
                %v254 = vld [vmem:[%s234 + $0x240] sm:$0xff]
                %255 = vst [vmem:[%s235 + $0x48] sm:$0xff] %v254
                %v256 = vld [vmem:[%s234 + $0x280] sm:$0xff]
                %257 = vst [vmem:[%s235 + $0x50] sm:$0xff] %v256
                %v258 = vld [vmem:[%s234 + $0x2c0] sm:$0xff]
                %259 = vst [vmem:[%s235 + $0x58] sm:$0xff] %v258
                %v260 = vld [vmem:[%s234 + $0x300] sm:$0xff]
                %261 = vst [vmem:[%s235 + $0x60] sm:$0xff] %v260
                %v262 = vld [vmem:[%s234 + $0x340] sm:$0xff]
                %263 = vst [vmem:[%s235 + $0x68] sm:$0xff] %v262
                %v264 = vld [vmem:[%s234 + $0x380] sm:$0xff]
                %265 = vst [vmem:[%s235 + $0x70] sm:$0xff] %v264
                %v266 = vld [vmem:[%s234 + $0x3c0] sm:$0xff]
                %267 = vst [vmem:[%s235 + $0x78] sm:$0xff] %v266
              $region49: #{wl_forward.11} parent=43 // loop_footer
                %s233 = sadd.s32 1, %s229
              $region50: #{wl_forward.11} parent=43 // loop_footer_branch
                %228 = sbr.rel target = $region46
              $region51: #{wl_forward.11} parent=43 // loop_exit
                _
            $region44: #{wl_forward.11} parent=35 // pred_fallthru
              _
          $region36: #{wl_forward.11} parent=31 // pred_fallthru
            _
          %312 = vnop
        $region32: #{wl_forward.11} parent=27 // pred_fallthru
          _
      $region28: #{wl_forward.11} parent=5 // pred_fallthru
        _
      %p313 = scmp.le.s32.totalorder 1, %s10
      %p314 = scmp.lt.s32.totalorder %s10, 9
      %p315 = pnand %p313, %p314
      %p316 = pneg %p315
      // Predicated region
      $region67: #{wl_forward.11} parent=5 // pred_check
        _
      $region68: #{wl_forward.11} parent=5 // pred_check_branch
        %318 = sbr.rel (%p315) target = $region70
      $region69: #{wl_forward.11} parent=5 // pred_region
        %s319 = ssub.s32 %s10, 1
        %s320 = sand.u32 %s72, 1
        %s321 = sand.u32 %s72, 1
        %s322 = smul.addr %s321, 128
        %s323 = scalar_lea.vmem [#allocation3], %s322
        // Predicated region
        $region71: #{wl_forward.11} parent=69 // pred_check
          %p324 = pneg %p85
        $region72: #{wl_forward.11} parent=69 // pred_check_branch
          %326 = sbr.rel (%p324) target = $region74
        $region73: #{wl_forward.11} parent=69 // pred_region
          _
        $region74: #{wl_forward.11} parent=69 // pred_fallthru
          _
        %p327 = scmp.lt.s32.totalorder %s20, 0
        %s328 = scalar_select %p327, %s20, 0
        %p329 = scmp.lt.s32.totalorder %s22, 0
        %s330 = scalar_select %p329, %s22, 0
        %s331 = sadd.s32 %s330, %s328
        %s332 = smul.addr %s331, 4
        %s333 = scalar_lea.vmem %s0, %s332
        %p334 = pneg %p57
        %p335 = pneg %p54
        %s336 = sand.u32 %s72, 1
        %s337 = sand.u32 %s72, 1
        %s338 = smul.addr %s337, 128
        %s339 = scalar_lea.vmem [#allocation3], %s338
        %p340 = pneg %p85
        %p341 = pneg %p82
        %p342 = scmp.lt.s32.totalorder %s20, 0
        %s343 = scalar_select %p342, %s20, 0
        %s344 = smul.addr %s343, 8
        %s345 = scalar_lea.vmem %s2, %s344
        %p346 = pneg %p111
        %p347 = pneg %p108
        %p348 = scmp.lt.s32.totalorder %s20, 0
        %s349 = scalar_select %p348, %s20, 0
        %s350 = smul.addr %s349, 8
        %s351 = scalar_lea.vmem %s3, %s350
        %p352 = pneg %p137
        %p353 = pneg %p134
        %p354 = pneg %p165
        %p355 = pneg %p162
        %s356 = smul.u32 2, %s21
        %p357 = scmp.lt.s32.totalorder %s20, 0
        %s358 = scalar_select %p357, %s20, 0
        %p359 = scmp.lt.s32.totalorder %s356, 15
        %s360 = scalar_select %p359, %s356, 15
        %s361 = smul.addr %s358, 16
        %s362 = sadd.s32 %s360, %s361
        %s363 = smul.addr %s362, 8
        %s364 = scalar_lea.vmem %s4, %s363
        %p365 = scmp.lt.s32.totalorder %s20, 0
        %s366 = scalar_select %p365, %s20, 0
        %p367 = scmp.lt.s32.totalorder %s22, 0
        %s368 = scalar_select %p367, %s22, 0
        %s369 = sadd.s32 %s368, %s366
        %s370 = smul.addr %s369, 4
        %s371 = scalar_lea.vmem %s0, %s370
        %s372 = smul.u32 16, %s22
        %s373 = smul.u32 2, %s21
        %p374 = scmp.lt.s32.totalorder %s20, 0
        %s375 = scalar_select %p374, %s20, 0
        %s376 = smul.addr %s375, 8
        %s377 = scalar_lea.vmem %s2, %s376
        %p378 = scmp.lt.s32.totalorder %s20, 0
        %s379 = scalar_select %p378, %s20, 0
        %s380 = smul.addr %s379, 8
        %s381 = scalar_lea.vmem %s3, %s380
        %s382 = smul.u32 2, %s21
        %p383 = scmp.lt.s32.totalorder %s20, 0
        %s384 = scalar_select %p383, %s20, 0
        %p385 = scmp.lt.s32.totalorder %s382, 15
        %s386 = scalar_select %p385, %s382, 15
        %s387 = smul.addr %s384, 16
        %s388 = sadd.s32 %s386, %s387
        %s389 = smul.addr %s388, 8
        %s390 = scalar_lea.vmem %s4, %s389
        %s391 = smul.u32 2, %s21
        %p393 = scmp.eq.s32.totalorder %s22, 0
        // Predicated region
        $region75: #{wl_forward.11} parent=69 // pred_check
          %p394 = pneg %p393
        $region76: #{wl_forward.11} parent=69 // pred_check_branch
          %396 = sbr.rel (%p394) target = $region78
        $region77: #{wl_forward.11} parent=69 // pred_region
          %397 = vst [vmem:[#allocation2] sm:$0xff] 0.0
          %398 = vst [vmem:[#allocation2 + $0x8] sm:$0xff] 0.0
        $region78: #{wl_forward.11} parent=69 // pred_fallthru
          _
        %v399 = vld [vmem:[#allocation2] sm:$0xff]
        %v400 = vld [vmem:[#allocation2 + $0x8] sm:$0xff]
        %v401 = vld [vmem:[%s371] sm:$0xf]
        %v402 = vld [vmem:[%s323] sm:$0xff]
        %v403 = vld [vmem:[%s323 + $0x8] sm:$0xff]
        %v404 = vld [vmem:[%s323 + $0x10] sm:$0xff]
        %v405 = vld [vmem:[%s323 + $0x18] sm:$0xff]
        %v406 = vld [vmem:[%s323 + $0x20] sm:$0xff]
        %v407 = vld [vmem:[%s323 + $0x28] sm:$0xff]
        %v408 = vld [vmem:[%s323 + $0x30] sm:$0xff]
        %v409 = vld [vmem:[%s323 + $0x38] sm:$0xff]
        %v410 = vld [vmem:[%s323 + $0x40] sm:$0xff]
        %v411 = vld [vmem:[%s323 + $0x48] sm:$0xff]
        %v412 = vld [vmem:[%s323 + $0x50] sm:$0xff]
        %v413 = vld [vmem:[%s323 + $0x58] sm:$0xff]
        %v414 = vld [vmem:[%s323 + $0x60] sm:$0xff]
        %v415 = vld [vmem:[%s323 + $0x68] sm:$0xff]
        %v416 = vld [vmem:[%s323 + $0x70] sm:$0xff]
        %v417 = vld [vmem:[%s323 + $0x78] sm:$0xff]
        %v434 = vunpack.c.l.b16 %v402
        %v435 = vunpack.c.h.b16 %v402
        %v436 = vunpack.c.l.b16 %v403
        %v437 = vunpack.c.h.b16 %v403
        %v438 = vunpack.c.l.b16 %v404
        %v439 = vunpack.c.h.b16 %v404
        %v440 = vunpack.c.l.b16 %v405
        %v441 = vunpack.c.h.b16 %v405
        %v442 = vunpack.c.l.b16 %v406
        %v443 = vunpack.c.h.b16 %v406
        %v444 = vunpack.c.l.b16 %v407
        %v445 = vunpack.c.h.b16 %v407
        %v446 = vunpack.c.l.b16 %v408
        %v447 = vunpack.c.h.b16 %v408
        %v448 = vunpack.c.l.b16 %v409
        %v449 = vunpack.c.h.b16 %v409
        %v450 = vunpack.c.l.b16 %v410
        %v451 = vunpack.c.h.b16 %v410
        %v452 = vunpack.c.l.b16 %v411
        %v453 = vunpack.c.h.b16 %v411
        %v454 = vunpack.c.l.b16 %v412
        %v455 = vunpack.c.h.b16 %v412
        %v456 = vunpack.c.l.b16 %v413
        %v457 = vunpack.c.h.b16 %v413
        %v458 = vunpack.c.l.b16 %v414
        %v459 = vunpack.c.h.b16 %v414
        %v460 = vunpack.c.l.b16 %v415
        %v461 = vunpack.c.h.b16 %v415
        %v462 = vunpack.c.l.b16 %v416
        %v463 = vunpack.c.h.b16 %v416
        %v464 = vunpack.c.l.b16 %v417
        %v465 = vunpack.c.h.b16 %v417
        %v466 = vpack.c.b16 %v436, %v434
        %v467 = vpack.c.b16 %v437, %v435
        %v468 = vpack.c.b16 %v440, %v438
        %v469 = vpack.c.b16 %v441, %v439
        %v470 = vpack.c.b16 %v444, %v442
        %v471 = vpack.c.b16 %v445, %v443
        %v472 = vpack.c.b16 %v448, %v446
        %v473 = vpack.c.b16 %v449, %v447
        %v474 = vpack.c.b16 %v452, %v450
        %v475 = vpack.c.b16 %v453, %v451
        %v476 = vpack.c.b16 %v456, %v454
        %v477 = vpack.c.b16 %v457, %v455
        %v478 = vpack.c.b16 %v460, %v458
        %v479 = vpack.c.b16 %v461, %v459
        %v480 = vpack.c.b16 %v464, %v462
        %v481 = vpack.c.b16 %v465, %v463
        %498 = vmatprep.subr.bf16.mxu0 %v467
        %499 = vmatpush1.bf16.msra.mxu0 %v466
        %500 = vmatprep.subr.bf16.mxu0 %v469
        %501 = vmatpush1.bf16.msra.mxu0 %v468
        %502 = vmatprep.subr.bf16.mxu0 %v471
        %503 = vmatpush1.bf16.msra.mxu0 %v470
        %504 = vmatprep.subr.bf16.mxu0 %v473
        %505 = vmatpush1.bf16.msra.mxu0 %v472
        %506 = vmatprep.subr.bf16.mxu0 %v475
        %507 = vmatpush1.bf16.msra.mxu0 %v474
        %508 = vmatprep.subr.bf16.mxu0 %v477
        %509 = vmatpush1.bf16.msra.mxu0 %v476
        %510 = vmatprep.subr.bf16.mxu0 %v479
        %511 = vmatpush1.bf16.msra.mxu0 %v478
        %512 = vmatprep.subr.bf16.mxu0 %v481
        %513 = vmatpush1.bf16.msra.mxu0 %v480
        %514 = vmatprep.subr.bf16.mxu0 0
        %515 = vmatpush1.bf16.msra.mxu0 0
        %516 = vmatprep.subr.bf16.mxu0 0
        %517 = vmatpush1.bf16.msra.mxu0 0
        %518 = vmatprep.subr.bf16.mxu0 0
        %519 = vmatpush1.bf16.msra.mxu0 0
        %520 = vmatprep.subr.bf16.mxu0 0
        %521 = vmatpush1.bf16.msra.mxu0 0
        %522 = vmatprep.subr.bf16.mxu0 0
        %523 = vmatpush1.bf16.msra.mxu0 0
        %524 = vmatprep.subr.bf16.mxu0 0
        %525 = vmatpush1.bf16.msra.mxu0 0
        %526 = vmatprep.subr.bf16.mxu0 0
        %527 = vmatpush1.bf16.msra.mxu0 0
        %528 = vmatprep.subr.bf16.mxu0 0
        %529 = vmatpush1.bf16.msra.mxu0 0
        %530 = vmatprep.mubr.bf16.mxu0 0
        %531 = vmatmul.mubr.bf16.gmra.mrb[0].mxu0 %v401
        %v532 = vpop.f32.mrb[0].mxu0
        %v533 = vadd.f32 0.0, %v532
        %v534 = vpop.f32.mrb[0].mxu0
        %v535 = vadd.f32 0.0, %v534
        %v536 = vpop.f32.mrb[0].mxu0
        %v537 = vpop.f32.mrb[0].mxu0
        %538 = vdwg.mxu0
        %v539 = vadd.f32 %v399, %v533
        %v540 = vadd.f32 %v400, %v535
        %541 = vst [vmem:[#allocation2] sm:$0xff] %v539
        %542 = vst [vmem:[#allocation2 + $0x8] sm:$0xff] %v540
        // Predicated region
        $region79: #{wl_forward.11} parent=69 // pred_check
          %p543 = pneg %p393
        $region80: #{wl_forward.11} parent=69 // pred_check_branch
          %545 = sbr.rel (%p543) target = $region82
        $region81: #{wl_forward.11} parent=69 // pred_region
          %v546 = vld [vmem:[#allocation2] sm:$0xff]
          %v547 = vld [vmem:[#allocation2 + $0x8] sm:$0xff]
          %v548 = vld [vmem:[%s377] sm:$0xff]
          %550 = vset.pattern.permute.xlu0 0
          %551 = vperm.xlu0 %550, %v548
          %v552 = vpop.permute.xlu0 %551
          %v554 = vmul.f32 %v546, %v552
          %v555 = vmul.f32 %v547, %v552
          %v556 = vld [vmem:[%s381] sm:$0xff]
          %558 = vset.pattern.permute.xlu0 0
          %559 = vperm.xlu0 %558, %v556
          %v560 = vpop.permute.xlu0 %559
          %v562 = vadd.f32 %v554, %v560
          %v563 = vadd.f32 %v555, %v560
          %v564 = vmax.f32 %v562, 0.0
          %v565 = vmax.f32 %v563, 0.0
          %566 = vst [vmem:[%s390] sm:$0xff] %v564
          %567 = vst [vmem:[%s390 + $0x8] sm:$0xff] %v565
        $region82: #{wl_forward.11} parent=69 // pred_fallthru
          _
        %s568 = smul.u32 2, %s21
        %p569 = scmp.lt.s32.totalorder %s20, 0
        %s570 = scalar_select %p569, %s20, 0
        %p571 = scmp.lt.s32.totalorder %s568, 15
        %s572 = scalar_select %p571, %s568, 15
        %s573 = smul.addr %s570, 16
        %s574 = sadd.s32 %s572, %s573
        %s575 = smul.addr %s574, 8
        %s576 = scalar_lea.vmem %s4, %s575
        // Predicated region
        $region83: #{wl_forward.11} parent=69 // pred_check
          %p577 = pneg %p162
        $region84: #{wl_forward.11} parent=69 // pred_check_branch
          %579 = sbr.rel (%p577) target = $region86
        $region85: #{wl_forward.11} parent=69 // pred_region
          %s580 = smul.u32 2, %s21
        $region86: #{wl_forward.11} parent=69 // pred_fallthru
          _
      $region70: #{wl_forward.11} parent=5 // pred_fallthru
        _
      %p581 = scmp.le.s32.totalorder 2, %s10
      // Predicated region
      $region87: #{wl_forward.11} parent=5 // pred_check
        %p582 = pneg %p581
      $region88: #{wl_forward.11} parent=5 // pred_check_branch
        %584 = sbr.rel (%p582) target = $region90
      $region89: #{wl_forward.11} parent=5 // pred_region
        %s585 = ssub.s32 %s10, 2
        // Predicated region
        $region91: #{wl_forward.11} parent=89 // pred_check
          %p586 = pneg %p168
        $region92: #{wl_forward.11} parent=89 // pred_check_branch
          %588 = sbr.rel (%p586) target = $region94
        $region93: #{wl_forward.11} parent=89 // pred_region
          %s589 = smul.u32 2, %s24
          %p590 = scmp.lt.s32.totalorder %s23, 0
          %s591 = scalar_select %p590, %s23, 0
          %p592 = scmp.lt.s32.totalorder %s589, 15
          %s593 = scalar_select %p592, %s589, 15
          %s594 = smul.addr %s591, 16
          %s595 = sadd.s32 %s593, %s594
          %s596 = smul.addr %s595, 8
          %s597 = scalar_lea.vmem %s4, %s596
        $region94: #{wl_forward.11} parent=89 // pred_fallthru
          _
      $region90: #{wl_forward.11} parent=5 // pred_fallthru
        _
    $region6: #{wl_forward.11} parent=1 // loop_footer
      %s14 = sadd.s32 1, %s10
    $region7: #{wl_forward.11} parent=1 // loop_footer_branch
      %9 = sbr.rel target = $region3
    $region8: #{wl_forward.11} parent=1 // loop_exit
      _

// kernel: wl_forward.12
$region0: #{wl_forward.12}
  #allocation0 [shape = 'u32[]', space=smem, size = 0x4, offset = 0x4, fixed_abs, tag = 'smem constant byte address 0x4 - core index']
  #allocation1 [shape = 'u32[144,128]{1,0:T(1,128)}', space=vmem, size = 0x12000, scoped, tag = 'internal scratch']
  #allocation2 [shape = 'f32[8,256]{1,0:T(8,128)}', space=vmem, size = 0x2000, scoped, tag = 'scratch operand']
  %s0 = inlined_call_operand.vmem [shape: bf16[8,128], index: 0, kind: input, shape index: {}]
  %s1 = inlined_call_operand.vmem [shape: bf16[128,2048], index: 1, kind: input, shape index: {}]
  %s2 = inlined_call_operand.vmem [shape: f32[8,1], index: 2, kind: input, shape index: {}]
  %s3 = inlined_call_operand.vmem [shape: f32[8,1], index: 3, kind: input, shape index: {}]
  %s4 = inlined_call_operand.vmem [shape: f32[8,2048], index: 4, kind: input, shape index: {}]
  %s5 = inlined_call_operand.vmem [shape: f32[8,2048], index: 5, kind: output, shape index: {}]
  %s6 = sld [smem:[#allocation0]]
  $region99: #{wl_forward.12} parent=0
    _
  %s8 = ssub.s32 1, %s6
  %s9 = scalar_select 0, %s8, %s6
  $region1: #{wl_forward.12} parent=0
    #allocation3 [shape = 'u8[131072]{0}', space=vmem, size = 0x20000, scoped, tag = 'input window, operand 1']
    loop: start=0, step=1, limit=10
    $region2: #{wl_forward.12} parent=1 // loop_pre_header
      _
    $region3: #{wl_forward.12} parent=1 // loop_header
      %s11 = sphi 0, %s15
      %p12 = scmp.ge.s32.totalorder %s11, 10
      %s18 = sphi 0, %s37
      %s19 = sphi 0, %s33
      %s20 = sphi 0, %s29
      %s21 = sphi 0, %s18
      %s22 = sphi 0, %s19
      %s23 = sphi 0, %s20
      %s24 = sphi 0, %s21
      %s25 = sphi 0, %s22
      %s26 = sphi 0, %s23
      %s42 = sphi 0, %s44
      %s45 = sphi 0, %s42
      %s46 = sphi 0, %s45
      %s62 = sphi 0, %s46
      %s70 = sphi 0, %s72
      %s73 = sphi 0, %s70
      %s74 = sphi 0, %s73
      %s90 = sphi 0, %s74
      %s96 = sphi 0, %s98
      %s99 = sphi 0, %s96
      %s100 = sphi 0, %s99
      %s116 = sphi 0, %s100
      %s122 = sphi 0, %s124
      %s125 = sphi 0, %s122
      %s126 = sphi 0, %s125
      %s142 = sphi 0, %s126
      %s150 = sphi 0, %s152
      %s153 = sphi 0, %s150
      %s154 = sphi 0, %s153
      %s170 = sphi 0, %s154
      %s178 = sphi 0, %s180
      %s181 = sphi 0, %s178
      %s182 = sphi 0, %s181
      %s198 = sphi 0, %s182
    $region4: #{wl_forward.12} parent=1 // loop_header_branch
      %14 = sbr.rel (%p12) target = $region8
    $region5: #{wl_forward.12} parent=1 // loop_body
      %s16 = ssub.s32 %s11, 1
      %s17 = ssub.s32 %s11, 2
      %s27 = sadd.s32 1, %s20
      %p28 = scmp.ge.s32.totalorder %s27, 1
      %s29 = scalar_select %p28, 0, %s27
      %s30 = sadd.s32 1, %s19
      %s31 = scalar_select %p28, %s30, %s19
      %p32 = scmp.ge.s32.totalorder %s31, 8
      %s33 = scalar_select %p32, 0, %s31
      %s34 = sadd.s32 1, %s18
      %s35 = scalar_select %p32, %s34, %s18
      %p36 = scmp.ge.s32.totalorder %s35, 1
      %s37 = scalar_select %p36, 0, %s35
      %s38 = ssub.s32 %s18, %s37
      %s39 = ssub.s32 %s20, %s29
      %s40 = sor.u32 %s38, %s39
      %p41 = scmp.eq.s32.totalorder %s40, 0
      %s43 = sadd.s32 %s42, 1
      %s44 = scalar_select %p41, %s42, %s43
      %p47 = pneg %p41
      %p48 = scmp.eq.s32.totalorder %s11, 7
      %p49 = por %p47, %p48
      %p50 = scmp.ne.s32.totalorder %s42, %s45
      %p51 = scmp.eq.s32.totalorder %s11, 0
      %p52 = por %p50, %p51
      %p53 = scmp.ne.s32.totalorder %s42, %s45
      %p54 = scmp.eq.s32.totalorder %s16, 7
      %p55 = por %p53, %p54
      %p56 = scmp.ne.s32.totalorder %s45, %s46
      %p57 = scmp.eq.s32.totalorder %s16, 0
      %p58 = por %p56, %p57
      %p59 = scmp.ne.s32.totalorder %s45, %s46
      %p60 = scmp.eq.s32.totalorder %s17, 7
      %p61 = por %p59, %p60
      %p63 = scmp.ne.s32.totalorder %s46, %s62
      %p64 = scmp.eq.s32.totalorder %s17, 0
      %p65 = por %p63, %p64
      %s66 = ssub.s32 %s20, %s29
      %s67 = ssub.s32 %s19, %s33
      %s68 = sor.u32 %s66, %s67
      %p69 = scmp.eq.s32.totalorder %s68, 0
      %s71 = sadd.s32 %s70, 1
      %s72 = scalar_select %p69, %s70, %s71
      %p75 = pneg %p69
      %p76 = scmp.eq.s32.totalorder %s11, 7
      %p77 = por %p75, %p76
      %p78 = scmp.ne.s32.totalorder %s70, %s73
      %p79 = scmp.eq.s32.totalorder %s11, 0
      %p80 = por %p78, %p79
      %p81 = scmp.ne.s32.totalorder %s70, %s73
      %p82 = scmp.eq.s32.totalorder %s16, 7
      %p83 = por %p81, %p82
      %p84 = scmp.ne.s32.totalorder %s73, %s74
      %p85 = scmp.eq.s32.totalorder %s16, 0
      %p86 = por %p84, %p85
      %p87 = scmp.ne.s32.totalorder %s73, %s74
      %p88 = scmp.eq.s32.totalorder %s17, 7
      %p89 = por %p87, %p88
      %p91 = scmp.ne.s32.totalorder %s74, %s90
      %p92 = scmp.eq.s32.totalorder %s17, 0
      %p93 = por %p91, %p92
      %s94 = ssub.s32 %s18, %s37
      %p95 = scmp.eq.s32.totalorder %s94, 0
      %s97 = sadd.s32 %s96, 1
      %s98 = scalar_select %p95, %s96, %s97
      %p101 = pneg %p95
      %p102 = scmp.eq.s32.totalorder %s11, 7
      %p103 = por %p101, %p102
      %p104 = scmp.ne.s32.totalorder %s96, %s99
      %p105 = scmp.eq.s32.totalorder %s11, 0
      %p106 = por %p104, %p105
      %p107 = scmp.ne.s32.totalorder %s96, %s99
      %p108 = scmp.eq.s32.totalorder %s16, 7
      %p109 = por %p107, %p108
      %p110 = scmp.ne.s32.totalorder %s99, %s100
      %p111 = scmp.eq.s32.totalorder %s16, 0
      %p112 = por %p110, %p111
      %p113 = scmp.ne.s32.totalorder %s99, %s100
      %p114 = scmp.eq.s32.totalorder %s17, 7
      %p115 = por %p113, %p114
      %p117 = scmp.ne.s32.totalorder %s100, %s116
      %p118 = scmp.eq.s32.totalorder %s17, 0
      %p119 = por %p117, %p118
      %s120 = ssub.s32 %s18, %s37
      %p121 = scmp.eq.s32.totalorder %s120, 0
      %s123 = sadd.s32 %s122, 1
      %s124 = scalar_select %p121, %s122, %s123
      %p127 = pneg %p121
      %p128 = scmp.eq.s32.totalorder %s11, 7
      %p129 = por %p127, %p128
      %p130 = scmp.ne.s32.totalorder %s122, %s125
      %p131 = scmp.eq.s32.totalorder %s11, 0
      %p132 = por %p130, %p131
      %p133 = scmp.ne.s32.totalorder %s122, %s125
      %p134 = scmp.eq.s32.totalorder %s16, 7
      %p135 = por %p133, %p134
      %p136 = scmp.ne.s32.totalorder %s125, %s126
      %p137 = scmp.eq.s32.totalorder %s16, 0
      %p138 = por %p136, %p137
      %p139 = scmp.ne.s32.totalorder %s125, %s126
      %p140 = scmp.eq.s32.totalorder %s17, 7
      %p141 = por %p139, %p140
      %p143 = scmp.ne.s32.totalorder %s126, %s142
      %p144 = scmp.eq.s32.totalorder %s17, 0
      %p145 = por %p143, %p144
      %s146 = ssub.s32 %s18, %s37
      %s147 = ssub.s32 %s19, %s33
      %s148 = sor.u32 %s146, %s147
      %p149 = scmp.eq.s32.totalorder %s148, 0
      %s151 = sadd.s32 %s150, 1
      %s152 = scalar_select %p149, %s150, %s151
      %p155 = pneg %p149
      %p156 = scmp.eq.s32.totalorder %s11, 7
      %p157 = por %p155, %p156
      %p158 = scmp.ne.s32.totalorder %s150, %s153
      %p159 = scmp.eq.s32.totalorder %s11, 0
      %p160 = por %p158, %p159
      %p161 = scmp.ne.s32.totalorder %s150, %s153
      %p162 = scmp.eq.s32.totalorder %s16, 7
      %p163 = por %p161, %p162
      %p164 = scmp.ne.s32.totalorder %s153, %s154
      %p165 = scmp.eq.s32.totalorder %s16, 0
      %p166 = por %p164, %p165
      %p167 = scmp.ne.s32.totalorder %s153, %s154
      %p168 = scmp.eq.s32.totalorder %s17, 7
      %p169 = por %p167, %p168
      %p171 = scmp.ne.s32.totalorder %s154, %s170
      %p172 = scmp.eq.s32.totalorder %s17, 0
      %p173 = por %p171, %p172
      %s174 = ssub.s32 %s18, %s37
      %s175 = ssub.s32 %s19, %s33
      %s176 = sor.u32 %s174, %s175
      %p177 = scmp.eq.s32.totalorder %s176, 0
      %s179 = sadd.s32 %s178, 1
      %s180 = scalar_select %p177, %s178, %s179
      %p183 = pneg %p177
      %p184 = scmp.eq.s32.totalorder %s11, 7
      %p185 = por %p183, %p184
      %p186 = scmp.ne.s32.totalorder %s178, %s181
      %p187 = scmp.eq.s32.totalorder %s11, 0
      %p188 = por %p186, %p187
      %p189 = scmp.ne.s32.totalorder %s178, %s181
      %p190 = scmp.eq.s32.totalorder %s16, 7
      %p191 = por %p189, %p190
      %p192 = scmp.ne.s32.totalorder %s181, %s182
      %p193 = scmp.eq.s32.totalorder %s16, 0
      %p194 = por %p192, %p193
      %p195 = scmp.ne.s32.totalorder %s181, %s182
      %p196 = scmp.eq.s32.totalorder %s17, 7
      %p197 = por %p195, %p196
      %p199 = scmp.ne.s32.totalorder %s182, %s198
      %p200 = scmp.eq.s32.totalorder %s17, 0
      %p201 = por %p199, %p200
      %p202 = scmp.le.s32.totalorder 1, %s11
      %p203 = scmp.lt.s32.totalorder %s11, 9
      %p204 = pnand %p202, %p203
      %p205 = pneg %p204
      // Predicated region
      $region9: #{wl_forward.12} parent=5 // pred_check
        _
      $region10: #{wl_forward.12} parent=5 // pred_check_branch
        %207 = sbr.rel (%p204) target = $region12
      $region11: #{wl_forward.12} parent=5 // pred_region
        %s208 = ssub.s32 %s11, 1
        // Predicated region
        $region13: #{wl_forward.12} parent=11 // pred_check
          %p209 = pneg %p58
        $region14: #{wl_forward.12} parent=11 // pred_check_branch
          %211 = sbr.rel (%p209) target = $region16
        $region15: #{wl_forward.12} parent=11 // pred_region
          %p212 = scmp.lt.s32.totalorder %s21, 0
          %s213 = scalar_select %p212, %s21, 0
          %p214 = scmp.lt.s32.totalorder %s23, 0
          %s215 = scalar_select %p214, %s23, 0
          %s216 = sadd.s32 %s215, %s213
          %s217 = smul.addr %s216, 4
          %s218 = scalar_lea.vmem %s0, %s217
        $region16: #{wl_forward.12} parent=11 // pred_fallthru
          _
        // Predicated region
        $region17: #{wl_forward.12} parent=11 // pred_check
          %p219 = pneg %p112
        $region18: #{wl_forward.12} parent=11 // pred_check_branch
          %221 = sbr.rel (%p219) target = $region20
        $region19: #{wl_forward.12} parent=11 // pred_region
          %p222 = scmp.lt.s32.totalorder %s21, 0
          %s223 = scalar_select %p222, %s21, 0
          %s224 = smul.addr %s223, 8
          %s225 = scalar_lea.vmem %s2, %s224
        $region20: #{wl_forward.12} parent=11 // pred_fallthru
          _
        // Predicated region
        $region21: #{wl_forward.12} parent=11 // pred_check
          %p226 = pneg %p138
        $region22: #{wl_forward.12} parent=11 // pred_check_branch
          %228 = sbr.rel (%p226) target = $region24
        $region23: #{wl_forward.12} parent=11 // pred_region
          %p229 = scmp.lt.s32.totalorder %s21, 0
          %s230 = scalar_select %p229, %s21, 0
          %s231 = smul.addr %s230, 8
          %s232 = scalar_lea.vmem %s3, %s231
        $region24: #{wl_forward.12} parent=11 // pred_fallthru
          _
      $region12: #{wl_forward.12} parent=5 // pred_fallthru
        _
      %p233 = scmp.lt.s32.totalorder %s11, 8
      // Predicated region
      $region25: #{wl_forward.12} parent=5 // pred_check
        %p234 = pneg %p233
      $region26: #{wl_forward.12} parent=5 // pred_check_branch
        %236 = sbr.rel (%p234) target = $region28
      $region27: #{wl_forward.12} parent=5 // pred_region
        // Predicated region
        $region29: #{wl_forward.12} parent=27 // pred_check
          %p237 = pneg %p80
        $region30: #{wl_forward.12} parent=27 // pred_check_branch
          %239 = sbr.rel (%p237) target = $region32
        $region31: #{wl_forward.12} parent=27 // pred_region
          %s240 = sand.u32 %s70, 1
          %s241 = sand.u32 %s70, 1
          %s242 = smul.addr %s241, 128
          %s243 = scalar_lea.vmem [#allocation3], %s242
          %s244 = smul.u32 16, %s20
          %s245 = smul.u32 2, %s19
          %s246 = smul.addr %s244, 16
          %s247 = sadd.s32 %s245, %s246
          %s248 = smul.addr %s247, 4
          %s249 = scalar_lea.vmem %s1, %s248
          // Predicated region
          $region33: #{wl_forward.12} parent=31 // pred_check
            _
          $region34: #{wl_forward.12} parent=31 // pred_check_branch
            %251 = sbr.rel (0) target = $region36
          $region35: #{wl_forward.12} parent=31 // pred_region
            // Predicated region
            $region37: #{wl_forward.12} parent=35 // pred_check
              _
            $region38: #{wl_forward.12} parent=35 // pred_check_branch
              %253 = sbr.rel (0) target = $region40
            $region39: #{wl_forward.12} parent=35 // pred_region
              // Predicated region
              $region52: #{wl_forward.12} parent=39 // pred_check
                _
              $region53: #{wl_forward.12} parent=39 // pred_check_branch
                %298 = sbr.rel (0) target = $region55
              $region54: #{wl_forward.12} parent=39 // pred_region
                loop: start=0, step=1, limit=1
                $region56: #{wl_forward.12} parent=54 // loop_pre_header
                  _
                $region57: #{wl_forward.12} parent=54 // loop_header
                  %s300 = sphi 0, %s304
                  %p301 = scmp.ge.s32.totalorder %s300, 1
                  %s305 = sphi %s249, %s249
                  %s306 = sphi %s243, %s243
                $region58: #{wl_forward.12} parent=54 // loop_header_branch
                  %303 = sbr.rel (%p301) target = $region62
                $region59: #{wl_forward.12} parent=54 // loop_body
                  %v307 = vld [vmem:[%s305] sm:$0xff]
                  %308 = vst [vmem:[%s306] sm:$0xff] %v307
                  %v309 = vld [vmem:[%s305 + $0x40] sm:$0xff]
                  %310 = vst [vmem:[%s306 + $0x8] sm:$0xff] %v309
                  %v311 = vld [vmem:[%s305 + $0x80] sm:$0xff]
                  %312 = vst [vmem:[%s306 + $0x10] sm:$0xff] %v311
                  %v313 = vld [vmem:[%s305 + $0xc0] sm:$0xff]
                  %314 = vst [vmem:[%s306 + $0x18] sm:$0xff] %v313
                  %v315 = vld [vmem:[%s305 + $0x100] sm:$0xff]
                  %316 = vst [vmem:[%s306 + $0x20] sm:$0xff] %v315
                  %v317 = vld [vmem:[%s305 + $0x140] sm:$0xff]
                  %318 = vst [vmem:[%s306 + $0x28] sm:$0xff] %v317
                  %v319 = vld [vmem:[%s305 + $0x180] sm:$0xff]
                  %320 = vst [vmem:[%s306 + $0x30] sm:$0xff] %v319
                  %v321 = vld [vmem:[%s305 + $0x1c0] sm:$0xff]
                  %322 = vst [vmem:[%s306 + $0x38] sm:$0xff] %v321
                  %v323 = vld [vmem:[%s305 + $0x200] sm:$0xff]
                  %324 = vst [vmem:[%s306 + $0x40] sm:$0xff] %v323
                  %v325 = vld [vmem:[%s305 + $0x240] sm:$0xff]
                  %326 = vst [vmem:[%s306 + $0x48] sm:$0xff] %v325
                  %v327 = vld [vmem:[%s305 + $0x280] sm:$0xff]
                  %328 = vst [vmem:[%s306 + $0x50] sm:$0xff] %v327
                  %v329 = vld [vmem:[%s305 + $0x2c0] sm:$0xff]
                  %330 = vst [vmem:[%s306 + $0x58] sm:$0xff] %v329
                  %v331 = vld [vmem:[%s305 + $0x300] sm:$0xff]
                  %332 = vst [vmem:[%s306 + $0x60] sm:$0xff] %v331
                  %v333 = vld [vmem:[%s305 + $0x340] sm:$0xff]
                  %334 = vst [vmem:[%s306 + $0x68] sm:$0xff] %v333
                  %v335 = vld [vmem:[%s305 + $0x380] sm:$0xff]
                  %336 = vst [vmem:[%s306 + $0x70] sm:$0xff] %v335
                  %v337 = vld [vmem:[%s305 + $0x3c0] sm:$0xff]
                  %338 = vst [vmem:[%s306 + $0x78] sm:$0xff] %v337
                $region60: #{wl_forward.12} parent=54 // loop_footer
                  %s304 = sadd.s32 1, %s300
                $region61: #{wl_forward.12} parent=54 // loop_footer_branch
                  %299 = sbr.rel target = $region57
                $region62: #{wl_forward.12} parent=54 // loop_exit
                  _
              $region55: #{wl_forward.12} parent=39 // pred_fallthru
                _
              // Predicated region
              $region63: #{wl_forward.12} parent=39 // pred_check
                _
              $region64: #{wl_forward.12} parent=39 // pred_check_branch
                %340 = sbr.rel target = $region66
              $region65: #{wl_forward.12} parent=39 // pred_region
                _
              $region66: #{wl_forward.12} parent=39 // pred_fallthru
                _
            $region40: #{wl_forward.12} parent=35 // pred_fallthru
              _
            // Predicated region
            $region41: #{wl_forward.12} parent=35 // pred_check
              _
            $region42: #{wl_forward.12} parent=35 // pred_check_branch
              %255 = sbr.rel target = $region44
            $region43: #{wl_forward.12} parent=35 // pred_region
              loop: start=0, step=1, limit=1
              $region45: #{wl_forward.12} parent=43 // loop_pre_header
                _
              $region46: #{wl_forward.12} parent=43 // loop_header
                %s258 = sphi 0, %s262
                %p259 = scmp.ge.s32.totalorder %s258, 1
                %s263 = sphi %s249, %s249
                %s264 = sphi %s243, %s243
              $region47: #{wl_forward.12} parent=43 // loop_header_branch
                %261 = sbr.rel (%p259) target = $region51
              $region48: #{wl_forward.12} parent=43 // loop_body
                %v265 = vld [vmem:[%s263] sm:$0xff]
                %266 = vst [vmem:[%s264] sm:$0xff] %v265
                %v267 = vld [vmem:[%s263 + $0x40] sm:$0xff]
                %268 = vst [vmem:[%s264 + $0x8] sm:$0xff] %v267
                %v269 = vld [vmem:[%s263 + $0x80] sm:$0xff]
                %270 = vst [vmem:[%s264 + $0x10] sm:$0xff] %v269
                %v271 = vld [vmem:[%s263 + $0xc0] sm:$0xff]
                %272 = vst [vmem:[%s264 + $0x18] sm:$0xff] %v271
                %v273 = vld [vmem:[%s263 + $0x100] sm:$0xff]
                %274 = vst [vmem:[%s264 + $0x20] sm:$0xff] %v273
                %v275 = vld [vmem:[%s263 + $0x140] sm:$0xff]
                %276 = vst [vmem:[%s264 + $0x28] sm:$0xff] %v275
                %v277 = vld [vmem:[%s263 + $0x180] sm:$0xff]
                %278 = vst [vmem:[%s264 + $0x30] sm:$0xff] %v277
                %v279 = vld [vmem:[%s263 + $0x1c0] sm:$0xff]
                %280 = vst [vmem:[%s264 + $0x38] sm:$0xff] %v279
                %v281 = vld [vmem:[%s263 + $0x200] sm:$0xff]
                %282 = vst [vmem:[%s264 + $0x40] sm:$0xff] %v281
                %v283 = vld [vmem:[%s263 + $0x240] sm:$0xff]
                %284 = vst [vmem:[%s264 + $0x48] sm:$0xff] %v283
                %v285 = vld [vmem:[%s263 + $0x280] sm:$0xff]
                %286 = vst [vmem:[%s264 + $0x50] sm:$0xff] %v285
                %v287 = vld [vmem:[%s263 + $0x2c0] sm:$0xff]
                %288 = vst [vmem:[%s264 + $0x58] sm:$0xff] %v287
                %v289 = vld [vmem:[%s263 + $0x300] sm:$0xff]
                %290 = vst [vmem:[%s264 + $0x60] sm:$0xff] %v289
                %v291 = vld [vmem:[%s263 + $0x340] sm:$0xff]
                %292 = vst [vmem:[%s264 + $0x68] sm:$0xff] %v291
                %v293 = vld [vmem:[%s263 + $0x380] sm:$0xff]
                %294 = vst [vmem:[%s264 + $0x70] sm:$0xff] %v293
                %v295 = vld [vmem:[%s263 + $0x3c0] sm:$0xff]
                %296 = vst [vmem:[%s264 + $0x78] sm:$0xff] %v295
              $region49: #{wl_forward.12} parent=43 // loop_footer
                %s262 = sadd.s32 1, %s258
              $region50: #{wl_forward.12} parent=43 // loop_footer_branch
                %257 = sbr.rel target = $region46
              $region51: #{wl_forward.12} parent=43 // loop_exit
                _
            $region44: #{wl_forward.12} parent=35 // pred_fallthru
              _
          $region36: #{wl_forward.12} parent=31 // pred_fallthru
            _
          %341 = vnop
        $region32: #{wl_forward.12} parent=27 // pred_fallthru
          _
        // Predicated region
        $region67: #{wl_forward.12} parent=27 // pred_check
          %p342 = pneg %p160
        $region68: #{wl_forward.12} parent=27 // pred_check_branch
          %344 = sbr.rel (%p342) target = $region70
        $region69: #{wl_forward.12} parent=27 // pred_region
          %s345 = smul.u32 2, %s19
          %p346 = scmp.lt.s32.totalorder %s18, 0
          %s347 = scalar_select %p346, %s18, 0
          %p348 = scmp.lt.s32.totalorder %s345, 15
          %s349 = scalar_select %p348, %s345, 15
          %s350 = smul.addr %s347, 16
          %s351 = sadd.s32 %s349, %s350
          %s352 = smul.addr %s351, 8
          %s353 = scalar_lea.vmem %s4, %s352
          %s354 = smul.u32 2, %s19
        $region70: #{wl_forward.12} parent=27 // pred_fallthru
          _
      $region28: #{wl_forward.12} parent=5 // pred_fallthru
        _
      %p355 = scmp.le.s32.totalorder 1, %s11
      %p356 = scmp.lt.s32.totalorder %s11, 9
      %p357 = pnand %p355, %p356
      %p358 = pneg %p357
      // Predicated region
      $region71: #{wl_forward.12} parent=5 // pred_check
        _
      $region72: #{wl_forward.12} parent=5 // pred_check_branch
        %360 = sbr.rel (%p357) target = $region74
      $region73: #{wl_forward.12} parent=5 // pred_region
        %s361 = ssub.s32 %s11, 1
        %s362 = sand.u32 %s73, 1
        %s363 = sand.u32 %s73, 1
        %s364 = smul.addr %s363, 128
        %s365 = scalar_lea.vmem [#allocation3], %s364
        // Predicated region
        $region75: #{wl_forward.12} parent=73 // pred_check
          %p366 = pneg %p86
        $region76: #{wl_forward.12} parent=73 // pred_check_branch
          %368 = sbr.rel (%p366) target = $region78
        $region77: #{wl_forward.12} parent=73 // pred_region
          _
        $region78: #{wl_forward.12} parent=73 // pred_fallthru
          _
        %p369 = scmp.lt.s32.totalorder %s21, 0
        %s370 = scalar_select %p369, %s21, 0
        %p371 = scmp.lt.s32.totalorder %s23, 0
        %s372 = scalar_select %p371, %s23, 0
        %s373 = sadd.s32 %s372, %s370
        %s374 = smul.addr %s373, 4
        %s375 = scalar_lea.vmem %s0, %s374
        %p376 = pneg %p58
        %p377 = pneg %p55
        %s378 = sand.u32 %s73, 1
        %s379 = sand.u32 %s73, 1
        %s380 = smul.addr %s379, 128
        %s381 = scalar_lea.vmem [#allocation3], %s380
        %p382 = pneg %p86
        %p383 = pneg %p83
        %p384 = scmp.lt.s32.totalorder %s21, 0
        %s385 = scalar_select %p384, %s21, 0
        %s386 = smul.addr %s385, 8
        %s387 = scalar_lea.vmem %s2, %s386
        %p388 = pneg %p112
        %p389 = pneg %p109
        %p390 = scmp.lt.s32.totalorder %s21, 0
        %s391 = scalar_select %p390, %s21, 0
        %s392 = smul.addr %s391, 8
        %s393 = scalar_lea.vmem %s3, %s392
        %p394 = pneg %p138
        %p395 = pneg %p135
        %s396 = smul.u32 2, %s22
        %p397 = scmp.lt.s32.totalorder %s21, 0
        %s398 = scalar_select %p397, %s21, 0
        %p399 = scmp.lt.s32.totalorder %s396, 15
        %s400 = scalar_select %p399, %s396, 15
        %s401 = smul.addr %s398, 16
        %s402 = sadd.s32 %s400, %s401
        %s403 = smul.addr %s402, 8
        %s404 = scalar_lea.vmem %s4, %s403
        %p405 = pneg %p166
        %p406 = pneg %p163
        %p407 = pneg %p194
        %p408 = pneg %p191
        %s409 = smul.u32 2, %s22
        %p410 = scmp.lt.s32.totalorder %s21, 0
        %s411 = scalar_select %p410, %s21, 0
        %p412 = scmp.lt.s32.totalorder %s409, 15
        %s413 = scalar_select %p412, %s409, 15
        %s414 = smul.addr %s411, 16
        %s415 = sadd.s32 %s413, %s414
        %s416 = smul.addr %s415, 8
        %s417 = scalar_lea.vmem %s5, %s416
        %p418 = scmp.lt.s32.totalorder %s21, 0
        %s419 = scalar_select %p418, %s21, 0
        %p420 = scmp.lt.s32.totalorder %s23, 0
        %s421 = scalar_select %p420, %s23, 0
        %s422 = sadd.s32 %s421, %s419
        %s423 = smul.addr %s422, 4
        %s424 = scalar_lea.vmem %s0, %s423
        %s425 = smul.u32 16, %s23
        %s426 = smul.u32 2, %s22
        %p427 = scmp.lt.s32.totalorder %s21, 0
        %s428 = scalar_select %p427, %s21, 0
        %s429 = smul.addr %s428, 8
        %s430 = scalar_lea.vmem %s2, %s429
        %p431 = scmp.lt.s32.totalorder %s21, 0
        %s432 = scalar_select %p431, %s21, 0
        %s433 = smul.addr %s432, 8
        %s434 = scalar_lea.vmem %s3, %s433
        %s435 = smul.u32 2, %s22
        %p436 = scmp.lt.s32.totalorder %s21, 0
        %s437 = scalar_select %p436, %s21, 0
        %p438 = scmp.lt.s32.totalorder %s435, 15
        %s439 = scalar_select %p438, %s435, 15
        %s440 = smul.addr %s437, 16
        %s441 = sadd.s32 %s439, %s440
        %s442 = smul.addr %s441, 8
        %s443 = scalar_lea.vmem %s4, %s442
        %s444 = smul.u32 2, %s22
        %s445 = smul.u32 2, %s22
        %p446 = scmp.lt.s32.totalorder %s21, 0
        %s447 = scalar_select %p446, %s21, 0
        %p448 = scmp.lt.s32.totalorder %s445, 15
        %s449 = scalar_select %p448, %s445, 15
        %s450 = smul.addr %s447, 16
        %s451 = sadd.s32 %s449, %s450
        %s452 = smul.addr %s451, 8
        %s453 = scalar_lea.vmem %s5, %s452
        %s454 = smul.u32 2, %s22
        %p456 = scmp.eq.s32.totalorder %s23, 0
        // Predicated region
        $region79: #{wl_forward.12} parent=73 // pred_check
          %p457 = pneg %p456
        $region80: #{wl_forward.12} parent=73 // pred_check_branch
          %459 = sbr.rel (%p457) target = $region82
        $region81: #{wl_forward.12} parent=73 // pred_region
          %460 = vst [vmem:[#allocation2] sm:$0xff] 0.0
          %461 = vst [vmem:[#allocation2 + $0x8] sm:$0xff] 0.0
        $region82: #{wl_forward.12} parent=73 // pred_fallthru
          _
        %v462 = vld [vmem:[#allocation2] sm:$0xff]
        %v463 = vld [vmem:[#allocation2 + $0x8] sm:$0xff]
        %v464 = vld [vmem:[%s424] sm:$0xf]
        %v465 = vld [vmem:[%s365] sm:$0xff]
        %v466 = vld [vmem:[%s365 + $0x8] sm:$0xff]
        %v467 = vld [vmem:[%s365 + $0x10] sm:$0xff]
        %v468 = vld [vmem:[%s365 + $0x18] sm:$0xff]
        %v469 = vld [vmem:[%s365 + $0x20] sm:$0xff]
        %v470 = vld [vmem:[%s365 + $0x28] sm:$0xff]
        %v471 = vld [vmem:[%s365 + $0x30] sm:$0xff]
        %v472 = vld [vmem:[%s365 + $0x38] sm:$0xff]
        %v473 = vld [vmem:[%s365 + $0x40] sm:$0xff]
        %v474 = vld [vmem:[%s365 + $0x48] sm:$0xff]
        %v475 = vld [vmem:[%s365 + $0x50] sm:$0xff]
        %v476 = vld [vmem:[%s365 + $0x58] sm:$0xff]
        %v477 = vld [vmem:[%s365 + $0x60] sm:$0xff]
        %v478 = vld [vmem:[%s365 + $0x68] sm:$0xff]
        %v479 = vld [vmem:[%s365 + $0x70] sm:$0xff]
        %v480 = vld [vmem:[%s365 + $0x78] sm:$0xff]
        %v497 = vunpack.c.l.b16 %v465
        %v498 = vunpack.c.h.b16 %v465
        %v499 = vunpack.c.l.b16 %v466
        %v500 = vunpack.c.h.b16 %v466
        %v501 = vunpack.c.l.b16 %v467
        %v502 = vunpack.c.h.b16 %v467
        %v503 = vunpack.c.l.b16 %v468
        %v504 = vunpack.c.h.b16 %v468
        %v505 = vunpack.c.l.b16 %v469
        %v506 = vunpack.c.h.b16 %v469
        %v507 = vunpack.c.l.b16 %v470
        %v508 = vunpack.c.h.b16 %v470
        %v509 = vunpack.c.l.b16 %v471
        %v510 = vunpack.c.h.b16 %v471
        %v511 = vunpack.c.l.b16 %v472
        %v512 = vunpack.c.h.b16 %v472
        %v513 = vunpack.c.l.b16 %v473
        %v514 = vunpack.c.h.b16 %v473
        %v515 = vunpack.c.l.b16 %v474
        %v516 = vunpack.c.h.b16 %v474
        %v517 = vunpack.c.l.b16 %v475
        %v518 = vunpack.c.h.b16 %v475
        %v519 = vunpack.c.l.b16 %v476
        %v520 = vunpack.c.h.b16 %v476
        %v521 = vunpack.c.l.b16 %v477
        %v522 = vunpack.c.h.b16 %v477
        %v523 = vunpack.c.l.b16 %v478
        %v524 = vunpack.c.h.b16 %v478
        %v525 = vunpack.c.l.b16 %v479
        %v526 = vunpack.c.h.b16 %v479
        %v527 = vunpack.c.l.b16 %v480
        %v528 = vunpack.c.h.b16 %v480
        %v529 = vpack.c.b16 %v499, %v497
        %v530 = vpack.c.b16 %v500, %v498
        %v531 = vpack.c.b16 %v503, %v501
        %v532 = vpack.c.b16 %v504, %v502
        %v533 = vpack.c.b16 %v507, %v505
        %v534 = vpack.c.b16 %v508, %v506
        %v535 = vpack.c.b16 %v511, %v509
        %v536 = vpack.c.b16 %v512, %v510
        %v537 = vpack.c.b16 %v515, %v513
        %v538 = vpack.c.b16 %v516, %v514
        %v539 = vpack.c.b16 %v519, %v517
        %v540 = vpack.c.b16 %v520, %v518
        %v541 = vpack.c.b16 %v523, %v521
        %v542 = vpack.c.b16 %v524, %v522
        %v543 = vpack.c.b16 %v527, %v525
        %v544 = vpack.c.b16 %v528, %v526
        %561 = vmatprep.subr.bf16.mxu0 %v530
        %562 = vmatpush1.bf16.msra.mxu0 %v529
        %563 = vmatprep.subr.bf16.mxu0 %v532
        %564 = vmatpush1.bf16.msra.mxu0 %v531
        %565 = vmatprep.subr.bf16.mxu0 %v534
        %566 = vmatpush1.bf16.msra.mxu0 %v533
        %567 = vmatprep.subr.bf16.mxu0 %v536
        %568 = vmatpush1.bf16.msra.mxu0 %v535
        %569 = vmatprep.subr.bf16.mxu0 %v538
        %570 = vmatpush1.bf16.msra.mxu0 %v537
        %571 = vmatprep.subr.bf16.mxu0 %v540
        %572 = vmatpush1.bf16.msra.mxu0 %v539
        %573 = vmatprep.subr.bf16.mxu0 %v542
        %574 = vmatpush1.bf16.msra.mxu0 %v541
        %575 = vmatprep.subr.bf16.mxu0 %v544
        %576 = vmatpush1.bf16.msra.mxu0 %v543
        %577 = vmatprep.subr.bf16.mxu0 0
        %578 = vmatpush1.bf16.msra.mxu0 0
        %579 = vmatprep.subr.bf16.mxu0 0
        %580 = vmatpush1.bf16.msra.mxu0 0
        %581 = vmatprep.subr.bf16.mxu0 0
        %582 = vmatpush1.bf16.msra.mxu0 0
        %583 = vmatprep.subr.bf16.mxu0 0
        %584 = vmatpush1.bf16.msra.mxu0 0
        %585 = vmatprep.subr.bf16.mxu0 0
        %586 = vmatpush1.bf16.msra.mxu0 0
        %587 = vmatprep.subr.bf16.mxu0 0
        %588 = vmatpush1.bf16.msra.mxu0 0
        %589 = vmatprep.subr.bf16.mxu0 0
        %590 = vmatpush1.bf16.msra.mxu0 0
        %591 = vmatprep.subr.bf16.mxu0 0
        %592 = vmatpush1.bf16.msra.mxu0 0
        %593 = vmatprep.mubr.bf16.mxu0 0
        %594 = vmatmul.mubr.bf16.gmra.mrb[0].mxu0 %v464
        %v595 = vpop.f32.mrb[0].mxu0
        %v596 = vadd.f32 0.0, %v595
        %v597 = vpop.f32.mrb[0].mxu0
        %v598 = vadd.f32 0.0, %v597
        %v599 = vpop.f32.mrb[0].mxu0
        %v600 = vpop.f32.mrb[0].mxu0
        %601 = vdwg.mxu0
        %v602 = vadd.f32 %v462, %v596
        %v603 = vadd.f32 %v463, %v598
        %604 = vst [vmem:[#allocation2] sm:$0xff] %v602
        %605 = vst [vmem:[#allocation2 + $0x8] sm:$0xff] %v603
        // Predicated region
        $region83: #{wl_forward.12} parent=73 // pred_check
          %p606 = pneg %p456
        $region84: #{wl_forward.12} parent=73 // pred_check_branch
          %608 = sbr.rel (%p606) target = $region86
        $region85: #{wl_forward.12} parent=73 // pred_region
          %v609 = vld [vmem:[#allocation2] sm:$0xff]
          %v610 = vld [vmem:[#allocation2 + $0x8] sm:$0xff]
          %v611 = vld [vmem:[%s430] sm:$0xff]
          %613 = vset.pattern.permute.xlu0 0
          %614 = vperm.xlu0 %613, %v611
          %v615 = vpop.permute.xlu0 %614
          %v617 = vmul.f32 %v609, %v615
          %v618 = vmul.f32 %v610, %v615
          %v619 = vld [vmem:[%s434] sm:$0xff]
          %621 = vset.pattern.permute.xlu0 0
          %622 = vperm.xlu0 %621, %v619
          %v623 = vpop.permute.xlu0 %622
          %v625 = vadd.f32 %v617, %v623
          %v626 = vadd.f32 %v618, %v623
          %v627 = vld [vmem:[%s443] sm:$0xff]
          %v628 = vld [vmem:[%s443 + $0x8] sm:$0xff]
          %v629 = vadd.f32 %v625, %v627
          %v630 = vadd.f32 %v626, %v628
          %v631 = vmax.f32 %v629, 0.0
          %v632 = vmax.f32 %v630, 0.0
          %633 = vst [vmem:[%s453] sm:$0xff] %v631
          %634 = vst [vmem:[%s453 + $0x8] sm:$0xff] %v632
        $region86: #{wl_forward.12} parent=73 // pred_fallthru
          _
        %s635 = smul.u32 2, %s22
        %p636 = scmp.lt.s32.totalorder %s21, 0
        %s637 = scalar_select %p636, %s21, 0
        %p638 = scmp.lt.s32.totalorder %s635, 15
        %s639 = scalar_select %p638, %s635, 15
        %s640 = smul.addr %s637, 16
        %s641 = sadd.s32 %s639, %s640
        %s642 = smul.addr %s641, 8
        %s643 = scalar_lea.vmem %s5, %s642
        // Predicated region
        $region87: #{wl_forward.12} parent=73 // pred_check
          %p644 = pneg %p191
        $region88: #{wl_forward.12} parent=73 // pred_check_branch
          %646 = sbr.rel (%p644) target = $region90
        $region89: #{wl_forward.12} parent=73 // pred_region
          %s647 = smul.u32 2, %s22
        $region90: #{wl_forward.12} parent=73 // pred_fallthru
          _
      $region74: #{wl_forward.12} parent=5 // pred_fallthru
        _
      %p648 = scmp.le.s32.totalorder 2, %s11
      // Predicated region
      $region91: #{wl_forward.12} parent=5 // pred_check
        %p649 = pneg %p648
      $region92: #{wl_forward.12} parent=5 // pred_check_branch
        %651 = sbr.rel (%p649) target = $region94
      $region93: #{wl_forward.12} parent=5 // pred_region
        %s652 = ssub.s32 %s11, 2
        // Predicated region
        $region95: #{wl_forward.12} parent=93 // pred_check
          %p653 = pneg %p197
        $region96: #{wl_forward.12} parent=93 // pred_check_branch
          %655 = sbr.rel (%p653) target = $region98
        $region97: #{wl_forward.12} parent=93 // pred_region
          %s656 = smul.u32 2, %s25
          %p657 = scmp.lt.s32.totalorder %s24, 0
          %s658 = scalar_select %p657, %s24, 0
          %p659 = scmp.lt.s32.totalorder %s656, 15
          %s660 = scalar_select %p659, %s656, 15
          %s661 = smul.addr %s658, 16
          %s662 = sadd.s32 %s660, %s661
          %s663 = smul.addr %s662, 8
          %s664 = scalar_lea.vmem %s5, %s663
        $region98: #{wl_forward.12} parent=93 // pred_fallthru
          _
      $region94: #{wl_forward.12} parent=5 // pred_fallthru
        _
    $region6: #{wl_forward.12} parent=1 // loop_footer
      %s15 = sadd.s32 1, %s11
    $region7: #{wl_forward.12} parent=1 // loop_footer_branch
      %10 = sbr.rel target = $region3
    $region8: #{wl_forward.12} parent=1 // loop_exit
      _

// kernel: wl_forward.13
$region0: #{wl_forward.13}
  #allocation0 [shape = 'u32[]', space=smem, size = 0x4, offset = 0x4, fixed_abs, tag = 'smem constant byte address 0x4 - core index']
  #allocation1 [shape = 'u32[144,128]{1,0:T(1,128)}', space=vmem, size = 0x12000, scoped, tag = 'internal scratch']
  #allocation2 [shape = 'f32[8,256]{1,0:T(8,128)}', space=vmem, size = 0x2000, scoped, tag = 'scratch operand']
  %s0 = inlined_call_operand.vmem [shape: bf16[8,128], index: 0, kind: input, shape index: {}]
  %s1 = inlined_call_operand.vmem [shape: bf16[128,512], index: 1, kind: input, shape index: {}]
  %s2 = inlined_call_operand.vmem [shape: f32[8,1], index: 2, kind: input, shape index: {}]
  %s3 = inlined_call_operand.vmem [shape: f32[8,1], index: 3, kind: input, shape index: {}]
  %s4 = inlined_call_operand.vmem [shape: f32[8,512], index: 4, kind: output, shape index: {}]
  %s5 = sld [smem:[#allocation0]]
  $region95: #{wl_forward.13} parent=0
    _
  %s7 = ssub.s32 1, %s5
  %s8 = scalar_select 0, %s7, %s5
  $region1: #{wl_forward.13} parent=0
    #allocation3 [shape = 'u8[131072]{0}', space=vmem, size = 0x20000, scoped, tag = 'input window, operand 1']
    loop: start=0, step=1, limit=4
    $region2: #{wl_forward.13} parent=1 // loop_pre_header
      _
    $region3: #{wl_forward.13} parent=1 // loop_header
      %s10 = sphi 0, %s14
      %p11 = scmp.ge.s32.totalorder %s10, 4
      %s17 = sphi 0, %s36
      %s18 = sphi 0, %s32
      %s19 = sphi 0, %s28
      %s20 = sphi 0, %s17
      %s21 = sphi 0, %s18
      %s22 = sphi 0, %s19
      %s23 = sphi 0, %s20
      %s24 = sphi 0, %s21
      %s25 = sphi 0, %s22
      %s41 = sphi 0, %s43
      %s44 = sphi 0, %s41
      %s45 = sphi 0, %s44
      %s61 = sphi 0, %s45
      %s69 = sphi 0, %s71
      %s72 = sphi 0, %s69
      %s73 = sphi 0, %s72
      %s89 = sphi 0, %s73
      %s95 = sphi 0, %s97
      %s98 = sphi 0, %s95
      %s99 = sphi 0, %s98
      %s115 = sphi 0, %s99
      %s121 = sphi 0, %s123
      %s124 = sphi 0, %s121
      %s125 = sphi 0, %s124
      %s141 = sphi 0, %s125
      %s149 = sphi 0, %s151
      %s152 = sphi 0, %s149
      %s153 = sphi 0, %s152
      %s169 = sphi 0, %s153
    $region4: #{wl_forward.13} parent=1 // loop_header_branch
      %13 = sbr.rel (%p11) target = $region8
    $region5: #{wl_forward.13} parent=1 // loop_body
      %s15 = ssub.s32 %s10, 1
      %s16 = ssub.s32 %s10, 2
      %s26 = sadd.s32 1, %s19
      %p27 = scmp.ge.s32.totalorder %s26, 1
      %s28 = scalar_select %p27, 0, %s26
      %s29 = sadd.s32 1, %s18
      %s30 = scalar_select %p27, %s29, %s18
      %p31 = scmp.ge.s32.totalorder %s30, 2
      %s32 = scalar_select %p31, 0, %s30
      %s33 = sadd.s32 1, %s17
      %s34 = scalar_select %p31, %s33, %s17
      %p35 = scmp.ge.s32.totalorder %s34, 1
      %s36 = scalar_select %p35, 0, %s34
      %s37 = ssub.s32 %s17, %s36
      %s38 = ssub.s32 %s19, %s28
      %s39 = sor.u32 %s37, %s38
      %p40 = scmp.eq.s32.totalorder %s39, 0
      %s42 = sadd.s32 %s41, 1
      %s43 = scalar_select %p40, %s41, %s42
      %p46 = pneg %p40
      %p47 = scmp.eq.s32.totalorder %s10, 1
      %p48 = por %p46, %p47
      %p49 = scmp.ne.s32.totalorder %s41, %s44
      %p50 = scmp.eq.s32.totalorder %s10, 0
      %p51 = por %p49, %p50
      %p52 = scmp.ne.s32.totalorder %s41, %s44
      %p53 = scmp.eq.s32.totalorder %s15, 1
      %p54 = por %p52, %p53
      %p55 = scmp.ne.s32.totalorder %s44, %s45
      %p56 = scmp.eq.s32.totalorder %s15, 0
      %p57 = por %p55, %p56
      %p58 = scmp.ne.s32.totalorder %s44, %s45
      %p59 = scmp.eq.s32.totalorder %s16, 1
      %p60 = por %p58, %p59
      %p62 = scmp.ne.s32.totalorder %s45, %s61
      %p63 = scmp.eq.s32.totalorder %s16, 0
      %p64 = por %p62, %p63
      %s65 = ssub.s32 %s19, %s28
      %s66 = ssub.s32 %s18, %s32
      %s67 = sor.u32 %s65, %s66
      %p68 = scmp.eq.s32.totalorder %s67, 0
      %s70 = sadd.s32 %s69, 1
      %s71 = scalar_select %p68, %s69, %s70
      %p74 = pneg %p68
      %p75 = scmp.eq.s32.totalorder %s10, 1
      %p76 = por %p74, %p75
      %p77 = scmp.ne.s32.totalorder %s69, %s72
      %p78 = scmp.eq.s32.totalorder %s10, 0
      %p79 = por %p77, %p78
      %p80 = scmp.ne.s32.totalorder %s69, %s72
      %p81 = scmp.eq.s32.totalorder %s15, 1
      %p82 = por %p80, %p81
      %p83 = scmp.ne.s32.totalorder %s72, %s73
      %p84 = scmp.eq.s32.totalorder %s15, 0
      %p85 = por %p83, %p84
      %p86 = scmp.ne.s32.totalorder %s72, %s73
      %p87 = scmp.eq.s32.totalorder %s16, 1
      %p88 = por %p86, %p87
      %p90 = scmp.ne.s32.totalorder %s73, %s89
      %p91 = scmp.eq.s32.totalorder %s16, 0
      %p92 = por %p90, %p91
      %s93 = ssub.s32 %s17, %s36
      %p94 = scmp.eq.s32.totalorder %s93, 0
      %s96 = sadd.s32 %s95, 1
      %s97 = scalar_select %p94, %s95, %s96
      %p100 = pneg %p94
      %p101 = scmp.eq.s32.totalorder %s10, 1
      %p102 = por %p100, %p101
      %p103 = scmp.ne.s32.totalorder %s95, %s98
      %p104 = scmp.eq.s32.totalorder %s10, 0
      %p105 = por %p103, %p104
      %p106 = scmp.ne.s32.totalorder %s95, %s98
      %p107 = scmp.eq.s32.totalorder %s15, 1
      %p108 = por %p106, %p107
      %p109 = scmp.ne.s32.totalorder %s98, %s99
      %p110 = scmp.eq.s32.totalorder %s15, 0
      %p111 = por %p109, %p110
      %p112 = scmp.ne.s32.totalorder %s98, %s99
      %p113 = scmp.eq.s32.totalorder %s16, 1
      %p114 = por %p112, %p113
      %p116 = scmp.ne.s32.totalorder %s99, %s115
      %p117 = scmp.eq.s32.totalorder %s16, 0
      %p118 = por %p116, %p117
      %s119 = ssub.s32 %s17, %s36
      %p120 = scmp.eq.s32.totalorder %s119, 0
      %s122 = sadd.s32 %s121, 1
      %s123 = scalar_select %p120, %s121, %s122
      %p126 = pneg %p120
      %p127 = scmp.eq.s32.totalorder %s10, 1
      %p128 = por %p126, %p127
      %p129 = scmp.ne.s32.totalorder %s121, %s124
      %p130 = scmp.eq.s32.totalorder %s10, 0
      %p131 = por %p129, %p130
      %p132 = scmp.ne.s32.totalorder %s121, %s124
      %p133 = scmp.eq.s32.totalorder %s15, 1
      %p134 = por %p132, %p133
      %p135 = scmp.ne.s32.totalorder %s124, %s125
      %p136 = scmp.eq.s32.totalorder %s15, 0
      %p137 = por %p135, %p136
      %p138 = scmp.ne.s32.totalorder %s124, %s125
      %p139 = scmp.eq.s32.totalorder %s16, 1
      %p140 = por %p138, %p139
      %p142 = scmp.ne.s32.totalorder %s125, %s141
      %p143 = scmp.eq.s32.totalorder %s16, 0
      %p144 = por %p142, %p143
      %s145 = ssub.s32 %s17, %s36
      %s146 = ssub.s32 %s18, %s32
      %s147 = sor.u32 %s145, %s146
      %p148 = scmp.eq.s32.totalorder %s147, 0
      %s150 = sadd.s32 %s149, 1
      %s151 = scalar_select %p148, %s149, %s150
      %p154 = pneg %p148
      %p155 = scmp.eq.s32.totalorder %s10, 1
      %p156 = por %p154, %p155
      %p157 = scmp.ne.s32.totalorder %s149, %s152
      %p158 = scmp.eq.s32.totalorder %s10, 0
      %p159 = por %p157, %p158
      %p160 = scmp.ne.s32.totalorder %s149, %s152
      %p161 = scmp.eq.s32.totalorder %s15, 1
      %p162 = por %p160, %p161
      %p163 = scmp.ne.s32.totalorder %s152, %s153
      %p164 = scmp.eq.s32.totalorder %s15, 0
      %p165 = por %p163, %p164
      %p166 = scmp.ne.s32.totalorder %s152, %s153
      %p167 = scmp.eq.s32.totalorder %s16, 1
      %p168 = por %p166, %p167
      %p170 = scmp.ne.s32.totalorder %s153, %s169
      %p171 = scmp.eq.s32.totalorder %s16, 0
      %p172 = por %p170, %p171
      %p173 = scmp.le.s32.totalorder 1, %s10
      %p174 = scmp.lt.s32.totalorder %s10, 3
      %p175 = pnand %p173, %p174
      %p176 = pneg %p175
      // Predicated region
      $region9: #{wl_forward.13} parent=5 // pred_check
        _
      $region10: #{wl_forward.13} parent=5 // pred_check_branch
        %178 = sbr.rel (%p175) target = $region12
      $region11: #{wl_forward.13} parent=5 // pred_region
        %s179 = ssub.s32 %s10, 1
        // Predicated region
        $region13: #{wl_forward.13} parent=11 // pred_check
          %p180 = pneg %p57
        $region14: #{wl_forward.13} parent=11 // pred_check_branch
          %182 = sbr.rel (%p180) target = $region16
        $region15: #{wl_forward.13} parent=11 // pred_region
          %p183 = scmp.lt.s32.totalorder %s20, 0
          %s184 = scalar_select %p183, %s20, 0
          %p185 = scmp.lt.s32.totalorder %s22, 0
          %s186 = scalar_select %p185, %s22, 0
          %s187 = sadd.s32 %s186, %s184
          %s188 = smul.addr %s187, 4
          %s189 = scalar_lea.vmem %s0, %s188
        $region16: #{wl_forward.13} parent=11 // pred_fallthru
          _
        // Predicated region
        $region17: #{wl_forward.13} parent=11 // pred_check
          %p190 = pneg %p111
        $region18: #{wl_forward.13} parent=11 // pred_check_branch
          %192 = sbr.rel (%p190) target = $region20
        $region19: #{wl_forward.13} parent=11 // pred_region
          %p193 = scmp.lt.s32.totalorder %s20, 0
          %s194 = scalar_select %p193, %s20, 0
          %s195 = smul.addr %s194, 8
          %s196 = scalar_lea.vmem %s2, %s195
        $region20: #{wl_forward.13} parent=11 // pred_fallthru
          _
        // Predicated region
        $region21: #{wl_forward.13} parent=11 // pred_check
          %p197 = pneg %p137
        $region22: #{wl_forward.13} parent=11 // pred_check_branch
          %199 = sbr.rel (%p197) target = $region24
        $region23: #{wl_forward.13} parent=11 // pred_region
          %p200 = scmp.lt.s32.totalorder %s20, 0
          %s201 = scalar_select %p200, %s20, 0
          %s202 = smul.addr %s201, 8
          %s203 = scalar_lea.vmem %s3, %s202
        $region24: #{wl_forward.13} parent=11 // pred_fallthru
          _
      $region12: #{wl_forward.13} parent=5 // pred_fallthru
        _
      %p204 = scmp.lt.s32.totalorder %s10, 2
      // Predicated region
      $region25: #{wl_forward.13} parent=5 // pred_check
        %p205 = pneg %p204
      $region26: #{wl_forward.13} parent=5 // pred_check_branch
        %207 = sbr.rel (%p205) target = $region28
      $region27: #{wl_forward.13} parent=5 // pred_region
        // Predicated region
        $region29: #{wl_forward.13} parent=27 // pred_check
          %p208 = pneg %p79
        $region30: #{wl_forward.13} parent=27 // pred_check_branch
          %210 = sbr.rel (%p208) target = $region32
        $region31: #{wl_forward.13} parent=27 // pred_region
          %s211 = sand.u32 %s69, 1
          %s212 = sand.u32 %s69, 1
          %s213 = smul.addr %s212, 128
          %s214 = scalar_lea.vmem [#allocation3], %s213
          %s215 = smul.u32 16, %s19
          %s216 = smul.u32 2, %s18
          %s217 = smul.addr %s215, 4
          %s218 = sadd.s32 %s216, %s217
          %s219 = smul.addr %s218, 4
          %s220 = scalar_lea.vmem %s1, %s219
          // Predicated region
          $region33: #{wl_forward.13} parent=31 // pred_check
            _
          $region34: #{wl_forward.13} parent=31 // pred_check_branch
            %222 = sbr.rel (0) target = $region36
          $region35: #{wl_forward.13} parent=31 // pred_region
            // Predicated region
            $region37: #{wl_forward.13} parent=35 // pred_check
              _
            $region38: #{wl_forward.13} parent=35 // pred_check_branch
              %224 = sbr.rel (0) target = $region40
            $region39: #{wl_forward.13} parent=35 // pred_region
              // Predicated region
              $region52: #{wl_forward.13} parent=39 // pred_check
                _
              $region53: #{wl_forward.13} parent=39 // pred_check_branch
                %269 = sbr.rel (0) target = $region55
              $region54: #{wl_forward.13} parent=39 // pred_region
                loop: start=0, step=1, limit=1
                $region56: #{wl_forward.13} parent=54 // loop_pre_header
                  _
                $region57: #{wl_forward.13} parent=54 // loop_header
                  %s271 = sphi 0, %s275
                  %p272 = scmp.ge.s32.totalorder %s271, 1
                  %s276 = sphi %s220, %s220
                  %s277 = sphi %s214, %s214
                $region58: #{wl_forward.13} parent=54 // loop_header_branch
                  %274 = sbr.rel (%p272) target = $region62
                $region59: #{wl_forward.13} parent=54 // loop_body
                  %v278 = vld [vmem:[%s276] sm:$0xff]
                  %279 = vst [vmem:[%s277] sm:$0xff] %v278
                  %v280 = vld [vmem:[%s276 + $0x10] sm:$0xff]
                  %281 = vst [vmem:[%s277 + $0x8] sm:$0xff] %v280
                  %v282 = vld [vmem:[%s276 + $0x20] sm:$0xff]
                  %283 = vst [vmem:[%s277 + $0x10] sm:$0xff] %v282
                  %v284 = vld [vmem:[%s276 + $0x30] sm:$0xff]
                  %285 = vst [vmem:[%s277 + $0x18] sm:$0xff] %v284
                  %v286 = vld [vmem:[%s276 + $0x40] sm:$0xff]
                  %287 = vst [vmem:[%s277 + $0x20] sm:$0xff] %v286
                  %v288 = vld [vmem:[%s276 + $0x50] sm:$0xff]
                  %289 = vst [vmem:[%s277 + $0x28] sm:$0xff] %v288
                  %v290 = vld [vmem:[%s276 + $0x60] sm:$0xff]
                  %291 = vst [vmem:[%s277 + $0x30] sm:$0xff] %v290
                  %v292 = vld [vmem:[%s276 + $0x70] sm:$0xff]
                  %293 = vst [vmem:[%s277 + $0x38] sm:$0xff] %v292
                  %v294 = vld [vmem:[%s276 + $0x80] sm:$0xff]
                  %295 = vst [vmem:[%s277 + $0x40] sm:$0xff] %v294
                  %v296 = vld [vmem:[%s276 + $0x90] sm:$0xff]
                  %297 = vst [vmem:[%s277 + $0x48] sm:$0xff] %v296
                  %v298 = vld [vmem:[%s276 + $0xa0] sm:$0xff]
                  %299 = vst [vmem:[%s277 + $0x50] sm:$0xff] %v298
                  %v300 = vld [vmem:[%s276 + $0xb0] sm:$0xff]
                  %301 = vst [vmem:[%s277 + $0x58] sm:$0xff] %v300
                  %v302 = vld [vmem:[%s276 + $0xc0] sm:$0xff]
                  %303 = vst [vmem:[%s277 + $0x60] sm:$0xff] %v302
                  %v304 = vld [vmem:[%s276 + $0xd0] sm:$0xff]
                  %305 = vst [vmem:[%s277 + $0x68] sm:$0xff] %v304
                  %v306 = vld [vmem:[%s276 + $0xe0] sm:$0xff]
                  %307 = vst [vmem:[%s277 + $0x70] sm:$0xff] %v306
                  %v308 = vld [vmem:[%s276 + $0xf0] sm:$0xff]
                  %309 = vst [vmem:[%s277 + $0x78] sm:$0xff] %v308
                $region60: #{wl_forward.13} parent=54 // loop_footer
                  %s275 = sadd.s32 1, %s271
                $region61: #{wl_forward.13} parent=54 // loop_footer_branch
                  %270 = sbr.rel target = $region57
                $region62: #{wl_forward.13} parent=54 // loop_exit
                  _
              $region55: #{wl_forward.13} parent=39 // pred_fallthru
                _
              // Predicated region
              $region63: #{wl_forward.13} parent=39 // pred_check
                _
              $region64: #{wl_forward.13} parent=39 // pred_check_branch
                %311 = sbr.rel target = $region66
              $region65: #{wl_forward.13} parent=39 // pred_region
                _
              $region66: #{wl_forward.13} parent=39 // pred_fallthru
                _
            $region40: #{wl_forward.13} parent=35 // pred_fallthru
              _
            // Predicated region
            $region41: #{wl_forward.13} parent=35 // pred_check
              _
            $region42: #{wl_forward.13} parent=35 // pred_check_branch
              %226 = sbr.rel target = $region44
            $region43: #{wl_forward.13} parent=35 // pred_region
              loop: start=0, step=1, limit=1
              $region45: #{wl_forward.13} parent=43 // loop_pre_header
                _
              $region46: #{wl_forward.13} parent=43 // loop_header
                %s229 = sphi 0, %s233
                %p230 = scmp.ge.s32.totalorder %s229, 1
                %s234 = sphi %s220, %s220
                %s235 = sphi %s214, %s214
              $region47: #{wl_forward.13} parent=43 // loop_header_branch
                %232 = sbr.rel (%p230) target = $region51
              $region48: #{wl_forward.13} parent=43 // loop_body
                %v236 = vld [vmem:[%s234] sm:$0xff]
                %237 = vst [vmem:[%s235] sm:$0xff] %v236
                %v238 = vld [vmem:[%s234 + $0x10] sm:$0xff]
                %239 = vst [vmem:[%s235 + $0x8] sm:$0xff] %v238
                %v240 = vld [vmem:[%s234 + $0x20] sm:$0xff]
                %241 = vst [vmem:[%s235 + $0x10] sm:$0xff] %v240
                %v242 = vld [vmem:[%s234 + $0x30] sm:$0xff]
                %243 = vst [vmem:[%s235 + $0x18] sm:$0xff] %v242
                %v244 = vld [vmem:[%s234 + $0x40] sm:$0xff]
                %245 = vst [vmem:[%s235 + $0x20] sm:$0xff] %v244
                %v246 = vld [vmem:[%s234 + $0x50] sm:$0xff]
                %247 = vst [vmem:[%s235 + $0x28] sm:$0xff] %v246
                %v248 = vld [vmem:[%s234 + $0x60] sm:$0xff]
                %249 = vst [vmem:[%s235 + $0x30] sm:$0xff] %v248
                %v250 = vld [vmem:[%s234 + $0x70] sm:$0xff]
                %251 = vst [vmem:[%s235 + $0x38] sm:$0xff] %v250
                %v252 = vld [vmem:[%s234 + $0x80] sm:$0xff]
                %253 = vst [vmem:[%s235 + $0x40] sm:$0xff] %v252
                %v254 = vld [vmem:[%s234 + $0x90] sm:$0xff]
                %255 = vst [vmem:[%s235 + $0x48] sm:$0xff] %v254
                %v256 = vld [vmem:[%s234 + $0xa0] sm:$0xff]
                %257 = vst [vmem:[%s235 + $0x50] sm:$0xff] %v256
                %v258 = vld [vmem:[%s234 + $0xb0] sm:$0xff]
                %259 = vst [vmem:[%s235 + $0x58] sm:$0xff] %v258
                %v260 = vld [vmem:[%s234 + $0xc0] sm:$0xff]
                %261 = vst [vmem:[%s235 + $0x60] sm:$0xff] %v260
                %v262 = vld [vmem:[%s234 + $0xd0] sm:$0xff]
                %263 = vst [vmem:[%s235 + $0x68] sm:$0xff] %v262
                %v264 = vld [vmem:[%s234 + $0xe0] sm:$0xff]
                %265 = vst [vmem:[%s235 + $0x70] sm:$0xff] %v264
                %v266 = vld [vmem:[%s234 + $0xf0] sm:$0xff]
                %267 = vst [vmem:[%s235 + $0x78] sm:$0xff] %v266
              $region49: #{wl_forward.13} parent=43 // loop_footer
                %s233 = sadd.s32 1, %s229
              $region50: #{wl_forward.13} parent=43 // loop_footer_branch
                %228 = sbr.rel target = $region46
              $region51: #{wl_forward.13} parent=43 // loop_exit
                _
            $region44: #{wl_forward.13} parent=35 // pred_fallthru
              _
          $region36: #{wl_forward.13} parent=31 // pred_fallthru
            _
          %312 = vnop
        $region32: #{wl_forward.13} parent=27 // pred_fallthru
          _
      $region28: #{wl_forward.13} parent=5 // pred_fallthru
        _
      %p313 = scmp.le.s32.totalorder 1, %s10
      %p314 = scmp.lt.s32.totalorder %s10, 3
      %p315 = pnand %p313, %p314
      %p316 = pneg %p315
      // Predicated region
      $region67: #{wl_forward.13} parent=5 // pred_check
        _
      $region68: #{wl_forward.13} parent=5 // pred_check_branch
        %318 = sbr.rel (%p315) target = $region70
      $region69: #{wl_forward.13} parent=5 // pred_region
        %s319 = ssub.s32 %s10, 1
        %s320 = sand.u32 %s72, 1
        %s321 = sand.u32 %s72, 1
        %s322 = smul.addr %s321, 128
        %s323 = scalar_lea.vmem [#allocation3], %s322
        // Predicated region
        $region71: #{wl_forward.13} parent=69 // pred_check
          %p324 = pneg %p85
        $region72: #{wl_forward.13} parent=69 // pred_check_branch
          %326 = sbr.rel (%p324) target = $region74
        $region73: #{wl_forward.13} parent=69 // pred_region
          _
        $region74: #{wl_forward.13} parent=69 // pred_fallthru
          _
        %p327 = scmp.lt.s32.totalorder %s20, 0
        %s328 = scalar_select %p327, %s20, 0
        %p329 = scmp.lt.s32.totalorder %s22, 0
        %s330 = scalar_select %p329, %s22, 0
        %s331 = sadd.s32 %s330, %s328
        %s332 = smul.addr %s331, 4
        %s333 = scalar_lea.vmem %s0, %s332
        %p334 = pneg %p57
        %p335 = pneg %p54
        %s336 = sand.u32 %s72, 1
        %s337 = sand.u32 %s72, 1
        %s338 = smul.addr %s337, 128
        %s339 = scalar_lea.vmem [#allocation3], %s338
        %p340 = pneg %p85
        %p341 = pneg %p82
        %p342 = scmp.lt.s32.totalorder %s20, 0
        %s343 = scalar_select %p342, %s20, 0
        %s344 = smul.addr %s343, 8
        %s345 = scalar_lea.vmem %s2, %s344
        %p346 = pneg %p111
        %p347 = pneg %p108
        %p348 = scmp.lt.s32.totalorder %s20, 0
        %s349 = scalar_select %p348, %s20, 0
        %s350 = smul.addr %s349, 8
        %s351 = scalar_lea.vmem %s3, %s350
        %p352 = pneg %p137
        %p353 = pneg %p134
        %p354 = pneg %p165
        %p355 = pneg %p162
        %s356 = smul.u32 2, %s21
        %p357 = scmp.lt.s32.totalorder %s20, 0
        %s358 = scalar_select %p357, %s20, 0
        %p359 = scmp.lt.s32.totalorder %s356, 3
        %s360 = scalar_select %p359, %s356, 3
        %s361 = smul.addr %s358, 4
        %s362 = sadd.s32 %s360, %s361
        %s363 = smul.addr %s362, 8
        %s364 = scalar_lea.vmem %s4, %s363
        %p365 = scmp.lt.s32.totalorder %s20, 0
        %s366 = scalar_select %p365, %s20, 0
        %p367 = scmp.lt.s32.totalorder %s22, 0
        %s368 = scalar_select %p367, %s22, 0
        %s369 = sadd.s32 %s368, %s366
        %s370 = smul.addr %s369, 4
        %s371 = scalar_lea.vmem %s0, %s370
        %s372 = smul.u32 16, %s22
        %s373 = smul.u32 2, %s21
        %p374 = scmp.lt.s32.totalorder %s20, 0
        %s375 = scalar_select %p374, %s20, 0
        %s376 = smul.addr %s375, 8
        %s377 = scalar_lea.vmem %s2, %s376
        %p378 = scmp.lt.s32.totalorder %s20, 0
        %s379 = scalar_select %p378, %s20, 0
        %s380 = smul.addr %s379, 8
        %s381 = scalar_lea.vmem %s3, %s380
        %s382 = smul.u32 2, %s21
        %p383 = scmp.lt.s32.totalorder %s20, 0
        %s384 = scalar_select %p383, %s20, 0
        %p385 = scmp.lt.s32.totalorder %s382, 3
        %s386 = scalar_select %p385, %s382, 3
        %s387 = smul.addr %s384, 4
        %s388 = sadd.s32 %s386, %s387
        %s389 = smul.addr %s388, 8
        %s390 = scalar_lea.vmem %s4, %s389
        %s391 = smul.u32 2, %s21
        %p393 = scmp.eq.s32.totalorder %s22, 0
        // Predicated region
        $region75: #{wl_forward.13} parent=69 // pred_check
          %p394 = pneg %p393
        $region76: #{wl_forward.13} parent=69 // pred_check_branch
          %396 = sbr.rel (%p394) target = $region78
        $region77: #{wl_forward.13} parent=69 // pred_region
          %397 = vst [vmem:[#allocation2] sm:$0xff] 0.0
          %398 = vst [vmem:[#allocation2 + $0x8] sm:$0xff] 0.0
        $region78: #{wl_forward.13} parent=69 // pred_fallthru
          _
        %v399 = vld [vmem:[#allocation2] sm:$0xff]
        %v400 = vld [vmem:[#allocation2 + $0x8] sm:$0xff]
        %v401 = vld [vmem:[%s371] sm:$0xf]
        %v402 = vld [vmem:[%s323] sm:$0xff]
        %v403 = vld [vmem:[%s323 + $0x8] sm:$0xff]
        %v404 = vld [vmem:[%s323 + $0x10] sm:$0xff]
        %v405 = vld [vmem:[%s323 + $0x18] sm:$0xff]
        %v406 = vld [vmem:[%s323 + $0x20] sm:$0xff]
        %v407 = vld [vmem:[%s323 + $0x28] sm:$0xff]
        %v408 = vld [vmem:[%s323 + $0x30] sm:$0xff]
        %v409 = vld [vmem:[%s323 + $0x38] sm:$0xff]
        %v410 = vld [vmem:[%s323 + $0x40] sm:$0xff]
        %v411 = vld [vmem:[%s323 + $0x48] sm:$0xff]
        %v412 = vld [vmem:[%s323 + $0x50] sm:$0xff]
        %v413 = vld [vmem:[%s323 + $0x58] sm:$0xff]
        %v414 = vld [vmem:[%s323 + $0x60] sm:$0xff]
        %v415 = vld [vmem:[%s323 + $0x68] sm:$0xff]
        %v416 = vld [vmem:[%s323 + $0x70] sm:$0xff]
        %v417 = vld [vmem:[%s323 + $0x78] sm:$0xff]
        %v434 = vunpack.c.l.b16 %v402
        %v435 = vunpack.c.h.b16 %v402
        %v436 = vunpack.c.l.b16 %v403
        %v437 = vunpack.c.h.b16 %v403
        %v438 = vunpack.c.l.b16 %v404
        %v439 = vunpack.c.h.b16 %v404
        %v440 = vunpack.c.l.b16 %v405
        %v441 = vunpack.c.h.b16 %v405
        %v442 = vunpack.c.l.b16 %v406
        %v443 = vunpack.c.h.b16 %v406
        %v444 = vunpack.c.l.b16 %v407
        %v445 = vunpack.c.h.b16 %v407
        %v446 = vunpack.c.l.b16 %v408
        %v447 = vunpack.c.h.b16 %v408
        %v448 = vunpack.c.l.b16 %v409
        %v449 = vunpack.c.h.b16 %v409
        %v450 = vunpack.c.l.b16 %v410
        %v451 = vunpack.c.h.b16 %v410
        %v452 = vunpack.c.l.b16 %v411
        %v453 = vunpack.c.h.b16 %v411
        %v454 = vunpack.c.l.b16 %v412
        %v455 = vunpack.c.h.b16 %v412
        %v456 = vunpack.c.l.b16 %v413
        %v457 = vunpack.c.h.b16 %v413
        %v458 = vunpack.c.l.b16 %v414
        %v459 = vunpack.c.h.b16 %v414
        %v460 = vunpack.c.l.b16 %v415
        %v461 = vunpack.c.h.b16 %v415
        %v462 = vunpack.c.l.b16 %v416
        %v463 = vunpack.c.h.b16 %v416
        %v464 = vunpack.c.l.b16 %v417
        %v465 = vunpack.c.h.b16 %v417
        %v466 = vpack.c.b16 %v436, %v434
        %v467 = vpack.c.b16 %v437, %v435
        %v468 = vpack.c.b16 %v440, %v438
        %v469 = vpack.c.b16 %v441, %v439
        %v470 = vpack.c.b16 %v444, %v442
        %v471 = vpack.c.b16 %v445, %v443
        %v472 = vpack.c.b16 %v448, %v446
        %v473 = vpack.c.b16 %v449, %v447
        %v474 = vpack.c.b16 %v452, %v450
        %v475 = vpack.c.b16 %v453, %v451
        %v476 = vpack.c.b16 %v456, %v454
        %v477 = vpack.c.b16 %v457, %v455
        %v478 = vpack.c.b16 %v460, %v458
        %v479 = vpack.c.b16 %v461, %v459
        %v480 = vpack.c.b16 %v464, %v462
        %v481 = vpack.c.b16 %v465, %v463
        %498 = vmatprep.subr.bf16.mxu0 %v467
        %499 = vmatpush1.bf16.msra.mxu0 %v466
        %500 = vmatprep.subr.bf16.mxu0 %v469
        %501 = vmatpush1.bf16.msra.mxu0 %v468
        %502 = vmatprep.subr.bf16.mxu0 %v471
        %503 = vmatpush1.bf16.msra.mxu0 %v470
        %504 = vmatprep.subr.bf16.mxu0 %v473
        %505 = vmatpush1.bf16.msra.mxu0 %v472
        %506 = vmatprep.subr.bf16.mxu0 %v475
        %507 = vmatpush1.bf16.msra.mxu0 %v474
        %508 = vmatprep.subr.bf16.mxu0 %v477
        %509 = vmatpush1.bf16.msra.mxu0 %v476
        %510 = vmatprep.subr.bf16.mxu0 %v479
        %511 = vmatpush1.bf16.msra.mxu0 %v478
        %512 = vmatprep.subr.bf16.mxu0 %v481
        %513 = vmatpush1.bf16.msra.mxu0 %v480
        %514 = vmatprep.subr.bf16.mxu0 0
        %515 = vmatpush1.bf16.msra.mxu0 0
        %516 = vmatprep.subr.bf16.mxu0 0
        %517 = vmatpush1.bf16.msra.mxu0 0
        %518 = vmatprep.subr.bf16.mxu0 0
        %519 = vmatpush1.bf16.msra.mxu0 0
        %520 = vmatprep.subr.bf16.mxu0 0
        %521 = vmatpush1.bf16.msra.mxu0 0
        %522 = vmatprep.subr.bf16.mxu0 0
        %523 = vmatpush1.bf16.msra.mxu0 0
        %524 = vmatprep.subr.bf16.mxu0 0
        %525 = vmatpush1.bf16.msra.mxu0 0
        %526 = vmatprep.subr.bf16.mxu0 0
        %527 = vmatpush1.bf16.msra.mxu0 0
        %528 = vmatprep.subr.bf16.mxu0 0
        %529 = vmatpush1.bf16.msra.mxu0 0
        %530 = vmatprep.mubr.bf16.mxu0 0
        %531 = vmatmul.mubr.bf16.gmra.mrb[0].mxu0 %v401
        %v532 = vpop.f32.mrb[0].mxu0
        %v533 = vadd.f32 0.0, %v532
        %v534 = vpop.f32.mrb[0].mxu0
        %v535 = vadd.f32 0.0, %v534
        %v536 = vpop.f32.mrb[0].mxu0
        %v537 = vpop.f32.mrb[0].mxu0
        %538 = vdwg.mxu0
        %v539 = vadd.f32 %v399, %v533
        %v540 = vadd.f32 %v400, %v535
        %541 = vst [vmem:[#allocation2] sm:$0xff] %v539
        %542 = vst [vmem:[#allocation2 + $0x8] sm:$0xff] %v540
        // Predicated region
        $region79: #{wl_forward.13} parent=69 // pred_check
          %p543 = pneg %p393
        $region80: #{wl_forward.13} parent=69 // pred_check_branch
          %545 = sbr.rel (%p543) target = $region82
        $region81: #{wl_forward.13} parent=69 // pred_region
          %v546 = vld [vmem:[#allocation2] sm:$0xff]
          %v547 = vld [vmem:[#allocation2 + $0x8] sm:$0xff]
          %v548 = vld [vmem:[%s377] sm:$0xff]
          %550 = vset.pattern.permute.xlu0 0
          %551 = vperm.xlu0 %550, %v548
          %v552 = vpop.permute.xlu0 %551
          %v554 = vmul.f32 %v546, %v552
          %v555 = vmul.f32 %v547, %v552
          %v556 = vld [vmem:[%s381] sm:$0xff]
          %558 = vset.pattern.permute.xlu0 0
          %559 = vperm.xlu0 %558, %v556
          %v560 = vpop.permute.xlu0 %559
          %v562 = vadd.f32 %v554, %v560
          %v563 = vadd.f32 %v555, %v560
          %564 = vst [vmem:[%s390] sm:$0xff] %v562
          %565 = vst [vmem:[%s390 + $0x8] sm:$0xff] %v563
        $region82: #{wl_forward.13} parent=69 // pred_fallthru
          _
        %s566 = smul.u32 2, %s21
        %p567 = scmp.lt.s32.totalorder %s20, 0
        %s568 = scalar_select %p567, %s20, 0
        %p569 = scmp.lt.s32.totalorder %s566, 3
        %s570 = scalar_select %p569, %s566, 3
        %s571 = smul.addr %s568, 4
        %s572 = sadd.s32 %s570, %s571
        %s573 = smul.addr %s572, 8
        %s574 = scalar_lea.vmem %s4, %s573
        // Predicated region
        $region83: #{wl_forward.13} parent=69 // pred_check
          %p575 = pneg %p162
        $region84: #{wl_forward.13} parent=69 // pred_check_branch
          %577 = sbr.rel (%p575) target = $region86
        $region85: #{wl_forward.13} parent=69 // pred_region
          %s578 = smul.u32 2, %s21
        $region86: #{wl_forward.13} parent=69 // pred_fallthru
          _
      $region70: #{wl_forward.13} parent=5 // pred_fallthru
        _
      %p579 = scmp.le.s32.totalorder 2, %s10
      // Predicated region
      $region87: #{wl_forward.13} parent=5 // pred_check
        %p580 = pneg %p579
      $region88: #{wl_forward.13} parent=5 // pred_check_branch
        %582 = sbr.rel (%p580) target = $region90
      $region89: #{wl_forward.13} parent=5 // pred_region
        %s583 = ssub.s32 %s10, 2
        // Predicated region
        $region91: #{wl_forward.13} parent=89 // pred_check
          %p584 = pneg %p168
        $region92: #{wl_forward.13} parent=89 // pred_check_branch
          %586 = sbr.rel (%p584) target = $region94
        $region93: #{wl_forward.13} parent=89 // pred_region
          %s587 = smul.u32 2, %s24
          %p588 = scmp.lt.s32.totalorder %s23, 0
          %s589 = scalar_select %p588, %s23, 0
          %p590 = scmp.lt.s32.totalorder %s587, 3
          %s591 = scalar_select %p590, %s587, 3
          %s592 = smul.addr %s589, 4
          %s593 = sadd.s32 %s591, %s592
          %s594 = smul.addr %s593, 8
          %s595 = scalar_lea.vmem %s4, %s594
        $region94: #{wl_forward.13} parent=89 // pred_fallthru
          _
      $region90: #{wl_forward.13} parent=5 // pred_fallthru
        _
    $region6: #{wl_forward.13} parent=1 // loop_footer
      %s14 = sadd.s32 1, %s10
    $region7: #{wl_forward.13} parent=1 // loop_footer_branch
      %9 = sbr.rel target = $region3
    $region8: #{wl_forward.13} parent=1 // loop_exit
      _

// kernel: wl_forward.14
$region0: #{wl_forward.14}
  #allocation0 [shape = 'u32[]', space=smem, size = 0x4, offset = 0x4, fixed_abs, tag = 'smem constant byte address 0x4 - core index']
  #allocation1 [shape = 'u32[144,128]{1,0:T(1,128)}', space=vmem, size = 0x12000, scoped, tag = 'internal scratch']
  #allocation2 [shape = 'f32[8,256]{1,0:T(8,128)}', space=vmem, size = 0x2000, scoped, tag = 'scratch operand']
  %s0 = inlined_call_operand.vmem [shape: bf16[8,128], index: 0, kind: input, shape index: {}]
  %s1 = inlined_call_operand.vmem [shape: bf16[128,512], index: 1, kind: input, shape index: {}]
  %s2 = inlined_call_operand.vmem [shape: f32[8,1], index: 2, kind: input, shape index: {}]
  %s3 = inlined_call_operand.vmem [shape: f32[8,1], index: 3, kind: input, shape index: {}]
  %s4 = inlined_call_operand.vmem [shape: f32[8,512], index: 4, kind: output, shape index: {}]
  %s5 = sld [smem:[#allocation0]]
  $region95: #{wl_forward.14} parent=0
    _
  %s7 = ssub.s32 1, %s5
  %s8 = scalar_select 0, %s7, %s5
  $region1: #{wl_forward.14} parent=0
    #allocation3 [shape = 'u8[131072]{0}', space=vmem, size = 0x20000, scoped, tag = 'input window, operand 1']
    loop: start=0, step=1, limit=4
    $region2: #{wl_forward.14} parent=1 // loop_pre_header
      _
    $region3: #{wl_forward.14} parent=1 // loop_header
      %s10 = sphi 0, %s14
      %p11 = scmp.ge.s32.totalorder %s10, 4
      %s17 = sphi 0, %s36
      %s18 = sphi 0, %s32
      %s19 = sphi 0, %s28
      %s20 = sphi 0, %s17
      %s21 = sphi 0, %s18
      %s22 = sphi 0, %s19
      %s23 = sphi 0, %s20
      %s24 = sphi 0, %s21
      %s25 = sphi 0, %s22
      %s41 = sphi 0, %s43
      %s44 = sphi 0, %s41
      %s45 = sphi 0, %s44
      %s61 = sphi 0, %s45
      %s69 = sphi 0, %s71
      %s72 = sphi 0, %s69
      %s73 = sphi 0, %s72
      %s89 = sphi 0, %s73
      %s95 = sphi 0, %s97
      %s98 = sphi 0, %s95
      %s99 = sphi 0, %s98
      %s115 = sphi 0, %s99
      %s121 = sphi 0, %s123
      %s124 = sphi 0, %s121
      %s125 = sphi 0, %s124
      %s141 = sphi 0, %s125
      %s149 = sphi 0, %s151
      %s152 = sphi 0, %s149
      %s153 = sphi 0, %s152
      %s169 = sphi 0, %s153
    $region4: #{wl_forward.14} parent=1 // loop_header_branch
      %13 = sbr.rel (%p11) target = $region8
    $region5: #{wl_forward.14} parent=1 // loop_body
      %s15 = ssub.s32 %s10, 1
      %s16 = ssub.s32 %s10, 2
      %s26 = sadd.s32 1, %s19
      %p27 = scmp.ge.s32.totalorder %s26, 1
      %s28 = scalar_select %p27, 0, %s26
      %s29 = sadd.s32 1, %s18
      %s30 = scalar_select %p27, %s29, %s18
      %p31 = scmp.ge.s32.totalorder %s30, 2
      %s32 = scalar_select %p31, 0, %s30
      %s33 = sadd.s32 1, %s17
      %s34 = scalar_select %p31, %s33, %s17
      %p35 = scmp.ge.s32.totalorder %s34, 1
      %s36 = scalar_select %p35, 0, %s34
      %s37 = ssub.s32 %s17, %s36
      %s38 = ssub.s32 %s19, %s28
      %s39 = sor.u32 %s37, %s38
      %p40 = scmp.eq.s32.totalorder %s39, 0
      %s42 = sadd.s32 %s41, 1
      %s43 = scalar_select %p40, %s41, %s42
      %p46 = pneg %p40
      %p47 = scmp.eq.s32.totalorder %s10, 1
      %p48 = por %p46, %p47
      %p49 = scmp.ne.s32.totalorder %s41, %s44
      %p50 = scmp.eq.s32.totalorder %s10, 0
      %p51 = por %p49, %p50
      %p52 = scmp.ne.s32.totalorder %s41, %s44
      %p53 = scmp.eq.s32.totalorder %s15, 1
      %p54 = por %p52, %p53
      %p55 = scmp.ne.s32.totalorder %s44, %s45
      %p56 = scmp.eq.s32.totalorder %s15, 0
      %p57 = por %p55, %p56
      %p58 = scmp.ne.s32.totalorder %s44, %s45
      %p59 = scmp.eq.s32.totalorder %s16, 1
      %p60 = por %p58, %p59
      %p62 = scmp.ne.s32.totalorder %s45, %s61
      %p63 = scmp.eq.s32.totalorder %s16, 0
      %p64 = por %p62, %p63
      %s65 = ssub.s32 %s19, %s28
      %s66 = ssub.s32 %s18, %s32
      %s67 = sor.u32 %s65, %s66
      %p68 = scmp.eq.s32.totalorder %s67, 0
      %s70 = sadd.s32 %s69, 1
      %s71 = scalar_select %p68, %s69, %s70
      %p74 = pneg %p68
      %p75 = scmp.eq.s32.totalorder %s10, 1
      %p76 = por %p74, %p75
      %p77 = scmp.ne.s32.totalorder %s69, %s72
      %p78 = scmp.eq.s32.totalorder %s10, 0
      %p79 = por %p77, %p78
      %p80 = scmp.ne.s32.totalorder %s69, %s72
      %p81 = scmp.eq.s32.totalorder %s15, 1
      %p82 = por %p80, %p81
      %p83 = scmp.ne.s32.totalorder %s72, %s73
      %p84 = scmp.eq.s32.totalorder %s15, 0
      %p85 = por %p83, %p84
      %p86 = scmp.ne.s32.totalorder %s72, %s73
      %p87 = scmp.eq.s32.totalorder %s16, 1
      %p88 = por %p86, %p87
      %p90 = scmp.ne.s32.totalorder %s73, %s89
      %p91 = scmp.eq.s32.totalorder %s16, 0
      %p92 = por %p90, %p91
      %s93 = ssub.s32 %s17, %s36
      %p94 = scmp.eq.s32.totalorder %s93, 0
      %s96 = sadd.s32 %s95, 1
      %s97 = scalar_select %p94, %s95, %s96
      %p100 = pneg %p94
      %p101 = scmp.eq.s32.totalorder %s10, 1
      %p102 = por %p100, %p101
      %p103 = scmp.ne.s32.totalorder %s95, %s98
      %p104 = scmp.eq.s32.totalorder %s10, 0
      %p105 = por %p103, %p104
      %p106 = scmp.ne.s32.totalorder %s95, %s98
      %p107 = scmp.eq.s32.totalorder %s15, 1
      %p108 = por %p106, %p107
      %p109 = scmp.ne.s32.totalorder %s98, %s99
      %p110 = scmp.eq.s32.totalorder %s15, 0
      %p111 = por %p109, %p110
      %p112 = scmp.ne.s32.totalorder %s98, %s99
      %p113 = scmp.eq.s32.totalorder %s16, 1
      %p114 = por %p112, %p113
      %p116 = scmp.ne.s32.totalorder %s99, %s115
      %p117 = scmp.eq.s32.totalorder %s16, 0
      %p118 = por %p116, %p117
      %s119 = ssub.s32 %s17, %s36
      %p120 = scmp.eq.s32.totalorder %s119, 0
      %s122 = sadd.s32 %s121, 1
      %s123 = scalar_select %p120, %s121, %s122
      %p126 = pneg %p120
      %p127 = scmp.eq.s32.totalorder %s10, 1
      %p128 = por %p126, %p127
      %p129 = scmp.ne.s32.totalorder %s121, %s124
      %p130 = scmp.eq.s32.totalorder %s10, 0
      %p131 = por %p129, %p130
      %p132 = scmp.ne.s32.totalorder %s121, %s124
      %p133 = scmp.eq.s32.totalorder %s15, 1
      %p134 = por %p132, %p133
      %p135 = scmp.ne.s32.totalorder %s124, %s125
      %p136 = scmp.eq.s32.totalorder %s15, 0
      %p137 = por %p135, %p136
      %p138 = scmp.ne.s32.totalorder %s124, %s125
      %p139 = scmp.eq.s32.totalorder %s16, 1
      %p140 = por %p138, %p139
      %p142 = scmp.ne.s32.totalorder %s125, %s141
      %p143 = scmp.eq.s32.totalorder %s16, 0
      %p144 = por %p142, %p143
      %s145 = ssub.s32 %s17, %s36
      %s146 = ssub.s32 %s18, %s32
      %s147 = sor.u32 %s145, %s146
      %p148 = scmp.eq.s32.totalorder %s147, 0
      %s150 = sadd.s32 %s149, 1
      %s151 = scalar_select %p148, %s149, %s150
      %p154 = pneg %p148
      %p155 = scmp.eq.s32.totalorder %s10, 1
      %p156 = por %p154, %p155
      %p157 = scmp.ne.s32.totalorder %s149, %s152
      %p158 = scmp.eq.s32.totalorder %s10, 0
      %p159 = por %p157, %p158
      %p160 = scmp.ne.s32.totalorder %s149, %s152
      %p161 = scmp.eq.s32.totalorder %s15, 1
      %p162 = por %p160, %p161
      %p163 = scmp.ne.s32.totalorder %s152, %s153
      %p164 = scmp.eq.s32.totalorder %s15, 0
      %p165 = por %p163, %p164
      %p166 = scmp.ne.s32.totalorder %s152, %s153
      %p167 = scmp.eq.s32.totalorder %s16, 1
      %p168 = por %p166, %p167
      %p170 = scmp.ne.s32.totalorder %s153, %s169
      %p171 = scmp.eq.s32.totalorder %s16, 0
      %p172 = por %p170, %p171
      %p173 = scmp.le.s32.totalorder 1, %s10
      %p174 = scmp.lt.s32.totalorder %s10, 3
      %p175 = pnand %p173, %p174
      %p176 = pneg %p175
      // Predicated region
      $region9: #{wl_forward.14} parent=5 // pred_check
        _
      $region10: #{wl_forward.14} parent=5 // pred_check_branch
        %178 = sbr.rel (%p175) target = $region12
      $region11: #{wl_forward.14} parent=5 // pred_region
        %s179 = ssub.s32 %s10, 1
        // Predicated region
        $region13: #{wl_forward.14} parent=11 // pred_check
          %p180 = pneg %p57
        $region14: #{wl_forward.14} parent=11 // pred_check_branch
          %182 = sbr.rel (%p180) target = $region16
        $region15: #{wl_forward.14} parent=11 // pred_region
          %p183 = scmp.lt.s32.totalorder %s20, 0
          %s184 = scalar_select %p183, %s20, 0
          %p185 = scmp.lt.s32.totalorder %s22, 0
          %s186 = scalar_select %p185, %s22, 0
          %s187 = sadd.s32 %s186, %s184
          %s188 = smul.addr %s187, 4
          %s189 = scalar_lea.vmem %s0, %s188
        $region16: #{wl_forward.14} parent=11 // pred_fallthru
          _
        // Predicated region
        $region17: #{wl_forward.14} parent=11 // pred_check
          %p190 = pneg %p111
        $region18: #{wl_forward.14} parent=11 // pred_check_branch
          %192 = sbr.rel (%p190) target = $region20
        $region19: #{wl_forward.14} parent=11 // pred_region
          %p193 = scmp.lt.s32.totalorder %s20, 0
          %s194 = scalar_select %p193, %s20, 0
          %s195 = smul.addr %s194, 8
          %s196 = scalar_lea.vmem %s2, %s195
        $region20: #{wl_forward.14} parent=11 // pred_fallthru
          _
        // Predicated region
        $region21: #{wl_forward.14} parent=11 // pred_check
          %p197 = pneg %p137
        $region22: #{wl_forward.14} parent=11 // pred_check_branch
          %199 = sbr.rel (%p197) target = $region24
        $region23: #{wl_forward.14} parent=11 // pred_region
          %p200 = scmp.lt.s32.totalorder %s20, 0
          %s201 = scalar_select %p200, %s20, 0
          %s202 = smul.addr %s201, 8
          %s203 = scalar_lea.vmem %s3, %s202
        $region24: #{wl_forward.14} parent=11 // pred_fallthru
          _
      $region12: #{wl_forward.14} parent=5 // pred_fallthru
        _
      %p204 = scmp.lt.s32.totalorder %s10, 2
      // Predicated region
      $region25: #{wl_forward.14} parent=5 // pred_check
        %p205 = pneg %p204
      $region26: #{wl_forward.14} parent=5 // pred_check_branch
        %207 = sbr.rel (%p205) target = $region28
      $region27: #{wl_forward.14} parent=5 // pred_region
        // Predicated region
        $region29: #{wl_forward.14} parent=27 // pred_check
          %p208 = pneg %p79
        $region30: #{wl_forward.14} parent=27 // pred_check_branch
          %210 = sbr.rel (%p208) target = $region32
        $region31: #{wl_forward.14} parent=27 // pred_region
          %s211 = sand.u32 %s69, 1
          %s212 = sand.u32 %s69, 1
          %s213 = smul.addr %s212, 128
          %s214 = scalar_lea.vmem [#allocation3], %s213
          %s215 = smul.u32 16, %s19
          %s216 = smul.u32 2, %s18
          %s217 = smul.addr %s215, 4
          %s218 = sadd.s32 %s216, %s217
          %s219 = smul.addr %s218, 4
          %s220 = scalar_lea.vmem %s1, %s219
          // Predicated region
          $region33: #{wl_forward.14} parent=31 // pred_check
            _
          $region34: #{wl_forward.14} parent=31 // pred_check_branch
            %222 = sbr.rel (0) target = $region36
          $region35: #{wl_forward.14} parent=31 // pred_region
            // Predicated region
            $region37: #{wl_forward.14} parent=35 // pred_check
              _
            $region38: #{wl_forward.14} parent=35 // pred_check_branch
              %224 = sbr.rel (0) target = $region40
            $region39: #{wl_forward.14} parent=35 // pred_region
              // Predicated region
              $region52: #{wl_forward.14} parent=39 // pred_check
                _
              $region53: #{wl_forward.14} parent=39 // pred_check_branch
                %269 = sbr.rel (0) target = $region55
              $region54: #{wl_forward.14} parent=39 // pred_region
                loop: start=0, step=1, limit=1
                $region56: #{wl_forward.14} parent=54 // loop_pre_header
                  _
                $region57: #{wl_forward.14} parent=54 // loop_header
                  %s271 = sphi 0, %s275
                  %p272 = scmp.ge.s32.totalorder %s271, 1
                  %s276 = sphi %s220, %s220
                  %s277 = sphi %s214, %s214
                $region58: #{wl_forward.14} parent=54 // loop_header_branch
                  %274 = sbr.rel (%p272) target = $region62
                $region59: #{wl_forward.14} parent=54 // loop_body
                  %v278 = vld [vmem:[%s276] sm:$0xff]
                  %279 = vst [vmem:[%s277] sm:$0xff] %v278
                  %v280 = vld [vmem:[%s276 + $0x10] sm:$0xff]
                  %281 = vst [vmem:[%s277 + $0x8] sm:$0xff] %v280
                  %v282 = vld [vmem:[%s276 + $0x20] sm:$0xff]
                  %283 = vst [vmem:[%s277 + $0x10] sm:$0xff] %v282
                  %v284 = vld [vmem:[%s276 + $0x30] sm:$0xff]
                  %285 = vst [vmem:[%s277 + $0x18] sm:$0xff] %v284
                  %v286 = vld [vmem:[%s276 + $0x40] sm:$0xff]
                  %287 = vst [vmem:[%s277 + $0x20] sm:$0xff] %v286
                  %v288 = vld [vmem:[%s276 + $0x50] sm:$0xff]
                  %289 = vst [vmem:[%s277 + $0x28] sm:$0xff] %v288
                  %v290 = vld [vmem:[%s276 + $0x60] sm:$0xff]
                  %291 = vst [vmem:[%s277 + $0x30] sm:$0xff] %v290
                  %v292 = vld [vmem:[%s276 + $0x70] sm:$0xff]
                  %293 = vst [vmem:[%s277 + $0x38] sm:$0xff] %v292
                  %v294 = vld [vmem:[%s276 + $0x80] sm:$0xff]
                  %295 = vst [vmem:[%s277 + $0x40] sm:$0xff] %v294
                  %v296 = vld [vmem:[%s276 + $0x90] sm:$0xff]
                  %297 = vst [vmem:[%s277 + $0x48] sm:$0xff] %v296
                  %v298 = vld [vmem:[%s276 + $0xa0] sm:$0xff]
                  %299 = vst [vmem:[%s277 + $0x50] sm:$0xff] %v298
                  %v300 = vld [vmem:[%s276 + $0xb0] sm:$0xff]
                  %301 = vst [vmem:[%s277 + $0x58] sm:$0xff] %v300
                  %v302 = vld [vmem:[%s276 + $0xc0] sm:$0xff]
                  %303 = vst [vmem:[%s277 + $0x60] sm:$0xff] %v302
                  %v304 = vld [vmem:[%s276 + $0xd0] sm:$0xff]
                  %305 = vst [vmem:[%s277 + $0x68] sm:$0xff] %v304
                  %v306 = vld [vmem:[%s276 + $0xe0] sm:$0xff]
                  %307 = vst [vmem:[%s277 + $0x70] sm:$0xff] %v306
                  %v308 = vld [vmem:[%s276 + $0xf0] sm:$0xff]
                  %309 = vst [vmem:[%s277 + $0x78] sm:$0xff] %v308
                $region60: #{wl_forward.14} parent=54 // loop_footer
                  %s275 = sadd.s32 1, %s271
                $region61: #{wl_forward.14} parent=54 // loop_footer_branch
                  %270 = sbr.rel target = $region57
                $region62: #{wl_forward.14} parent=54 // loop_exit
                  _
              $region55: #{wl_forward.14} parent=39 // pred_fallthru
                _
              // Predicated region
              $region63: #{wl_forward.14} parent=39 // pred_check
                _
              $region64: #{wl_forward.14} parent=39 // pred_check_branch
                %311 = sbr.rel target = $region66
              $region65: #{wl_forward.14} parent=39 // pred_region
                _
              $region66: #{wl_forward.14} parent=39 // pred_fallthru
                _
            $region40: #{wl_forward.14} parent=35 // pred_fallthru
              _
            // Predicated region
            $region41: #{wl_forward.14} parent=35 // pred_check
              _
            $region42: #{wl_forward.14} parent=35 // pred_check_branch
              %226 = sbr.rel target = $region44
            $region43: #{wl_forward.14} parent=35 // pred_region
              loop: start=0, step=1, limit=1
              $region45: #{wl_forward.14} parent=43 // loop_pre_header
                _
              $region46: #{wl_forward.14} parent=43 // loop_header
                %s229 = sphi 0, %s233
                %p230 = scmp.ge.s32.totalorder %s229, 1
                %s234 = sphi %s220, %s220
                %s235 = sphi %s214, %s214
              $region47: #{wl_forward.14} parent=43 // loop_header_branch
                %232 = sbr.rel (%p230) target = $region51
              $region48: #{wl_forward.14} parent=43 // loop_body
                %v236 = vld [vmem:[%s234] sm:$0xff]
                %237 = vst [vmem:[%s235] sm:$0xff] %v236
                %v238 = vld [vmem:[%s234 + $0x10] sm:$0xff]
                %239 = vst [vmem:[%s235 + $0x8] sm:$0xff] %v238
                %v240 = vld [vmem:[%s234 + $0x20] sm:$0xff]
                %241 = vst [vmem:[%s235 + $0x10] sm:$0xff] %v240
                %v242 = vld [vmem:[%s234 + $0x30] sm:$0xff]
                %243 = vst [vmem:[%s235 + $0x18] sm:$0xff] %v242
                %v244 = vld [vmem:[%s234 + $0x40] sm:$0xff]
                %245 = vst [vmem:[%s235 + $0x20] sm:$0xff] %v244
                %v246 = vld [vmem:[%s234 + $0x50] sm:$0xff]
                %247 = vst [vmem:[%s235 + $0x28] sm:$0xff] %v246
                %v248 = vld [vmem:[%s234 + $0x60] sm:$0xff]
                %249 = vst [vmem:[%s235 + $0x30] sm:$0xff] %v248
                %v250 = vld [vmem:[%s234 + $0x70] sm:$0xff]
                %251 = vst [vmem:[%s235 + $0x38] sm:$0xff] %v250
                %v252 = vld [vmem:[%s234 + $0x80] sm:$0xff]
                %253 = vst [vmem:[%s235 + $0x40] sm:$0xff] %v252
                %v254 = vld [vmem:[%s234 + $0x90] sm:$0xff]
                %255 = vst [vmem:[%s235 + $0x48] sm:$0xff] %v254
                %v256 = vld [vmem:[%s234 + $0xa0] sm:$0xff]
                %257 = vst [vmem:[%s235 + $0x50] sm:$0xff] %v256
                %v258 = vld [vmem:[%s234 + $0xb0] sm:$0xff]
                %259 = vst [vmem:[%s235 + $0x58] sm:$0xff] %v258
                %v260 = vld [vmem:[%s234 + $0xc0] sm:$0xff]
                %261 = vst [vmem:[%s235 + $0x60] sm:$0xff] %v260
                %v262 = vld [vmem:[%s234 + $0xd0] sm:$0xff]
                %263 = vst [vmem:[%s235 + $0x68] sm:$0xff] %v262
                %v264 = vld [vmem:[%s234 + $0xe0] sm:$0xff]
                %265 = vst [vmem:[%s235 + $0x70] sm:$0xff] %v264
                %v266 = vld [vmem:[%s234 + $0xf0] sm:$0xff]
                %267 = vst [vmem:[%s235 + $0x78] sm:$0xff] %v266
              $region49: #{wl_forward.14} parent=43 // loop_footer
                %s233 = sadd.s32 1, %s229
              $region50: #{wl_forward.14} parent=43 // loop_footer_branch
                %228 = sbr.rel target = $region46
              $region51: #{wl_forward.14} parent=43 // loop_exit
                _
            $region44: #{wl_forward.14} parent=35 // pred_fallthru
              _
          $region36: #{wl_forward.14} parent=31 // pred_fallthru
            _
          %312 = vnop
        $region32: #{wl_forward.14} parent=27 // pred_fallthru
          _
      $region28: #{wl_forward.14} parent=5 // pred_fallthru
        _
      %p313 = scmp.le.s32.totalorder 1, %s10
      %p314 = scmp.lt.s32.totalorder %s10, 3
      %p315 = pnand %p313, %p314
      %p316 = pneg %p315
      // Predicated region
      $region67: #{wl_forward.14} parent=5 // pred_check
        _
      $region68: #{wl_forward.14} parent=5 // pred_check_branch
        %318 = sbr.rel (%p315) target = $region70
      $region69: #{wl_forward.14} parent=5 // pred_region
        %s319 = ssub.s32 %s10, 1
        %s320 = sand.u32 %s72, 1
        %s321 = sand.u32 %s72, 1
        %s322 = smul.addr %s321, 128
        %s323 = scalar_lea.vmem [#allocation3], %s322
        // Predicated region
        $region71: #{wl_forward.14} parent=69 // pred_check
          %p324 = pneg %p85
        $region72: #{wl_forward.14} parent=69 // pred_check_branch
          %326 = sbr.rel (%p324) target = $region74
        $region73: #{wl_forward.14} parent=69 // pred_region
          _
        $region74: #{wl_forward.14} parent=69 // pred_fallthru
          _
        %p327 = scmp.lt.s32.totalorder %s20, 0
        %s328 = scalar_select %p327, %s20, 0
        %p329 = scmp.lt.s32.totalorder %s22, 0
        %s330 = scalar_select %p329, %s22, 0
        %s331 = sadd.s32 %s330, %s328
        %s332 = smul.addr %s331, 4
        %s333 = scalar_lea.vmem %s0, %s332
        %p334 = pneg %p57
        %p335 = pneg %p54
        %s336 = sand.u32 %s72, 1
        %s337 = sand.u32 %s72, 1
        %s338 = smul.addr %s337, 128
        %s339 = scalar_lea.vmem [#allocation3], %s338
        %p340 = pneg %p85
        %p341 = pneg %p82
        %p342 = scmp.lt.s32.totalorder %s20, 0
        %s343 = scalar_select %p342, %s20, 0
        %s344 = smul.addr %s343, 8
        %s345 = scalar_lea.vmem %s2, %s344
        %p346 = pneg %p111
        %p347 = pneg %p108
        %p348 = scmp.lt.s32.totalorder %s20, 0
        %s349 = scalar_select %p348, %s20, 0
        %s350 = smul.addr %s349, 8
        %s351 = scalar_lea.vmem %s3, %s350
        %p352 = pneg %p137
        %p353 = pneg %p134
        %p354 = pneg %p165
        %p355 = pneg %p162
        %s356 = smul.u32 2, %s21
        %p357 = scmp.lt.s32.totalorder %s20, 0
        %s358 = scalar_select %p357, %s20, 0
        %p359 = scmp.lt.s32.totalorder %s356, 3
        %s360 = scalar_select %p359, %s356, 3
        %s361 = smul.addr %s358, 4
        %s362 = sadd.s32 %s360, %s361
        %s363 = smul.addr %s362, 8
        %s364 = scalar_lea.vmem %s4, %s363
        %p365 = scmp.lt.s32.totalorder %s20, 0
        %s366 = scalar_select %p365, %s20, 0
        %p367 = scmp.lt.s32.totalorder %s22, 0
        %s368 = scalar_select %p367, %s22, 0
        %s369 = sadd.s32 %s368, %s366
        %s370 = smul.addr %s369, 4
        %s371 = scalar_lea.vmem %s0, %s370
        %s372 = smul.u32 16, %s22
        %s373 = smul.u32 2, %s21
        %p374 = scmp.lt.s32.totalorder %s20, 0
        %s375 = scalar_select %p374, %s20, 0
        %s376 = smul.addr %s375, 8
        %s377 = scalar_lea.vmem %s2, %s376
        %p378 = scmp.lt.s32.totalorder %s20, 0
        %s379 = scalar_select %p378, %s20, 0
        %s380 = smul.addr %s379, 8
        %s381 = scalar_lea.vmem %s3, %s380
        %s382 = smul.u32 2, %s21
        %p383 = scmp.lt.s32.totalorder %s20, 0
        %s384 = scalar_select %p383, %s20, 0
        %p385 = scmp.lt.s32.totalorder %s382, 3
        %s386 = scalar_select %p385, %s382, 3
        %s387 = smul.addr %s384, 4
        %s388 = sadd.s32 %s386, %s387
        %s389 = smul.addr %s388, 8
        %s390 = scalar_lea.vmem %s4, %s389
        %s391 = smul.u32 2, %s21
        %p393 = scmp.eq.s32.totalorder %s22, 0
        // Predicated region
        $region75: #{wl_forward.14} parent=69 // pred_check
          %p394 = pneg %p393
        $region76: #{wl_forward.14} parent=69 // pred_check_branch
          %396 = sbr.rel (%p394) target = $region78
        $region77: #{wl_forward.14} parent=69 // pred_region
          %397 = vst [vmem:[#allocation2] sm:$0xff] 0.0
          %398 = vst [vmem:[#allocation2 + $0x8] sm:$0xff] 0.0
        $region78: #{wl_forward.14} parent=69 // pred_fallthru
          _
        %v399 = vld [vmem:[#allocation2] sm:$0xff]
        %v400 = vld [vmem:[#allocation2 + $0x8] sm:$0xff]
        %v401 = vld [vmem:[%s371] sm:$0xf]
        %v402 = vld [vmem:[%s323] sm:$0xff]
        %v403 = vld [vmem:[%s323 + $0x8] sm:$0xff]
        %v404 = vld [vmem:[%s323 + $0x10] sm:$0xff]
        %v405 = vld [vmem:[%s323 + $0x18] sm:$0xff]
        %v406 = vld [vmem:[%s323 + $0x20] sm:$0xff]
        %v407 = vld [vmem:[%s323 + $0x28] sm:$0xff]
        %v408 = vld [vmem:[%s323 + $0x30] sm:$0xff]
        %v409 = vld [vmem:[%s323 + $0x38] sm:$0xff]
        %v410 = vld [vmem:[%s323 + $0x40] sm:$0xff]
        %v411 = vld [vmem:[%s323 + $0x48] sm:$0xff]
        %v412 = vld [vmem:[%s323 + $0x50] sm:$0xff]
        %v413 = vld [vmem:[%s323 + $0x58] sm:$0xff]
        %v414 = vld [vmem:[%s323 + $0x60] sm:$0xff]
        %v415 = vld [vmem:[%s323 + $0x68] sm:$0xff]
        %v416 = vld [vmem:[%s323 + $0x70] sm:$0xff]
        %v417 = vld [vmem:[%s323 + $0x78] sm:$0xff]
        %v434 = vunpack.c.l.b16 %v402
        %v435 = vunpack.c.h.b16 %v402
        %v436 = vunpack.c.l.b16 %v403
        %v437 = vunpack.c.h.b16 %v403
        %v438 = vunpack.c.l.b16 %v404
        %v439 = vunpack.c.h.b16 %v404
        %v440 = vunpack.c.l.b16 %v405
        %v441 = vunpack.c.h.b16 %v405
        %v442 = vunpack.c.l.b16 %v406
        %v443 = vunpack.c.h.b16 %v406
        %v444 = vunpack.c.l.b16 %v407
        %v445 = vunpack.c.h.b16 %v407
        %v446 = vunpack.c.l.b16 %v408
        %v447 = vunpack.c.h.b16 %v408
        %v448 = vunpack.c.l.b16 %v409
        %v449 = vunpack.c.h.b16 %v409
        %v450 = vunpack.c.l.b16 %v410
        %v451 = vunpack.c.h.b16 %v410
        %v452 = vunpack.c.l.b16 %v411
        %v453 = vunpack.c.h.b16 %v411
        %v454 = vunpack.c.l.b16 %v412
        %v455 = vunpack.c.h.b16 %v412
        %v456 = vunpack.c.l.b16 %v413
        %v457 = vunpack.c.h.b16 %v413
        %v458 = vunpack.c.l.b16 %v414
        %v459 = vunpack.c.h.b16 %v414
        %v460 = vunpack.c.l.b16 %v415
        %v461 = vunpack.c.h.b16 %v415
        %v462 = vunpack.c.l.b16 %v416
        %v463 = vunpack.c.h.b16 %v416
        %v464 = vunpack.c.l.b16 %v417
        %v465 = vunpack.c.h.b16 %v417
        %v466 = vpack.c.b16 %v436, %v434
        %v467 = vpack.c.b16 %v437, %v435
        %v468 = vpack.c.b16 %v440, %v438
        %v469 = vpack.c.b16 %v441, %v439
        %v470 = vpack.c.b16 %v444, %v442
        %v471 = vpack.c.b16 %v445, %v443
        %v472 = vpack.c.b16 %v448, %v446
        %v473 = vpack.c.b16 %v449, %v447
        %v474 = vpack.c.b16 %v452, %v450
        %v475 = vpack.c.b16 %v453, %v451
        %v476 = vpack.c.b16 %v456, %v454
        %v477 = vpack.c.b16 %v457, %v455
        %v478 = vpack.c.b16 %v460, %v458
        %v479 = vpack.c.b16 %v461, %v459
        %v480 = vpack.c.b16 %v464, %v462
        %v481 = vpack.c.b16 %v465, %v463
        %498 = vmatprep.subr.bf16.mxu0 %v467
        %499 = vmatpush1.bf16.msra.mxu0 %v466
        %500 = vmatprep.subr.bf16.mxu0 %v469
        %501 = vmatpush1.bf16.msra.mxu0 %v468
        %502 = vmatprep.subr.bf16.mxu0 %v471
        %503 = vmatpush1.bf16.msra.mxu0 %v470
        %504 = vmatprep.subr.bf16.mxu0 %v473
        %505 = vmatpush1.bf16.msra.mxu0 %v472
        %506 = vmatprep.subr.bf16.mxu0 %v475
        %507 = vmatpush1.bf16.msra.mxu0 %v474
        %508 = vmatprep.subr.bf16.mxu0 %v477
        %509 = vmatpush1.bf16.msra.mxu0 %v476
        %510 = vmatprep.subr.bf16.mxu0 %v479
        %511 = vmatpush1.bf16.msra.mxu0 %v478
        %512 = vmatprep.subr.bf16.mxu0 %v481
        %513 = vmatpush1.bf16.msra.mxu0 %v480
        %514 = vmatprep.subr.bf16.mxu0 0
        %515 = vmatpush1.bf16.msra.mxu0 0
        %516 = vmatprep.subr.bf16.mxu0 0
        %517 = vmatpush1.bf16.msra.mxu0 0
        %518 = vmatprep.subr.bf16.mxu0 0
        %519 = vmatpush1.bf16.msra.mxu0 0
        %520 = vmatprep.subr.bf16.mxu0 0
        %521 = vmatpush1.bf16.msra.mxu0 0
        %522 = vmatprep.subr.bf16.mxu0 0
        %523 = vmatpush1.bf16.msra.mxu0 0
        %524 = vmatprep.subr.bf16.mxu0 0
        %525 = vmatpush1.bf16.msra.mxu0 0
        %526 = vmatprep.subr.bf16.mxu0 0
        %527 = vmatpush1.bf16.msra.mxu0 0
        %528 = vmatprep.subr.bf16.mxu0 0
        %529 = vmatpush1.bf16.msra.mxu0 0
        %530 = vmatprep.mubr.bf16.mxu0 0
        %531 = vmatmul.mubr.bf16.gmra.mrb[0].mxu0 %v401
        %v532 = vpop.f32.mrb[0].mxu0
        %v533 = vadd.f32 0.0, %v532
        %v534 = vpop.f32.mrb[0].mxu0
        %v535 = vadd.f32 0.0, %v534
        %v536 = vpop.f32.mrb[0].mxu0
        %v537 = vpop.f32.mrb[0].mxu0
        %538 = vdwg.mxu0
        %v539 = vadd.f32 %v399, %v533
        %v540 = vadd.f32 %v400, %v535
        %541 = vst [vmem:[#allocation2] sm:$0xff] %v539
        %542 = vst [vmem:[#allocation2 + $0x8] sm:$0xff] %v540
        // Predicated region
        $region79: #{wl_forward.14} parent=69 // pred_check
          %p543 = pneg %p393
        $region80: #{wl_forward.14} parent=69 // pred_check_branch
          %545 = sbr.rel (%p543) target = $region82
        $region81: #{wl_forward.14} parent=69 // pred_region
          %v546 = vld [vmem:[#allocation2] sm:$0xff]
          %v547 = vld [vmem:[#allocation2 + $0x8] sm:$0xff]
          %v548 = vld [vmem:[%s377] sm:$0xff]
          %550 = vset.pattern.permute.xlu0 0
          %551 = vperm.xlu0 %550, %v548
          %v552 = vpop.permute.xlu0 %551
          %v554 = vmul.f32 %v546, %v552
          %v555 = vmul.f32 %v547, %v552
          %v556 = vld [vmem:[%s381] sm:$0xff]
          %558 = vset.pattern.permute.xlu0 0
          %559 = vperm.xlu0 %558, %v556
          %v560 = vpop.permute.xlu0 %559
          %v562 = vadd.f32 %v554, %v560
          %v563 = vadd.f32 %v555, %v560
          %v564 = vmax.f32 %v562, 0.0
          %v565 = vmax.f32 %v563, 0.0
          %566 = vst [vmem:[%s390] sm:$0xff] %v564
          %567 = vst [vmem:[%s390 + $0x8] sm:$0xff] %v565
        $region82: #{wl_forward.14} parent=69 // pred_fallthru
          _
        %s568 = smul.u32 2, %s21
        %p569 = scmp.lt.s32.totalorder %s20, 0
        %s570 = scalar_select %p569, %s20, 0
        %p571 = scmp.lt.s32.totalorder %s568, 3
        %s572 = scalar_select %p571, %s568, 3
        %s573 = smul.addr %s570, 4
        %s574 = sadd.s32 %s572, %s573
        %s575 = smul.addr %s574, 8
        %s576 = scalar_lea.vmem %s4, %s575
        // Predicated region
        $region83: #{wl_forward.14} parent=69 // pred_check
          %p577 = pneg %p162
        $region84: #{wl_forward.14} parent=69 // pred_check_branch
          %579 = sbr.rel (%p577) target = $region86
        $region85: #{wl_forward.14} parent=69 // pred_region
          %s580 = smul.u32 2, %s21
        $region86: #{wl_forward.14} parent=69 // pred_fallthru
          _
      $region70: #{wl_forward.14} parent=5 // pred_fallthru
        _
      %p581 = scmp.le.s32.totalorder 2, %s10
      // Predicated region
      $region87: #{wl_forward.14} parent=5 // pred_check
        %p582 = pneg %p581
      $region88: #{wl_forward.14} parent=5 // pred_check_branch
        %584 = sbr.rel (%p582) target = $region90
      $region89: #{wl_forward.14} parent=5 // pred_region
        %s585 = ssub.s32 %s10, 2
        // Predicated region
        $region91: #{wl_forward.14} parent=89 // pred_check
          %p586 = pneg %p168
        $region92: #{wl_forward.14} parent=89 // pred_check_branch
          %588 = sbr.rel (%p586) target = $region94
        $region93: #{wl_forward.14} parent=89 // pred_region
          %s589 = smul.u32 2, %s24
          %p590 = scmp.lt.s32.totalorder %s23, 0
          %s591 = scalar_select %p590, %s23, 0
          %p592 = scmp.lt.s32.totalorder %s589, 3
          %s593 = scalar_select %p592, %s589, 3
          %s594 = smul.addr %s591, 4
          %s595 = sadd.s32 %s593, %s594
          %s596 = smul.addr %s595, 8
          %s597 = scalar_lea.vmem %s4, %s596
        $region94: #{wl_forward.14} parent=89 // pred_fallthru
          _
      $region90: #{wl_forward.14} parent=5 // pred_fallthru
        _
    $region6: #{wl_forward.14} parent=1 // loop_footer
      %s14 = sadd.s32 1, %s10
    $region7: #{wl_forward.14} parent=1 // loop_footer_branch
      %9 = sbr.rel target = $region3
    $region8: #{wl_forward.14} parent=1 // loop_exit
      _

// kernel: wl_forward.15
$region0: #{wl_forward.15}
  #allocation0 [shape = 'u32[]', space=smem, size = 0x4, offset = 0x4, fixed_abs, tag = 'smem constant byte address 0x4 - core index']
  #allocation1 [shape = 'u32[144,128]{1,0:T(1,128)}', space=vmem, size = 0x12000, scoped, tag = 'internal scratch']
  #allocation2 [shape = 'f32[8,256]{1,0:T(8,128)}', space=vmem, size = 0x2000, scoped, tag = 'scratch operand']
  %s0 = inlined_call_operand.vmem [shape: bf16[8,128], index: 0, kind: input, shape index: {}]
  %s1 = inlined_call_operand.vmem [shape: bf16[128,512], index: 1, kind: input, shape index: {}]
  %s2 = inlined_call_operand.vmem [shape: f32[8,1], index: 2, kind: input, shape index: {}]
  %s3 = inlined_call_operand.vmem [shape: f32[8,1], index: 3, kind: input, shape index: {}]
  %s4 = inlined_call_operand.vmem [shape: f32[8,512], index: 4, kind: input, shape index: {}]
  %s5 = inlined_call_operand.vmem [shape: f32[8,512], index: 5, kind: output, shape index: {}]
  %s6 = sld [smem:[#allocation0]]
  $region99: #{wl_forward.15} parent=0
    _
  %s8 = ssub.s32 1, %s6
  %s9 = scalar_select 0, %s8, %s6
  $region1: #{wl_forward.15} parent=0
    #allocation3 [shape = 'u8[131072]{0}', space=vmem, size = 0x20000, scoped, tag = 'input window, operand 1']
    loop: start=0, step=1, limit=4
    $region2: #{wl_forward.15} parent=1 // loop_pre_header
      _
    $region3: #{wl_forward.15} parent=1 // loop_header
      %s11 = sphi 0, %s15
      %p12 = scmp.ge.s32.totalorder %s11, 4
      %s18 = sphi 0, %s37
      %s19 = sphi 0, %s33
      %s20 = sphi 0, %s29
      %s21 = sphi 0, %s18
      %s22 = sphi 0, %s19
      %s23 = sphi 0, %s20
      %s24 = sphi 0, %s21
      %s25 = sphi 0, %s22
      %s26 = sphi 0, %s23
      %s42 = sphi 0, %s44
      %s45 = sphi 0, %s42
      %s46 = sphi 0, %s45
      %s62 = sphi 0, %s46
      %s70 = sphi 0, %s72
      %s73 = sphi 0, %s70
      %s74 = sphi 0, %s73
      %s90 = sphi 0, %s74
      %s96 = sphi 0, %s98
      %s99 = sphi 0, %s96
      %s100 = sphi 0, %s99
      %s116 = sphi 0, %s100
      %s122 = sphi 0, %s124
      %s125 = sphi 0, %s122
      %s126 = sphi 0, %s125
      %s142 = sphi 0, %s126
      %s150 = sphi 0, %s152
      %s153 = sphi 0, %s150
      %s154 = sphi 0, %s153
      %s170 = sphi 0, %s154
      %s178 = sphi 0, %s180
      %s181 = sphi 0, %s178
      %s182 = sphi 0, %s181
      %s198 = sphi 0, %s182
    $region4: #{wl_forward.15} parent=1 // loop_header_branch
      %14 = sbr.rel (%p12) target = $region8
    $region5: #{wl_forward.15} parent=1 // loop_body
      %s16 = ssub.s32 %s11, 1
      %s17 = ssub.s32 %s11, 2
      %s27 = sadd.s32 1, %s20
      %p28 = scmp.ge.s32.totalorder %s27, 1
      %s29 = scalar_select %p28, 0, %s27
      %s30 = sadd.s32 1, %s19
      %s31 = scalar_select %p28, %s30, %s19
      %p32 = scmp.ge.s32.totalorder %s31, 2
      %s33 = scalar_select %p32, 0, %s31
      %s34 = sadd.s32 1, %s18
      %s35 = scalar_select %p32, %s34, %s18
      %p36 = scmp.ge.s32.totalorder %s35, 1
      %s37 = scalar_select %p36, 0, %s35
      %s38 = ssub.s32 %s18, %s37
      %s39 = ssub.s32 %s20, %s29
      %s40 = sor.u32 %s38, %s39
      %p41 = scmp.eq.s32.totalorder %s40, 0
      %s43 = sadd.s32 %s42, 1
      %s44 = scalar_select %p41, %s42, %s43
      %p47 = pneg %p41
      %p48 = scmp.eq.s32.totalorder %s11, 1
      %p49 = por %p47, %p48
      %p50 = scmp.ne.s32.totalorder %s42, %s45
      %p51 = scmp.eq.s32.totalorder %s11, 0
      %p52 = por %p50, %p51
      %p53 = scmp.ne.s32.totalorder %s42, %s45
      %p54 = scmp.eq.s32.totalorder %s16, 1
      %p55 = por %p53, %p54
      %p56 = scmp.ne.s32.totalorder %s45, %s46
      %p57 = scmp.eq.s32.totalorder %s16, 0
      %p58 = por %p56, %p57
      %p59 = scmp.ne.s32.totalorder %s45, %s46
      %p60 = scmp.eq.s32.totalorder %s17, 1
      %p61 = por %p59, %p60
      %p63 = scmp.ne.s32.totalorder %s46, %s62
      %p64 = scmp.eq.s32.totalorder %s17, 0
      %p65 = por %p63, %p64
      %s66 = ssub.s32 %s20, %s29
      %s67 = ssub.s32 %s19, %s33
      %s68 = sor.u32 %s66, %s67
      %p69 = scmp.eq.s32.totalorder %s68, 0
      %s71 = sadd.s32 %s70, 1
      %s72 = scalar_select %p69, %s70, %s71
      %p75 = pneg %p69
      %p76 = scmp.eq.s32.totalorder %s11, 1
      %p77 = por %p75, %p76
      %p78 = scmp.ne.s32.totalorder %s70, %s73
      %p79 = scmp.eq.s32.totalorder %s11, 0
      %p80 = por %p78, %p79
      %p81 = scmp.ne.s32.totalorder %s70, %s73
      %p82 = scmp.eq.s32.totalorder %s16, 1
      %p83 = por %p81, %p82
      %p84 = scmp.ne.s32.totalorder %s73, %s74
      %p85 = scmp.eq.s32.totalorder %s16, 0
      %p86 = por %p84, %p85
      %p87 = scmp.ne.s32.totalorder %s73, %s74
      %p88 = scmp.eq.s32.totalorder %s17, 1
      %p89 = por %p87, %p88
      %p91 = scmp.ne.s32.totalorder %s74, %s90
      %p92 = scmp.eq.s32.totalorder %s17, 0
      %p93 = por %p91, %p92
      %s94 = ssub.s32 %s18, %s37
      %p95 = scmp.eq.s32.totalorder %s94, 0
      %s97 = sadd.s32 %s96, 1
      %s98 = scalar_select %p95, %s96, %s97
      %p101 = pneg %p95
      %p102 = scmp.eq.s32.totalorder %s11, 1
      %p103 = por %p101, %p102
      %p104 = scmp.ne.s32.totalorder %s96, %s99
      %p105 = scmp.eq.s32.totalorder %s11, 0
      %p106 = por %p104, %p105
      %p107 = scmp.ne.s32.totalorder %s96, %s99
      %p108 = scmp.eq.s32.totalorder %s16, 1
      %p109 = por %p107, %p108
      %p110 = scmp.ne.s32.totalorder %s99, %s100
      %p111 = scmp.eq.s32.totalorder %s16, 0
      %p112 = por %p110, %p111
      %p113 = scmp.ne.s32.totalorder %s99, %s100
      %p114 = scmp.eq.s32.totalorder %s17, 1
      %p115 = por %p113, %p114
      %p117 = scmp.ne.s32.totalorder %s100, %s116
      %p118 = scmp.eq.s32.totalorder %s17, 0
      %p119 = por %p117, %p118
      %s120 = ssub.s32 %s18, %s37
      %p121 = scmp.eq.s32.totalorder %s120, 0
      %s123 = sadd.s32 %s122, 1
      %s124 = scalar_select %p121, %s122, %s123
      %p127 = pneg %p121
      %p128 = scmp.eq.s32.totalorder %s11, 1
      %p129 = por %p127, %p128
      %p130 = scmp.ne.s32.totalorder %s122, %s125
      %p131 = scmp.eq.s32.totalorder %s11, 0
      %p132 = por %p130, %p131
      %p133 = scmp.ne.s32.totalorder %s122, %s125
      %p134 = scmp.eq.s32.totalorder %s16, 1
      %p135 = por %p133, %p134
      %p136 = scmp.ne.s32.totalorder %s125, %s126
      %p137 = scmp.eq.s32.totalorder %s16, 0
      %p138 = por %p136, %p137
      %p139 = scmp.ne.s32.totalorder %s125, %s126
      %p140 = scmp.eq.s32.totalorder %s17, 1
      %p141 = por %p139, %p140
      %p143 = scmp.ne.s32.totalorder %s126, %s142
      %p144 = scmp.eq.s32.totalorder %s17, 0
      %p145 = por %p143, %p144
      %s146 = ssub.s32 %s18, %s37
      %s147 = ssub.s32 %s19, %s33
      %s148 = sor.u32 %s146, %s147
      %p149 = scmp.eq.s32.totalorder %s148, 0
      %s151 = sadd.s32 %s150, 1
      %s152 = scalar_select %p149, %s150, %s151
      %p155 = pneg %p149
      %p156 = scmp.eq.s32.totalorder %s11, 1
      %p157 = por %p155, %p156
      %p158 = scmp.ne.s32.totalorder %s150, %s153
      %p159 = scmp.eq.s32.totalorder %s11, 0
      %p160 = por %p158, %p159
      %p161 = scmp.ne.s32.totalorder %s150, %s153
      %p162 = scmp.eq.s32.totalorder %s16, 1
      %p163 = por %p161, %p162
      %p164 = scmp.ne.s32.totalorder %s153, %s154
      %p165 = scmp.eq.s32.totalorder %s16, 0
      %p166 = por %p164, %p165
      %p167 = scmp.ne.s32.totalorder %s153, %s154
      %p168 = scmp.eq.s32.totalorder %s17, 1
      %p169 = por %p167, %p168
      %p171 = scmp.ne.s32.totalorder %s154, %s170
      %p172 = scmp.eq.s32.totalorder %s17, 0
      %p173 = por %p171, %p172
      %s174 = ssub.s32 %s18, %s37
      %s175 = ssub.s32 %s19, %s33
      %s176 = sor.u32 %s174, %s175
      %p177 = scmp.eq.s32.totalorder %s176, 0
      %s179 = sadd.s32 %s178, 1
      %s180 = scalar_select %p177, %s178, %s179
      %p183 = pneg %p177
      %p184 = scmp.eq.s32.totalorder %s11, 1
      %p185 = por %p183, %p184
      %p186 = scmp.ne.s32.totalorder %s178, %s181
      %p187 = scmp.eq.s32.totalorder %s11, 0
      %p188 = por %p186, %p187
      %p189 = scmp.ne.s32.totalorder %s178, %s181
      %p190 = scmp.eq.s32.totalorder %s16, 1
      %p191 = por %p189, %p190
      %p192 = scmp.ne.s32.totalorder %s181, %s182
      %p193 = scmp.eq.s32.totalorder %s16, 0
      %p194 = por %p192, %p193
      %p195 = scmp.ne.s32.totalorder %s181, %s182
      %p196 = scmp.eq.s32.totalorder %s17, 1
      %p197 = por %p195, %p196
      %p199 = scmp.ne.s32.totalorder %s182, %s198
      %p200 = scmp.eq.s32.totalorder %s17, 0
      %p201 = por %p199, %p200
      %p202 = scmp.le.s32.totalorder 1, %s11
      %p203 = scmp.lt.s32.totalorder %s11, 3
      %p204 = pnand %p202, %p203
      %p205 = pneg %p204
      // Predicated region
      $region9: #{wl_forward.15} parent=5 // pred_check
        _
      $region10: #{wl_forward.15} parent=5 // pred_check_branch
        %207 = sbr.rel (%p204) target = $region12
      $region11: #{wl_forward.15} parent=5 // pred_region
        %s208 = ssub.s32 %s11, 1
        // Predicated region
        $region13: #{wl_forward.15} parent=11 // pred_check
          %p209 = pneg %p58
        $region14: #{wl_forward.15} parent=11 // pred_check_branch
          %211 = sbr.rel (%p209) target = $region16
        $region15: #{wl_forward.15} parent=11 // pred_region
          %p212 = scmp.lt.s32.totalorder %s21, 0
          %s213 = scalar_select %p212, %s21, 0
          %p214 = scmp.lt.s32.totalorder %s23, 0
          %s215 = scalar_select %p214, %s23, 0
          %s216 = sadd.s32 %s215, %s213
          %s217 = smul.addr %s216, 4
          %s218 = scalar_lea.vmem %s0, %s217
        $region16: #{wl_forward.15} parent=11 // pred_fallthru
          _
        // Predicated region
        $region17: #{wl_forward.15} parent=11 // pred_check
          %p219 = pneg %p112
        $region18: #{wl_forward.15} parent=11 // pred_check_branch
          %221 = sbr.rel (%p219) target = $region20
        $region19: #{wl_forward.15} parent=11 // pred_region
          %p222 = scmp.lt.s32.totalorder %s21, 0
          %s223 = scalar_select %p222, %s21, 0
          %s224 = smul.addr %s223, 8
          %s225 = scalar_lea.vmem %s2, %s224
        $region20: #{wl_forward.15} parent=11 // pred_fallthru
          _
        // Predicated region
        $region21: #{wl_forward.15} parent=11 // pred_check
          %p226 = pneg %p138
        $region22: #{wl_forward.15} parent=11 // pred_check_branch
          %228 = sbr.rel (%p226) target = $region24
        $region23: #{wl_forward.15} parent=11 // pred_region
          %p229 = scmp.lt.s32.totalorder %s21, 0
          %s230 = scalar_select %p229, %s21, 0
          %s231 = smul.addr %s230, 8
          %s232 = scalar_lea.vmem %s3, %s231
        $region24: #{wl_forward.15} parent=11 // pred_fallthru
          _
      $region12: #{wl_forward.15} parent=5 // pred_fallthru
        _
      %p233 = scmp.lt.s32.totalorder %s11, 2
      // Predicated region
      $region25: #{wl_forward.15} parent=5 // pred_check
        %p234 = pneg %p233
      $region26: #{wl_forward.15} parent=5 // pred_check_branch
        %236 = sbr.rel (%p234) target = $region28
      $region27: #{wl_forward.15} parent=5 // pred_region
        // Predicated region
        $region29: #{wl_forward.15} parent=27 // pred_check
          %p237 = pneg %p80
        $region30: #{wl_forward.15} parent=27 // pred_check_branch
          %239 = sbr.rel (%p237) target = $region32
        $region31: #{wl_forward.15} parent=27 // pred_region
          %s240 = sand.u32 %s70, 1
          %s241 = sand.u32 %s70, 1
          %s242 = smul.addr %s241, 128
          %s243 = scalar_lea.vmem [#allocation3], %s242
          %s244 = smul.u32 16, %s20
          %s245 = smul.u32 2, %s19
          %s246 = smul.addr %s244, 4
          %s247 = sadd.s32 %s245, %s246
          %s248 = smul.addr %s247, 4
          %s249 = scalar_lea.vmem %s1, %s248
          // Predicated region
          $region33: #{wl_forward.15} parent=31 // pred_check
            _
          $region34: #{wl_forward.15} parent=31 // pred_check_branch
            %251 = sbr.rel (0) target = $region36
          $region35: #{wl_forward.15} parent=31 // pred_region
            // Predicated region
            $region37: #{wl_forward.15} parent=35 // pred_check
              _
            $region38: #{wl_forward.15} parent=35 // pred_check_branch
              %253 = sbr.rel (0) target = $region40
            $region39: #{wl_forward.15} parent=35 // pred_region
              // Predicated region
              $region52: #{wl_forward.15} parent=39 // pred_check
                _
              $region53: #{wl_forward.15} parent=39 // pred_check_branch
                %298 = sbr.rel (0) target = $region55
              $region54: #{wl_forward.15} parent=39 // pred_region
                loop: start=0, step=1, limit=1
                $region56: #{wl_forward.15} parent=54 // loop_pre_header
                  _
                $region57: #{wl_forward.15} parent=54 // loop_header
                  %s300 = sphi 0, %s304
                  %p301 = scmp.ge.s32.totalorder %s300, 1
                  %s305 = sphi %s249, %s249
                  %s306 = sphi %s243, %s243
                $region58: #{wl_forward.15} parent=54 // loop_header_branch
                  %303 = sbr.rel (%p301) target = $region62
                $region59: #{wl_forward.15} parent=54 // loop_body
                  %v307 = vld [vmem:[%s305] sm:$0xff]
                  %308 = vst [vmem:[%s306] sm:$0xff] %v307
                  %v309 = vld [vmem:[%s305 + $0x10] sm:$0xff]
                  %310 = vst [vmem:[%s306 + $0x8] sm:$0xff] %v309
                  %v311 = vld [vmem:[%s305 + $0x20] sm:$0xff]
                  %312 = vst [vmem:[%s306 + $0x10] sm:$0xff] %v311
                  %v313 = vld [vmem:[%s305 + $0x30] sm:$0xff]
                  %314 = vst [vmem:[%s306 + $0x18] sm:$0xff] %v313
                  %v315 = vld [vmem:[%s305 + $0x40] sm:$0xff]
                  %316 = vst [vmem:[%s306 + $0x20] sm:$0xff] %v315
                  %v317 = vld [vmem:[%s305 + $0x50] sm:$0xff]
                  %318 = vst [vmem:[%s306 + $0x28] sm:$0xff] %v317
                  %v319 = vld [vmem:[%s305 + $0x60] sm:$0xff]
                  %320 = vst [vmem:[%s306 + $0x30] sm:$0xff] %v319
                  %v321 = vld [vmem:[%s305 + $0x70] sm:$0xff]
                  %322 = vst [vmem:[%s306 + $0x38] sm:$0xff] %v321
                  %v323 = vld [vmem:[%s305 + $0x80] sm:$0xff]
                  %324 = vst [vmem:[%s306 + $0x40] sm:$0xff] %v323
                  %v325 = vld [vmem:[%s305 + $0x90] sm:$0xff]
                  %326 = vst [vmem:[%s306 + $0x48] sm:$0xff] %v325
                  %v327 = vld [vmem:[%s305 + $0xa0] sm:$0xff]
                  %328 = vst [vmem:[%s306 + $0x50] sm:$0xff] %v327
                  %v329 = vld [vmem:[%s305 + $0xb0] sm:$0xff]
                  %330 = vst [vmem:[%s306 + $0x58] sm:$0xff] %v329
                  %v331 = vld [vmem:[%s305 + $0xc0] sm:$0xff]
                  %332 = vst [vmem:[%s306 + $0x60] sm:$0xff] %v331
                  %v333 = vld [vmem:[%s305 + $0xd0] sm:$0xff]
                  %334 = vst [vmem:[%s306 + $0x68] sm:$0xff] %v333
                  %v335 = vld [vmem:[%s305 + $0xe0] sm:$0xff]
                  %336 = vst [vmem:[%s306 + $0x70] sm:$0xff] %v335
                  %v337 = vld [vmem:[%s305 + $0xf0] sm:$0xff]
                  %338 = vst [vmem:[%s306 + $0x78] sm:$0xff] %v337
                $region60: #{wl_forward.15} parent=54 // loop_footer
                  %s304 = sadd.s32 1, %s300
                $region61: #{wl_forward.15} parent=54 // loop_footer_branch
                  %299 = sbr.rel target = $region57
                $region62: #{wl_forward.15} parent=54 // loop_exit
                  _
              $region55: #{wl_forward.15} parent=39 // pred_fallthru
                _
              // Predicated region
              $region63: #{wl_forward.15} parent=39 // pred_check
                _
              $region64: #{wl_forward.15} parent=39 // pred_check_branch
                %340 = sbr.rel target = $region66
              $region65: #{wl_forward.15} parent=39 // pred_region
                _
              $region66: #{wl_forward.15} parent=39 // pred_fallthru
                _
            $region40: #{wl_forward.15} parent=35 // pred_fallthru
              _
            // Predicated region
            $region41: #{wl_forward.15} parent=35 // pred_check
              _
            $region42: #{wl_forward.15} parent=35 // pred_check_branch
              %255 = sbr.rel target = $region44
            $region43: #{wl_forward.15} parent=35 // pred_region
              loop: start=0, step=1, limit=1
              $region45: #{wl_forward.15} parent=43 // loop_pre_header
                _
              $region46: #{wl_forward.15} parent=43 // loop_header
                %s258 = sphi 0, %s262
                %p259 = scmp.ge.s32.totalorder %s258, 1
                %s263 = sphi %s249, %s249
                %s264 = sphi %s243, %s243
              $region47: #{wl_forward.15} parent=43 // loop_header_branch
                %261 = sbr.rel (%p259) target = $region51
              $region48: #{wl_forward.15} parent=43 // loop_body
                %v265 = vld [vmem:[%s263] sm:$0xff]
                %266 = vst [vmem:[%s264] sm:$0xff] %v265
                %v267 = vld [vmem:[%s263 + $0x10] sm:$0xff]
                %268 = vst [vmem:[%s264 + $0x8] sm:$0xff] %v267
                %v269 = vld [vmem:[%s263 + $0x20] sm:$0xff]
                %270 = vst [vmem:[%s264 + $0x10] sm:$0xff] %v269
                %v271 = vld [vmem:[%s263 + $0x30] sm:$0xff]
                %272 = vst [vmem:[%s264 + $0x18] sm:$0xff] %v271
                %v273 = vld [vmem:[%s263 + $0x40] sm:$0xff]
                %274 = vst [vmem:[%s264 + $0x20] sm:$0xff] %v273
                %v275 = vld [vmem:[%s263 + $0x50] sm:$0xff]
                %276 = vst [vmem:[%s264 + $0x28] sm:$0xff] %v275
                %v277 = vld [vmem:[%s263 + $0x60] sm:$0xff]
                %278 = vst [vmem:[%s264 + $0x30] sm:$0xff] %v277
                %v279 = vld [vmem:[%s263 + $0x70] sm:$0xff]
                %280 = vst [vmem:[%s264 + $0x38] sm:$0xff] %v279
                %v281 = vld [vmem:[%s263 + $0x80] sm:$0xff]
                %282 = vst [vmem:[%s264 + $0x40] sm:$0xff] %v281
                %v283 = vld [vmem:[%s263 + $0x90] sm:$0xff]
                %284 = vst [vmem:[%s264 + $0x48] sm:$0xff] %v283
                %v285 = vld [vmem:[%s263 + $0xa0] sm:$0xff]
                %286 = vst [vmem:[%s264 + $0x50] sm:$0xff] %v285
                %v287 = vld [vmem:[%s263 + $0xb0] sm:$0xff]
                %288 = vst [vmem:[%s264 + $0x58] sm:$0xff] %v287
                %v289 = vld [vmem:[%s263 + $0xc0] sm:$0xff]
                %290 = vst [vmem:[%s264 + $0x60] sm:$0xff] %v289
                %v291 = vld [vmem:[%s263 + $0xd0] sm:$0xff]
                %292 = vst [vmem:[%s264 + $0x68] sm:$0xff] %v291
                %v293 = vld [vmem:[%s263 + $0xe0] sm:$0xff]
                %294 = vst [vmem:[%s264 + $0x70] sm:$0xff] %v293
                %v295 = vld [vmem:[%s263 + $0xf0] sm:$0xff]
                %296 = vst [vmem:[%s264 + $0x78] sm:$0xff] %v295
              $region49: #{wl_forward.15} parent=43 // loop_footer
                %s262 = sadd.s32 1, %s258
              $region50: #{wl_forward.15} parent=43 // loop_footer_branch
                %257 = sbr.rel target = $region46
              $region51: #{wl_forward.15} parent=43 // loop_exit
                _
            $region44: #{wl_forward.15} parent=35 // pred_fallthru
              _
          $region36: #{wl_forward.15} parent=31 // pred_fallthru
            _
          %341 = vnop
        $region32: #{wl_forward.15} parent=27 // pred_fallthru
          _
        // Predicated region
        $region67: #{wl_forward.15} parent=27 // pred_check
          %p342 = pneg %p160
        $region68: #{wl_forward.15} parent=27 // pred_check_branch
          %344 = sbr.rel (%p342) target = $region70
        $region69: #{wl_forward.15} parent=27 // pred_region
          %s345 = smul.u32 2, %s19
          %p346 = scmp.lt.s32.totalorder %s18, 0
          %s347 = scalar_select %p346, %s18, 0
          %p348 = scmp.lt.s32.totalorder %s345, 3
          %s349 = scalar_select %p348, %s345, 3
          %s350 = smul.addr %s347, 4
          %s351 = sadd.s32 %s349, %s350
          %s352 = smul.addr %s351, 8
          %s353 = scalar_lea.vmem %s4, %s352
          %s354 = smul.u32 2, %s19
        $region70: #{wl_forward.15} parent=27 // pred_fallthru
          _
      $region28: #{wl_forward.15} parent=5 // pred_fallthru
        _
      %p355 = scmp.le.s32.totalorder 1, %s11
      %p356 = scmp.lt.s32.totalorder %s11, 3
      %p357 = pnand %p355, %p356
      %p358 = pneg %p357
      // Predicated region
      $region71: #{wl_forward.15} parent=5 // pred_check
        _
      $region72: #{wl_forward.15} parent=5 // pred_check_branch
        %360 = sbr.rel (%p357) target = $region74
      $region73: #{wl_forward.15} parent=5 // pred_region
        %s361 = ssub.s32 %s11, 1
        %s362 = sand.u32 %s73, 1
        %s363 = sand.u32 %s73, 1
        %s364 = smul.addr %s363, 128
        %s365 = scalar_lea.vmem [#allocation3], %s364
        // Predicated region
        $region75: #{wl_forward.15} parent=73 // pred_check
          %p366 = pneg %p86
        $region76: #{wl_forward.15} parent=73 // pred_check_branch
          %368 = sbr.rel (%p366) target = $region78
        $region77: #{wl_forward.15} parent=73 // pred_region
          _
        $region78: #{wl_forward.15} parent=73 // pred_fallthru
          _
        %p369 = scmp.lt.s32.totalorder %s21, 0
        %s370 = scalar_select %p369, %s21, 0
        %p371 = scmp.lt.s32.totalorder %s23, 0
        %s372 = scalar_select %p371, %s23, 0
        %s373 = sadd.s32 %s372, %s370
        %s374 = smul.addr %s373, 4
        %s375 = scalar_lea.vmem %s0, %s374
        %p376 = pneg %p58
        %p377 = pneg %p55
        %s378 = sand.u32 %s73, 1
        %s379 = sand.u32 %s73, 1
        %s380 = smul.addr %s379, 128
        %s381 = scalar_lea.vmem [#allocation3], %s380
        %p382 = pneg %p86
        %p383 = pneg %p83
        %p384 = scmp.lt.s32.totalorder %s21, 0
        %s385 = scalar_select %p384, %s21, 0
        %s386 = smul.addr %s385, 8
        %s387 = scalar_lea.vmem %s2, %s386
        %p388 = pneg %p112
        %p389 = pneg %p109
        %p390 = scmp.lt.s32.totalorder %s21, 0
        %s391 = scalar_select %p390, %s21, 0
        %s392 = smul.addr %s391, 8
        %s393 = scalar_lea.vmem %s3, %s392
        %p394 = pneg %p138
        %p395 = pneg %p135
        %s396 = smul.u32 2, %s22
        %p397 = scmp.lt.s32.totalorder %s21, 0
        %s398 = scalar_select %p397, %s21, 0
        %p399 = scmp.lt.s32.totalorder %s396, 3
        %s400 = scalar_select %p399, %s396, 3
        %s401 = smul.addr %s398, 4
        %s402 = sadd.s32 %s400, %s401
        %s403 = smul.addr %s402, 8
        %s404 = scalar_lea.vmem %s4, %s403
        %p405 = pneg %p166
        %p406 = pneg %p163
        %p407 = pneg %p194
        %p408 = pneg %p191
        %s409 = smul.u32 2, %s22
        %p410 = scmp.lt.s32.totalorder %s21, 0
        %s411 = scalar_select %p410, %s21, 0
        %p412 = scmp.lt.s32.totalorder %s409, 3
        %s413 = scalar_select %p412, %s409, 3
        %s414 = smul.addr %s411, 4
        %s415 = sadd.s32 %s413, %s414
        %s416 = smul.addr %s415, 8
        %s417 = scalar_lea.vmem %s5, %s416
        %p418 = scmp.lt.s32.totalorder %s21, 0
        %s419 = scalar_select %p418, %s21, 0
        %p420 = scmp.lt.s32.totalorder %s23, 0
        %s421 = scalar_select %p420, %s23, 0
        %s422 = sadd.s32 %s421, %s419
        %s423 = smul.addr %s422, 4
        %s424 = scalar_lea.vmem %s0, %s423
        %s425 = smul.u32 16, %s23
        %s426 = smul.u32 2, %s22
        %p427 = scmp.lt.s32.totalorder %s21, 0
        %s428 = scalar_select %p427, %s21, 0
        %s429 = smul.addr %s428, 8
        %s430 = scalar_lea.vmem %s2, %s429
        %p431 = scmp.lt.s32.totalorder %s21, 0
        %s432 = scalar_select %p431, %s21, 0
        %s433 = smul.addr %s432, 8
        %s434 = scalar_lea.vmem %s3, %s433
        %s435 = smul.u32 2, %s22
        %p436 = scmp.lt.s32.totalorder %s21, 0
        %s437 = scalar_select %p436, %s21, 0
        %p438 = scmp.lt.s32.totalorder %s435, 3
        %s439 = scalar_select %p438, %s435, 3
        %s440 = smul.addr %s437, 4
        %s441 = sadd.s32 %s439, %s440
        %s442 = smul.addr %s441, 8
        %s443 = scalar_lea.vmem %s4, %s442
        %s444 = smul.u32 2, %s22
        %s445 = smul.u32 2, %s22
        %p446 = scmp.lt.s32.totalorder %s21, 0
        %s447 = scalar_select %p446, %s21, 0
        %p448 = scmp.lt.s32.totalorder %s445, 3
        %s449 = scalar_select %p448, %s445, 3
        %s450 = smul.addr %s447, 4
        %s451 = sadd.s32 %s449, %s450
        %s452 = smul.addr %s451, 8
        %s453 = scalar_lea.vmem %s5, %s452
        %s454 = smul.u32 2, %s22
        %p456 = scmp.eq.s32.totalorder %s23, 0
        // Predicated region
        $region79: #{wl_forward.15} parent=73 // pred_check
          %p457 = pneg %p456
        $region80: #{wl_forward.15} parent=73 // pred_check_branch
          %459 = sbr.rel (%p457) target = $region82
        $region81: #{wl_forward.15} parent=73 // pred_region
          %460 = vst [vmem:[#allocation2] sm:$0xff] 0.0
          %461 = vst [vmem:[#allocation2 + $0x8] sm:$0xff] 0.0
        $region82: #{wl_forward.15} parent=73 // pred_fallthru
          _
        %v462 = vld [vmem:[#allocation2] sm:$0xff]
        %v463 = vld [vmem:[#allocation2 + $0x8] sm:$0xff]
        %v464 = vld [vmem:[%s424] sm:$0xf]
        %v465 = vld [vmem:[%s365] sm:$0xff]
        %v466 = vld [vmem:[%s365 + $0x8] sm:$0xff]
        %v467 = vld [vmem:[%s365 + $0x10] sm:$0xff]
        %v468 = vld [vmem:[%s365 + $0x18] sm:$0xff]
        %v469 = vld [vmem:[%s365 + $0x20] sm:$0xff]
        %v470 = vld [vmem:[%s365 + $0x28] sm:$0xff]
        %v471 = vld [vmem:[%s365 + $0x30] sm:$0xff]
        %v472 = vld [vmem:[%s365 + $0x38] sm:$0xff]
        %v473 = vld [vmem:[%s365 + $0x40] sm:$0xff]
        %v474 = vld [vmem:[%s365 + $0x48] sm:$0xff]
        %v475 = vld [vmem:[%s365 + $0x50] sm:$0xff]
        %v476 = vld [vmem:[%s365 + $0x58] sm:$0xff]
        %v477 = vld [vmem:[%s365 + $0x60] sm:$0xff]
        %v478 = vld [vmem:[%s365 + $0x68] sm:$0xff]
        %v479 = vld [vmem:[%s365 + $0x70] sm:$0xff]
        %v480 = vld [vmem:[%s365 + $0x78] sm:$0xff]
        %v497 = vunpack.c.l.b16 %v465
        %v498 = vunpack.c.h.b16 %v465
        %v499 = vunpack.c.l.b16 %v466
        %v500 = vunpack.c.h.b16 %v466
        %v501 = vunpack.c.l.b16 %v467
        %v502 = vunpack.c.h.b16 %v467
        %v503 = vunpack.c.l.b16 %v468
        %v504 = vunpack.c.h.b16 %v468
        %v505 = vunpack.c.l.b16 %v469
        %v506 = vunpack.c.h.b16 %v469
        %v507 = vunpack.c.l.b16 %v470
        %v508 = vunpack.c.h.b16 %v470
        %v509 = vunpack.c.l.b16 %v471
        %v510 = vunpack.c.h.b16 %v471
        %v511 = vunpack.c.l.b16 %v472
        %v512 = vunpack.c.h.b16 %v472
        %v513 = vunpack.c.l.b16 %v473
        %v514 = vunpack.c.h.b16 %v473
        %v515 = vunpack.c.l.b16 %v474
        %v516 = vunpack.c.h.b16 %v474
        %v517 = vunpack.c.l.b16 %v475
        %v518 = vunpack.c.h.b16 %v475
        %v519 = vunpack.c.l.b16 %v476
        %v520 = vunpack.c.h.b16 %v476
        %v521 = vunpack.c.l.b16 %v477
        %v522 = vunpack.c.h.b16 %v477
        %v523 = vunpack.c.l.b16 %v478
        %v524 = vunpack.c.h.b16 %v478
        %v525 = vunpack.c.l.b16 %v479
        %v526 = vunpack.c.h.b16 %v479
        %v527 = vunpack.c.l.b16 %v480
        %v528 = vunpack.c.h.b16 %v480
        %v529 = vpack.c.b16 %v499, %v497
        %v530 = vpack.c.b16 %v500, %v498
        %v531 = vpack.c.b16 %v503, %v501
        %v532 = vpack.c.b16 %v504, %v502
        %v533 = vpack.c.b16 %v507, %v505
        %v534 = vpack.c.b16 %v508, %v506
        %v535 = vpack.c.b16 %v511, %v509
        %v536 = vpack.c.b16 %v512, %v510
        %v537 = vpack.c.b16 %v515, %v513
        %v538 = vpack.c.b16 %v516, %v514
        %v539 = vpack.c.b16 %v519, %v517
        %v540 = vpack.c.b16 %v520, %v518
        %v541 = vpack.c.b16 %v523, %v521
        %v542 = vpack.c.b16 %v524, %v522
        %v543 = vpack.c.b16 %v527, %v525
        %v544 = vpack.c.b16 %v528, %v526
        %561 = vmatprep.subr.bf16.mxu0 %v530
        %562 = vmatpush1.bf16.msra.mxu0 %v529
        %563 = vmatprep.subr.bf16.mxu0 %v532
        %564 = vmatpush1.bf16.msra.mxu0 %v531
        %565 = vmatprep.subr.bf16.mxu0 %v534
        %566 = vmatpush1.bf16.msra.mxu0 %v533
        %567 = vmatprep.subr.bf16.mxu0 %v536
        %568 = vmatpush1.bf16.msra.mxu0 %v535
        %569 = vmatprep.subr.bf16.mxu0 %v538
        %570 = vmatpush1.bf16.msra.mxu0 %v537
        %571 = vmatprep.subr.bf16.mxu0 %v540
        %572 = vmatpush1.bf16.msra.mxu0 %v539
        %573 = vmatprep.subr.bf16.mxu0 %v542
        %574 = vmatpush1.bf16.msra.mxu0 %v541
        %575 = vmatprep.subr.bf16.mxu0 %v544
        %576 = vmatpush1.bf16.msra.mxu0 %v543
        %577 = vmatprep.subr.bf16.mxu0 0
        %578 = vmatpush1.bf16.msra.mxu0 0
        %579 = vmatprep.subr.bf16.mxu0 0
        %580 = vmatpush1.bf16.msra.mxu0 0
        %581 = vmatprep.subr.bf16.mxu0 0
        %582 = vmatpush1.bf16.msra.mxu0 0
        %583 = vmatprep.subr.bf16.mxu0 0
        %584 = vmatpush1.bf16.msra.mxu0 0
        %585 = vmatprep.subr.bf16.mxu0 0
        %586 = vmatpush1.bf16.msra.mxu0 0
        %587 = vmatprep.subr.bf16.mxu0 0
        %588 = vmatpush1.bf16.msra.mxu0 0
        %589 = vmatprep.subr.bf16.mxu0 0
        %590 = vmatpush1.bf16.msra.mxu0 0
        %591 = vmatprep.subr.bf16.mxu0 0
        %592 = vmatpush1.bf16.msra.mxu0 0
        %593 = vmatprep.mubr.bf16.mxu0 0
        %594 = vmatmul.mubr.bf16.gmra.mrb[0].mxu0 %v464
        %v595 = vpop.f32.mrb[0].mxu0
        %v596 = vadd.f32 0.0, %v595
        %v597 = vpop.f32.mrb[0].mxu0
        %v598 = vadd.f32 0.0, %v597
        %v599 = vpop.f32.mrb[0].mxu0
        %v600 = vpop.f32.mrb[0].mxu0
        %601 = vdwg.mxu0
        %v602 = vadd.f32 %v462, %v596
        %v603 = vadd.f32 %v463, %v598
        %604 = vst [vmem:[#allocation2] sm:$0xff] %v602
        %605 = vst [vmem:[#allocation2 + $0x8] sm:$0xff] %v603
        // Predicated region
        $region83: #{wl_forward.15} parent=73 // pred_check
          %p606 = pneg %p456
        $region84: #{wl_forward.15} parent=73 // pred_check_branch
          %608 = sbr.rel (%p606) target = $region86
        $region85: #{wl_forward.15} parent=73 // pred_region
          %v609 = vld [vmem:[#allocation2] sm:$0xff]
          %v610 = vld [vmem:[#allocation2 + $0x8] sm:$0xff]
          %v611 = vld [vmem:[%s430] sm:$0xff]
          %613 = vset.pattern.permute.xlu0 0
          %614 = vperm.xlu0 %613, %v611
          %v615 = vpop.permute.xlu0 %614
          %v617 = vmul.f32 %v609, %v615
          %v618 = vmul.f32 %v610, %v615
          %v619 = vld [vmem:[%s434] sm:$0xff]
          %621 = vset.pattern.permute.xlu0 0
          %622 = vperm.xlu0 %621, %v619
          %v623 = vpop.permute.xlu0 %622
          %v625 = vadd.f32 %v617, %v623
          %v626 = vadd.f32 %v618, %v623
          %v627 = vld [vmem:[%s443] sm:$0xff]
          %v628 = vld [vmem:[%s443 + $0x8] sm:$0xff]
          %v629 = vadd.f32 %v625, %v627
          %v630 = vadd.f32 %v626, %v628
          %v631 = vmax.f32 %v629, 0.0
          %v632 = vmax.f32 %v630, 0.0
          %633 = vst [vmem:[%s453] sm:$0xff] %v631
          %634 = vst [vmem:[%s453 + $0x8] sm:$0xff] %v632
        $region86: #{wl_forward.15} parent=73 // pred_fallthru
          _
        %s635 = smul.u32 2, %s22
        %p636 = scmp.lt.s32.totalorder %s21, 0
        %s637 = scalar_select %p636, %s21, 0
        %p638 = scmp.lt.s32.totalorder %s635, 3
        %s639 = scalar_select %p638, %s635, 3
        %s640 = smul.addr %s637, 4
        %s641 = sadd.s32 %s639, %s640
        %s642 = smul.addr %s641, 8
        %s643 = scalar_lea.vmem %s5, %s642
        // Predicated region
        $region87: #{wl_forward.15} parent=73 // pred_check
          %p644 = pneg %p191
        $region88: #{wl_forward.15} parent=73 // pred_check_branch
          %646 = sbr.rel (%p644) target = $region90
        $region89: #{wl_forward.15} parent=73 // pred_region
          %s647 = smul.u32 2, %s22
        $region90: #{wl_forward.15} parent=73 // pred_fallthru
          _
      $region74: #{wl_forward.15} parent=5 // pred_fallthru
        _
      %p648 = scmp.le.s32.totalorder 2, %s11
      // Predicated region
      $region91: #{wl_forward.15} parent=5 // pred_check
        %p649 = pneg %p648
      $region92: #{wl_forward.15} parent=5 // pred_check_branch
        %651 = sbr.rel (%p649) target = $region94
      $region93: #{wl_forward.15} parent=5 // pred_region
        %s652 = ssub.s32 %s11, 2
        // Predicated region
        $region95: #{wl_forward.15} parent=93 // pred_check
          %p653 = pneg %p197
        $region96: #{wl_forward.15} parent=93 // pred_check_branch
          %655 = sbr.rel (%p653) target = $region98
        $region97: #{wl_forward.15} parent=93 // pred_region
          %s656 = smul.u32 2, %s25
          %p657 = scmp.lt.s32.totalorder %s24, 0
          %s658 = scalar_select %p657, %s24, 0
          %p659 = scmp.lt.s32.totalorder %s656, 3
          %s660 = scalar_select %p659, %s656, 3
          %s661 = smul.addr %s658, 4
          %s662 = sadd.s32 %s660, %s661
          %s663 = smul.addr %s662, 8
          %s664 = scalar_lea.vmem %s5, %s663
        $region98: #{wl_forward.15} parent=93 // pred_fallthru
          _
      $region94: #{wl_forward.15} parent=5 // pred_fallthru
        _
    $region6: #{wl_forward.15} parent=1 // loop_footer
      %s15 = sadd.s32 1, %s11
    $region7: #{wl_forward.15} parent=1 // loop_footer_branch
      %10 = sbr.rel target = $region3
    $region8: #{wl_forward.15} parent=1 // loop_exit
      _

// kernel: wl_forward.16
$region0: #{wl_forward.16}
  #allocation0 [shape = 'u32[]', space=smem, size = 0x4, offset = 0x4, fixed_abs, tag = 'smem constant byte address 0x4 - core index']
  #allocation1 [shape = 'u32[144,128]{1,0:T(1,128)}', space=vmem, size = 0x12000, scoped, tag = 'internal scratch']
  #allocation2 [shape = 'f32[32,128]{1,0:T(8,128)}', space=vmem, size = 0x4000, scoped, tag = 'scratch operand']
  %s0 = inlined_call_operand.vmem [shape: bf16[32,128], index: 0, kind: input, shape index: {}]
  %s1 = inlined_call_operand.vmem [shape: bf16[128,128], index: 1, kind: input, shape index: {}]
  %s2 = inlined_call_operand.vmem [shape: f32[32,128], index: 2, kind: output, shape index: {}]
  %s3 = sld [smem:[#allocation0]]
  $region26: #{wl_forward.16} parent=0
    _
  %s5 = ssub.s32 1, %s3
  %s6 = scalar_select 0, %s5, %s3
  // Predicated region
  $region2: #{wl_forward.16} parent=0 // pred_check
    _
  $region3: #{wl_forward.16} parent=0 // pred_check_branch
    %8 = sbr.rel (0) target = $region5
  $region4: #{wl_forward.16} parent=0 // pred_region
    _
  $region5: #{wl_forward.16} parent=0 // pred_fallthru
    _
  // Predicated region
  $region6: #{wl_forward.16} parent=0 // pred_check
    _
  $region7: #{wl_forward.16} parent=0 // pred_check_branch
    %10 = sbr.rel (0) target = $region9
  $region8: #{wl_forward.16} parent=0 // pred_region
    _
  $region9: #{wl_forward.16} parent=0 // pred_fallthru
    _
  %p12 = scmp.eq.s32.totalorder 0, 0
  // Predicated region
  $region10: #{wl_forward.16} parent=0 // pred_check
    %p13 = pneg %p12
  $region11: #{wl_forward.16} parent=0 // pred_check_branch
    %15 = sbr.rel (%p13) target = $region13
  $region12: #{wl_forward.16} parent=0 // pred_region
    %16 = vst [vmem:[#allocation2] sm:$0xff] 0.0
    %17 = vst [vmem:[#allocation2 + $0x8] sm:$0xff] 0.0
    %18 = vst [vmem:[#allocation2 + $0x10] sm:$0xff] 0.0
    %19 = vst [vmem:[#allocation2 + $0x18] sm:$0xff] 0.0
  $region13: #{wl_forward.16} parent=0 // pred_fallthru
    _
  %v20 = vld [vmem:[#allocation2] sm:$0xff]
  %v21 = vld [vmem:[#allocation2 + $0x8] sm:$0xff]
  %v22 = vld [vmem:[#allocation2 + $0x10] sm:$0xff]
  %v23 = vld [vmem:[#allocation2 + $0x18] sm:$0xff]
  %v24 = vld [vmem:[%s0] sm:$0xf]
  %v25 = vld [vmem:[%s0 + $0x4] sm:$0xf]
  %v26 = vld [vmem:[%s0 + $0x8] sm:$0xf]
  %v27 = vld [vmem:[%s0 + $0xc] sm:$0xf]
  %v28 = vld [vmem:[%s1] sm:$0xf]
  %v29 = vld [vmem:[%s1 + $0x4] sm:$0xf]
  %v30 = vld [vmem:[%s1 + $0x8] sm:$0xf]
  %v31 = vld [vmem:[%s1 + $0xc] sm:$0xf]
  %v32 = vld [vmem:[%s1 + $0x10] sm:$0xf]
  %v33 = vld [vmem:[%s1 + $0x14] sm:$0xf]
  %v34 = vld [vmem:[%s1 + $0x18] sm:$0xf]
  %v35 = vld [vmem:[%s1 + $0x1c] sm:$0xf]
  %v36 = vld [vmem:[%s1 + $0x20] sm:$0xf]
  %v37 = vld [vmem:[%s1 + $0x24] sm:$0xf]
  %v38 = vld [vmem:[%s1 + $0x28] sm:$0xf]
  %v39 = vld [vmem:[%s1 + $0x2c] sm:$0xf]
  %v40 = vld [vmem:[%s1 + $0x30] sm:$0xf]
  %v41 = vld [vmem:[%s1 + $0x34] sm:$0xf]
  %v42 = vld [vmem:[%s1 + $0x38] sm:$0xf]
  %v43 = vld [vmem:[%s1 + $0x3c] sm:$0xf]
  %v48 = vunpack.c.l.b16 %v24
  %v49 = vunpack.c.l.b16 %v25
  %v50 = vunpack.c.l.b16 %v26
  %v51 = vunpack.c.l.b16 %v27
  %v52 = vpack.c.b16 %v49, %v48
  %v53 = vpack.c.b16 %v51, %v50
  %v72 = vunpack.c.l.b16 %v28
  %v73 = vunpack.c.l.b16 %v29
  %v74 = vunpack.c.l.b16 %v30
  %v75 = vunpack.c.l.b16 %v31
  %v76 = vunpack.c.l.b16 %v32
  %v77 = vunpack.c.l.b16 %v33
  %v78 = vunpack.c.l.b16 %v34
  %v79 = vunpack.c.l.b16 %v35
  %v80 = vunpack.c.l.b16 %v36
  %v81 = vunpack.c.l.b16 %v37
  %v82 = vunpack.c.l.b16 %v38
  %v83 = vunpack.c.l.b16 %v39
  %v84 = vunpack.c.l.b16 %v40
  %v85 = vunpack.c.l.b16 %v41
  %v86 = vunpack.c.l.b16 %v42
  %v87 = vunpack.c.l.b16 %v43
  %v88 = vpack.c.b16 %v73, %v72
  %v89 = vpack.c.b16 %v75, %v74
  %v90 = vpack.c.b16 %v77, %v76
  %v91 = vpack.c.b16 %v79, %v78
  %v92 = vpack.c.b16 %v81, %v80
  %v93 = vpack.c.b16 %v83, %v82
  %v94 = vpack.c.b16 %v85, %v84
  %v95 = vpack.c.b16 %v87, %v86
  %104 = vmatprep.subr.bf16.mxu0 0
  %105 = vmatpush1.bf16.msra.mxu0 %v88
  %106 = vmatprep.subr.bf16.mxu0 0
  %107 = vmatpush1.bf16.msra.mxu0 %v89
  %108 = vmatprep.subr.bf16.mxu0 0
  %109 = vmatpush1.bf16.msra.mxu0 %v90
  %110 = vmatprep.subr.bf16.mxu0 0
  %111 = vmatpush1.bf16.msra.mxu0 %v91
  %112 = vmatprep.subr.bf16.mxu0 0
  %113 = vmatpush1.bf16.msra.mxu0 %v92
  %114 = vmatprep.subr.bf16.mxu0 0
  %115 = vmatpush1.bf16.msra.mxu0 %v93
  %116 = vmatprep.subr.bf16.mxu0 0
  %117 = vmatpush1.bf16.msra.mxu0 %v94
  %118 = vmatprep.subr.bf16.mxu0 0
  %119 = vmatpush1.bf16.msra.mxu0 %v95
  %120 = vmatprep.subr.bf16.mxu0 0
  %121 = vmatpush1.bf16.msra.mxu0 0
  %122 = vmatprep.subr.bf16.mxu0 0
  %123 = vmatpush1.bf16.msra.mxu0 0
  %124 = vmatprep.subr.bf16.mxu0 0
  %125 = vmatpush1.bf16.msra.mxu0 0
  %126 = vmatprep.subr.bf16.mxu0 0
  %127 = vmatpush1.bf16.msra.mxu0 0
  %128 = vmatprep.subr.bf16.mxu0 0
  %129 = vmatpush1.bf16.msra.mxu0 0
  %130 = vmatprep.subr.bf16.mxu0 0
  %131 = vmatpush1.bf16.msra.mxu0 0
  %132 = vmatprep.subr.bf16.mxu0 0
  %133 = vmatpush1.bf16.msra.mxu0 0
  %134 = vmatprep.subr.bf16.mxu0 0
  %135 = vmatpush1.bf16.msra.mxu0 0
  %136 = vmatprep.mubr.bf16.mxu0 0
  %137 = vmatmul.mubr.bf16.gmra.mrb[0].mxu0 %v52
  %v138 = vpop.f32.mrb[0].mxu0
  %v139 = vadd.f32 0.0, %v138
  %v140 = vpop.f32.mrb[0].mxu0
  %v141 = vpop.f32.mrb[0].mxu0
  %v142 = vadd.f32 0.0, %v141
  %v143 = vpop.f32.mrb[0].mxu0
  %144 = vmatprep.mubr.bf16.mxu0 0
  %145 = vmatmul.mubr.bf16.gmra.mrb[0].mxu0 %v53
  %v146 = vpop.f32.mrb[0].mxu0
  %v147 = vadd.f32 0.0, %v146
  %v148 = vpop.f32.mrb[0].mxu0
  %v149 = vpop.f32.mrb[0].mxu0
  %v150 = vadd.f32 0.0, %v149
  %v151 = vpop.f32.mrb[0].mxu0
  %152 = vdwg.mxu0
  %v153 = vadd.f32 %v20, %v139
  %v154 = vadd.f32 %v21, %v142
  %v155 = vadd.f32 %v22, %v147
  %v156 = vadd.f32 %v23, %v150
  %157 = vst [vmem:[#allocation2] sm:$0xff] %v153
  %158 = vst [vmem:[#allocation2 + $0x8] sm:$0xff] %v154
  %159 = vst [vmem:[#allocation2 + $0x10] sm:$0xff] %v155
  %160 = vst [vmem:[#allocation2 + $0x18] sm:$0xff] %v156
  // Predicated region
  $region14: #{wl_forward.16} parent=0 // pred_check
    %p161 = pneg %p12
  $region15: #{wl_forward.16} parent=0 // pred_check_branch
    %163 = sbr.rel (%p161) target = $region17
  $region16: #{wl_forward.16} parent=0 // pred_region
    %v164 = vld [vmem:[#allocation2] sm:$0xff]
    %v165 = vld [vmem:[#allocation2 + $0x8] sm:$0xff]
    %v166 = vld [vmem:[#allocation2 + $0x10] sm:$0xff]
    %v167 = vld [vmem:[#allocation2 + $0x18] sm:$0xff]
    %168 = vst [vmem:[%s2] sm:$0xff] %v164
    %169 = vst [vmem:[%s2 + $0x8] sm:$0xff] %v165
    %170 = vst [vmem:[%s2 + $0x10] sm:$0xff] %v166
    %171 = vst [vmem:[%s2 + $0x18] sm:$0xff] %v167
  $region17: #{wl_forward.16} parent=0 // pred_fallthru
    _
  // Predicated region
  $region18: #{wl_forward.16} parent=0 // pred_check
    _
  $region19: #{wl_forward.16} parent=0 // pred_check_branch
    %173 = sbr.rel (0) target = $region21
  $region20: #{wl_forward.16} parent=0 // pred_region
    _
  $region21: #{wl_forward.16} parent=0 // pred_fallthru
    _
  // Predicated region
  $region22: #{wl_forward.16} parent=0 // pred_check
    _
  $region23: #{wl_forward.16} parent=0 // pred_check_branch
    %175 = sbr.rel (0) target = $region25
  $region24: #{wl_forward.16} parent=0 // pred_region
    _
  $region25: #{wl_forward.16} parent=0 // pred_fallthru
    _

// kernel: wl_forward.17
$region0: #{wl_forward.17}
  #allocation0 [shape = 'u32[]', space=smem, size = 0x4, offset = 0x4, fixed_abs, tag = 'smem constant byte address 0x4 - core index']
  #allocation1 [shape = 'u32[144,128]{1,0:T(1,128)}', space=vmem, size = 0x12000, scoped, tag = 'internal scratch']
  #allocation2 [shape = 'f32[2,32]{1,0:T(2,128)}', space=vmem, size = 0x400, scoped, tag = 'scratch operand']
  #allocation3 [shape = 'f32[2,32]{1,0:T(2,128)}', space=vmem, size = 0x400, scoped, tag = 'scratch operand']
  %s0 = inlined_call_operand.vmem [shape: f32[16,2,128], index: 0, kind: input, shape index: {}]
  %s1 = inlined_call_operand.vmem [shape: f32[32,128], index: 1, kind: input, shape index: {}]
  %s2 = inlined_call_operand.vmem [shape: f32[16,2,32], index: 2, kind: output, shape index: {0}]
  %s3 = inlined_call_operand.vmem [shape: f32[2,32], index: 3, kind: output, shape index: {1}]
  %s4 = inlined_call_operand.vmem [shape: f32[2,32], index: 4, kind: output, shape index: {2}]
  %5 = xla_tuple %s2, %s3, %s4
  %s6 = sld [smem:[#allocation0]]
  $region61: #{wl_forward.17} parent=0
    _
  %s8 = ssub.s32 1, %s6
  %s9 = scalar_select 0, %s8, %s6
  loop: start=0, step=1, limit=4
  $region2: #{wl_forward.17} parent=0 // loop_pre_header
    _
  $region3: #{wl_forward.17} parent=0 // loop_header
    %s11 = sphi 0, %s15
    %p12 = scmp.ge.s32.totalorder %s11, 4
    %s21 = sphi 0, %s23
    %s24 = sphi 0, %s21
    %s25 = sphi 0, %s24
    %s41 = sphi 0, %s25
    %s45 = sphi 0, %s45
    %s47 = sphi 0, %s45
    %s48 = sphi 0, %s47
    %s62 = sphi 0, %s48
    %s68 = sphi 0, %s70
    %s71 = sphi 0, %s68
    %s72 = sphi 0, %s71
    %s88 = sphi 0, %s72
    %s92 = sphi 0, %s92
    %s94 = sphi 0, %s92
    %s95 = sphi 0, %s94
    %s109 = sphi 0, %s95
    %s113 = sphi 0, %s113
    %s115 = sphi 0, %s113
    %s116 = sphi 0, %s115
    %s130 = sphi 0, %s116
  $region4: #{wl_forward.17} parent=0 // loop_header_branch
    %14 = sbr.rel (%p12) target = $region8
  $region5: #{wl_forward.17} parent=0 // loop_body
    %s16 = ssub.s32 %s11, 1
    %s17 = ssub.s32 %s11, 2
    %s18 = sadd.s32 %s11, 1
    %s19 = ssub.s32 %s11, %s18
    %p20 = scmp.eq.s32.totalorder %s19, 0
    %s22 = sadd.s32 %s21, 1
    %s23 = scalar_select %p20, %s21, %s22
    %p26 = pneg %p20
    %p27 = scmp.eq.s32.totalorder %s11, 1
    %p28 = por %p26, %p27
    %p29 = scmp.ne.s32.totalorder %s21, %s24
    %p30 = scmp.eq.s32.totalorder %s11, 0
    %p31 = por %p29, %p30
    %p32 = scmp.ne.s32.totalorder %s21, %s24
    %p33 = scmp.eq.s32.totalorder %s16, 1
    %p34 = por %p32, %p33
    %p35 = scmp.ne.s32.totalorder %s24, %s25
    %p36 = scmp.eq.s32.totalorder %s16, 0
    %p37 = por %p35, %p36
    %p38 = scmp.ne.s32.totalorder %s24, %s25
    %p39 = scmp.eq.s32.totalorder %s17, 1
    %p40 = por %p38, %p39
    %p42 = scmp.ne.s32.totalorder %s25, %s41
    %p43 = scmp.eq.s32.totalorder %s17, 0
    %p44 = por %p42, %p43
    %s46 = sadd.s32 %s45, 1
    %p49 = scmp.eq.s32.totalorder %s11, 1
    %p50 = scmp.ne.s32.totalorder %s45, %s47
    %p51 = scmp.eq.s32.totalorder %s11, 0
    %p52 = por %p50, %p51
    %p53 = scmp.ne.s32.totalorder %s45, %s47
    %p54 = scmp.eq.s32.totalorder %s16, 1
    %p55 = por %p53, %p54
    %p56 = scmp.ne.s32.totalorder %s47, %s48
    %p57 = scmp.eq.s32.totalorder %s16, 0
    %p58 = por %p56, %p57
    %p59 = scmp.ne.s32.totalorder %s47, %s48
    %p60 = scmp.eq.s32.totalorder %s17, 1
    %p61 = por %p59, %p60
    %p63 = scmp.ne.s32.totalorder %s48, %s62
    %p64 = scmp.eq.s32.totalorder %s17, 0
    %p65 = por %p63, %p64
    %s66 = ssub.s32 %s11, %s18
    %p67 = scmp.eq.s32.totalorder %s66, 0
    %s69 = sadd.s32 %s68, 1
    %s70 = scalar_select %p67, %s68, %s69
    %p73 = pneg %p67
    %p74 = scmp.eq.s32.totalorder %s11, 1
    %p75 = por %p73, %p74
    %p76 = scmp.ne.s32.totalorder %s68, %s71
    %p77 = scmp.eq.s32.totalorder %s11, 0
    %p78 = por %p76, %p77
    %p79 = scmp.ne.s32.totalorder %s68, %s71
    %p80 = scmp.eq.s32.totalorder %s16, 1
    %p81 = por %p79, %p80
    %p82 = scmp.ne.s32.totalorder %s71, %s72
    %p83 = scmp.eq.s32.totalorder %s16, 0
    %p84 = por %p82, %p83
    %p85 = scmp.ne.s32.totalorder %s71, %s72
    %p86 = scmp.eq.s32.totalorder %s17, 1
    %p87 = por %p85, %p86
    %p89 = scmp.ne.s32.totalorder %s72, %s88
    %p90 = scmp.eq.s32.totalorder %s17, 0
    %p91 = por %p89, %p90
    %s93 = sadd.s32 %s92, 1
    %p96 = scmp.eq.s32.totalorder %s11, 1
    %p97 = scmp.ne.s32.totalorder %s92, %s94
    %p98 = scmp.eq.s32.totalorder %s11, 0
    %p99 = por %p97, %p98
    %p100 = scmp.ne.s32.totalorder %s92, %s94
    %p101 = scmp.eq.s32.totalorder %s16, 1
    %p102 = por %p100, %p101
    %p103 = scmp.ne.s32.totalorder %s94, %s95
    %p104 = scmp.eq.s32.totalorder %s16, 0
    %p105 = por %p103, %p104
    %p106 = scmp.ne.s32.totalorder %s94, %s95
    %p107 = scmp.eq.s32.totalorder %s17, 1
    %p108 = por %p106, %p107
    %p110 = scmp.ne.s32.totalorder %s95, %s109
    %p111 = scmp.eq.s32.totalorder %s17, 0
    %p112 = por %p110, %p111
    %s114 = sadd.s32 %s113, 1
    %p117 = scmp.eq.s32.totalorder %s11, 1
    %p118 = scmp.ne.s32.totalorder %s113, %s115
    %p119 = scmp.eq.s32.totalorder %s11, 0
    %p120 = por %p118, %p119
    %p121 = scmp.ne.s32.totalorder %s113, %s115
    %p122 = scmp.eq.s32.totalorder %s16, 1
    %p123 = por %p121, %p122
    %p124 = scmp.ne.s32.totalorder %s115, %s116
    %p125 = scmp.eq.s32.totalorder %s16, 0
    %p126 = por %p124, %p125
    %p127 = scmp.ne.s32.totalorder %s115, %s116
    %p128 = scmp.eq.s32.totalorder %s17, 1
    %p129 = por %p127, %p128
    %p131 = scmp.ne.s32.totalorder %s116, %s130
    %p132 = scmp.eq.s32.totalorder %s17, 0
    %p133 = por %p131, %p132
    %p134 = scmp.le.s32.totalorder 1, %s11
    %p135 = scmp.lt.s32.totalorder %s11, 3
    %p136 = pnand %p134, %p135
    %p137 = pneg %p136
    // Predicated region
    $region9: #{wl_forward.17} parent=5 // pred_check
      _
    $region10: #{wl_forward.17} parent=5 // pred_check_branch
      %139 = sbr.rel (%p136) target = $region12
    $region11: #{wl_forward.17} parent=5 // pred_region
      %s140 = ssub.s32 %s11, 1
      // Predicated region
      $region13: #{wl_forward.17} parent=11 // pred_check
        %p141 = pneg %p58
      $region14: #{wl_forward.17} parent=11 // pred_check_branch
        %143 = sbr.rel (%p141) target = $region16
      $region15: #{wl_forward.17} parent=11 // pred_region
        _
      $region16: #{wl_forward.17} parent=11 // pred_fallthru
        _
    $region12: #{wl_forward.17} parent=5 // pred_fallthru
      _
    %p144 = scmp.lt.s32.totalorder %s11, 2
    // Predicated region
    $region17: #{wl_forward.17} parent=5 // pred_check
      %p145 = pneg %p144
    $region18: #{wl_forward.17} parent=5 // pred_check_branch
      %147 = sbr.rel (%p145) target = $region20
    $region19: #{wl_forward.17} parent=5 // pred_region
      // Predicated region
      $region21: #{wl_forward.17} parent=19 // pred_check
        %p148 = pneg %p31
      $region22: #{wl_forward.17} parent=19 // pred_check_branch
        %150 = sbr.rel (%p148) target = $region24
      $region23: #{wl_forward.17} parent=19 // pred_region
        %s151 = smul.u32 8, %s11
        %p152 = scmp.lt.s32.totalorder %s151, 15
        %s153 = scalar_select %p152, %s151, 15
        %s154 = smul.addr %s153, 2
        %s155 = scalar_lea.vmem %s0, %s154
        %s156 = smul.u32 8, %s11
      $region24: #{wl_forward.17} parent=19 // pred_fallthru
        _
    $region20: #{wl_forward.17} parent=5 // pred_fallthru
      _
    %p157 = scmp.le.s32.totalorder 1, %s11
    %p158 = scmp.lt.s32.totalorder %s11, 3
    %p159 = pnand %p157, %p158
    %p160 = pneg %p159
    // Predicated region
    $region25: #{wl_forward.17} parent=5 // pred_check
      _
    $region26: #{wl_forward.17} parent=5 // pred_check_branch
      %162 = sbr.rel (%p159) target = $region28
    $region27: #{wl_forward.17} parent=5 // pred_region
      %s163 = ssub.s32 %s11, 1
      %s164 = smul.u32 8, %s16
      %p165 = scmp.lt.s32.totalorder %s164, 15
      %s166 = scalar_select %p165, %s164, 15
      %s167 = smul.addr %s166, 2
      %s168 = scalar_lea.vmem %s0, %s167
      %p169 = pneg %p37
      %p170 = pneg %p34
      %p171 = pneg %p58
      %p172 = pneg %p55
      %p173 = pneg %p84
      %p174 = pneg %p81
      %s175 = smul.u32 8, %s16
      %p176 = scmp.lt.s32.totalorder %s175, 15
      %s177 = scalar_select %p176, %s175, 15
      %s178 = smul.addr %s177, 2
      %s179 = scalar_lea.vmem %s2, %s178
      %p180 = pneg %p105
      %p181 = pneg %p102
      %p182 = pneg %p126
      %p183 = pneg %p123
      %s184 = smul.u32 8, %s16
      %p185 = scmp.lt.s32.totalorder %s184, 15
      %s186 = scalar_select %p185, %s184, 15
      %s187 = smul.addr %s186, 2
      %s188 = scalar_lea.vmem %s0, %s187
      %s189 = smul.u32 8, %s16
      %s190 = smul.u32 8, %s16
      %p191 = scmp.lt.s32.totalorder %s190, 15
      %s192 = scalar_select %p191, %s190, 15
      %s193 = smul.addr %s192, 2
      %s194 = scalar_lea.vmem %s2, %s193
      %s195 = smul.u32 8, %s16
      %p196 = scmp.eq.s32.totalorder %s16, 0
      // Predicated region
      $region29: #{wl_forward.17} parent=27 // pred_check
        %p197 = pneg %p196
      $region30: #{wl_forward.17} parent=27 // pred_check_branch
        %199 = sbr.rel (%p197) target = $region32
      $region31: #{wl_forward.17} parent=27 // pred_region
        %vm200 = vcmask 254976
        %201 = vst.msk [vmem:[#allocation2] sm:$0x3] %vm200, 0.0
        %202 = vst.msk [vmem:[#allocation3] sm:$0x3] %vm200, 0.0
      $region32: #{wl_forward.17} parent=27 // pred_fallthru
        _
      %v203 = vld [vmem:[%s1] sm:$0xff]
      %v204 = vld [vmem:[%s1 + $0x8] sm:$0xff]
      %v205 = vld [vmem:[%s1 + $0x10] sm:$0xff]
      %v206 = vld [vmem:[%s1 + $0x18] sm:$0xff]
      %v207 = vld [vmem:[%s188] sm:$0x3]
      %v208 = vld [vmem:[#allocation2] sm:$0x3]
      %vm209 = vcmask 261120
      %v211 = vsel %vm209, %v208, 0
      %213 = vmatprep.subr.mxu0 0.0
      %214 = vmatpush1.msra.mxu0 %v203
      %215 = vmatprep.subr.mxu0 0.0
      %216 = vmatpush1.msra.mxu0 %v204
      %217 = vmatprep.subr.mxu0 0.0
      %218 = vmatpush1.msra.mxu0 %v205
      %219 = vmatprep.subr.mxu0 0.0
      %220 = vmatpush1.msra.mxu0 %v206
      %221 = vmatprep.subr.mxu0 0.0
      %222 = vmatpush1.msra.mxu0 0.0
      %223 = vmatprep.subr.mxu0 0.0
      %224 = vmatpush1.msra.mxu0 0.0
      %225 = vmatprep.subr.mxu0 0.0
      %226 = vmatpush1.msra.mxu0 0.0
      %227 = vmatprep.subr.mxu0 0.0
      %228 = vmatpush1.msra.mxu0 0.0
      %229 = vmatprep.subr.mxu0 0.0
      %230 = vmatpush1.msra.mxu0 0.0
      %231 = vmatprep.subr.mxu0 0.0
      %232 = vmatpush1.msra.mxu0 0.0
      %233 = vmatprep.subr.mxu0 0.0
      %234 = vmatpush1.msra.mxu0 0.0
      %235 = vmatprep.subr.mxu0 0.0
      %236 = vmatpush1.msra.mxu0 0.0
      %237 = vmatprep.subr.mxu0 0.0
      %238 = vmatpush1.msra.mxu0 0.0
      %239 = vmatprep.subr.mxu0 0.0
      %240 = vmatpush1.msra.mxu0 0.0
      %241 = vmatprep.subr.mxu0 0.0
      %242 = vmatpush1.msra.mxu0 0.0
      %243 = vmatprep.subr.mxu0 0.0
      %244 = vmatpush1.msra.mxu0 0.0
      %245 = vmatprep.subr.mxu0 0.0
      %246 = vmatpush1.msra.mxu0 0.0
      %247 = vmatprep.subr.mxu0 0.0
      %248 = vmatpush1.msra.mxu0 0.0
      %249 = vmatprep.subr.mxu0 0.0
      %250 = vmatpush1.msra.mxu0 0.0
      %251 = vmatprep.subr.mxu0 0.0
      %252 = vmatpush1.msra.mxu0 0.0
      %253 = vmatprep.subr.mxu0 0.0
      %254 = vmatpush1.msra.mxu0 0.0
      %255 = vmatprep.subr.mxu0 0.0
      %256 = vmatpush1.msra.mxu0 0.0
      %257 = vmatprep.subr.mxu0 0.0
      %258 = vmatpush1.msra.mxu0 0.0
      %259 = vmatprep.subr.mxu0 0.0
      %260 = vmatpush1.msra.mxu0 0.0
      %261 = vmatprep.subr.mxu0 0.0
      %262 = vmatpush1.msra.mxu0 0.0
      %263 = vmatprep.subr.mxu0 0.0
      %264 = vmatpush1.msra.mxu0 0.0
      %265 = vmatprep.subr.mxu0 0.0
      %266 = vmatpush1.msra.mxu0 0.0
      %267 = vmatprep.subr.mxu0 0.0
      %268 = vmatpush1.msra.mxu0 0.0
      %269 = vmatprep.subr.mxu0 0.0
      %270 = vmatpush1.msra.mxu0 0.0
      %271 = vmatprep.subr.mxu0 0.0
      %272 = vmatpush1.msra.mxu0 0.0
      %273 = vmatprep.subr.mxu0 0.0
      %274 = vmatpush1.msra.mxu0 0.0
      %275 = vmatprep.subr.mxu0 0.0
      %276 = vmatpush1.msra.mxu0 0.0
      %277 = vmatprep.mubr.f32.mxu0 0.0
      %278 = vmatmul.mubr.f32.gmra.mrb[0].mxu0 %v211
      %v279 = vpop.f32.mrb[0].mxu0
      %v280 = vadd.f32 0.0, %v279
      %v281 = vpop.f32.mrb[0].mxu0
      %282 = vdwg.mxu0
      %v283 = vadd.f32 %v207, %v280
      %v284 = vxor.u32 %v283, 2147483648
      %v285 = vmul.f32 %v284, 1.442695
      %v286 = vpow.pop %v285
      %v287 = vadd.f32 %v286, 1.0
      %v288 = vrcp.pop %v287
      %v289 = vmul.f32 1.0, %v288
      %v290 = vtanh.pop %v283
      %v291 = vld [vmem:[#allocation3] sm:$0x3]
      %293 = vrot.lane.b32.xlu0 %v291, 32
      %v294 = vpop.permute.xlu0 %293
      %v296 = vmul.f32 %v289, %v294
      %298 = vrot.lane.b32.xlu0 %v290, 64
      %v299 = vpop.permute.xlu0 %298
      %v301 = vmul.f32 %v289, %v299
      %303 = vrot.lane.b32.xlu0 %v301, 32
      %v304 = vpop.permute.xlu0 %303
      %v306 = vadd.f32 %v296, %v304
      %v307 = vtanh.pop %v306
      %309 = vrot.lane.b32.xlu0 %v307, 64
      %v310 = vpop.permute.xlu0 %309
      %v312 = vmul.f32 %v289, %v310
      %314 = vrot.lane.b32.xlu0 %v306, 96
      %v315 = vpop.permute.xlu0 %314
      %vm317 = vcmask 254976
      %318 = vst.msk [vmem:[#allocation3] sm:$0x3] %vm317, %v315
      %320 = vrot.lane.b32.xlu0 %v312, 32
      %v321 = vpop.permute.xlu0 %320
      %323 = vst.msk [vmem:[#allocation2] sm:$0x3] %vm317, %v321
      %324 = vst.msk [vmem:[%s194] sm:$0x3] %vm317, %v321
      %s325 = scalar_lea.vmem %s188, 2
      %v326 = vld [vmem:[%s325] sm:$0x3]
      %v327 = vld [vmem:[#allocation2] sm:$0x3]
      %v329 = vsel %vm209, %v327, 0
      %331 = vmatprep.subr.mxu0 0.0
      %332 = vmatpush1.msra.mxu0 %v203
      %333 = vmatprep.subr.mxu0 0.0
      %334 = vmatpush1.msra.mxu0 %v204
      %335 = vmatprep.subr.mxu0 0.0
      %336 = vmatpush1.msra.mxu0 %v205
      %337 = vmatprep.subr.mxu0 0.0
      %338 = vmatpush1.msra.mxu0 %v206
      %339 = vmatprep.subr.mxu0 0.0
      %340 = vmatpush1.msra.mxu0 0.0
      %341 = vmatprep.subr.mxu0 0.0
      %342 = vmatpush1.msra.mxu0 0.0
      %343 = vmatprep.subr.mxu0 0.0
      %344 = vmatpush1.msra.mxu0 0.0
      %345 = vmatprep.subr.mxu0 0.0
      %346 = vmatpush1.msra.mxu0 0.0
      %347 = vmatprep.subr.mxu0 0.0
      %348 = vmatpush1.msra.mxu0 0.0
      %349 = vmatprep.subr.mxu0 0.0
      %350 = vmatpush1.msra.mxu0 0.0
      %351 = vmatprep.subr.mxu0 0.0
      %352 = vmatpush1.msra.mxu0 0.0
      %353 = vmatprep.subr.mxu0 0.0
      %354 = vmatpush1.msra.mxu0 0.0
      %355 = vmatprep.subr.mxu0 0.0
      %356 = vmatpush1.msra.mxu0 0.0
      %357 = vmatprep.subr.mxu0 0.0
      %358 = vmatpush1.msra.mxu0 0.0
      %359 = vmatprep.subr.mxu0 0.0
      %360 = vmatpush1.msra.mxu0 0.0
      %361 = vmatprep.subr.mxu0 0.0
      %362 = vmatpush1.msra.mxu0 0.0
      %363 = vmatprep.subr.mxu0 0.0
      %364 = vmatpush1.msra.mxu0 0.0
      %365 = vmatprep.subr.mxu0 0.0
      %366 = vmatpush1.msra.mxu0 0.0
      %367 = vmatprep.subr.mxu0 0.0
      %368 = vmatpush1.msra.mxu0 0.0
      %369 = vmatprep.subr.mxu0 0.0
      %370 = vmatpush1.msra.mxu0 0.0
      %371 = vmatprep.subr.mxu0 0.0
      %372 = vmatpush1.msra.mxu0 0.0
      %373 = vmatprep.subr.mxu0 0.0
      %374 = vmatpush1.msra.mxu0 0.0
      %375 = vmatprep.subr.mxu0 0.0
      %376 = vmatpush1.msra.mxu0 0.0
      %377 = vmatprep.subr.mxu0 0.0
      %378 = vmatpush1.msra.mxu0 0.0
      %379 = vmatprep.subr.mxu0 0.0
      %380 = vmatpush1.msra.mxu0 0.0
      %381 = vmatprep.subr.mxu0 0.0
      %382 = vmatpush1.msra.mxu0 0.0
      %383 = vmatprep.subr.mxu0 0.0
      %384 = vmatpush1.msra.mxu0 0.0
      %385 = vmatprep.subr.mxu0 0.0
      %386 = vmatpush1.msra.mxu0 0.0
      %387 = vmatprep.subr.mxu0 0.0
      %388 = vmatpush1.msra.mxu0 0.0
      %389 = vmatprep.subr.mxu0 0.0
      %390 = vmatpush1.msra.mxu0 0.0
      %391 = vmatprep.subr.mxu0 0.0
      %392 = vmatpush1.msra.mxu0 0.0
      %393 = vmatprep.subr.mxu0 0.0
      %394 = vmatpush1.msra.mxu0 0.0
      %395 = vmatprep.mubr.f32.mxu0 0.0
      %396 = vmatmul.mubr.f32.gmra.mrb[0].mxu0 %v329
      %v397 = vpop.f32.mrb[0].mxu0
      %v398 = vadd.f32 0.0, %v397
      %v399 = vpop.f32.mrb[0].mxu0
      %400 = vdwg.mxu0
      %v401 = vadd.f32 %v326, %v398
      %v402 = vxor.u32 %v401, 2147483648
      %v403 = vmul.f32 %v402, 1.442695
      %v404 = vpow.pop %v403
      %v405 = vadd.f32 %v404, 1.0
      %v406 = vrcp.pop %v405
      %v407 = vmul.f32 1.0, %v406
      %v408 = vtanh.pop %v401
      %v409 = vld [vmem:[#allocation3] sm:$0x3]
      %411 = vrot.lane.b32.xlu0 %v409, 32
      %v412 = vpop.permute.xlu0 %411
      %v414 = vmul.f32 %v407, %v412
      %416 = vrot.lane.b32.xlu0 %v408, 64
      %v417 = vpop.permute.xlu0 %416
      %v419 = vmul.f32 %v407, %v417
      %421 = vrot.lane.b32.xlu0 %v419, 32
      %v422 = vpop.permute.xlu0 %421
      %v424 = vadd.f32 %v414, %v422
      %v425 = vtanh.pop %v424
      %427 = vrot.lane.b32.xlu0 %v425, 64
      %v428 = vpop.permute.xlu0 %427
      %v430 = vmul.f32 %v407, %v428
      %432 = vrot.lane.b32.xlu0 %v424, 96
      %v433 = vpop.permute.xlu0 %432
      %435 = vst.msk [vmem:[#allocation3] sm:$0x3] %vm317, %v433
      %437 = vrot.lane.b32.xlu0 %v430, 32
      %v438 = vpop.permute.xlu0 %437
      %440 = vst.msk [vmem:[#allocation2] sm:$0x3] %vm317, %v438
      %s441 = scalar_lea.vmem %s194, 2
      %442 = vst.msk [vmem:[%s441] sm:$0x3] %vm317, %v438
      %s443 = scalar_lea.vmem %s188, 4
      %v444 = vld [vmem:[%s443] sm:$0x3]
      %v445 = vld [vmem:[#allocation2] sm:$0x3]
      %v447 = vsel %vm209, %v445, 0
      %449 = vmatprep.subr.mxu0 0.0
      %450 = vmatpush1.msra.mxu0 %v203
      %451 = vmatprep.subr.mxu0 0.0
      %452 = vmatpush1.msra.mxu0 %v204
      %453 = vmatprep.subr.mxu0 0.0
      %454 = vmatpush1.msra.mxu0 %v205
      %455 = vmatprep.subr.mxu0 0.0
      %456 = vmatpush1.msra.mxu0 %v206
      %457 = vmatprep.subr.mxu0 0.0
      %458 = vmatpush1.msra.mxu0 0.0
      %459 = vmatprep.subr.mxu0 0.0
      %460 = vmatpush1.msra.mxu0 0.0
      %461 = vmatprep.subr.mxu0 0.0
      %462 = vmatpush1.msra.mxu0 0.0
      %463 = vmatprep.subr.mxu0 0.0
      %464 = vmatpush1.msra.mxu0 0.0
      %465 = vmatprep.subr.mxu0 0.0
      %466 = vmatpush1.msra.mxu0 0.0
      %467 = vmatprep.subr.mxu0 0.0
      %468 = vmatpush1.msra.mxu0 0.0
      %469 = vmatprep.subr.mxu0 0.0
      %470 = vmatpush1.msra.mxu0 0.0
      %471 = vmatprep.subr.mxu0 0.0
      %472 = vmatpush1.msra.mxu0 0.0
      %473 = vmatprep.subr.mxu0 0.0
      %474 = vmatpush1.msra.mxu0 0.0
      %475 = vmatprep.subr.mxu0 0.0
      %476 = vmatpush1.msra.mxu0 0.0
      %477 = vmatprep.subr.mxu0 0.0
      %478 = vmatpush1.msra.mxu0 0.0
      %479 = vmatprep.subr.mxu0 0.0
      %480 = vmatpush1.msra.mxu0 0.0
      %481 = vmatprep.subr.mxu0 0.0
      %482 = vmatpush1.msra.mxu0 0.0
      %483 = vmatprep.subr.mxu0 0.0
      %484 = vmatpush1.msra.mxu0 0.0
      %485 = vmatprep.subr.mxu0 0.0
      %486 = vmatpush1.msra.mxu0 0.0
      %487 = vmatprep.subr.mxu0 0.0
      %488 = vmatpush1.msra.mxu0 0.0
      %489 = vmatprep.subr.mxu0 0.0
      %490 = vmatpush1.msra.mxu0 0.0
      %491 = vmatprep.subr.mxu0 0.0
      %492 = vmatpush1.msra.mxu0 0.0
      %493 = vmatprep.subr.mxu0 0.0
      %494 = vmatpush1.msra.mxu0 0.0
      %495 = vmatprep.subr.mxu0 0.0
      %496 = vmatpush1.msra.mxu0 0.0
      %497 = vmatprep.subr.mxu0 0.0
      %498 = vmatpush1.msra.mxu0 0.0
      %499 = vmatprep.subr.mxu0 0.0
      %500 = vmatpush1.msra.mxu0 0.0
      %501 = vmatprep.subr.mxu0 0.0
      %502 = vmatpush1.msra.mxu0 0.0
      %503 = vmatprep.subr.mxu0 0.0
      %504 = vmatpush1.msra.mxu0 0.0
      %505 = vmatprep.subr.mxu0 0.0
      %506 = vmatpush1.msra.mxu0 0.0
      %507 = vmatprep.subr.mxu0 0.0
      %508 = vmatpush1.msra.mxu0 0.0
      %509 = vmatprep.subr.mxu0 0.0
      %510 = vmatpush1.msra.mxu0 0.0
      %511 = vmatprep.subr.mxu0 0.0
      %512 = vmatpush1.msra.mxu0 0.0
      %513 = vmatprep.mubr.f32.mxu0 0.0
      %514 = vmatmul.mubr.f32.gmra.mrb[0].mxu0 %v447
      %v515 = vpop.f32.mrb[0].mxu0
      %v516 = vadd.f32 0.0, %v515
      %v517 = vpop.f32.mrb[0].mxu0
      %518 = vdwg.mxu0
      %v519 = vadd.f32 %v444, %v516
      %v520 = vxor.u32 %v519, 2147483648
      %v521 = vmul.f32 %v520, 1.442695
      %v522 = vpow.pop %v521
      %v523 = vadd.f32 %v522, 1.0
      %v524 = vrcp.pop %v523
      %v525 = vmul.f32 1.0, %v524
      %v526 = vtanh.pop %v519
      %v527 = vld [vmem:[#allocation3] sm:$0x3]
      %529 = vrot.lane.b32.xlu0 %v527, 32
      %v530 = vpop.permute.xlu0 %529
      %v532 = vmul.f32 %v525, %v530
      %534 = vrot.lane.b32.xlu0 %v526, 64
      %v535 = vpop.permute.xlu0 %534
      %v537 = vmul.f32 %v525, %v535
      %539 = vrot.lane.b32.xlu0 %v537, 32
      %v540 = vpop.permute.xlu0 %539
      %v542 = vadd.f32 %v532, %v540
      %v543 = vtanh.pop %v542
      %545 = vrot.lane.b32.xlu0 %v543, 64
      %v546 = vpop.permute.xlu0 %545
      %v548 = vmul.f32 %v525, %v546
      %550 = vrot.lane.b32.xlu0 %v542, 96
      %v551 = vpop.permute.xlu0 %550
      %553 = vst.msk [vmem:[#allocation3] sm:$0x3] %vm317, %v551
      %555 = vrot.lane.b32.xlu0 %v548, 32
      %v556 = vpop.permute.xlu0 %555
      %558 = vst.msk [vmem:[#allocation2] sm:$0x3] %vm317, %v556
      %s559 = scalar_lea.vmem %s194, 4
      %560 = vst.msk [vmem:[%s559] sm:$0x3] %vm317, %v556
      %s561 = scalar_lea.vmem %s188, 6
      %v562 = vld [vmem:[%s561] sm:$0x3]
      %v563 = vld [vmem:[#allocation2] sm:$0x3]
      %v565 = vsel %vm209, %v563, 0
      %567 = vmatprep.subr.mxu0 0.0
      %568 = vmatpush1.msra.mxu0 %v203
      %569 = vmatprep.subr.mxu0 0.0
      %570 = vmatpush1.msra.mxu0 %v204
      %571 = vmatprep.subr.mxu0 0.0
      %572 = vmatpush1.msra.mxu0 %v205
      %573 = vmatprep.subr.mxu0 0.0
      %574 = vmatpush1.msra.mxu0 %v206
      %575 = vmatprep.subr.mxu0 0.0
      %576 = vmatpush1.msra.mxu0 0.0
      %577 = vmatprep.subr.mxu0 0.0
      %578 = vmatpush1.msra.mxu0 0.0
      %579 = vmatprep.subr.mxu0 0.0
      %580 = vmatpush1.msra.mxu0 0.0
      %581 = vmatprep.subr.mxu0 0.0
      %582 = vmatpush1.msra.mxu0 0.0
      %583 = vmatprep.subr.mxu0 0.0
      %584 = vmatpush1.msra.mxu0 0.0
      %585 = vmatprep.subr.mxu0 0.0
      %586 = vmatpush1.msra.mxu0 0.0
      %587 = vmatprep.subr.mxu0 0.0
      %588 = vmatpush1.msra.mxu0 0.0
      %589 = vmatprep.subr.mxu0 0.0
      %590 = vmatpush1.msra.mxu0 0.0
      %591 = vmatprep.subr.mxu0 0.0
      %592 = vmatpush1.msra.mxu0 0.0
      %593 = vmatprep.subr.mxu0 0.0
      %594 = vmatpush1.msra.mxu0 0.0
      %595 = vmatprep.subr.mxu0 0.0
      %596 = vmatpush1.msra.mxu0 0.0
      %597 = vmatprep.subr.mxu0 0.0
      %598 = vmatpush1.msra.mxu0 0.0
      %599 = vmatprep.subr.mxu0 0.0
      %600 = vmatpush1.msra.mxu0 0.0
      %601 = vmatprep.subr.mxu0 0.0
      %602 = vmatpush1.msra.mxu0 0.0
      %603 = vmatprep.subr.mxu0 0.0
      %604 = vmatpush1.msra.mxu0 0.0
      %605 = vmatprep.subr.mxu0 0.0
      %606 = vmatpush1.msra.mxu0 0.0
      %607 = vmatprep.subr.mxu0 0.0
      %608 = vmatpush1.msra.mxu0 0.0
      %609 = vmatprep.subr.mxu0 0.0
      %610 = vmatpush1.msra.mxu0 0.0
      %611 = vmatprep.subr.mxu0 0.0
      %612 = vmatpush1.msra.mxu0 0.0
      %613 = vmatprep.subr.mxu0 0.0
      %614 = vmatpush1.msra.mxu0 0.0
      %615 = vmatprep.subr.mxu0 0.0
      %616 = vmatpush1.msra.mxu0 0.0
      %617 = vmatprep.subr.mxu0 0.0
      %618 = vmatpush1.msra.mxu0 0.0
      %619 = vmatprep.subr.mxu0 0.0
      %620 = vmatpush1.msra.mxu0 0.0
      %621 = vmatprep.subr.mxu0 0.0
      %622 = vmatpush1.msra.mxu0 0.0
      %623 = vmatprep.subr.mxu0 0.0
      %624 = vmatpush1.msra.mxu0 0.0
      %625 = vmatprep.subr.mxu0 0.0
      %626 = vmatpush1.msra.mxu0 0.0
      %627 = vmatprep.subr.mxu0 0.0
      %628 = vmatpush1.msra.mxu0 0.0
      %629 = vmatprep.subr.mxu0 0.0
      %630 = vmatpush1.msra.mxu0 0.0
      %631 = vmatprep.mubr.f32.mxu0 0.0
      %632 = vmatmul.mubr.f32.gmra.mrb[0].mxu0 %v565
      %v633 = vpop.f32.mrb[0].mxu0
      %v634 = vadd.f32 0.0, %v633
      %v635 = vpop.f32.mrb[0].mxu0
      %636 = vdwg.mxu0
      %v637 = vadd.f32 %v562, %v634
      %v638 = vxor.u32 %v637, 2147483648
      %v639 = vmul.f32 %v638, 1.442695
      %v640 = vpow.pop %v639
      %v641 = vadd.f32 %v640, 1.0
      %v642 = vrcp.pop %v641
      %v643 = vmul.f32 1.0, %v642
      %v644 = vtanh.pop %v637
      %v645 = vld [vmem:[#allocation3] sm:$0x3]
      %647 = vrot.lane.b32.xlu0 %v645, 32
      %v648 = vpop.permute.xlu0 %647
      %v650 = vmul.f32 %v643, %v648
      %652 = vrot.lane.b32.xlu0 %v644, 64
      %v653 = vpop.permute.xlu0 %652
      %v655 = vmul.f32 %v643, %v653
      %657 = vrot.lane.b32.xlu0 %v655, 32
      %v658 = vpop.permute.xlu0 %657
      %v660 = vadd.f32 %v650, %v658
      %v661 = vtanh.pop %v660
      %663 = vrot.lane.b32.xlu0 %v661, 64
      %v664 = vpop.permute.xlu0 %663
      %v666 = vmul.f32 %v643, %v664
      %668 = vrot.lane.b32.xlu0 %v660, 96
      %v669 = vpop.permute.xlu0 %668
      %671 = vst.msk [vmem:[#allocation3] sm:$0x3] %vm317, %v669
      %673 = vrot.lane.b32.xlu0 %v666, 32
      %v674 = vpop.permute.xlu0 %673
      %676 = vst.msk [vmem:[#allocation2] sm:$0x3] %vm317, %v674
      %s677 = scalar_lea.vmem %s194, 6
      %678 = vst.msk [vmem:[%s677] sm:$0x3] %vm317, %v674
      %s679 = scalar_lea.vmem %s188, 8
      %v680 = vld [vmem:[%s679] sm:$0x3]
      %v681 = vld [vmem:[#allocation2] sm:$0x3]
      %v683 = vsel %vm209, %v681, 0
      %685 = vmatprep.subr.mxu0 0.0
      %686 = vmatpush1.msra.mxu0 %v203
      %687 = vmatprep.subr.mxu0 0.0
      %688 = vmatpush1.msra.mxu0 %v204
      %689 = vmatprep.subr.mxu0 0.0
      %690 = vmatpush1.msra.mxu0 %v205
      %691 = vmatprep.subr.mxu0 0.0
      %692 = vmatpush1.msra.mxu0 %v206
      %693 = vmatprep.subr.mxu0 0.0
      %694 = vmatpush1.msra.mxu0 0.0
      %695 = vmatprep.subr.mxu0 0.0
      %696 = vmatpush1.msra.mxu0 0.0
      %697 = vmatprep.subr.mxu0 0.0
      %698 = vmatpush1.msra.mxu0 0.0
      %699 = vmatprep.subr.mxu0 0.0
      %700 = vmatpush1.msra.mxu0 0.0
      %701 = vmatprep.subr.mxu0 0.0
      %702 = vmatpush1.msra.mxu0 0.0
      %703 = vmatprep.subr.mxu0 0.0
      %704 = vmatpush1.msra.mxu0 0.0
      %705 = vmatprep.subr.mxu0 0.0
      %706 = vmatpush1.msra.mxu0 0.0
      %707 = vmatprep.subr.mxu0 0.0
      %708 = vmatpush1.msra.mxu0 0.0
      %709 = vmatprep.subr.mxu0 0.0
      %710 = vmatpush1.msra.mxu0 0.0
      %711 = vmatprep.subr.mxu0 0.0
      %712 = vmatpush1.msra.mxu0 0.0
      %713 = vmatprep.subr.mxu0 0.0
      %714 = vmatpush1.msra.mxu0 0.0
      %715 = vmatprep.subr.mxu0 0.0
      %716 = vmatpush1.msra.mxu0 0.0
      %717 = vmatprep.subr.mxu0 0.0
      %718 = vmatpush1.msra.mxu0 0.0
      %719 = vmatprep.subr.mxu0 0.0
      %720 = vmatpush1.msra.mxu0 0.0
      %721 = vmatprep.subr.mxu0 0.0
      %722 = vmatpush1.msra.mxu0 0.0
      %723 = vmatprep.subr.mxu0 0.0
      %724 = vmatpush1.msra.mxu0 0.0
      %725 = vmatprep.subr.mxu0 0.0
      %726 = vmatpush1.msra.mxu0 0.0
      %727 = vmatprep.subr.mxu0 0.0
      %728 = vmatpush1.msra.mxu0 0.0
      %729 = vmatprep.subr.mxu0 0.0
      %730 = vmatpush1.msra.mxu0 0.0
      %731 = vmatprep.subr.mxu0 0.0
      %732 = vmatpush1.msra.mxu0 0.0
      %733 = vmatprep.subr.mxu0 0.0
      %734 = vmatpush1.msra.mxu0 0.0
      %735 = vmatprep.subr.mxu0 0.0
      %736 = vmatpush1.msra.mxu0 0.0
      %737 = vmatprep.subr.mxu0 0.0
      %738 = vmatpush1.msra.mxu0 0.0
      %739 = vmatprep.subr.mxu0 0.0
      %740 = vmatpush1.msra.mxu0 0.0
      %741 = vmatprep.subr.mxu0 0.0
      %742 = vmatpush1.msra.mxu0 0.0
      %743 = vmatprep.subr.mxu0 0.0
      %744 = vmatpush1.msra.mxu0 0.0
      %745 = vmatprep.subr.mxu0 0.0
      %746 = vmatpush1.msra.mxu0 0.0
      %747 = vmatprep.subr.mxu0 0.0
      %748 = vmatpush1.msra.mxu0 0.0
      %749 = vmatprep.mubr.f32.mxu0 0.0
      %750 = vmatmul.mubr.f32.gmra.mrb[0].mxu0 %v683
      %v751 = vpop.f32.mrb[0].mxu0
      %v752 = vadd.f32 0.0, %v751
      %v753 = vpop.f32.mrb[0].mxu0
      %754 = vdwg.mxu0
      %v755 = vadd.f32 %v680, %v752
      %v756 = vxor.u32 %v755, 2147483648
      %v757 = vmul.f32 %v756, 1.442695
      %v758 = vpow.pop %v757
      %v759 = vadd.f32 %v758, 1.0
      %v760 = vrcp.pop %v759
      %v761 = vmul.f32 1.0, %v760
      %v762 = vtanh.pop %v755
      %v763 = vld [vmem:[#allocation3] sm:$0x3]
      %765 = vrot.lane.b32.xlu0 %v763, 32
      %v766 = vpop.permute.xlu0 %765
      %v768 = vmul.f32 %v761, %v766
      %770 = vrot.lane.b32.xlu0 %v762, 64
      %v771 = vpop.permute.xlu0 %770
      %v773 = vmul.f32 %v761, %v771
      %775 = vrot.lane.b32.xlu0 %v773, 32
      %v776 = vpop.permute.xlu0 %775
      %v778 = vadd.f32 %v768, %v776
      %v779 = vtanh.pop %v778
      %781 = vrot.lane.b32.xlu0 %v779, 64
      %v782 = vpop.permute.xlu0 %781
      %v784 = vmul.f32 %v761, %v782
      %786 = vrot.lane.b32.xlu0 %v778, 96
      %v787 = vpop.permute.xlu0 %786
      %789 = vst.msk [vmem:[#allocation3] sm:$0x3] %vm317, %v787
      %791 = vrot.lane.b32.xlu0 %v784, 32
      %v792 = vpop.permute.xlu0 %791
      %794 = vst.msk [vmem:[#allocation2] sm:$0x3] %vm317, %v792
      %s795 = scalar_lea.vmem %s194, 8
      %796 = vst.msk [vmem:[%s795] sm:$0x3] %vm317, %v792
      %s797 = scalar_lea.vmem %s188, 10
      %v798 = vld [vmem:[%s797] sm:$0x3]
      %v799 = vld [vmem:[#allocation2] sm:$0x3]
      %v801 = vsel %vm209, %v799, 0
      %803 = vmatprep.subr.mxu0 0.0
      %804 = vmatpush1.msra.mxu0 %v203
      %805 = vmatprep.subr.mxu0 0.0
      %806 = vmatpush1.msra.mxu0 %v204
      %807 = vmatprep.subr.mxu0 0.0
      %808 = vmatpush1.msra.mxu0 %v205
      %809 = vmatprep.subr.mxu0 0.0
      %810 = vmatpush1.msra.mxu0 %v206
      %811 = vmatprep.subr.mxu0 0.0
      %812 = vmatpush1.msra.mxu0 0.0
      %813 = vmatprep.subr.mxu0 0.0
      %814 = vmatpush1.msra.mxu0 0.0
      %815 = vmatprep.subr.mxu0 0.0
      %816 = vmatpush1.msra.mxu0 0.0
      %817 = vmatprep.subr.mxu0 0.0
      %818 = vmatpush1.msra.mxu0 0.0
      %819 = vmatprep.subr.mxu0 0.0
      %820 = vmatpush1.msra.mxu0 0.0
      %821 = vmatprep.subr.mxu0 0.0
      %822 = vmatpush1.msra.mxu0 0.0
      %823 = vmatprep.subr.mxu0 0.0
      %824 = vmatpush1.msra.mxu0 0.0
      %825 = vmatprep.subr.mxu0 0.0
      %826 = vmatpush1.msra.mxu0 0.0
      %827 = vmatprep.subr.mxu0 0.0
      %828 = vmatpush1.msra.mxu0 0.0
      %829 = vmatprep.subr.mxu0 0.0
      %830 = vmatpush1.msra.mxu0 0.0
      %831 = vmatprep.subr.mxu0 0.0
      %832 = vmatpush1.msra.mxu0 0.0
      %833 = vmatprep.subr.mxu0 0.0
      %834 = vmatpush1.msra.mxu0 0.0
      %835 = vmatprep.subr.mxu0 0.0
      %836 = vmatpush1.msra.mxu0 0.0
      %837 = vmatprep.subr.mxu0 0.0
      %838 = vmatpush1.msra.mxu0 0.0
      %839 = vmatprep.subr.mxu0 0.0
      %840 = vmatpush1.msra.mxu0 0.0
      %841 = vmatprep.subr.mxu0 0.0
      %842 = vmatpush1.msra.mxu0 0.0
      %843 = vmatprep.subr.mxu0 0.0
      %844 = vmatpush1.msra.mxu0 0.0
      %845 = vmatprep.subr.mxu0 0.0
      %846 = vmatpush1.msra.mxu0 0.0
      %847 = vmatprep.subr.mxu0 0.0
      %848 = vmatpush1.msra.mxu0 0.0
      %849 = vmatprep.subr.mxu0 0.0
      %850 = vmatpush1.msra.mxu0 0.0
      %851 = vmatprep.subr.mxu0 0.0
      %852 = vmatpush1.msra.mxu0 0.0
      %853 = vmatprep.subr.mxu0 0.0
      %854 = vmatpush1.msra.mxu0 0.0
      %855 = vmatprep.subr.mxu0 0.0
      %856 = vmatpush1.msra.mxu0 0.0
      %857 = vmatprep.subr.mxu0 0.0
      %858 = vmatpush1.msra.mxu0 0.0
      %859 = vmatprep.subr.mxu0 0.0
      %860 = vmatpush1.msra.mxu0 0.0
      %861 = vmatprep.subr.mxu0 0.0
      %862 = vmatpush1.msra.mxu0 0.0
      %863 = vmatprep.subr.mxu0 0.0
      %864 = vmatpush1.msra.mxu0 0.0
      %865 = vmatprep.subr.mxu0 0.0
      %866 = vmatpush1.msra.mxu0 0.0
      %867 = vmatprep.mubr.f32.mxu0 0.0
      %868 = vmatmul.mubr.f32.gmra.mrb[0].mxu0 %v801
      %v869 = vpop.f32.mrb[0].mxu0
      %v870 = vadd.f32 0.0, %v869
      %v871 = vpop.f32.mrb[0].mxu0
      %872 = vdwg.mxu0
      %v873 = vadd.f32 %v798, %v870
      %v874 = vxor.u32 %v873, 2147483648
      %v875 = vmul.f32 %v874, 1.442695
      %v876 = vpow.pop %v875
      %v877 = vadd.f32 %v876, 1.0
      %v878 = vrcp.pop %v877
      %v879 = vmul.f32 1.0, %v878
      %v880 = vtanh.pop %v873
      %v881 = vld [vmem:[#allocation3] sm:$0x3]
      %883 = vrot.lane.b32.xlu0 %v881, 32
      %v884 = vpop.permute.xlu0 %883
      %v886 = vmul.f32 %v879, %v884
      %888 = vrot.lane.b32.xlu0 %v880, 64
      %v889 = vpop.permute.xlu0 %888
      %v891 = vmul.f32 %v879, %v889
      %893 = vrot.lane.b32.xlu0 %v891, 32
      %v894 = vpop.permute.xlu0 %893
      %v896 = vadd.f32 %v886, %v894
      %v897 = vtanh.pop %v896
      %899 = vrot.lane.b32.xlu0 %v897, 64
      %v900 = vpop.permute.xlu0 %899
      %v902 = vmul.f32 %v879, %v900
      %904 = vrot.lane.b32.xlu0 %v896, 96
      %v905 = vpop.permute.xlu0 %904
      %907 = vst.msk [vmem:[#allocation3] sm:$0x3] %vm317, %v905
      %909 = vrot.lane.b32.xlu0 %v902, 32
      %v910 = vpop.permute.xlu0 %909
      %912 = vst.msk [vmem:[#allocation2] sm:$0x3] %vm317, %v910
      %s913 = scalar_lea.vmem %s194, 10
      %914 = vst.msk [vmem:[%s913] sm:$0x3] %vm317, %v910
      %s915 = scalar_lea.vmem %s188, 12
      %v916 = vld [vmem:[%s915] sm:$0x3]
      %v917 = vld [vmem:[#allocation2] sm:$0x3]
      %v919 = vsel %vm209, %v917, 0
      %921 = vmatprep.subr.mxu0 0.0
      %922 = vmatpush1.msra.mxu0 %v203
      %923 = vmatprep.subr.mxu0 0.0
      %924 = vmatpush1.msra.mxu0 %v204
      %925 = vmatprep.subr.mxu0 0.0
      %926 = vmatpush1.msra.mxu0 %v205
      %927 = vmatprep.subr.mxu0 0.0
      %928 = vmatpush1.msra.mxu0 %v206
      %929 = vmatprep.subr.mxu0 0.0
      %930 = vmatpush1.msra.mxu0 0.0
      %931 = vmatprep.subr.mxu0 0.0
      %932 = vmatpush1.msra.mxu0 0.0
      %933 = vmatprep.subr.mxu0 0.0
      %934 = vmatpush1.msra.mxu0 0.0
      %935 = vmatprep.subr.mxu0 0.0
      %936 = vmatpush1.msra.mxu0 0.0
      %937 = vmatprep.subr.mxu0 0.0
      %938 = vmatpush1.msra.mxu0 0.0
      %939 = vmatprep.subr.mxu0 0.0
      %940 = vmatpush1.msra.mxu0 0.0
      %941 = vmatprep.subr.mxu0 0.0
      %942 = vmatpush1.msra.mxu0 0.0
      %943 = vmatprep.subr.mxu0 0.0
      %944 = vmatpush1.msra.mxu0 0.0
      %945 = vmatprep.subr.mxu0 0.0
      %946 = vmatpush1.msra.mxu0 0.0
      %947 = vmatprep.subr.mxu0 0.0
      %948 = vmatpush1.msra.mxu0 0.0
      %949 = vmatprep.subr.mxu0 0.0
      %950 = vmatpush1.msra.mxu0 0.0
      %951 = vmatprep.subr.mxu0 0.0
      %952 = vmatpush1.msra.mxu0 0.0
      %953 = vmatprep.subr.mxu0 0.0
      %954 = vmatpush1.msra.mxu0 0.0
      %955 = vmatprep.subr.mxu0 0.0
      %956 = vmatpush1.msra.mxu0 0.0
      %957 = vmatprep.subr.mxu0 0.0
      %958 = vmatpush1.msra.mxu0 0.0
      %959 = vmatprep.subr.mxu0 0.0
      %960 = vmatpush1.msra.mxu0 0.0
      %961 = vmatprep.subr.mxu0 0.0
      %962 = vmatpush1.msra.mxu0 0.0
      %963 = vmatprep.subr.mxu0 0.0
      %964 = vmatpush1.msra.mxu0 0.0
      %965 = vmatprep.subr.mxu0 0.0
      %966 = vmatpush1.msra.mxu0 0.0
      %967 = vmatprep.subr.mxu0 0.0
      %968 = vmatpush1.msra.mxu0 0.0
      %969 = vmatprep.subr.mxu0 0.0
      %970 = vmatpush1.msra.mxu0 0.0
      %971 = vmatprep.subr.mxu0 0.0
      %972 = vmatpush1.msra.mxu0 0.0
      %973 = vmatprep.subr.mxu0 0.0
      %974 = vmatpush1.msra.mxu0 0.0
      %975 = vmatprep.subr.mxu0 0.0
      %976 = vmatpush1.msra.mxu0 0.0
      %977 = vmatprep.subr.mxu0 0.0
      %978 = vmatpush1.msra.mxu0 0.0
      %979 = vmatprep.subr.mxu0 0.0
      %980 = vmatpush1.msra.mxu0 0.0
      %981 = vmatprep.subr.mxu0 0.0
      %982 = vmatpush1.msra.mxu0 0.0
      %983 = vmatprep.subr.mxu0 0.0
      %984 = vmatpush1.msra.mxu0 0.0
      %985 = vmatprep.mubr.f32.mxu0 0.0
      %986 = vmatmul.mubr.f32.gmra.mrb[0].mxu0 %v919
      %v987 = vpop.f32.mrb[0].mxu0
      %v988 = vadd.f32 0.0, %v987
      %v989 = vpop.f32.mrb[0].mxu0
      %990 = vdwg.mxu0
      %v991 = vadd.f32 %v916, %v988
      %v992 = vxor.u32 %v991, 2147483648
      %v993 = vmul.f32 %v992, 1.442695
      %v994 = vpow.pop %v993
      %v995 = vadd.f32 %v994, 1.0
      %v996 = vrcp.pop %v995
      %v997 = vmul.f32 1.0, %v996
      %v998 = vtanh.pop %v991
      %v999 = vld [vmem:[#allocation3] sm:$0x3]
      %1001 = vrot.lane.b32.xlu0 %v999, 32
      %v1002 = vpop.permute.xlu0 %1001
      %v1004 = vmul.f32 %v997, %v1002
      %1006 = vrot.lane.b32.xlu0 %v998, 64
      %v1007 = vpop.permute.xlu0 %1006
      %v1009 = vmul.f32 %v997, %v1007
      %1011 = vrot.lane.b32.xlu0 %v1009, 32
      %v1012 = vpop.permute.xlu0 %1011
      %v1014 = vadd.f32 %v1004, %v1012
      %v1015 = vtanh.pop %v1014
      %1017 = vrot.lane.b32.xlu0 %v1015, 64
      %v1018 = vpop.permute.xlu0 %1017
      %v1020 = vmul.f32 %v997, %v1018
      %1022 = vrot.lane.b32.xlu0 %v1014, 96
      %v1023 = vpop.permute.xlu0 %1022
      %1025 = vst.msk [vmem:[#allocation3] sm:$0x3] %vm317, %v1023
      %1027 = vrot.lane.b32.xlu0 %v1020, 32
      %v1028 = vpop.permute.xlu0 %1027
      %1030 = vst.msk [vmem:[#allocation2] sm:$0x3] %vm317, %v1028
      %s1031 = scalar_lea.vmem %s194, 12
      %1032 = vst.msk [vmem:[%s1031] sm:$0x3] %vm317, %v1028
      %s1033 = scalar_lea.vmem %s188, 14
      %v1034 = vld [vmem:[%s1033] sm:$0x3]
      %v1035 = vld [vmem:[#allocation2] sm:$0x3]
      %v1037 = vsel %vm209, %v1035, 0
      %1039 = vmatprep.subr.mxu0 0.0
      %1040 = vmatpush1.msra.mxu0 %v203
      %1041 = vmatprep.subr.mxu0 0.0
      %1042 = vmatpush1.msra.mxu0 %v204
      %1043 = vmatprep.subr.mxu0 0.0
      %1044 = vmatpush1.msra.mxu0 %v205
      %1045 = vmatprep.subr.mxu0 0.0
      %1046 = vmatpush1.msra.mxu0 %v206
      %1047 = vmatprep.subr.mxu0 0.0
      %1048 = vmatpush1.msra.mxu0 0.0
      %1049 = vmatprep.subr.mxu0 0.0
      %1050 = vmatpush1.msra.mxu0 0.0
      %1051 = vmatprep.subr.mxu0 0.0
      %1052 = vmatpush1.msra.mxu0 0.0
      %1053 = vmatprep.subr.mxu0 0.0
      %1054 = vmatpush1.msra.mxu0 0.0
      %1055 = vmatprep.subr.mxu0 0.0
      %1056 = vmatpush1.msra.mxu0 0.0
      %1057 = vmatprep.subr.mxu0 0.0
      %1058 = vmatpush1.msra.mxu0 0.0
      %1059 = vmatprep.subr.mxu0 0.0
      %1060 = vmatpush1.msra.mxu0 0.0
      %1061 = vmatprep.subr.mxu0 0.0
      %1062 = vmatpush1.msra.mxu0 0.0
      %1063 = vmatprep.subr.mxu0 0.0
      %1064 = vmatpush1.msra.mxu0 0.0
      %1065 = vmatprep.subr.mxu0 0.0
      %1066 = vmatpush1.msra.mxu0 0.0
      %1067 = vmatprep.subr.mxu0 0.0
      %1068 = vmatpush1.msra.mxu0 0.0
      %1069 = vmatprep.subr.mxu0 0.0
      %1070 = vmatpush1.msra.mxu0 0.0
      %1071 = vmatprep.subr.mxu0 0.0
      %1072 = vmatpush1.msra.mxu0 0.0
      %1073 = vmatprep.subr.mxu0 0.0
      %1074 = vmatpush1.msra.mxu0 0.0
      %1075 = vmatprep.subr.mxu0 0.0
      %1076 = vmatpush1.msra.mxu0 0.0
      %1077 = vmatprep.subr.mxu0 0.0
      %1078 = vmatpush1.msra.mxu0 0.0
      %1079 = vmatprep.subr.mxu0 0.0
      %1080 = vmatpush1.msra.mxu0 0.0
      %1081 = vmatprep.subr.mxu0 0.0
      %1082 = vmatpush1.msra.mxu0 0.0
      %1083 = vmatprep.subr.mxu0 0.0
      %1084 = vmatpush1.msra.mxu0 0.0
      %1085 = vmatprep.subr.mxu0 0.0
      %1086 = vmatpush1.msra.mxu0 0.0
      %1087 = vmatprep.subr.mxu0 0.0
      %1088 = vmatpush1.msra.mxu0 0.0
      %1089 = vmatprep.subr.mxu0 0.0
      %1090 = vmatpush1.msra.mxu0 0.0
      %1091 = vmatprep.subr.mxu0 0.0
      %1092 = vmatpush1.msra.mxu0 0.0
      %1093 = vmatprep.subr.mxu0 0.0
      %1094 = vmatpush1.msra.mxu0 0.0
      %1095 = vmatprep.subr.mxu0 0.0
      %1096 = vmatpush1.msra.mxu0 0.0
      %1097 = vmatprep.subr.mxu0 0.0
      %1098 = vmatpush1.msra.mxu0 0.0
      %1099 = vmatprep.subr.mxu0 0.0
      %1100 = vmatpush1.msra.mxu0 0.0
      %1101 = vmatprep.subr.mxu0 0.0
      %1102 = vmatpush1.msra.mxu0 0.0
      %1103 = vmatprep.mubr.f32.mxu0 0.0
      %1104 = vmatmul.mubr.f32.gmra.mrb[0].mxu0 %v1037
      %v1105 = vpop.f32.mrb[0].mxu0
      %v1106 = vadd.f32 0.0, %v1105
      %v1107 = vpop.f32.mrb[0].mxu0
      %1108 = vdwg.mxu0
      %v1109 = vadd.f32 %v1034, %v1106
      %v1110 = vxor.u32 %v1109, 2147483648
      %v1111 = vmul.f32 %v1110, 1.442695
      %v1112 = vpow.pop %v1111
      %v1113 = vadd.f32 %v1112, 1.0
      %v1114 = vrcp.pop %v1113
      %v1115 = vmul.f32 1.0, %v1114
      %v1116 = vtanh.pop %v1109
      %v1117 = vld [vmem:[#allocation3] sm:$0x3]
      %1119 = vrot.lane.b32.xlu0 %v1117, 32
      %v1120 = vpop.permute.xlu0 %1119
      %v1122 = vmul.f32 %v1115, %v1120
      %1124 = vrot.lane.b32.xlu0 %v1116, 64
      %v1125 = vpop.permute.xlu0 %1124
      %v1127 = vmul.f32 %v1115, %v1125
      %1129 = vrot.lane.b32.xlu0 %v1127, 32
      %v1130 = vpop.permute.xlu0 %1129
      %v1132 = vadd.f32 %v1122, %v1130
      %v1133 = vtanh.pop %v1132
      %1135 = vrot.lane.b32.xlu0 %v1133, 64
      %v1136 = vpop.permute.xlu0 %1135
      %v1138 = vmul.f32 %v1115, %v1136
      %1140 = vrot.lane.b32.xlu0 %v1132, 96
      %v1141 = vpop.permute.xlu0 %1140
      %1143 = vst.msk [vmem:[#allocation3] sm:$0x3] %vm317, %v1141
      %1145 = vrot.lane.b32.xlu0 %v1138, 32
      %v1146 = vpop.permute.xlu0 %1145
      %1148 = vst.msk [vmem:[#allocation2] sm:$0x3] %vm317, %v1146
      %s1149 = scalar_lea.vmem %s194, 14
      %1150 = vst.msk [vmem:[%s1149] sm:$0x3] %vm317, %v1146
      %v1151 = vld [vmem:[#allocation2] sm:$0x3]
      %1152 = vst.msk [vmem:[%s3] sm:$0x3] %vm317, %v1151
      %v1153 = vld [vmem:[#allocation3] sm:$0x3]
      %1154 = vst.msk [vmem:[%s4] sm:$0x3] %vm317, %v1153
      %s1155 = smul.u32 8, %s16
      %p1156 = scmp.lt.s32.totalorder %s1155, 15
      %s1157 = scalar_select %p1156, %s1155, 15
      %s1158 = smul.addr %s1157, 2
      %s1159 = scalar_lea.vmem %s2, %s1158
      // Predicated region
      $region33: #{wl_forward.17} parent=27 // pred_check
        %p1160 = pneg %p81
      $region34: #{wl_forward.17} parent=27 // pred_check_branch
        %1162 = sbr.rel (%p1160) target = $region36
      $region35: #{wl_forward.17} parent=27 // pred_region
        %s1163 = smul.u32 8, %s16
      $region36: #{wl_forward.17} parent=27 // pred_fallthru
        _
      // Predicated region
      $region37: #{wl_forward.17} parent=27 // pred_check
        %p1164 = pneg %p102
      $region38: #{wl_forward.17} parent=27 // pred_check_branch
        %1166 = sbr.rel (%p1164) target = $region40
      $region39: #{wl_forward.17} parent=27 // pred_region
        _
      $region40: #{wl_forward.17} parent=27 // pred_fallthru
        _
      // Predicated region
      $region41: #{wl_forward.17} parent=27 // pred_check
        %p1167 = pneg %p123
      $region42: #{wl_forward.17} parent=27 // pred_check_branch
        %1169 = sbr.rel (%p1167) target = $region44
      $region43: #{wl_forward.17} parent=27 // pred_region
        _
      $region44: #{wl_forward.17} parent=27 // pred_fallthru
        _
      // Predicated region
      $region45: #{wl_forward.17} parent=27 // pred_check
        %p1170 = pneg %p102
      $region46: #{wl_forward.17} parent=27 // pred_check_branch
        %1172 = sbr.rel (%p1170) target = $region48
      $region47: #{wl_forward.17} parent=27 // pred_region
        _
      $region48: #{wl_forward.17} parent=27 // pred_fallthru
        _
      // Predicated region
      $region49: #{wl_forward.17} parent=27 // pred_check
        %p1173 = pneg %p123
      $region50: #{wl_forward.17} parent=27 // pred_check_branch
        %1175 = sbr.rel (%p1173) target = $region52
      $region51: #{wl_forward.17} parent=27 // pred_region
        _
      $region52: #{wl_forward.17} parent=27 // pred_fallthru
        _
    $region28: #{wl_forward.17} parent=5 // pred_fallthru
      _
    %p1176 = scmp.le.s32.totalorder 2, %s11
    // Predicated region
    $region53: #{wl_forward.17} parent=5 // pred_check
      %p1177 = pneg %p1176
    $region54: #{wl_forward.17} parent=5 // pred_check_branch
      %1179 = sbr.rel (%p1177) target = $region56
    $region55: #{wl_forward.17} parent=5 // pred_region
      %s1180 = ssub.s32 %s11, 2
      // Predicated region
      $region57: #{wl_forward.17} parent=55 // pred_check
        %p1181 = pneg %p87
      $region58: #{wl_forward.17} parent=55 // pred_check_branch
        %1183 = sbr.rel (%p1181) target = $region60
      $region59: #{wl_forward.17} parent=55 // pred_region
        %s1184 = smul.u32 8, %s17
        %p1185 = scmp.lt.s32.totalorder %s1184, 15
        %s1186 = scalar_select %p1185, %s1184, 15
        %s1187 = smul.addr %s1186, 2
        %s1188 = scalar_lea.vmem %s2, %s1187
      $region60: #{wl_forward.17} parent=55 // pred_fallthru
        _
    $region56: #{wl_forward.17} parent=5 // pred_fallthru
      _
  $region6: #{wl_forward.17} parent=0 // loop_footer
    %s15 = sadd.s32 1, %s11
  $region7: #{wl_forward.17} parent=0 // loop_footer_branch
    %10 = sbr.rel target = $region3
  $region8: #{wl_forward.17} parent=0 // loop_exit
    _

// kernel: wl_forward.19
$region0: #{wl_forward.19}
  #allocation0 [shape = 'u32[]', space=smem, size = 0x4, offset = 0x4, fixed_abs, tag = 'smem constant byte address 0x4 - core index']
  #allocation1 [shape = 'u32[144,128]{1,0:T(1,128)}', space=vmem, size = 0x12000, scoped, tag = 'internal scratch']
  #allocation2 [shape = 'f32[2,32]{1,0:T(2,128)}', space=vmem, size = 0x400, scoped, tag = 'scratch operand']
  #allocation3 [shape = 'f32[2,32]{1,0:T(2,128)}', space=vmem, size = 0x400, scoped, tag = 'scratch operand']
  %s0 = inlined_call_operand.vmem [shape: f32[16,2,128], index: 0, kind: input, shape index: {}]
  %s1 = inlined_call_operand.vmem [shape: f32[32,128], index: 1, kind: input, shape index: {}]
  %s2 = inlined_call_operand.vmem [shape: f32[32,1], index: 2, kind: input, shape index: {}]
  %s3 = inlined_call_operand.vmem [shape: f32[16,2,1], index: 3, kind: output, shape index: {0}]
  %s4 = inlined_call_operand.vmem [shape: f32[2,32], index: 4, kind: output, shape index: {1}]
  %s5 = inlined_call_operand.vmem [shape: f32[2,32], index: 5, kind: output, shape index: {2}]
  %6 = xla_tuple %s3, %s4, %s5
  %s7 = sld [smem:[#allocation0]]
  $region65: #{wl_forward.19} parent=0
    _
  %s9 = ssub.s32 1, %s7
  %s10 = scalar_select 0, %s9, %s7
  loop: start=0, step=1, limit=4
  $region2: #{wl_forward.19} parent=0 // loop_pre_header
    _
  $region3: #{wl_forward.19} parent=0 // loop_header
    %s12 = sphi 0, %s16
    %p13 = scmp.ge.s32.totalorder %s12, 4
    %s22 = sphi 0, %s24
    %s25 = sphi 0, %s22
    %s26 = sphi 0, %s25
    %s42 = sphi 0, %s26
    %s46 = sphi 0, %s46
    %s48 = sphi 0, %s46
    %s49 = sphi 0, %s48
    %s63 = sphi 0, %s49
    %s67 = sphi 0, %s67
    %s69 = sphi 0, %s67
    %s70 = sphi 0, %s69
    %s84 = sphi 0, %s70
    %s90 = sphi 0, %s92
    %s93 = sphi 0, %s90
    %s94 = sphi 0, %s93
    %s110 = sphi 0, %s94
    %s114 = sphi 0, %s114
    %s116 = sphi 0, %s114
    %s117 = sphi 0, %s116
    %s131 = sphi 0, %s117
    %s135 = sphi 0, %s135
    %s137 = sphi 0, %s135
    %s138 = sphi 0, %s137
    %s152 = sphi 0, %s138
  $region4: #{wl_forward.19} parent=0 // loop_header_branch
    %15 = sbr.rel (%p13) target = $region8
  $region5: #{wl_forward.19} parent=0 // loop_body
    %s17 = ssub.s32 %s12, 1
    %s18 = ssub.s32 %s12, 2
    %s19 = sadd.s32 %s12, 1
    %s20 = ssub.s32 %s12, %s19
    %p21 = scmp.eq.s32.totalorder %s20, 0
    %s23 = sadd.s32 %s22, 1
    %s24 = scalar_select %p21, %s22, %s23
    %p27 = pneg %p21
    %p28 = scmp.eq.s32.totalorder %s12, 1
    %p29 = por %p27, %p28
    %p30 = scmp.ne.s32.totalorder %s22, %s25
    %p31 = scmp.eq.s32.totalorder %s12, 0
    %p32 = por %p30, %p31
    %p33 = scmp.ne.s32.totalorder %s22, %s25
    %p34 = scmp.eq.s32.totalorder %s17, 1
    %p35 = por %p33, %p34
    %p36 = scmp.ne.s32.totalorder %s25, %s26
    %p37 = scmp.eq.s32.totalorder %s17, 0
    %p38 = por %p36, %p37
    %p39 = scmp.ne.s32.totalorder %s25, %s26
    %p40 = scmp.eq.s32.totalorder %s18, 1
    %p41 = por %p39, %p40
    %p43 = scmp.ne.s32.totalorder %s26, %s42
    %p44 = scmp.eq.s32.totalorder %s18, 0
    %p45 = por %p43, %p44
    %s47 = sadd.s32 %s46, 1
    %p50 = scmp.eq.s32.totalorder %s12, 1
    %p51 = scmp.ne.s32.totalorder %s46, %s48
    %p52 = scmp.eq.s32.totalorder %s12, 0
    %p53 = por %p51, %p52
    %p54 = scmp.ne.s32.totalorder %s46, %s48
    %p55 = scmp.eq.s32.totalorder %s17, 1
    %p56 = por %p54, %p55
    %p57 = scmp.ne.s32.totalorder %s48, %s49
    %p58 = scmp.eq.s32.totalorder %s17, 0
    %p59 = por %p57, %p58
    %p60 = scmp.ne.s32.totalorder %s48, %s49
    %p61 = scmp.eq.s32.totalorder %s18, 1
    %p62 = por %p60, %p61
    %p64 = scmp.ne.s32.totalorder %s49, %s63
    %p65 = scmp.eq.s32.totalorder %s18, 0
    %p66 = por %p64, %p65
    %s68 = sadd.s32 %s67, 1
    %p71 = scmp.eq.s32.totalorder %s12, 1
    %p72 = scmp.ne.s32.totalorder %s67, %s69
    %p73 = scmp.eq.s32.totalorder %s12, 0
    %p74 = por %p72, %p73
    %p75 = scmp.ne.s32.totalorder %s67, %s69
    %p76 = scmp.eq.s32.totalorder %s17, 1
    %p77 = por %p75, %p76
    %p78 = scmp.ne.s32.totalorder %s69, %s70
    %p79 = scmp.eq.s32.totalorder %s17, 0
    %p80 = por %p78, %p79
    %p81 = scmp.ne.s32.totalorder %s69, %s70
    %p82 = scmp.eq.s32.totalorder %s18, 1
    %p83 = por %p81, %p82
    %p85 = scmp.ne.s32.totalorder %s70, %s84
    %p86 = scmp.eq.s32.totalorder %s18, 0
    %p87 = por %p85, %p86
    %s88 = ssub.s32 %s12, %s19
    %p89 = scmp.eq.s32.totalorder %s88, 0
    %s91 = sadd.s32 %s90, 1
    %s92 = scalar_select %p89, %s90, %s91
    %p95 = pneg %p89
    %p96 = scmp.eq.s32.totalorder %s12, 1
    %p97 = por %p95, %p96
    %p98 = scmp.ne.s32.totalorder %s90, %s93
    %p99 = scmp.eq.s32.totalorder %s12, 0
    %p100 = por %p98, %p99
    %p101 = scmp.ne.s32.totalorder %s90, %s93
    %p102 = scmp.eq.s32.totalorder %s17, 1
    %p103 = por %p101, %p102
    %p104 = scmp.ne.s32.totalorder %s93, %s94
    %p105 = scmp.eq.s32.totalorder %s17, 0
    %p106 = por %p104, %p105
    %p107 = scmp.ne.s32.totalorder %s93, %s94
    %p108 = scmp.eq.s32.totalorder %s18, 1
    %p109 = por %p107, %p108
    %p111 = scmp.ne.s32.totalorder %s94, %s110
    %p112 = scmp.eq.s32.totalorder %s18, 0
    %p113 = por %p111, %p112
    %s115 = sadd.s32 %s114, 1
    %p118 = scmp.eq.s32.totalorder %s12, 1
    %p119 = scmp.ne.s32.totalorder %s114, %s116
    %p120 = scmp.eq.s32.totalorder %s12, 0
    %p121 = por %p119, %p120
    %p122 = scmp.ne.s32.totalorder %s114, %s116
    %p123 = scmp.eq.s32.totalorder %s17, 1
    %p124 = por %p122, %p123
    %p125 = scmp.ne.s32.totalorder %s116, %s117
    %p126 = scmp.eq.s32.totalorder %s17, 0
    %p127 = por %p125, %p126
    %p128 = scmp.ne.s32.totalorder %s116, %s117
    %p129 = scmp.eq.s32.totalorder %s18, 1
    %p130 = por %p128, %p129
    %p132 = scmp.ne.s32.totalorder %s117, %s131
    %p133 = scmp.eq.s32.totalorder %s18, 0
    %p134 = por %p132, %p133
    %s136 = sadd.s32 %s135, 1
    %p139 = scmp.eq.s32.totalorder %s12, 1
    %p140 = scmp.ne.s32.totalorder %s135, %s137
    %p141 = scmp.eq.s32.totalorder %s12, 0
    %p142 = por %p140, %p141
    %p143 = scmp.ne.s32.totalorder %s135, %s137
    %p144 = scmp.eq.s32.totalorder %s17, 1
    %p145 = por %p143, %p144
    %p146 = scmp.ne.s32.totalorder %s137, %s138
    %p147 = scmp.eq.s32.totalorder %s17, 0
    %p148 = por %p146, %p147
    %p149 = scmp.ne.s32.totalorder %s137, %s138
    %p150 = scmp.eq.s32.totalorder %s18, 1
    %p151 = por %p149, %p150
    %p153 = scmp.ne.s32.totalorder %s138, %s152
    %p154 = scmp.eq.s32.totalorder %s18, 0
    %p155 = por %p153, %p154
    %p156 = scmp.le.s32.totalorder 1, %s12
    %p157 = scmp.lt.s32.totalorder %s12, 3
    %p158 = pnand %p156, %p157
    %p159 = pneg %p158
    // Predicated region
    $region9: #{wl_forward.19} parent=5 // pred_check
      _
    $region10: #{wl_forward.19} parent=5 // pred_check_branch
      %161 = sbr.rel (%p158) target = $region12
    $region11: #{wl_forward.19} parent=5 // pred_region
      %s162 = ssub.s32 %s12, 1
      // Predicated region
      $region13: #{wl_forward.19} parent=11 // pred_check
        %p163 = pneg %p59
      $region14: #{wl_forward.19} parent=11 // pred_check_branch
        %165 = sbr.rel (%p163) target = $region16
      $region15: #{wl_forward.19} parent=11 // pred_region
        _
      $region16: #{wl_forward.19} parent=11 // pred_fallthru
        _
      // Predicated region
      $region17: #{wl_forward.19} parent=11 // pred_check
        %p166 = pneg %p80
      $region18: #{wl_forward.19} parent=11 // pred_check_branch
        %168 = sbr.rel (%p166) target = $region20
      $region19: #{wl_forward.19} parent=11 // pred_region
        _
      $region20: #{wl_forward.19} parent=11 // pred_fallthru
        _
    $region12: #{wl_forward.19} parent=5 // pred_fallthru
      _
    %p169 = scmp.lt.s32.totalorder %s12, 2
    // Predicated region
    $region21: #{wl_forward.19} parent=5 // pred_check
      %p170 = pneg %p169
    $region22: #{wl_forward.19} parent=5 // pred_check_branch
      %172 = sbr.rel (%p170) target = $region24
    $region23: #{wl_forward.19} parent=5 // pred_region
      // Predicated region
      $region25: #{wl_forward.19} parent=23 // pred_check
        %p173 = pneg %p32
      $region26: #{wl_forward.19} parent=23 // pred_check_branch
        %175 = sbr.rel (%p173) target = $region28
      $region27: #{wl_forward.19} parent=23 // pred_region
        %s176 = smul.u32 8, %s12
        %p177 = scmp.lt.s32.totalorder %s176, 15
        %s178 = scalar_select %p177, %s176, 15
        %s179 = smul.addr %s178, 2
        %s180 = scalar_lea.vmem %s0, %s179
        %s181 = smul.u32 8, %s12
      $region28: #{wl_forward.19} parent=23 // pred_fallthru
        _
    $region24: #{wl_forward.19} parent=5 // pred_fallthru
      _
    %p182 = scmp.le.s32.totalorder 1, %s12
    %p183 = scmp.lt.s32.totalorder %s12, 3
    %p184 = pnand %p182, %p183
    %p185 = pneg %p184
    // Predicated region
    $region29: #{wl_forward.19} parent=5 // pred_check
      _
    $region30: #{wl_forward.19} parent=5 // pred_check_branch
      %187 = sbr.rel (%p184) target = $region32
    $region31: #{wl_forward.19} parent=5 // pred_region
      %s188 = ssub.s32 %s12, 1
      %s189 = smul.u32 8, %s17
      %p190 = scmp.lt.s32.totalorder %s189, 15
      %s191 = scalar_select %p190, %s189, 15
      %s192 = smul.addr %s191, 2
      %s193 = scalar_lea.vmem %s0, %s192
      %p194 = pneg %p38
      %p195 = pneg %p35
      %p196 = pneg %p59
      %p197 = pneg %p56
      %p198 = pneg %p80
      %p199 = pneg %p77
      %p200 = pneg %p106
      %p201 = pneg %p103
      %s202 = smul.u32 8, %s17
      %p203 = scmp.lt.s32.totalorder %s202, 15
      %s204 = scalar_select %p203, %s202, 15
      %s205 = smul.addr %s204, 2
      %s206 = scalar_lea.vmem %s3, %s205
      %p207 = pneg %p127
      %p208 = pneg %p124
      %p209 = pneg %p148
      %p210 = pneg %p145
      %s211 = smul.u32 8, %s17
      %p212 = scmp.lt.s32.totalorder %s211, 15
      %s213 = scalar_select %p212, %s211, 15
      %s214 = smul.addr %s213, 2
      %s215 = scalar_lea.vmem %s0, %s214
      %s216 = smul.u32 8, %s17
      %s217 = smul.u32 8, %s17
      %p218 = scmp.lt.s32.totalorder %s217, 15
      %s219 = scalar_select %p218, %s217, 15
      %s220 = smul.addr %s219, 2
      %s221 = scalar_lea.vmem %s3, %s220
      %s222 = smul.u32 8, %s17
      %p223 = scmp.eq.s32.totalorder %s17, 0
      // Predicated region
      $region33: #{wl_forward.19} parent=31 // pred_check
        %p224 = pneg %p223
      $region34: #{wl_forward.19} parent=31 // pred_check_branch
        %226 = sbr.rel (%p224) target = $region36
      $region35: #{wl_forward.19} parent=31 // pred_region
        %vm227 = vcmask 254976
        %228 = vst.msk [vmem:[#allocation2] sm:$0x3] %vm227, 0.0
        %229 = vst.msk [vmem:[#allocation3] sm:$0x3] %vm227, 0.0
      $region36: #{wl_forward.19} parent=31 // pred_fallthru
        _
      %v230 = vld [vmem:[%s1] sm:$0xff]
      %v231 = vld [vmem:[%s1 + $0x8] sm:$0xff]
      %v232 = vld [vmem:[%s1 + $0x10] sm:$0xff]
      %v233 = vld [vmem:[%s1 + $0x18] sm:$0xff]
      %v234 = vld [vmem:[%s215] sm:$0x3]
      %v235 = vld [vmem:[#allocation2] sm:$0x3]
      %vm236 = vcmask 261120
      %v238 = vsel %vm236, %v235, 0
      %240 = vmatprep.subr.mxu0 0.0
      %241 = vmatpush1.msra.mxu0 %v230
      %242 = vmatprep.subr.mxu0 0.0
      %243 = vmatpush1.msra.mxu0 %v231
      %244 = vmatprep.subr.mxu0 0.0
      %245 = vmatpush1.msra.mxu0 %v232
      %246 = vmatprep.subr.mxu0 0.0
      %247 = vmatpush1.msra.mxu0 %v233
      %248 = vmatprep.subr.mxu0 0.0
      %249 = vmatpush1.msra.mxu0 0.0
      %250 = vmatprep.subr.mxu0 0.0
      %251 = vmatpush1.msra.mxu0 0.0
      %252 = vmatprep.subr.mxu0 0.0
      %253 = vmatpush1.msra.mxu0 0.0
      %254 = vmatprep.subr.mxu0 0.0
      %255 = vmatpush1.msra.mxu0 0.0
      %256 = vmatprep.subr.mxu0 0.0
      %257 = vmatpush1.msra.mxu0 0.0
      %258 = vmatprep.subr.mxu0 0.0
      %259 = vmatpush1.msra.mxu0 0.0
      %260 = vmatprep.subr.mxu0 0.0
      %261 = vmatpush1.msra.mxu0 0.0
      %262 = vmatprep.subr.mxu0 0.0
      %263 = vmatpush1.msra.mxu0 0.0
      %264 = vmatprep.subr.mxu0 0.0
      %265 = vmatpush1.msra.mxu0 0.0
      %266 = vmatprep.subr.mxu0 0.0
      %267 = vmatpush1.msra.mxu0 0.0
      %268 = vmatprep.subr.mxu0 0.0
      %269 = vmatpush1.msra.mxu0 0.0
      %270 = vmatprep.subr.mxu0 0.0
      %271 = vmatpush1.msra.mxu0 0.0
      %272 = vmatprep.subr.mxu0 0.0
      %273 = vmatpush1.msra.mxu0 0.0
      %274 = vmatprep.subr.mxu0 0.0
      %275 = vmatpush1.msra.mxu0 0.0
      %276 = vmatprep.subr.mxu0 0.0
      %277 = vmatpush1.msra.mxu0 0.0
      %278 = vmatprep.subr.mxu0 0.0
      %279 = vmatpush1.msra.mxu0 0.0
      %280 = vmatprep.subr.mxu0 0.0
      %281 = vmatpush1.msra.mxu0 0.0
      %282 = vmatprep.subr.mxu0 0.0
      %283 = vmatpush1.msra.mxu0 0.0
      %284 = vmatprep.subr.mxu0 0.0
      %285 = vmatpush1.msra.mxu0 0.0
      %286 = vmatprep.subr.mxu0 0.0
      %287 = vmatpush1.msra.mxu0 0.0
      %288 = vmatprep.subr.mxu0 0.0
      %289 = vmatpush1.msra.mxu0 0.0
      %290 = vmatprep.subr.mxu0 0.0
      %291 = vmatpush1.msra.mxu0 0.0
      %292 = vmatprep.subr.mxu0 0.0
      %293 = vmatpush1.msra.mxu0 0.0
      %294 = vmatprep.subr.mxu0 0.0
      %295 = vmatpush1.msra.mxu0 0.0
      %296 = vmatprep.subr.mxu0 0.0
      %297 = vmatpush1.msra.mxu0 0.0
      %298 = vmatprep.subr.mxu0 0.0
      %299 = vmatpush1.msra.mxu0 0.0
      %300 = vmatprep.subr.mxu0 0.0
      %301 = vmatpush1.msra.mxu0 0.0
      %302 = vmatprep.subr.mxu0 0.0
      %303 = vmatpush1.msra.mxu0 0.0
      %304 = vmatprep.mubr.f32.mxu0 0.0
      %305 = vmatmul.mubr.f32.gmra.mrb[0].mxu0 %v238
      %v306 = vpop.f32.mrb[0].mxu0
      %v307 = vadd.f32 0.0, %v306
      %v308 = vpop.f32.mrb[0].mxu0
      %309 = vdwg.mxu0
      %v310 = vadd.f32 %v234, %v307
      %v311 = vxor.u32 %v310, 2147483648
      %v312 = vmul.f32 %v311, 1.442695
      %v313 = vpow.pop %v312
      %v314 = vadd.f32 %v313, 1.0
      %v315 = vrcp.pop %v314
      %v316 = vmul.f32 1.0, %v315
      %v317 = vtanh.pop %v310
      %v318 = vld [vmem:[#allocation3] sm:$0x3]
      %320 = vrot.lane.b32.xlu0 %v318, 32
      %v321 = vpop.permute.xlu0 %320
      %v323 = vmul.f32 %v316, %v321
      %325 = vrot.lane.b32.xlu0 %v317, 64
      %v326 = vpop.permute.xlu0 %325
      %v328 = vmul.f32 %v316, %v326
      %330 = vrot.lane.b32.xlu0 %v328, 32
      %v331 = vpop.permute.xlu0 %330
      %v333 = vadd.f32 %v323, %v331
      %v334 = vtanh.pop %v333
      %336 = vrot.lane.b32.xlu0 %v334, 64
      %v337 = vpop.permute.xlu0 %336
      %v339 = vmul.f32 %v316, %v337
      %341 = vrot.lane.b32.xlu0 %v333, 96
      %v342 = vpop.permute.xlu0 %341
      %vm344 = vcmask 254976
      %345 = vst.msk [vmem:[#allocation3] sm:$0x3] %vm344, %v342
      %347 = vrot.lane.b32.xlu0 %v339, 32
      %v348 = vpop.permute.xlu0 %347
      %350 = vst.msk [vmem:[#allocation2] sm:$0x3] %vm344, %v348
      %v351 = vld [vmem:[%s2] sm:$0xff]
      %v352 = vld [vmem:[%s2 + $0x8] sm:$0xff]
      %v353 = vld [vmem:[%s2 + $0x10] sm:$0xff]
      %v354 = vld [vmem:[%s2 + $0x18] sm:$0xff]
      %v355 = vsel %vm236, %v348, 0
      %357 = vmatprep.subr.mxu0 0.0
      %358 = vmatpush1.msra.mxu0 %v351
      %359 = vmatprep.subr.mxu0 0.0
      %360 = vmatpush1.msra.mxu0 %v352
      %361 = vmatprep.subr.mxu0 0.0
      %362 = vmatpush1.msra.mxu0 %v353
      %363 = vmatprep.subr.mxu0 0.0
      %364 = vmatpush1.msra.mxu0 %v354
      %365 = vmatprep.subr.mxu0 0.0
      %366 = vmatpush1.msra.mxu0 0.0
      %367 = vmatprep.subr.mxu0 0.0
      %368 = vmatpush1.msra.mxu0 0.0
      %369 = vmatprep.subr.mxu0 0.0
      %370 = vmatpush1.msra.mxu0 0.0
      %371 = vmatprep.subr.mxu0 0.0
      %372 = vmatpush1.msra.mxu0 0.0
      %373 = vmatprep.subr.mxu0 0.0
      %374 = vmatpush1.msra.mxu0 0.0
      %375 = vmatprep.subr.mxu0 0.0
      %376 = vmatpush1.msra.mxu0 0.0
      %377 = vmatprep.subr.mxu0 0.0
      %378 = vmatpush1.msra.mxu0 0.0
      %379 = vmatprep.subr.mxu0 0.0
      %380 = vmatpush1.msra.mxu0 0.0
      %381 = vmatprep.subr.mxu0 0.0
      %382 = vmatpush1.msra.mxu0 0.0
      %383 = vmatprep.subr.mxu0 0.0
      %384 = vmatpush1.msra.mxu0 0.0
      %385 = vmatprep.subr.mxu0 0.0
      %386 = vmatpush1.msra.mxu0 0.0
      %387 = vmatprep.subr.mxu0 0.0
      %388 = vmatpush1.msra.mxu0 0.0
      %389 = vmatprep.subr.mxu0 0.0
      %390 = vmatpush1.msra.mxu0 0.0
      %391 = vmatprep.subr.mxu0 0.0
      %392 = vmatpush1.msra.mxu0 0.0
      %393 = vmatprep.subr.mxu0 0.0
      %394 = vmatpush1.msra.mxu0 0.0
      %395 = vmatprep.subr.mxu0 0.0
      %396 = vmatpush1.msra.mxu0 0.0
      %397 = vmatprep.subr.mxu0 0.0
      %398 = vmatpush1.msra.mxu0 0.0
      %399 = vmatprep.subr.mxu0 0.0
      %400 = vmatpush1.msra.mxu0 0.0
      %401 = vmatprep.subr.mxu0 0.0
      %402 = vmatpush1.msra.mxu0 0.0
      %403 = vmatprep.subr.mxu0 0.0
      %404 = vmatpush1.msra.mxu0 0.0
      %405 = vmatprep.subr.mxu0 0.0
      %406 = vmatpush1.msra.mxu0 0.0
      %407 = vmatprep.subr.mxu0 0.0
      %408 = vmatpush1.msra.mxu0 0.0
      %409 = vmatprep.subr.mxu0 0.0
      %410 = vmatpush1.msra.mxu0 0.0
      %411 = vmatprep.subr.mxu0 0.0
      %412 = vmatpush1.msra.mxu0 0.0
      %413 = vmatprep.subr.mxu0 0.0
      %414 = vmatpush1.msra.mxu0 0.0
      %415 = vmatprep.subr.mxu0 0.0
      %416 = vmatpush1.msra.mxu0 0.0
      %417 = vmatprep.subr.mxu0 0.0
      %418 = vmatpush1.msra.mxu0 0.0
      %419 = vmatprep.subr.mxu0 0.0
      %420 = vmatpush1.msra.mxu0 0.0
      %421 = vmatprep.mubr.f32.mxu0 0.0
      %422 = vmatmul.mubr.f32.gmra.mrb[0].mxu0 %v355
      %v423 = vpop.f32.mrb[0].mxu0
      %v424 = vadd.f32 0.0, %v423
      %v425 = vpop.f32.mrb[0].mxu0
      %426 = vdwg.mxu0
      %v427 = vxor.u32 %v424, 2147483648
      %v428 = vmul.f32 %v427, 1.442695
      %v429 = vpow.pop %v428
      %v430 = vadd.f32 %v429, 1.0
      %v431 = vrcp.pop %v430
      %v432 = vmul.f32 1.0, %v431
      %vm433 = vcmask 1024
      %434 = vst.msk [vmem:[%s221] sm:$0x3] %vm433, %v432
      %s435 = scalar_lea.vmem %s215, 2
      %v436 = vld [vmem:[%s435] sm:$0x3]
      %v437 = vld [vmem:[#allocation2] sm:$0x3]
      %v439 = vsel %vm236, %v437, 0
      %441 = vmatprep.subr.mxu0 0.0
      %442 = vmatpush1.msra.mxu0 %v230
      %443 = vmatprep.subr.mxu0 0.0
      %444 = vmatpush1.msra.mxu0 %v231
      %445 = vmatprep.subr.mxu0 0.0
      %446 = vmatpush1.msra.mxu0 %v232
      %447 = vmatprep.subr.mxu0 0.0
      %448 = vmatpush1.msra.mxu0 %v233
      %449 = vmatprep.subr.mxu0 0.0
      %450 = vmatpush1.msra.mxu0 0.0
      %451 = vmatprep.subr.mxu0 0.0
      %452 = vmatpush1.msra.mxu0 0.0
      %453 = vmatprep.subr.mxu0 0.0
      %454 = vmatpush1.msra.mxu0 0.0
      %455 = vmatprep.subr.mxu0 0.0
      %456 = vmatpush1.msra.mxu0 0.0
      %457 = vmatprep.subr.mxu0 0.0
      %458 = vmatpush1.msra.mxu0 0.0
      %459 = vmatprep.subr.mxu0 0.0
      %460 = vmatpush1.msra.mxu0 0.0
      %461 = vmatprep.subr.mxu0 0.0
      %462 = vmatpush1.msra.mxu0 0.0
      %463 = vmatprep.subr.mxu0 0.0
      %464 = vmatpush1.msra.mxu0 0.0
      %465 = vmatprep.subr.mxu0 0.0
      %466 = vmatpush1.msra.mxu0 0.0
      %467 = vmatprep.subr.mxu0 0.0
      %468 = vmatpush1.msra.mxu0 0.0
      %469 = vmatprep.subr.mxu0 0.0
      %470 = vmatpush1.msra.mxu0 0.0
      %471 = vmatprep.subr.mxu0 0.0
      %472 = vmatpush1.msra.mxu0 0.0
      %473 = vmatprep.subr.mxu0 0.0
      %474 = vmatpush1.msra.mxu0 0.0
      %475 = vmatprep.subr.mxu0 0.0
      %476 = vmatpush1.msra.mxu0 0.0
      %477 = vmatprep.subr.mxu0 0.0
      %478 = vmatpush1.msra.mxu0 0.0
      %479 = vmatprep.subr.mxu0 0.0
      %480 = vmatpush1.msra.mxu0 0.0
      %481 = vmatprep.subr.mxu0 0.0
      %482 = vmatpush1.msra.mxu0 0.0
      %483 = vmatprep.subr.mxu0 0.0
      %484 = vmatpush1.msra.mxu0 0.0
      %485 = vmatprep.subr.mxu0 0.0
      %486 = vmatpush1.msra.mxu0 0.0
      %487 = vmatprep.subr.mxu0 0.0
      %488 = vmatpush1.msra.mxu0 0.0
      %489 = vmatprep.subr.mxu0 0.0
      %490 = vmatpush1.msra.mxu0 0.0
      %491 = vmatprep.subr.mxu0 0.0
      %492 = vmatpush1.msra.mxu0 0.0
      %493 = vmatprep.subr.mxu0 0.0
      %494 = vmatpush1.msra.mxu0 0.0
      %495 = vmatprep.subr.mxu0 0.0
      %496 = vmatpush1.msra.mxu0 0.0
      %497 = vmatprep.subr.mxu0 0.0
      %498 = vmatpush1.msra.mxu0 0.0
      %499 = vmatprep.subr.mxu0 0.0
      %500 = vmatpush1.msra.mxu0 0.0
      %501 = vmatprep.subr.mxu0 0.0
      %502 = vmatpush1.msra.mxu0 0.0
      %503 = vmatprep.subr.mxu0 0.0
      %504 = vmatpush1.msra.mxu0 0.0
      %505 = vmatprep.mubr.f32.mxu0 0.0
      %506 = vmatmul.mubr.f32.gmra.mrb[0].mxu0 %v439
      %v507 = vpop.f32.mrb[0].mxu0
      %v508 = vadd.f32 0.0, %v507
      %v509 = vpop.f32.mrb[0].mxu0
      %510 = vdwg.mxu0
      %v511 = vadd.f32 %v436, %v508
      %v512 = vxor.u32 %v511, 2147483648
      %v513 = vmul.f32 %v512, 1.442695
      %v514 = vpow.pop %v513
      %v515 = vadd.f32 %v514, 1.0
      %v516 = vrcp.pop %v515
      %v517 = vmul.f32 1.0, %v516
      %v518 = vtanh.pop %v511
      %v519 = vld [vmem:[#allocation3] sm:$0x3]
      %521 = vrot.lane.b32.xlu0 %v519, 32
      %v522 = vpop.permute.xlu0 %521
      %v524 = vmul.f32 %v517, %v522
      %526 = vrot.lane.b32.xlu0 %v518, 64
      %v527 = vpop.permute.xlu0 %526
      %v529 = vmul.f32 %v517, %v527
      %531 = vrot.lane.b32.xlu0 %v529, 32
      %v532 = vpop.permute.xlu0 %531
      %v534 = vadd.f32 %v524, %v532
      %v535 = vtanh.pop %v534
      %537 = vrot.lane.b32.xlu0 %v535, 64
      %v538 = vpop.permute.xlu0 %537
      %v540 = vmul.f32 %v517, %v538
      %542 = vrot.lane.b32.xlu0 %v534, 96
      %v543 = vpop.permute.xlu0 %542
      %545 = vst.msk [vmem:[#allocation3] sm:$0x3] %vm344, %v543
      %547 = vrot.lane.b32.xlu0 %v540, 32
      %v548 = vpop.permute.xlu0 %547
      %550 = vst.msk [vmem:[#allocation2] sm:$0x3] %vm344, %v548
      %v551 = vld [vmem:[%s2] sm:$0xff]
      %v552 = vld [vmem:[%s2 + $0x8] sm:$0xff]
      %v553 = vld [vmem:[%s2 + $0x10] sm:$0xff]
      %v554 = vld [vmem:[%s2 + $0x18] sm:$0xff]
      %v555 = vsel %vm236, %v548, 0
      %557 = vmatprep.subr.mxu0 0.0
      %558 = vmatpush1.msra.mxu0 %v551
      %559 = vmatprep.subr.mxu0 0.0
      %560 = vmatpush1.msra.mxu0 %v552
      %561 = vmatprep.subr.mxu0 0.0
      %562 = vmatpush1.msra.mxu0 %v553
      %563 = vmatprep.subr.mxu0 0.0
      %564 = vmatpush1.msra.mxu0 %v554
      %565 = vmatprep.subr.mxu0 0.0
      %566 = vmatpush1.msra.mxu0 0.0
      %567 = vmatprep.subr.mxu0 0.0
      %568 = vmatpush1.msra.mxu0 0.0
      %569 = vmatprep.subr.mxu0 0.0
      %570 = vmatpush1.msra.mxu0 0.0
      %571 = vmatprep.subr.mxu0 0.0
      %572 = vmatpush1.msra.mxu0 0.0
      %573 = vmatprep.subr.mxu0 0.0
      %574 = vmatpush1.msra.mxu0 0.0
      %575 = vmatprep.subr.mxu0 0.0
      %576 = vmatpush1.msra.mxu0 0.0
      %577 = vmatprep.subr.mxu0 0.0
      %578 = vmatpush1.msra.mxu0 0.0
      %579 = vmatprep.subr.mxu0 0.0
      %580 = vmatpush1.msra.mxu0 0.0
      %581 = vmatprep.subr.mxu0 0.0
      %582 = vmatpush1.msra.mxu0 0.0
      %583 = vmatprep.subr.mxu0 0.0
      %584 = vmatpush1.msra.mxu0 0.0
      %585 = vmatprep.subr.mxu0 0.0
      %586 = vmatpush1.msra.mxu0 0.0
      %587 = vmatprep.subr.mxu0 0.0
      %588 = vmatpush1.msra.mxu0 0.0
      %589 = vmatprep.subr.mxu0 0.0
      %590 = vmatpush1.msra.mxu0 0.0
      %591 = vmatprep.subr.mxu0 0.0
      %592 = vmatpush1.msra.mxu0 0.0
      %593 = vmatprep.subr.mxu0 0.0
      %594 = vmatpush1.msra.mxu0 0.0
      %595 = vmatprep.subr.mxu0 0.0
      %596 = vmatpush1.msra.mxu0 0.0
      %597 = vmatprep.subr.mxu0 0.0
      %598 = vmatpush1.msra.mxu0 0.0
      %599 = vmatprep.subr.mxu0 0.0
      %600 = vmatpush1.msra.mxu0 0.0
      %601 = vmatprep.subr.mxu0 0.0
      %602 = vmatpush1.msra.mxu0 0.0
      %603 = vmatprep.subr.mxu0 0.0
      %604 = vmatpush1.msra.mxu0 0.0
      %605 = vmatprep.subr.mxu0 0.0
      %606 = vmatpush1.msra.mxu0 0.0
      %607 = vmatprep.subr.mxu0 0.0
      %608 = vmatpush1.msra.mxu0 0.0
      %609 = vmatprep.subr.mxu0 0.0
      %610 = vmatpush1.msra.mxu0 0.0
      %611 = vmatprep.subr.mxu0 0.0
      %612 = vmatpush1.msra.mxu0 0.0
      %613 = vmatprep.subr.mxu0 0.0
      %614 = vmatpush1.msra.mxu0 0.0
      %615 = vmatprep.subr.mxu0 0.0
      %616 = vmatpush1.msra.mxu0 0.0
      %617 = vmatprep.subr.mxu0 0.0
      %618 = vmatpush1.msra.mxu0 0.0
      %619 = vmatprep.subr.mxu0 0.0
      %620 = vmatpush1.msra.mxu0 0.0
      %621 = vmatprep.mubr.f32.mxu0 0.0
      %622 = vmatmul.mubr.f32.gmra.mrb[0].mxu0 %v555
      %v623 = vpop.f32.mrb[0].mxu0
      %v624 = vadd.f32 0.0, %v623
      %v625 = vpop.f32.mrb[0].mxu0
      %626 = vdwg.mxu0
      %v627 = vxor.u32 %v624, 2147483648
      %v628 = vmul.f32 %v627, 1.442695
      %v629 = vpow.pop %v628
      %v630 = vadd.f32 %v629, 1.0
      %v631 = vrcp.pop %v630
      %v632 = vmul.f32 1.0, %v631
      %s633 = scalar_lea.vmem %s221, 2
      %634 = vst.msk [vmem:[%s633] sm:$0x3] %vm433, %v632
      %s635 = scalar_lea.vmem %s215, 4
      %v636 = vld [vmem:[%s635] sm:$0x3]
      %v637 = vld [vmem:[#allocation2] sm:$0x3]
      %v639 = vsel %vm236, %v637, 0
      %641 = vmatprep.subr.mxu0 0.0
      %642 = vmatpush1.msra.mxu0 %v230
      %643 = vmatprep.subr.mxu0 0.0
      %644 = vmatpush1.msra.mxu0 %v231
      %645 = vmatprep.subr.mxu0 0.0
      %646 = vmatpush1.msra.mxu0 %v232
      %647 = vmatprep.subr.mxu0 0.0
      %648 = vmatpush1.msra.mxu0 %v233
      %649 = vmatprep.subr.mxu0 0.0
      %650 = vmatpush1.msra.mxu0 0.0
      %651 = vmatprep.subr.mxu0 0.0
      %652 = vmatpush1.msra.mxu0 0.0
      %653 = vmatprep.subr.mxu0 0.0
      %654 = vmatpush1.msra.mxu0 0.0
      %655 = vmatprep.subr.mxu0 0.0
      %656 = vmatpush1.msra.mxu0 0.0
      %657 = vmatprep.subr.mxu0 0.0
      %658 = vmatpush1.msra.mxu0 0.0
      %659 = vmatprep.subr.mxu0 0.0
      %660 = vmatpush1.msra.mxu0 0.0
      %661 = vmatprep.subr.mxu0 0.0
      %662 = vmatpush1.msra.mxu0 0.0
      %663 = vmatprep.subr.mxu0 0.0
      %664 = vmatpush1.msra.mxu0 0.0
      %665 = vmatprep.subr.mxu0 0.0
      %666 = vmatpush1.msra.mxu0 0.0
      %667 = vmatprep.subr.mxu0 0.0
      %668 = vmatpush1.msra.mxu0 0.0
      %669 = vmatprep.subr.mxu0 0.0
      %670 = vmatpush1.msra.mxu0 0.0
      %671 = vmatprep.subr.mxu0 0.0
      %672 = vmatpush1.msra.mxu0 0.0
      %673 = vmatprep.subr.mxu0 0.0
      %674 = vmatpush1.msra.mxu0 0.0
      %675 = vmatprep.subr.mxu0 0.0
      %676 = vmatpush1.msra.mxu0 0.0
      %677 = vmatprep.subr.mxu0 0.0
      %678 = vmatpush1.msra.mxu0 0.0
      %679 = vmatprep.subr.mxu0 0.0
      %680 = vmatpush1.msra.mxu0 0.0
      %681 = vmatprep.subr.mxu0 0.0
      %682 = vmatpush1.msra.mxu0 0.0
      %683 = vmatprep.subr.mxu0 0.0
      %684 = vmatpush1.msra.mxu0 0.0
      %685 = vmatprep.subr.mxu0 0.0
      %686 = vmatpush1.msra.mxu0 0.0
      %687 = vmatprep.subr.mxu0 0.0
      %688 = vmatpush1.msra.mxu0 0.0
      %689 = vmatprep.subr.mxu0 0.0
      %690 = vmatpush1.msra.mxu0 0.0
      %691 = vmatprep.subr.mxu0 0.0
      %692 = vmatpush1.msra.mxu0 0.0
      %693 = vmatprep.subr.mxu0 0.0
      %694 = vmatpush1.msra.mxu0 0.0
      %695 = vmatprep.subr.mxu0 0.0
      %696 = vmatpush1.msra.mxu0 0.0
      %697 = vmatprep.subr.mxu0 0.0
      %698 = vmatpush1.msra.mxu0 0.0
      %699 = vmatprep.subr.mxu0 0.0
      %700 = vmatpush1.msra.mxu0 0.0
      %701 = vmatprep.subr.mxu0 0.0
      %702 = vmatpush1.msra.mxu0 0.0
      %703 = vmatprep.subr.mxu0 0.0
      %704 = vmatpush1.msra.mxu0 0.0
      %705 = vmatprep.mubr.f32.mxu0 0.0
      %706 = vmatmul.mubr.f32.gmra.mrb[0].mxu0 %v639
      %v707 = vpop.f32.mrb[0].mxu0
      %v708 = vadd.f32 0.0, %v707
      %v709 = vpop.f32.mrb[0].mxu0
      %710 = vdwg.mxu0
      %v711 = vadd.f32 %v636, %v708
      %v712 = vxor.u32 %v711, 2147483648
      %v713 = vmul.f32 %v712, 1.442695
      %v714 = vpow.pop %v713
      %v715 = vadd.f32 %v714, 1.0
      %v716 = vrcp.pop %v715
      %v717 = vmul.f32 1.0, %v716
      %v718 = vtanh.pop %v711
      %v719 = vld [vmem:[#allocation3] sm:$0x3]
      %721 = vrot.lane.b32.xlu0 %v719, 32
      %v722 = vpop.permute.xlu0 %721
      %v724 = vmul.f32 %v717, %v722
      %726 = vrot.lane.b32.xlu0 %v718, 64
      %v727 = vpop.permute.xlu0 %726
      %v729 = vmul.f32 %v717, %v727
      %731 = vrot.lane.b32.xlu0 %v729, 32
      %v732 = vpop.permute.xlu0 %731
      %v734 = vadd.f32 %v724, %v732
      %v735 = vtanh.pop %v734
      %737 = vrot.lane.b32.xlu0 %v735, 64
      %v738 = vpop.permute.xlu0 %737
      %v740 = vmul.f32 %v717, %v738
      %742 = vrot.lane.b32.xlu0 %v734, 96
      %v743 = vpop.permute.xlu0 %742
      %745 = vst.msk [vmem:[#allocation3] sm:$0x3] %vm344, %v743
      %747 = vrot.lane.b32.xlu0 %v740, 32
      %v748 = vpop.permute.xlu0 %747
      %750 = vst.msk [vmem:[#allocation2] sm:$0x3] %vm344, %v748
      %v751 = vld [vmem:[%s2] sm:$0xff]
      %v752 = vld [vmem:[%s2 + $0x8] sm:$0xff]
      %v753 = vld [vmem:[%s2 + $0x10] sm:$0xff]
      %v754 = vld [vmem:[%s2 + $0x18] sm:$0xff]
      %v755 = vsel %vm236, %v748, 0
      %757 = vmatprep.subr.mxu0 0.0
      %758 = vmatpush1.msra.mxu0 %v751
      %759 = vmatprep.subr.mxu0 0.0
      %760 = vmatpush1.msra.mxu0 %v752
      %761 = vmatprep.subr.mxu0 0.0
      %762 = vmatpush1.msra.mxu0 %v753
      %763 = vmatprep.subr.mxu0 0.0
      %764 = vmatpush1.msra.mxu0 %v754
      %765 = vmatprep.subr.mxu0 0.0
      %766 = vmatpush1.msra.mxu0 0.0
      %767 = vmatprep.subr.mxu0 0.0
      %768 = vmatpush1.msra.mxu0 0.0
      %769 = vmatprep.subr.mxu0 0.0
      %770 = vmatpush1.msra.mxu0 0.0
      %771 = vmatprep.subr.mxu0 0.0
      %772 = vmatpush1.msra.mxu0 0.0
      %773 = vmatprep.subr.mxu0 0.0
      %774 = vmatpush1.msra.mxu0 0.0
      %775 = vmatprep.subr.mxu0 0.0
      %776 = vmatpush1.msra.mxu0 0.0
      %777 = vmatprep.subr.mxu0 0.0
      %778 = vmatpush1.msra.mxu0 0.0
      %779 = vmatprep.subr.mxu0 0.0
      %780 = vmatpush1.msra.mxu0 0.0
      %781 = vmatprep.subr.mxu0 0.0
      %782 = vmatpush1.msra.mxu0 0.0
      %783 = vmatprep.subr.mxu0 0.0
      %784 = vmatpush1.msra.mxu0 0.0
      %785 = vmatprep.subr.mxu0 0.0
      %786 = vmatpush1.msra.mxu0 0.0
      %787 = vmatprep.subr.mxu0 0.0
      %788 = vmatpush1.msra.mxu0 0.0
      %789 = vmatprep.subr.mxu0 0.0
      %790 = vmatpush1.msra.mxu0 0.0
      %791 = vmatprep.subr.mxu0 0.0
      %792 = vmatpush1.msra.mxu0 0.0
      %793 = vmatprep.subr.mxu0 0.0
      %794 = vmatpush1.msra.mxu0 0.0
      %795 = vmatprep.subr.mxu0 0.0
      %796 = vmatpush1.msra.mxu0 0.0
      %797 = vmatprep.subr.mxu0 0.0
      %798 = vmatpush1.msra.mxu0 0.0
      %799 = vmatprep.subr.mxu0 0.0
      %800 = vmatpush1.msra.mxu0 0.0
      %801 = vmatprep.subr.mxu0 0.0
      %802 = vmatpush1.msra.mxu0 0.0
      %803 = vmatprep.subr.mxu0 0.0
      %804 = vmatpush1.msra.mxu0 0.0
      %805 = vmatprep.subr.mxu0 0.0
      %806 = vmatpush1.msra.mxu0 0.0
      %807 = vmatprep.subr.mxu0 0.0
      %808 = vmatpush1.msra.mxu0 0.0
      %809 = vmatprep.subr.mxu0 0.0
      %810 = vmatpush1.msra.mxu0 0.0
      %811 = vmatprep.subr.mxu0 0.0
      %812 = vmatpush1.msra.mxu0 0.0
      %813 = vmatprep.subr.mxu0 0.0
      %814 = vmatpush1.msra.mxu0 0.0
      %815 = vmatprep.subr.mxu0 0.0
      %816 = vmatpush1.msra.mxu0 0.0
      %817 = vmatprep.subr.mxu0 0.0
      %818 = vmatpush1.msra.mxu0 0.0
      %819 = vmatprep.subr.mxu0 0.0
      %820 = vmatpush1.msra.mxu0 0.0
      %821 = vmatprep.mubr.f32.mxu0 0.0
      %822 = vmatmul.mubr.f32.gmra.mrb[0].mxu0 %v755
      %v823 = vpop.f32.mrb[0].mxu0
      %v824 = vadd.f32 0.0, %v823
      %v825 = vpop.f32.mrb[0].mxu0
      %826 = vdwg.mxu0
      %v827 = vxor.u32 %v824, 2147483648
      %v828 = vmul.f32 %v827, 1.442695
      %v829 = vpow.pop %v828
      %v830 = vadd.f32 %v829, 1.0
      %v831 = vrcp.pop %v830
      %v832 = vmul.f32 1.0, %v831
      %s833 = scalar_lea.vmem %s221, 4
      %834 = vst.msk [vmem:[%s833] sm:$0x3] %vm433, %v832
      %s835 = scalar_lea.vmem %s215, 6
      %v836 = vld [vmem:[%s835] sm:$0x3]
      %v837 = vld [vmem:[#allocation2] sm:$0x3]
      %v839 = vsel %vm236, %v837, 0
      %841 = vmatprep.subr.mxu0 0.0
      %842 = vmatpush1.msra.mxu0 %v230
      %843 = vmatprep.subr.mxu0 0.0
      %844 = vmatpush1.msra.mxu0 %v231
      %845 = vmatprep.subr.mxu0 0.0
      %846 = vmatpush1.msra.mxu0 %v232
      %847 = vmatprep.subr.mxu0 0.0
      %848 = vmatpush1.msra.mxu0 %v233
      %849 = vmatprep.subr.mxu0 0.0
      %850 = vmatpush1.msra.mxu0 0.0
      %851 = vmatprep.subr.mxu0 0.0
      %852 = vmatpush1.msra.mxu0 0.0
      %853 = vmatprep.subr.mxu0 0.0
      %854 = vmatpush1.msra.mxu0 0.0
      %855 = vmatprep.subr.mxu0 0.0
      %856 = vmatpush1.msra.mxu0 0.0
      %857 = vmatprep.subr.mxu0 0.0
      %858 = vmatpush1.msra.mxu0 0.0
      %859 = vmatprep.subr.mxu0 0.0
      %860 = vmatpush1.msra.mxu0 0.0
      %861 = vmatprep.subr.mxu0 0.0
      %862 = vmatpush1.msra.mxu0 0.0
      %863 = vmatprep.subr.mxu0 0.0
      %864 = vmatpush1.msra.mxu0 0.0
      %865 = vmatprep.subr.mxu0 0.0
      %866 = vmatpush1.msra.mxu0 0.0
      %867 = vmatprep.subr.mxu0 0.0
      %868 = vmatpush1.msra.mxu0 0.0
      %869 = vmatprep.subr.mxu0 0.0
      %870 = vmatpush1.msra.mxu0 0.0
      %871 = vmatprep.subr.mxu0 0.0
      %872 = vmatpush1.msra.mxu0 0.0
      %873 = vmatprep.subr.mxu0 0.0
      %874 = vmatpush1.msra.mxu0 0.0
      %875 = vmatprep.subr.mxu0 0.0
      %876 = vmatpush1.msra.mxu0 0.0
      %877 = vmatprep.subr.mxu0 0.0
      %878 = vmatpush1.msra.mxu0 0.0
      %879 = vmatprep.subr.mxu0 0.0
      %880 = vmatpush1.msra.mxu0 0.0
      %881 = vmatprep.subr.mxu0 0.0
      %882 = vmatpush1.msra.mxu0 0.0
      %883 = vmatprep.subr.mxu0 0.0
      %884 = vmatpush1.msra.mxu0 0.0
      %885 = vmatprep.subr.mxu0 0.0
      %886 = vmatpush1.msra.mxu0 0.0
      %887 = vmatprep.subr.mxu0 0.0
      %888 = vmatpush1.msra.mxu0 0.0
      %889 = vmatprep.subr.mxu0 0.0
      %890 = vmatpush1.msra.mxu0 0.0
      %891 = vmatprep.subr.mxu0 0.0
      %892 = vmatpush1.msra.mxu0 0.0
      %893 = vmatprep.subr.mxu0 0.0
      %894 = vmatpush1.msra.mxu0 0.0
      %895 = vmatprep.subr.mxu0 0.0
      %896 = vmatpush1.msra.mxu0 0.0
      %897 = vmatprep.subr.mxu0 0.0
      %898 = vmatpush1.msra.mxu0 0.0
      %899 = vmatprep.subr.mxu0 0.0
      %900 = vmatpush1.msra.mxu0 0.0
      %901 = vmatprep.subr.mxu0 0.0
      %902 = vmatpush1.msra.mxu0 0.0
      %903 = vmatprep.subr.mxu0 0.0
      %904 = vmatpush1.msra.mxu0 0.0
      %905 = vmatprep.mubr.f32.mxu0 0.0
      %906 = vmatmul.mubr.f32.gmra.mrb[0].mxu0 %v839
      %v907 = vpop.f32.mrb[0].mxu0
      %v908 = vadd.f32 0.0, %v907
      %v909 = vpop.f32.mrb[0].mxu0
      %910 = vdwg.mxu0
      %v911 = vadd.f32 %v836, %v908
      %v912 = vxor.u32 %v911, 2147483648
      %v913 = vmul.f32 %v912, 1.442695
      %v914 = vpow.pop %v913
      %v915 = vadd.f32 %v914, 1.0
      %v916 = vrcp.pop %v915
      %v917 = vmul.f32 1.0, %v916
      %v918 = vtanh.pop %v911
      %v919 = vld [vmem:[#allocation3] sm:$0x3]
      %921 = vrot.lane.b32.xlu0 %v919, 32
      %v922 = vpop.permute.xlu0 %921
      %v924 = vmul.f32 %v917, %v922
      %926 = vrot.lane.b32.xlu0 %v918, 64
      %v927 = vpop.permute.xlu0 %926
      %v929 = vmul.f32 %v917, %v927
      %931 = vrot.lane.b32.xlu0 %v929, 32
      %v932 = vpop.permute.xlu0 %931
      %v934 = vadd.f32 %v924, %v932
      %v935 = vtanh.pop %v934
      %937 = vrot.lane.b32.xlu0 %v935, 64
      %v938 = vpop.permute.xlu0 %937
      %v940 = vmul.f32 %v917, %v938
      %942 = vrot.lane.b32.xlu0 %v934, 96
      %v943 = vpop.permute.xlu0 %942
      %945 = vst.msk [vmem:[#allocation3] sm:$0x3] %vm344, %v943
      %947 = vrot.lane.b32.xlu0 %v940, 32
      %v948 = vpop.permute.xlu0 %947
      %950 = vst.msk [vmem:[#allocation2] sm:$0x3] %vm344, %v948
      %v951 = vld [vmem:[%s2] sm:$0xff]
      %v952 = vld [vmem:[%s2 + $0x8] sm:$0xff]
      %v953 = vld [vmem:[%s2 + $0x10] sm:$0xff]
      %v954 = vld [vmem:[%s2 + $0x18] sm:$0xff]
      %v955 = vsel %vm236, %v948, 0
      %957 = vmatprep.subr.mxu0 0.0
      %958 = vmatpush1.msra.mxu0 %v951
      %959 = vmatprep.subr.mxu0 0.0
      %960 = vmatpush1.msra.mxu0 %v952
      %961 = vmatprep.subr.mxu0 0.0
      %962 = vmatpush1.msra.mxu0 %v953
      %963 = vmatprep.subr.mxu0 0.0
      %964 = vmatpush1.msra.mxu0 %v954
      %965 = vmatprep.subr.mxu0 0.0
      %966 = vmatpush1.msra.mxu0 0.0
      %967 = vmatprep.subr.mxu0 0.0
      %968 = vmatpush1.msra.mxu0 0.0
      %969 = vmatprep.subr.mxu0 0.0
      %970 = vmatpush1.msra.mxu0 0.0
      %971 = vmatprep.subr.mxu0 0.0
      %972 = vmatpush1.msra.mxu0 0.0
      %973 = vmatprep.subr.mxu0 0.0
      %974 = vmatpush1.msra.mxu0 0.0
      %975 = vmatprep.subr.mxu0 0.0
      %976 = vmatpush1.msra.mxu0 0.0
      %977 = vmatprep.subr.mxu0 0.0
      %978 = vmatpush1.msra.mxu0 0.0
      %979 = vmatprep.subr.mxu0 0.0
      %980 = vmatpush1.msra.mxu0 0.0
      %981 = vmatprep.subr.mxu0 0.0
      %982 = vmatpush1.msra.mxu0 0.0
      %983 = vmatprep.subr.mxu0 0.0
      %984 = vmatpush1.msra.mxu0 0.0
      %985 = vmatprep.subr.mxu0 0.0
      %986 = vmatpush1.msra.mxu0 0.0
      %987 = vmatprep.subr.mxu0 0.0
      %988 = vmatpush1.msra.mxu0 0.0
      %989 = vmatprep.subr.mxu0 0.0
      %990 = vmatpush1.msra.mxu0 0.0
      %991 = vmatprep.subr.mxu0 0.0
      %992 = vmatpush1.msra.mxu0 0.0
      %993 = vmatprep.subr.mxu0 0.0
      %994 = vmatpush1.msra.mxu0 0.0
      %995 = vmatprep.subr.mxu0 0.0
      %996 = vmatpush1.msra.mxu0 0.0
      %997 = vmatprep.subr.mxu0 0.0
      %998 = vmatpush1.msra.mxu0 0.0
      %999 = vmatprep.subr.mxu0 0.0
      %1000 = vmatpush1.msra.mxu0 0.0
      %1001 = vmatprep.subr.mxu0 0.0
      %1002 = vmatpush1.msra.mxu0 0.0
      %1003 = vmatprep.subr.mxu0 0.0
      %1004 = vmatpush1.msra.mxu0 0.0
      %1005 = vmatprep.subr.mxu0 0.0
      %1006 = vmatpush1.msra.mxu0 0.0
      %1007 = vmatprep.subr.mxu0 0.0
      %1008 = vmatpush1.msra.mxu0 0.0
      %1009 = vmatprep.subr.mxu0 0.0
      %1010 = vmatpush1.msra.mxu0 0.0
      %1011 = vmatprep.subr.mxu0 0.0
      %1012 = vmatpush1.msra.mxu0 0.0
      %1013 = vmatprep.subr.mxu0 0.0
      %1014 = vmatpush1.msra.mxu0 0.0
      %1015 = vmatprep.subr.mxu0 0.0
      %1016 = vmatpush1.msra.mxu0 0.0
      %1017 = vmatprep.subr.mxu0 0.0
      %1018 = vmatpush1.msra.mxu0 0.0
      %1019 = vmatprep.subr.mxu0 0.0
      %1020 = vmatpush1.msra.mxu0 0.0
      %1021 = vmatprep.mubr.f32.mxu0 0.0
      %1022 = vmatmul.mubr.f32.gmra.mrb[0].mxu0 %v955
      %v1023 = vpop.f32.mrb[0].mxu0
      %v1024 = vadd.f32 0.0, %v1023
      %v1025 = vpop.f32.mrb[0].mxu0
      %1026 = vdwg.mxu0
      %v1027 = vxor.u32 %v1024, 2147483648
      %v1028 = vmul.f32 %v1027, 1.442695
      %v1029 = vpow.pop %v1028
      %v1030 = vadd.f32 %v1029, 1.0
      %v1031 = vrcp.pop %v1030
      %v1032 = vmul.f32 1.0, %v1031
      %s1033 = scalar_lea.vmem %s221, 6
      %1034 = vst.msk [vmem:[%s1033] sm:$0x3] %vm433, %v1032
      %s1035 = scalar_lea.vmem %s215, 8
      %v1036 = vld [vmem:[%s1035] sm:$0x3]
      %v1037 = vld [vmem:[#allocation2] sm:$0x3]
      %v1039 = vsel %vm236, %v1037, 0
      %1041 = vmatprep.subr.mxu0 0.0
      %1042 = vmatpush1.msra.mxu0 %v230
      %1043 = vmatprep.subr.mxu0 0.0
      %1044 = vmatpush1.msra.mxu0 %v231
      %1045 = vmatprep.subr.mxu0 0.0
      %1046 = vmatpush1.msra.mxu0 %v232
      %1047 = vmatprep.subr.mxu0 0.0
      %1048 = vmatpush1.msra.mxu0 %v233
      %1049 = vmatprep.subr.mxu0 0.0
      %1050 = vmatpush1.msra.mxu0 0.0
      %1051 = vmatprep.subr.mxu0 0.0
      %1052 = vmatpush1.msra.mxu0 0.0
      %1053 = vmatprep.subr.mxu0 0.0
      %1054 = vmatpush1.msra.mxu0 0.0
      %1055 = vmatprep.subr.mxu0 0.0
      %1056 = vmatpush1.msra.mxu0 0.0
      %1057 = vmatprep.subr.mxu0 0.0
      %1058 = vmatpush1.msra.mxu0 0.0
      %1059 = vmatprep.subr.mxu0 0.0
      %1060 = vmatpush1.msra.mxu0 0.0
      %1061 = vmatprep.subr.mxu0 0.0
      %1062 = vmatpush1.msra.mxu0 0.0
      %1063 = vmatprep.subr.mxu0 0.0
      %1064 = vmatpush1.msra.mxu0 0.0
      %1065 = vmatprep.subr.mxu0 0.0
      %1066 = vmatpush1.msra.mxu0 0.0
      %1067 = vmatprep.subr.mxu0 0.0
      %1068 = vmatpush1.msra.mxu0 0.0
      %1069 = vmatprep.subr.mxu0 0.0
      %1070 = vmatpush1.msra.mxu0 0.0
      %1071 = vmatprep.subr.mxu0 0.0
      %1072 = vmatpush1.msra.mxu0 0.0
      %1073 = vmatprep.subr.mxu0 0.0
      %1074 = vmatpush1.msra.mxu0 0.0
      %1075 = vmatprep.subr.mxu0 0.0
      %1076 = vmatpush1.msra.mxu0 0.0
      %1077 = vmatprep.subr.mxu0 0.0
      %1078 = vmatpush1.msra.mxu0 0.0
      %1079 = vmatprep.subr.mxu0 0.0
      %1080 = vmatpush1.msra.mxu0 0.0
      %1081 = vmatprep.subr.mxu0 0.0
      %1082 = vmatpush1.msra.mxu0 0.0
      %1083 = vmatprep.subr.mxu0 0.0
      %1084 = vmatpush1.msra.mxu0 0.0
      %1085 = vmatprep.subr.mxu0 0.0
      %1086 = vmatpush1.msra.mxu0 0.0
      %1087 = vmatprep.subr.mxu0 0.0
      %1088 = vmatpush1.msra.mxu0 0.0
      %1089 = vmatprep.subr.mxu0 0.0
      %1090 = vmatpush1.msra.mxu0 0.0
      %1091 = vmatprep.subr.mxu0 0.0
      %1092 = vmatpush1.msra.mxu0 0.0
      %1093 = vmatprep.subr.mxu0 0.0
      %1094 = vmatpush1.msra.mxu0 0.0
      %1095 = vmatprep.subr.mxu0 0.0
      %1096 = vmatpush1.msra.mxu0 0.0
      %1097 = vmatprep.subr.mxu0 0.0
      %1098 = vmatpush1.msra.mxu0 0.0
      %1099 = vmatprep.subr.mxu0 0.0
      %1100 = vmatpush1.msra.mxu0 0.0
      %1101 = vmatprep.subr.mxu0 0.0
      %1102 = vmatpush1.msra.mxu0 0.0
      %1103 = vmatprep.subr.mxu0 0.0
      %1104 = vmatpush1.msra.mxu0 0.0
      %1105 = vmatprep.mubr.f32.mxu0 0.0
      %1106 = vmatmul.mubr.f32.gmra.mrb[0].mxu0 %v1039
      %v1107 = vpop.f32.mrb[0].mxu0
      %v1108 = vadd.f32 0.0, %v1107
      %v1109 = vpop.f32.mrb[0].mxu0
      %1110 = vdwg.mxu0
      %v1111 = vadd.f32 %v1036, %v1108
      %v1112 = vxor.u32 %v1111, 2147483648
      %v1113 = vmul.f32 %v1112, 1.442695
      %v1114 = vpow.pop %v1113
      %v1115 = vadd.f32 %v1114, 1.0
      %v1116 = vrcp.pop %v1115
      %v1117 = vmul.f32 1.0, %v1116
      %v1118 = vtanh.pop %v1111
      %v1119 = vld [vmem:[#allocation3] sm:$0x3]
      %1121 = vrot.lane.b32.xlu0 %v1119, 32
      %v1122 = vpop.permute.xlu0 %1121
      %v1124 = vmul.f32 %v1117, %v1122
      %1126 = vrot.lane.b32.xlu0 %v1118, 64
      %v1127 = vpop.permute.xlu0 %1126
      %v1129 = vmul.f32 %v1117, %v1127
      %1131 = vrot.lane.b32.xlu0 %v1129, 32
      %v1132 = vpop.permute.xlu0 %1131
      %v1134 = vadd.f32 %v1124, %v1132
      %v1135 = vtanh.pop %v1134
      %1137 = vrot.lane.b32.xlu0 %v1135, 64
      %v1138 = vpop.permute.xlu0 %1137
      %v1140 = vmul.f32 %v1117, %v1138
      %1142 = vrot.lane.b32.xlu0 %v1134, 96
      %v1143 = vpop.permute.xlu0 %1142
      %1145 = vst.msk [vmem:[#allocation3] sm:$0x3] %vm344, %v1143
      %1147 = vrot.lane.b32.xlu0 %v1140, 32
      %v1148 = vpop.permute.xlu0 %1147
      %1150 = vst.msk [vmem:[#allocation2] sm:$0x3] %vm344, %v1148
      %v1151 = vld [vmem:[%s2] sm:$0xff]
      %v1152 = vld [vmem:[%s2 + $0x8] sm:$0xff]
      %v1153 = vld [vmem:[%s2 + $0x10] sm:$0xff]
      %v1154 = vld [vmem:[%s2 + $0x18] sm:$0xff]
      %v1155 = vsel %vm236, %v1148, 0
      %1157 = vmatprep.subr.mxu0 0.0
      %1158 = vmatpush1.msra.mxu0 %v1151
      %1159 = vmatprep.subr.mxu0 0.0
      %1160 = vmatpush1.msra.mxu0 %v1152
      %1161 = vmatprep.subr.mxu0 0.0
      %1162 = vmatpush1.msra.mxu0 %v1153
      %1163 = vmatprep.subr.mxu0 0.0
      %1164 = vmatpush1.msra.mxu0 %v1154
      %1165 = vmatprep.subr.mxu0 0.0
      %1166 = vmatpush1.msra.mxu0 0.0
      %1167 = vmatprep.subr.mxu0 0.0
      %1168 = vmatpush1.msra.mxu0 0.0
      %1169 = vmatprep.subr.mxu0 0.0
      %1170 = vmatpush1.msra.mxu0 0.0
      %1171 = vmatprep.subr.mxu0 0.0
      %1172 = vmatpush1.msra.mxu0 0.0
      %1173 = vmatprep.subr.mxu0 0.0
      %1174 = vmatpush1.msra.mxu0 0.0
      %1175 = vmatprep.subr.mxu0 0.0
      %1176 = vmatpush1.msra.mxu0 0.0
      %1177 = vmatprep.subr.mxu0 0.0
      %1178 = vmatpush1.msra.mxu0 0.0
      %1179 = vmatprep.subr.mxu0 0.0
      %1180 = vmatpush1.msra.mxu0 0.0
      %1181 = vmatprep.subr.mxu0 0.0
      %1182 = vmatpush1.msra.mxu0 0.0
      %1183 = vmatprep.subr.mxu0 0.0
      %1184 = vmatpush1.msra.mxu0 0.0
      %1185 = vmatprep.subr.mxu0 0.0
      %1186 = vmatpush1.msra.mxu0 0.0
      %1187 = vmatprep.subr.mxu0 0.0
      %1188 = vmatpush1.msra.mxu0 0.0
      %1189 = vmatprep.subr.mxu0 0.0
      %1190 = vmatpush1.msra.mxu0 0.0
      %1191 = vmatprep.subr.mxu0 0.0
      %1192 = vmatpush1.msra.mxu0 0.0
      %1193 = vmatprep.subr.mxu0 0.0
      %1194 = vmatpush1.msra.mxu0 0.0
      %1195 = vmatprep.subr.mxu0 0.0
      %1196 = vmatpush1.msra.mxu0 0.0
      %1197 = vmatprep.subr.mxu0 0.0
      %1198 = vmatpush1.msra.mxu0 0.0
      %1199 = vmatprep.subr.mxu0 0.0
      %1200 = vmatpush1.msra.mxu0 0.0
      %1201 = vmatprep.subr.mxu0 0.0
      %1202 = vmatpush1.msra.mxu0 0.0
      %1203 = vmatprep.subr.mxu0 0.0
      %1204 = vmatpush1.msra.mxu0 0.0
      %1205 = vmatprep.subr.mxu0 0.0
      %1206 = vmatpush1.msra.mxu0 0.0
      %1207 = vmatprep.subr.mxu0 0.0
      %1208 = vmatpush1.msra.mxu0 0.0
      %1209 = vmatprep.subr.mxu0 0.0
      %1210 = vmatpush1.msra.mxu0 0.0
      %1211 = vmatprep.subr.mxu0 0.0
      %1212 = vmatpush1.msra.mxu0 0.0
      %1213 = vmatprep.subr.mxu0 0.0
      %1214 = vmatpush1.msra.mxu0 0.0
      %1215 = vmatprep.subr.mxu0 0.0
      %1216 = vmatpush1.msra.mxu0 0.0
      %1217 = vmatprep.subr.mxu0 0.0
      %1218 = vmatpush1.msra.mxu0 0.0
      %1219 = vmatprep.subr.mxu0 0.0
      %1220 = vmatpush1.msra.mxu0 0.0
      %1221 = vmatprep.mubr.f32.mxu0 0.0
      %1222 = vmatmul.mubr.f32.gmra.mrb[0].mxu0 %v1155
      %v1223 = vpop.f32.mrb[0].mxu0
      %v1224 = vadd.f32 0.0, %v1223
      %v1225 = vpop.f32.mrb[0].mxu0
      %1226 = vdwg.mxu0
      %v1227 = vxor.u32 %v1224, 2147483648
      %v1228 = vmul.f32 %v1227, 1.442695
      %v1229 = vpow.pop %v1228
      %v1230 = vadd.f32 %v1229, 1.0
      %v1231 = vrcp.pop %v1230
      %v1232 = vmul.f32 1.0, %v1231
      %s1233 = scalar_lea.vmem %s221, 8
      %1234 = vst.msk [vmem:[%s1233] sm:$0x3] %vm433, %v1232
      %s1235 = scalar_lea.vmem %s215, 10
      %v1236 = vld [vmem:[%s1235] sm:$0x3]
      %v1237 = vld [vmem:[#allocation2] sm:$0x3]
      %v1239 = vsel %vm236, %v1237, 0
      %1241 = vmatprep.subr.mxu0 0.0
      %1242 = vmatpush1.msra.mxu0 %v230
      %1243 = vmatprep.subr.mxu0 0.0
      %1244 = vmatpush1.msra.mxu0 %v231
      %1245 = vmatprep.subr.mxu0 0.0
      %1246 = vmatpush1.msra.mxu0 %v232
      %1247 = vmatprep.subr.mxu0 0.0
      %1248 = vmatpush1.msra.mxu0 %v233
      %1249 = vmatprep.subr.mxu0 0.0
      %1250 = vmatpush1.msra.mxu0 0.0
      %1251 = vmatprep.subr.mxu0 0.0
      %1252 = vmatpush1.msra.mxu0 0.0
      %1253 = vmatprep.subr.mxu0 0.0
      %1254 = vmatpush1.msra.mxu0 0.0
      %1255 = vmatprep.subr.mxu0 0.0
      %1256 = vmatpush1.msra.mxu0 0.0
      %1257 = vmatprep.subr.mxu0 0.0
      %1258 = vmatpush1.msra.mxu0 0.0
      %1259 = vmatprep.subr.mxu0 0.0
      %1260 = vmatpush1.msra.mxu0 0.0
      %1261 = vmatprep.subr.mxu0 0.0
      %1262 = vmatpush1.msra.mxu0 0.0
      %1263 = vmatprep.subr.mxu0 0.0
      %1264 = vmatpush1.msra.mxu0 0.0
      %1265 = vmatprep.subr.mxu0 0.0
      %1266 = vmatpush1.msra.mxu0 0.0
      %1267 = vmatprep.subr.mxu0 0.0
      %1268 = vmatpush1.msra.mxu0 0.0
      %1269 = vmatprep.subr.mxu0 0.0
      %1270 = vmatpush1.msra.mxu0 0.0
      %1271 = vmatprep.subr.mxu0 0.0
      %1272 = vmatpush1.msra.mxu0 0.0
      %1273 = vmatprep.subr.mxu0 0.0
      %1274 = vmatpush1.msra.mxu0 0.0
      %1275 = vmatprep.subr.mxu0 0.0
      %1276 = vmatpush1.msra.mxu0 0.0
      %1277 = vmatprep.subr.mxu0 0.0
      %1278 = vmatpush1.msra.mxu0 0.0
      %1279 = vmatprep.subr.mxu0 0.0
      %1280 = vmatpush1.msra.mxu0 0.0
      %1281 = vmatprep.subr.mxu0 0.0
      %1282 = vmatpush1.msra.mxu0 0.0
      %1283 = vmatprep.subr.mxu0 0.0
      %1284 = vmatpush1.msra.mxu0 0.0
      %1285 = vmatprep.subr.mxu0 0.0
      %1286 = vmatpush1.msra.mxu0 0.0
      %1287 = vmatprep.subr.mxu0 0.0
      %1288 = vmatpush1.msra.mxu0 0.0
      %1289 = vmatprep.subr.mxu0 0.0
      %1290 = vmatpush1.msra.mxu0 0.0
      %1291 = vmatprep.subr.mxu0 0.0
      %1292 = vmatpush1.msra.mxu0 0.0
      %1293 = vmatprep.subr.mxu0 0.0
      %1294 = vmatpush1.msra.mxu0 0.0
      %1295 = vmatprep.subr.mxu0 0.0
      %1296 = vmatpush1.msra.mxu0 0.0
      %1297 = vmatprep.subr.mxu0 0.0
      %1298 = vmatpush1.msra.mxu0 0.0
      %1299 = vmatprep.subr.mxu0 0.0
      %1300 = vmatpush1.msra.mxu0 0.0
      %1301 = vmatprep.subr.mxu0 0.0
      %1302 = vmatpush1.msra.mxu0 0.0
      %1303 = vmatprep.subr.mxu0 0.0
      %1304 = vmatpush1.msra.mxu0 0.0
      %1305 = vmatprep.mubr.f32.mxu0 0.0
      %1306 = vmatmul.mubr.f32.gmra.mrb[0].mxu0 %v1239
      %v1307 = vpop.f32.mrb[0].mxu0
      %v1308 = vadd.f32 0.0, %v1307
      %v1309 = vpop.f32.mrb[0].mxu0
      %1310 = vdwg.mxu0
      %v1311 = vadd.f32 %v1236, %v1308
      %v1312 = vxor.u32 %v1311, 2147483648
      %v1313 = vmul.f32 %v1312, 1.442695
      %v1314 = vpow.pop %v1313
      %v1315 = vadd.f32 %v1314, 1.0
      %v1316 = vrcp.pop %v1315
      %v1317 = vmul.f32 1.0, %v1316
      %v1318 = vtanh.pop %v1311
      %v1319 = vld [vmem:[#allocation3] sm:$0x3]
      %1321 = vrot.lane.b32.xlu0 %v1319, 32
      %v1322 = vpop.permute.xlu0 %1321
      %v1324 = vmul.f32 %v1317, %v1322
      %1326 = vrot.lane.b32.xlu0 %v1318, 64
      %v1327 = vpop.permute.xlu0 %1326
      %v1329 = vmul.f32 %v1317, %v1327
      %1331 = vrot.lane.b32.xlu0 %v1329, 32
      %v1332 = vpop.permute.xlu0 %1331
      %v1334 = vadd.f32 %v1324, %v1332
      %v1335 = vtanh.pop %v1334
      %1337 = vrot.lane.b32.xlu0 %v1335, 64
      %v1338 = vpop.permute.xlu0 %1337
      %v1340 = vmul.f32 %v1317, %v1338
      %1342 = vrot.lane.b32.xlu0 %v1334, 96
      %v1343 = vpop.permute.xlu0 %1342
      %1345 = vst.msk [vmem:[#allocation3] sm:$0x3] %vm344, %v1343
      %1347 = vrot.lane.b32.xlu0 %v1340, 32
      %v1348 = vpop.permute.xlu0 %1347
      %1350 = vst.msk [vmem:[#allocation2] sm:$0x3] %vm344, %v1348
      %v1351 = vld [vmem:[%s2] sm:$0xff]
      %v1352 = vld [vmem:[%s2 + $0x8] sm:$0xff]
      %v1353 = vld [vmem:[%s2 + $0x10] sm:$0xff]
      %v1354 = vld [vmem:[%s2 + $0x18] sm:$0xff]
      %v1355 = vsel %vm236, %v1348, 0
      %1357 = vmatprep.subr.mxu0 0.0
      %1358 = vmatpush1.msra.mxu0 %v1351
      %1359 = vmatprep.subr.mxu0 0.0
      %1360 = vmatpush1.msra.mxu0 %v1352
      %1361 = vmatprep.subr.mxu0 0.0
      %1362 = vmatpush1.msra.mxu0 %v1353
      %1363 = vmatprep.subr.mxu0 0.0
      %1364 = vmatpush1.msra.mxu0 %v1354
      %1365 = vmatprep.subr.mxu0 0.0
      %1366 = vmatpush1.msra.mxu0 0.0
      %1367 = vmatprep.subr.mxu0 0.0
      %1368 = vmatpush1.msra.mxu0 0.0
      %1369 = vmatprep.subr.mxu0 0.0
      %1370 = vmatpush1.msra.mxu0 0.0
      %1371 = vmatprep.subr.mxu0 0.0
      %1372 = vmatpush1.msra.mxu0 0.0
      %1373 = vmatprep.subr.mxu0 0.0
      %1374 = vmatpush1.msra.mxu0 0.0
      %1375 = vmatprep.subr.mxu0 0.0
      %1376 = vmatpush1.msra.mxu0 0.0
      %1377 = vmatprep.subr.mxu0 0.0
      %1378 = vmatpush1.msra.mxu0 0.0
      %1379 = vmatprep.subr.mxu0 0.0
      %1380 = vmatpush1.msra.mxu0 0.0
      %1381 = vmatprep.subr.mxu0 0.0
      %1382 = vmatpush1.msra.mxu0 0.0
      %1383 = vmatprep.subr.mxu0 0.0
      %1384 = vmatpush1.msra.mxu0 0.0
      %1385 = vmatprep.subr.mxu0 0.0
      %1386 = vmatpush1.msra.mxu0 0.0
      %1387 = vmatprep.subr.mxu0 0.0
      %1388 = vmatpush1.msra.mxu0 0.0
      %1389 = vmatprep.subr.mxu0 0.0
      %1390 = vmatpush1.msra.mxu0 0.0
      %1391 = vmatprep.subr.mxu0 0.0
      %1392 = vmatpush1.msra.mxu0 0.0
      %1393 = vmatprep.subr.mxu0 0.0
      %1394 = vmatpush1.msra.mxu0 0.0
      %1395 = vmatprep.subr.mxu0 0.0
      %1396 = vmatpush1.msra.mxu0 0.0
      %1397 = vmatprep.subr.mxu0 0.0
      %1398 = vmatpush1.msra.mxu0 0.0
      %1399 = vmatprep.subr.mxu0 0.0
      %1400 = vmatpush1.msra.mxu0 0.0
      %1401 = vmatprep.subr.mxu0 0.0
      %1402 = vmatpush1.msra.mxu0 0.0
      %1403 = vmatprep.subr.mxu0 0.0
      %1404 = vmatpush1.msra.mxu0 0.0
      %1405 = vmatprep.subr.mxu0 0.0
      %1406 = vmatpush1.msra.mxu0 0.0
      %1407 = vmatprep.subr.mxu0 0.0
      %1408 = vmatpush1.msra.mxu0 0.0
      %1409 = vmatprep.subr.mxu0 0.0
      %1410 = vmatpush1.msra.mxu0 0.0
      %1411 = vmatprep.subr.mxu0 0.0
      %1412 = vmatpush1.msra.mxu0 0.0
      %1413 = vmatprep.subr.mxu0 0.0
      %1414 = vmatpush1.msra.mxu0 0.0
      %1415 = vmatprep.subr.mxu0 0.0
      %1416 = vmatpush1.msra.mxu0 0.0
      %1417 = vmatprep.subr.mxu0 0.0
      %1418 = vmatpush1.msra.mxu0 0.0
      %1419 = vmatprep.subr.mxu0 0.0
      %1420 = vmatpush1.msra.mxu0 0.0
      %1421 = vmatprep.mubr.f32.mxu0 0.0
      %1422 = vmatmul.mubr.f32.gmra.mrb[0].mxu0 %v1355
      %v1423 = vpop.f32.mrb[0].mxu0
      %v1424 = vadd.f32 0.0, %v1423
      %v1425 = vpop.f32.mrb[0].mxu0
      %1426 = vdwg.mxu0
      %v1427 = vxor.u32 %v1424, 2147483648
      %v1428 = vmul.f32 %v1427, 1.442695
      %v1429 = vpow.pop %v1428
      %v1430 = vadd.f32 %v1429, 1.0
      %v1431 = vrcp.pop %v1430
      %v1432 = vmul.f32 1.0, %v1431
      %s1433 = scalar_lea.vmem %s221, 10
      %1434 = vst.msk [vmem:[%s1433] sm:$0x3] %vm433, %v1432
      %s1435 = scalar_lea.vmem %s215, 12
      %v1436 = vld [vmem:[%s1435] sm:$0x3]
      %v1437 = vld [vmem:[#allocation2] sm:$0x3]
      %v1439 = vsel %vm236, %v1437, 0
      %1441 = vmatprep.subr.mxu0 0.0
      %1442 = vmatpush1.msra.mxu0 %v230
      %1443 = vmatprep.subr.mxu0 0.0
      %1444 = vmatpush1.msra.mxu0 %v231
      %1445 = vmatprep.subr.mxu0 0.0
      %1446 = vmatpush1.msra.mxu0 %v232
      %1447 = vmatprep.subr.mxu0 0.0
      %1448 = vmatpush1.msra.mxu0 %v233
      %1449 = vmatprep.subr.mxu0 0.0
      %1450 = vmatpush1.msra.mxu0 0.0
      %1451 = vmatprep.subr.mxu0 0.0
      %1452 = vmatpush1.msra.mxu0 0.0
      %1453 = vmatprep.subr.mxu0 0.0
      %1454 = vmatpush1.msra.mxu0 0.0
      %1455 = vmatprep.subr.mxu0 0.0
      %1456 = vmatpush1.msra.mxu0 0.0
      %1457 = vmatprep.subr.mxu0 0.0
      %1458 = vmatpush1.msra.mxu0 0.0
      %1459 = vmatprep.subr.mxu0 0.0
      %1460 = vmatpush1.msra.mxu0 0.0
      %1461 = vmatprep.subr.mxu0 0.0
      %1462 = vmatpush1.msra.mxu0 0.0
      %1463 = vmatprep.subr.mxu0 0.0
      %1464 = vmatpush1.msra.mxu0 0.0
      %1465 = vmatprep.subr.mxu0 0.0
      %1466 = vmatpush1.msra.mxu0 0.0
      %1467 = vmatprep.subr.mxu0 0.0
      %1468 = vmatpush1.msra.mxu0 0.0
      %1469 = vmatprep.subr.mxu0 0.0
      %1470 = vmatpush1.msra.mxu0 0.0
      %1471 = vmatprep.subr.mxu0 0.0
      %1472 = vmatpush1.msra.mxu0 0.0
      %1473 = vmatprep.subr.mxu0 0.0
      %1474 = vmatpush1.msra.mxu0 0.0
      %1475 = vmatprep.subr.mxu0 0.0
      %1476 = vmatpush1.msra.mxu0 0.0
      %1477 = vmatprep.subr.mxu0 0.0
      %1478 = vmatpush1.msra.mxu0 0.0
      %1479 = vmatprep.subr.mxu0 0.0
      %1480 = vmatpush1.msra.mxu0 0.0
      %1481 = vmatprep.subr.mxu0 0.0
      %1482 = vmatpush1.msra.mxu0 0.0
      %1483 = vmatprep.subr.mxu0 0.0
      %1484 = vmatpush1.msra.mxu0 0.0
      %1485 = vmatprep.subr.mxu0 0.0
      %1486 = vmatpush1.msra.mxu0 0.0
      %1487 = vmatprep.subr.mxu0 0.0
      %1488 = vmatpush1.msra.mxu0 0.0
      %1489 = vmatprep.subr.mxu0 0.0
      %1490 = vmatpush1.msra.mxu0 0.0
      %1491 = vmatprep.subr.mxu0 0.0
      %1492 = vmatpush1.msra.mxu0 0.0
      %1493 = vmatprep.subr.mxu0 0.0
      %1494 = vmatpush1.msra.mxu0 0.0
      %1495 = vmatprep.subr.mxu0 0.0
      %1496 = vmatpush1.msra.mxu0 0.0
      %1497 = vmatprep.subr.mxu0 0.0
      %1498 = vmatpush1.msra.mxu0 0.0
      %1499 = vmatprep.subr.mxu0 0.0
      %1500 = vmatpush1.msra.mxu0 0.0
      %1501 = vmatprep.subr.mxu0 0.0
      %1502 = vmatpush1.msra.mxu0 0.0
      %1503 = vmatprep.subr.mxu0 0.0
      %1504 = vmatpush1.msra.mxu0 0.0
      %1505 = vmatprep.mubr.f32.mxu0 0.0
      %1506 = vmatmul.mubr.f32.gmra.mrb[0].mxu0 %v1439
      %v1507 = vpop.f32.mrb[0].mxu0
      %v1508 = vadd.f32 0.0, %v1507
      %v1509 = vpop.f32.mrb[0].mxu0
      %1510 = vdwg.mxu0
      %v1511 = vadd.f32 %v1436, %v1508
      %v1512 = vxor.u32 %v1511, 2147483648
      %v1513 = vmul.f32 %v1512, 1.442695
      %v1514 = vpow.pop %v1513
      %v1515 = vadd.f32 %v1514, 1.0
      %v1516 = vrcp.pop %v1515
      %v1517 = vmul.f32 1.0, %v1516
      %v1518 = vtanh.pop %v1511
      %v1519 = vld [vmem:[#allocation3] sm:$0x3]
      %1521 = vrot.lane.b32.xlu0 %v1519, 32
      %v1522 = vpop.permute.xlu0 %1521
      %v1524 = vmul.f32 %v1517, %v1522
      %1526 = vrot.lane.b32.xlu0 %v1518, 64
      %v1527 = vpop.permute.xlu0 %1526
      %v1529 = vmul.f32 %v1517, %v1527
      %1531 = vrot.lane.b32.xlu0 %v1529, 32
      %v1532 = vpop.permute.xlu0 %1531
      %v1534 = vadd.f32 %v1524, %v1532
      %v1535 = vtanh.pop %v1534
      %1537 = vrot.lane.b32.xlu0 %v1535, 64
      %v1538 = vpop.permute.xlu0 %1537
      %v1540 = vmul.f32 %v1517, %v1538
      %1542 = vrot.lane.b32.xlu0 %v1534, 96
      %v1543 = vpop.permute.xlu0 %1542
      %1545 = vst.msk [vmem:[#allocation3] sm:$0x3] %vm344, %v1543
      %1547 = vrot.lane.b32.xlu0 %v1540, 32
      %v1548 = vpop.permute.xlu0 %1547
      %1550 = vst.msk [vmem:[#allocation2] sm:$0x3] %vm344, %v1548
      %v1551 = vld [vmem:[%s2] sm:$0xff]
      %v1552 = vld [vmem:[%s2 + $0x8] sm:$0xff]
      %v1553 = vld [vmem:[%s2 + $0x10] sm:$0xff]
      %v1554 = vld [vmem:[%s2 + $0x18] sm:$0xff]
      %v1555 = vsel %vm236, %v1548, 0
      %1557 = vmatprep.subr.mxu0 0.0
      %1558 = vmatpush1.msra.mxu0 %v1551
      %1559 = vmatprep.subr.mxu0 0.0
      %1560 = vmatpush1.msra.mxu0 %v1552
      %1561 = vmatprep.subr.mxu0 0.0
      %1562 = vmatpush1.msra.mxu0 %v1553
      %1563 = vmatprep.subr.mxu0 0.0
      %1564 = vmatpush1.msra.mxu0 %v1554
      %1565 = vmatprep.subr.mxu0 0.0
      %1566 = vmatpush1.msra.mxu0 0.0
      %1567 = vmatprep.subr.mxu0 0.0
      %1568 = vmatpush1.msra.mxu0 0.0
      %1569 = vmatprep.subr.mxu0 0.0
      %1570 = vmatpush1.msra.mxu0 0.0
      %1571 = vmatprep.subr.mxu0 0.0
      %1572 = vmatpush1.msra.mxu0 0.0
      %1573 = vmatprep.subr.mxu0 0.0
      %1574 = vmatpush1.msra.mxu0 0.0
      %1575 = vmatprep.subr.mxu0 0.0
      %1576 = vmatpush1.msra.mxu0 0.0
      %1577 = vmatprep.subr.mxu0 0.0
      %1578 = vmatpush1.msra.mxu0 0.0
      %1579 = vmatprep.subr.mxu0 0.0
      %1580 = vmatpush1.msra.mxu0 0.0
      %1581 = vmatprep.subr.mxu0 0.0
      %1582 = vmatpush1.msra.mxu0 0.0
      %1583 = vmatprep.subr.mxu0 0.0
      %1584 = vmatpush1.msra.mxu0 0.0
      %1585 = vmatprep.subr.mxu0 0.0
      %1586 = vmatpush1.msra.mxu0 0.0
      %1587 = vmatprep.subr.mxu0 0.0
      %1588 = vmatpush1.msra.mxu0 0.0
      %1589 = vmatprep.subr.mxu0 0.0
      %1590 = vmatpush1.msra.mxu0 0.0
      %1591 = vmatprep.subr.mxu0 0.0
      %1592 = vmatpush1.msra.mxu0 0.0
      %1593 = vmatprep.subr.mxu0 0.0
      %1594 = vmatpush1.msra.mxu0 0.0
      %1595 = vmatprep.subr.mxu0 0.0
      %1596 = vmatpush1.msra.mxu0 0.0
      %1597 = vmatprep.subr.mxu0 0.0
      %1598 = vmatpush1.msra.mxu0 0.0
      %1599 = vmatprep.subr.mxu0 0.0
      %1600 = vmatpush1.msra.mxu0 0.0
      %1601 = vmatprep.subr.mxu0 0.0
      %1602 = vmatpush1.msra.mxu0 0.0
      %1603 = vmatprep.subr.mxu0 0.0
      %1604 = vmatpush1.msra.mxu0 0.0
      %1605 = vmatprep.subr.mxu0 0.0
      %1606 = vmatpush1.msra.mxu0 0.0
      %1607 = vmatprep.subr.mxu0 0.0
      %1608 = vmatpush1.msra.mxu0 0.0
      %1609 = vmatprep.subr.mxu0 0.0
      %1610 = vmatpush1.msra.mxu0 0.0
      %1611 = vmatprep.subr.mxu0 0.0
      %1612 = vmatpush1.msra.mxu0 0.0
      %1613 = vmatprep.subr.mxu0 0.0
      %1614 = vmatpush1.msra.mxu0 0.0
      %1615 = vmatprep.subr.mxu0 0.0
      %1616 = vmatpush1.msra.mxu0 0.0
      %1617 = vmatprep.subr.mxu0 0.0
      %1618 = vmatpush1.msra.mxu0 0.0
      %1619 = vmatprep.subr.mxu0 0.0
      %1620 = vmatpush1.msra.mxu0 0.0
      %1621 = vmatprep.mubr.f32.mxu0 0.0
      %1622 = vmatmul.mubr.f32.gmra.mrb[0].mxu0 %v1555
      %v1623 = vpop.f32.mrb[0].mxu0
      %v1624 = vadd.f32 0.0, %v1623
      %v1625 = vpop.f32.mrb[0].mxu0
      %1626 = vdwg.mxu0
      %v1627 = vxor.u32 %v1624, 2147483648
      %v1628 = vmul.f32 %v1627, 1.442695
      %v1629 = vpow.pop %v1628
      %v1630 = vadd.f32 %v1629, 1.0
      %v1631 = vrcp.pop %v1630
      %v1632 = vmul.f32 1.0, %v1631
      %s1633 = scalar_lea.vmem %s221, 12
      %1634 = vst.msk [vmem:[%s1633] sm:$0x3] %vm433, %v1632
      %s1635 = scalar_lea.vmem %s215, 14
      %v1636 = vld [vmem:[%s1635] sm:$0x3]
      %v1637 = vld [vmem:[#allocation2] sm:$0x3]
      %v1639 = vsel %vm236, %v1637, 0
      %1641 = vmatprep.subr.mxu0 0.0
      %1642 = vmatpush1.msra.mxu0 %v230
      %1643 = vmatprep.subr.mxu0 0.0
      %1644 = vmatpush1.msra.mxu0 %v231
      %1645 = vmatprep.subr.mxu0 0.0
      %1646 = vmatpush1.msra.mxu0 %v232
      %1647 = vmatprep.subr.mxu0 0.0
      %1648 = vmatpush1.msra.mxu0 %v233
      %1649 = vmatprep.subr.mxu0 0.0
      %1650 = vmatpush1.msra.mxu0 0.0
      %1651 = vmatprep.subr.mxu0 0.0
      %1652 = vmatpush1.msra.mxu0 0.0
      %1653 = vmatprep.subr.mxu0 0.0
      %1654 = vmatpush1.msra.mxu0 0.0
      %1655 = vmatprep.subr.mxu0 0.0
      %1656 = vmatpush1.msra.mxu0 0.0
      %1657 = vmatprep.subr.mxu0 0.0
      %1658 = vmatpush1.msra.mxu0 0.0
      %1659 = vmatprep.subr.mxu0 0.0
      %1660 = vmatpush1.msra.mxu0 0.0
      %1661 = vmatprep.subr.mxu0 0.0
      %1662 = vmatpush1.msra.mxu0 0.0
      %1663 = vmatprep.subr.mxu0 0.0
      %1664 = vmatpush1.msra.mxu0 0.0
      %1665 = vmatprep.subr.mxu0 0.0
      %1666 = vmatpush1.msra.mxu0 0.0
      %1667 = vmatprep.subr.mxu0 0.0
      %1668 = vmatpush1.msra.mxu0 0.0
      %1669 = vmatprep.subr.mxu0 0.0
      %1670 = vmatpush1.msra.mxu0 0.0
      %1671 = vmatprep.subr.mxu0 0.0
      %1672 = vmatpush1.msra.mxu0 0.0
      %1673 = vmatprep.subr.mxu0 0.0
      %1674 = vmatpush1.msra.mxu0 0.0
      %1675 = vmatprep.subr.mxu0 0.0
      %1676 = vmatpush1.msra.mxu0 0.0
      %1677 = vmatprep.subr.mxu0 0.0
      %1678 = vmatpush1.msra.mxu0 0.0
      %1679 = vmatprep.subr.mxu0 0.0
      %1680 = vmatpush1.msra.mxu0 0.0
      %1681 = vmatprep.subr.mxu0 0.0
      %1682 = vmatpush1.msra.mxu0 0.0
      %1683 = vmatprep.subr.mxu0 0.0
      %1684 = vmatpush1.msra.mxu0 0.0
      %1685 = vmatprep.subr.mxu0 0.0
      %1686 = vmatpush1.msra.mxu0 0.0
      %1687 = vmatprep.subr.mxu0 0.0
      %1688 = vmatpush1.msra.mxu0 0.0
      %1689 = vmatprep.subr.mxu0 0.0
      %1690 = vmatpush1.msra.mxu0 0.0
      %1691 = vmatprep.subr.mxu0 0.0
      %1692 = vmatpush1.msra.mxu0 0.0
      %1693 = vmatprep.subr.mxu0 0.0
      %1694 = vmatpush1.msra.mxu0 0.0
      %1695 = vmatprep.subr.mxu0 0.0
      %1696 = vmatpush1.msra.mxu0 0.0
      %1697 = vmatprep.subr.mxu0 0.0
      %1698 = vmatpush1.msra.mxu0 0.0
      %1699 = vmatprep.subr.mxu0 0.0
      %1700 = vmatpush1.msra.mxu0 0.0
      %1701 = vmatprep.subr.mxu0 0.0
      %1702 = vmatpush1.msra.mxu0 0.0
      %1703 = vmatprep.subr.mxu0 0.0
      %1704 = vmatpush1.msra.mxu0 0.0
      %1705 = vmatprep.mubr.f32.mxu0 0.0
      %1706 = vmatmul.mubr.f32.gmra.mrb[0].mxu0 %v1639
      %v1707 = vpop.f32.mrb[0].mxu0
      %v1708 = vadd.f32 0.0, %v1707
      %v1709 = vpop.f32.mrb[0].mxu0
      %1710 = vdwg.mxu0
      %v1711 = vadd.f32 %v1636, %v1708
      %v1712 = vxor.u32 %v1711, 2147483648
      %v1713 = vmul.f32 %v1712, 1.442695
      %v1714 = vpow.pop %v1713
      %v1715 = vadd.f32 %v1714, 1.0
      %v1716 = vrcp.pop %v1715
      %v1717 = vmul.f32 1.0, %v1716
      %v1718 = vtanh.pop %v1711
      %v1719 = vld [vmem:[#allocation3] sm:$0x3]
      %1721 = vrot.lane.b32.xlu0 %v1719, 32
      %v1722 = vpop.permute.xlu0 %1721
      %v1724 = vmul.f32 %v1717, %v1722
      %1726 = vrot.lane.b32.xlu0 %v1718, 64
      %v1727 = vpop.permute.xlu0 %1726
      %v1729 = vmul.f32 %v1717, %v1727
      %1731 = vrot.lane.b32.xlu0 %v1729, 32
      %v1732 = vpop.permute.xlu0 %1731
      %v1734 = vadd.f32 %v1724, %v1732
      %v1735 = vtanh.pop %v1734
      %1737 = vrot.lane.b32.xlu0 %v1735, 64
      %v1738 = vpop.permute.xlu0 %1737
      %v1740 = vmul.f32 %v1717, %v1738
      %1742 = vrot.lane.b32.xlu0 %v1734, 96
      %v1743 = vpop.permute.xlu0 %1742
      %1745 = vst.msk [vmem:[#allocation3] sm:$0x3] %vm344, %v1743
      %1747 = vrot.lane.b32.xlu0 %v1740, 32
      %v1748 = vpop.permute.xlu0 %1747
      %1750 = vst.msk [vmem:[#allocation2] sm:$0x3] %vm344, %v1748
      %v1751 = vld [vmem:[%s2] sm:$0xff]
      %v1752 = vld [vmem:[%s2 + $0x8] sm:$0xff]
      %v1753 = vld [vmem:[%s2 + $0x10] sm:$0xff]
      %v1754 = vld [vmem:[%s2 + $0x18] sm:$0xff]
      %v1755 = vsel %vm236, %v1748, 0
      %1757 = vmatprep.subr.mxu0 0.0
      %1758 = vmatpush1.msra.mxu0 %v1751
      %1759 = vmatprep.subr.mxu0 0.0
      %1760 = vmatpush1.msra.mxu0 %v1752
      %1761 = vmatprep.subr.mxu0 0.0
      %1762 = vmatpush1.msra.mxu0 %v1753
      %1763 = vmatprep.subr.mxu0 0.0
      %1764 = vmatpush1.msra.mxu0 %v1754
      %1765 = vmatprep.subr.mxu0 0.0
      %1766 = vmatpush1.msra.mxu0 0.0
      %1767 = vmatprep.subr.mxu0 0.0
      %1768 = vmatpush1.msra.mxu0 0.0
      %1769 = vmatprep.subr.mxu0 0.0
      %1770 = vmatpush1.msra.mxu0 0.0
      %1771 = vmatprep.subr.mxu0 0.0
      %1772 = vmatpush1.msra.mxu0 0.0
      %1773 = vmatprep.subr.mxu0 0.0
      %1774 = vmatpush1.msra.mxu0 0.0
      %1775 = vmatprep.subr.mxu0 0.0
      %1776 = vmatpush1.msra.mxu0 0.0
      %1777 = vmatprep.subr.mxu0 0.0
      %1778 = vmatpush1.msra.mxu0 0.0
      %1779 = vmatprep.subr.mxu0 0.0
      %1780 = vmatpush1.msra.mxu0 0.0
      %1781 = vmatprep.subr.mxu0 0.0
      %1782 = vmatpush1.msra.mxu0 0.0
      %1783 = vmatprep.subr.mxu0 0.0
      %1784 = vmatpush1.msra.mxu0 0.0
      %1785 = vmatprep.subr.mxu0 0.0
      %1786 = vmatpush1.msra.mxu0 0.0
      %1787 = vmatprep.subr.mxu0 0.0
      %1788 = vmatpush1.msra.mxu0 0.0
      %1789 = vmatprep.subr.mxu0 0.0
      %1790 = vmatpush1.msra.mxu0 0.0
      %1791 = vmatprep.subr.mxu0 0.0
      %1792 = vmatpush1.msra.mxu0 0.0
      %1793 = vmatprep.subr.mxu0 0.0
      %1794 = vmatpush1.msra.mxu0 0.0
      %1795 = vmatprep.subr.mxu0 0.0
      %1796 = vmatpush1.msra.mxu0 0.0
      %1797 = vmatprep.subr.mxu0 0.0
      %1798 = vmatpush1.msra.mxu0 0.0
      %1799 = vmatprep.subr.mxu0 0.0
      %1800 = vmatpush1.msra.mxu0 0.0
      %1801 = vmatprep.subr.mxu0 0.0
      %1802 = vmatpush1.msra.mxu0 0.0
      %1803 = vmatprep.subr.mxu0 0.0
      %1804 = vmatpush1.msra.mxu0 0.0
      %1805 = vmatprep.subr.mxu0 0.0
      %1806 = vmatpush1.msra.mxu0 0.0
      %1807 = vmatprep.subr.mxu0 0.0
      %1808 = vmatpush1.msra.mxu0 0.0
      %1809 = vmatprep.subr.mxu0 0.0
      %1810 = vmatpush1.msra.mxu0 0.0
      %1811 = vmatprep.subr.mxu0 0.0
      %1812 = vmatpush1.msra.mxu0 0.0
      %1813 = vmatprep.subr.mxu0 0.0
      %1814 = vmatpush1.msra.mxu0 0.0
      %1815 = vmatprep.subr.mxu0 0.0
      %1816 = vmatpush1.msra.mxu0 0.0
      %1817 = vmatprep.subr.mxu0 0.0
      %1818 = vmatpush1.msra.mxu0 0.0
      %1819 = vmatprep.subr.mxu0 0.0
      %1820 = vmatpush1.msra.mxu0 0.0
      %1821 = vmatprep.mubr.f32.mxu0 0.0
      %1822 = vmatmul.mubr.f32.gmra.mrb[0].mxu0 %v1755
      %v1823 = vpop.f32.mrb[0].mxu0
      %v1824 = vadd.f32 0.0, %v1823
      %v1825 = vpop.f32.mrb[0].mxu0
      %1826 = vdwg.mxu0
      %v1827 = vxor.u32 %v1824, 2147483648
      %v1828 = vmul.f32 %v1827, 1.442695
      %v1829 = vpow.pop %v1828
      %v1830 = vadd.f32 %v1829, 1.0
      %v1831 = vrcp.pop %v1830
      %v1832 = vmul.f32 1.0, %v1831
      %s1833 = scalar_lea.vmem %s221, 14
      %1834 = vst.msk [vmem:[%s1833] sm:$0x3] %vm433, %v1832
      %v1835 = vld [vmem:[#allocation2] sm:$0x3]
      %1836 = vst.msk [vmem:[%s4] sm:$0x3] %vm344, %v1835
      %v1837 = vld [vmem:[#allocation3] sm:$0x3]
      %1838 = vst.msk [vmem:[%s5] sm:$0x3] %vm344, %v1837
      %s1839 = smul.u32 8, %s17
      %p1840 = scmp.lt.s32.totalorder %s1839, 15
      %s1841 = scalar_select %p1840, %s1839, 15
      %s1842 = smul.addr %s1841, 2
      %s1843 = scalar_lea.vmem %s3, %s1842
      // Predicated region
      $region37: #{wl_forward.19} parent=31 // pred_check
        %p1844 = pneg %p103
      $region38: #{wl_forward.19} parent=31 // pred_check_branch
        %1846 = sbr.rel (%p1844) target = $region40
      $region39: #{wl_forward.19} parent=31 // pred_region
        %s1847 = smul.u32 8, %s17
      $region40: #{wl_forward.19} parent=31 // pred_fallthru
        _
      // Predicated region
      $region41: #{wl_forward.19} parent=31 // pred_check
        %p1848 = pneg %p124
      $region42: #{wl_forward.19} parent=31 // pred_check_branch
        %1850 = sbr.rel (%p1848) target = $region44
      $region43: #{wl_forward.19} parent=31 // pred_region
        _
      $region44: #{wl_forward.19} parent=31 // pred_fallthru
        _
      // Predicated region
      $region45: #{wl_forward.19} parent=31 // pred_check
        %p1851 = pneg %p145
      $region46: #{wl_forward.19} parent=31 // pred_check_branch
        %1853 = sbr.rel (%p1851) target = $region48
      $region47: #{wl_forward.19} parent=31 // pred_region
        _
      $region48: #{wl_forward.19} parent=31 // pred_fallthru
        _
      // Predicated region
      $region49: #{wl_forward.19} parent=31 // pred_check
        %p1854 = pneg %p124
      $region50: #{wl_forward.19} parent=31 // pred_check_branch
        %1856 = sbr.rel (%p1854) target = $region52
      $region51: #{wl_forward.19} parent=31 // pred_region
        _
      $region52: #{wl_forward.19} parent=31 // pred_fallthru
        _
      // Predicated region
      $region53: #{wl_forward.19} parent=31 // pred_check
        %p1857 = pneg %p145
      $region54: #{wl_forward.19} parent=31 // pred_check_branch
        %1859 = sbr.rel (%p1857) target = $region56
      $region55: #{wl_forward.19} parent=31 // pred_region
        _
      $region56: #{wl_forward.19} parent=31 // pred_fallthru
        _
    $region32: #{wl_forward.19} parent=5 // pred_fallthru
      _
    %p1860 = scmp.le.s32.totalorder 2, %s12
    // Predicated region
    $region57: #{wl_forward.19} parent=5 // pred_check
      %p1861 = pneg %p1860
    $region58: #{wl_forward.19} parent=5 // pred_check_branch
      %1863 = sbr.rel (%p1861) target = $region60
    $region59: #{wl_forward.19} parent=5 // pred_region
      %s1864 = ssub.s32 %s12, 2
      // Predicated region
      $region61: #{wl_forward.19} parent=59 // pred_check
        %p1865 = pneg %p109
      $region62: #{wl_forward.19} parent=59 // pred_check_branch
        %1867 = sbr.rel (%p1865) target = $region64
      $region63: #{wl_forward.19} parent=59 // pred_region
        %s1868 = smul.u32 8, %s18
        %p1869 = scmp.lt.s32.totalorder %s1868, 15
        %s1870 = scalar_select %p1869, %s1868, 15
        %s1871 = smul.addr %s1870, 2
        %s1872 = scalar_lea.vmem %s3, %s1871
      $region64: #{wl_forward.19} parent=59 // pred_fallthru
        _
    $region60: #{wl_forward.19} parent=5 // pred_fallthru
      _
  $region6: #{wl_forward.19} parent=0 // loop_footer
    %s16 = sadd.s32 1, %s12
  $region7: #{wl_forward.19} parent=0 // loop_footer_branch
    %11 = sbr.rel target = $region3
  $region8: #{wl_forward.19} parent=0 // loop_exit
    _

</llo_original>
